<compile_context>
chip_gen: v7x
topology: tpu7x:2x2x1
jax: 0.10.0
libtpu: 0.0.40
codegen_flags: <defaults>
</compile_context>

<pallas_src>
import functools
import math

import jax
import jax.numpy as jnp
from jax.experimental import pallas as pl
from jax.experimental.pallas import tpu as pltpu

# ---------------- small test-time hyper-parameters (consistent with the module) --
B = 2            # batch
D = 128          # dim (original 4096; kept small)
H = 8            # num_heads
HD = D // H      # head dim
NS = 7           # former_support_clip tokens -> Lkv = 1 + NS = 8
NQ = 8           # query tokens
DH = int(D * 4.0)
LN_EPS = 1e-5


def _ln_rows(x, g, b):
    """Row-wise LayerNorm over the last (feature/lane) dim."""
    mu = jnp.mean(x, axis=-1, keepdims=True)
    xc = x - mu
    var = jnp.mean(xc * xc, axis=-1, keepdims=True)
    return xc * jax.lax.rsqrt(var + LN_EPS) * g + b


# ================================ Pallas kernels ================================

def _gru_kv_kernel(x_ref, wih_ref, whh_ref, bih_ref, bhhn_ref,
                   ln2g_ref, ln2b_ref, wkv_ref,
                   q_ref, ln1g_ref, ln1b_ref,
                   kvp_ref, qn_ref, h_all_ref, *, lkv, batch):
    """GRU (h0=0) + LN2 + kv-projection, plus LN1(q); single grid=(1,) program.

    x_ref : (Lkv*B, D) time-major rows (row = t*B + b)
    kvp_ref: (Lkv*B, 2D)   qn_ref: (B*NQ, D)
    """
    d = q_ref.shape[-1]

    # Hoisted input projection: ONE matmul for all timesteps (+ combined r/z bias).
    gi = (jnp.dot(x_ref[...], wih_ref[...], preferred_element_type=jnp.float32)
          + bih_ref[...])                                   # (Lkv*B, 3D)

    whh = whh_ref[...]
    bhh_n = bhhn_ref[...]                                   # (1, D) n-gate hidden bias
    h = jnp.zeros((batch, d), jnp.float32)

    # Statically unrolled recurrence; only gh depends on the carried state.
    for t in range(lkv):
        gi_t = gi[t * batch:(t + 1) * batch, :]             # (B, 3D)
        gh = jnp.dot(h, whh, preferred_element_type=jnp.float32)
        r = jax.nn.sigmoid(gi_t[:, 0:d] + gh[:, 0:d])
        z = jax.nn.sigmoid(gi_t[:, d:2 * d] + gh[:, d:2 * d])
        n = jnp.tanh(gi_t[:, 2 * d:3 * d] + r * (gh[:, 2 * d:3 * d] + bhh_n))
        h = (1.0 - z) * n + z * h
        h_all_ref[t * batch:(t + 1) * batch, :] = h

    hs = h_all_ref[...]                                     # (Lkv*B, D)
    # LN2 + kv projection (qkv_bias=False -> no bias, no zeros DMA).
    hn = _ln_rows(hs, ln2g_ref[...], ln2b_ref[...])
    kvp_ref[...] = jnp.dot(hn, wkv_ref[...], preferred_element_type=jnp.float32)

    # LN1 of the queries, fused in (saves a separate launch).
    qn_ref[...] = _ln_rows(q_ref[...], ln1g_ref[...], ln1b_ref[...])


def _attn_mlp_kernel(qh_ref, kvp_ref, qres_ref,
                     wp_ref, bp_ref, ls1_ref,
                     ln3g_ref, ln3b_ref,
                     w1_ref, b1_ref, w2_ref, b2_ref, ls2_ref,
                     o_ref, attn_sc):
    """All-heads attention + proj + LS1 + residual + LN3 + MLP + LS2 + residual."""
    b_, nh, nq, hd = qh_ref.shape
    d = nh * hd
    scale = float(hd) ** -0.5

    qh = qh_ref[...]                                        # (B, H, NQ, hd)
    kvp = kvp_ref[...]                                      # (B, Lkv, 2D)

    for hidx in range(nh):
        q_h = qh[:, hidx]                                   # (B, NQ, hd)
        k_h = kvp[:, :, hidx * hd:(hidx + 1) * hd]          # (B, Lkv, hd)
        v_h = kvp[:, :, d + hidx * hd:d + (hidx + 1) * hd]  # (B, Lkv, hd)
        s = jax.lax.dot_general(q_h, k_h, (((2,), (2,)), ((0,), (0,))),
                                preferred_element_type=jnp.float32) * scale
        s = s - jnp.max(s, axis=-1, keepdims=True)
        p = jnp.exp(s)
        p = p * pl.reciprocal(jnp.sum(p, axis=-1, keepdims=True), approx=True)
        o_h = jax.lax.dot_general(p, v_h, (((2,), (1,)), ((0,), (0,))),
                                  preferred_element_type=jnp.float32)   # (B, NQ, hd)
        attn_sc[:, :, hidx * hd:(hidx + 1) * hd] = o_h      # assemble lane-dense

    x = attn_sc[...].reshape(b_ * nq, d)                    # (B*NQ, D) lane-dense

    # out projection + LayerScale + residual
    y = jnp.dot(x, wp_ref[...], preferred_element_type=jnp.float32) + bp_ref[...]
    rgb = qres_ref[...] + ls1_ref[...] * y

    # MLP block: LN3 -> fc1 -> exact GELU -> fc2 -> LayerScale + residual
    xn = _ln_rows(rgb, ln3g_ref[...], ln3b_ref[...])
    hid = jnp.dot(xn, w1_ref[...], preferred_element_type=jnp.float32) + b1_ref[...]
    hid = 0.5 * hid * (1.0 + jax.lax.erf(hid * (1.0 / math.sqrt(2.0))))
    y2 = jnp.dot(hid, w2_ref[...], preferred_element_type=jnp.float32) + b2_ref[...]
    o_ref[...] = rgb + ls2_ref[...] * y2


# ============================ wrapper / composition =============================

def prepare_params(p):
    """One-time weight transposes + GRU bias packing (hoisted out of the forward)."""
    d = p["w_proj"].shape[0]
    bih_comb = p["gru_b_ih"] + jnp.concatenate(
        [p["gru_b_hh"][:2 * d], jnp.zeros((d,), p["gru_b_hh"].dtype)])
    return dict(
        wih_t=jnp.transpose(p["gru_w_ih"]),            # (D, 3D)
        whh_t=jnp.transpose(p["gru_w_hh"]),            # (D, 3D)
        bih=bih_comb.reshape(1, 3 * d),                # r/z biases pre-combined
        bhh_n=p["gru_b_hh"][2 * d:].reshape(1, d),     # n-gate hidden bias (under r*)
        ln1_g=p["ln1_g"].reshape(1, d), ln1_b=p["ln1_b"].reshape(1, d),
        ln2_g=p["ln2_g"].reshape(1, d), ln2_b=p["ln2_b"].reshape(1, d),
        ln3_g=p["ln3_g"].reshape(1, d), ln3_b=p["ln3_b"].reshape(1, d),
        wkv_t=jnp.transpose(p["w_kv"]),                # (D, 2D)
        wproj_t=jnp.transpose(p["w_proj"]),            # (D, D)
        bproj=p["b_proj"].reshape(1, d),
        ls1=p["ls1"].reshape(1, d), ls2=p["ls2"].reshape(1, d),
        w1_t=jnp.transpose(p["w_fc1"]), b1=p["b_fc1"].reshape(1, -1),
        w2_t=jnp.transpose(p["w_fc2"]), b2=p["b_fc2"].reshape(1, -1),
    )


@jax.jit
def gru_attention_forward(kp, former_support_clip, former_query_clip, temple_memcach):
    """GRU_Attention.forward -> (B, NQ, D). (Dropout / DropPath are identity at p=0.)"""
    b, nq, d = former_query_clip.shape
    hd = d // H
    dh = kp["w1_t"].shape[1]

    kv_in = jnp.concatenate([temple_memcach[:, None, :], former_support_clip], axis=1)
    lkv = kv_in.shape[1]
    x_tm = jnp.transpose(kv_in, (1, 0, 2)).reshape(lkv * b, d)   # time-major (Lkv*B, D)
    q2d = former_query_clip.reshape(b * nq, d)

    row = lambda n: pl.BlockSpec((1, n), lambda i: (0, 0))
    mat = lambda m, n: pl.BlockSpec((m, n), lambda i: (0, 0))

    # ---- Kernel A: GRU + LN2 + kv-proj (+ LN1(q)) ------------------------------
    kvp_flat, qn = pl.pallas_call(
        functools.partial(_gru_kv_kernel, lkv=lkv, batch=b),
        out_shape=(jax.ShapeDtypeStruct((lkv * b, 2 * d), jnp.float32),
                   jax.ShapeDtypeStruct((b * nq, d), jnp.float32)),
        grid=(1,),
        in_specs=[mat(lkv * b, d), mat(d, 3 * d), mat(d, 3 * d), row(3 * d), row(d),
                  row(d), row(d), mat(d, 2 * d),
                  mat(b * nq, d), row(d), row(d)],
        out_specs=(mat(lkv * b, 2 * d), mat(b * nq, d)),
        scratch_shapes=[pltpu.VMEM((lkv * b, d), jnp.float32)],
        compiler_params=pltpu.CompilerParams(dimension_semantics=("arbitrary",)),
    )(x_tm, kp["wih_t"], kp["whh_t"], kp["bih"], kp["bhh_n"],
      kp["ln2_g"], kp["ln2_b"], kp["wkv_t"],
      q2d, kp["ln1_g"], kp["ln1_b"])

    # Tiny XLA glue: batch-major kv, and the PyTorch "raw reshape" of q into heads.
    kvp = jnp.transpose(kvp_flat.reshape(lkv, b, 2 * d), (1, 0, 2))   # (B, Lkv, 2D)
    qh = qn.reshape(b, H, nq, hd)                                     # raw reshape (no head transpose)

    # ---- Kernel B: attention (all heads) + proj + LS + residual + MLP ----------
    out2d = pl.pallas_call(
        _attn_mlp_kernel,
        out_shape=jax.ShapeDtypeStruct((b * nq, d), jnp.float32),
        grid=(1,),
        in_specs=[pl.BlockSpec((b, H, nq, hd), lambda i: (0, 0, 0, 0)),
                  pl.BlockSpec((b, lkv, 2 * d), lambda i: (0, 0, 0)),
                  mat(b * nq, d),
                  mat(d, d), row(d), row(d),
                  row(d), row(d),
                  mat(d, dh), row(dh), mat(dh, d), row(d), row(d)],
        out_specs=mat(b * nq, d),
        scratch_shapes=[pltpu.VMEM((b, nq, d), jnp.float32)],
        compiler_params=pltpu.CompilerParams(dimension_semantics=("arbitrary",)),
    )(qh, kvp, q2d,
      kp["wproj_t"], kp["bproj"], kp["ls1"],
      kp["ln3_g"], kp["ln3_b"],
      kp["w1_t"], kp["b1"], kp["w2_t"], kp["b2"], kp["ls2"])

    return out2d.reshape(b, nq, d)


# ============================ pure-JAX reference ================================

def _ref_ln(x, g, b):
    mu = jnp.mean(x, axis=-1, keepdims=True)
    var = jnp.mean((x - mu) ** 2, axis=-1, keepdims=True)
    return (x - mu) / jnp.sqrt(var + LN_EPS) * g + b


def _ref_gru(x, w_ih, w_hh, b_ih, b_hh):
    b_, l_, d_ = x.shape

    def step(h, xt):
        gi = xt @ w_ih.T + b_ih
        gh = h @ w_hh.T + b_hh
        r = jax.nn.sigmoid(gi[:, :d_] + gh[:, :d_])
        z = jax.nn.sigmoid(gi[:, d_:2 * d_] + gh[:, d_:2 * d_])
        n = jnp.tanh(gi[:, 2 * d_:] + r * gh[:, 2 * d_:])
        hn = (1.0 - z) * n + z * h
        return hn, hn

    _, ys = jax.lax.scan(step, jnp.zeros((b_, d_), x.dtype), jnp.swapaxes(x, 0, 1))
    return jnp.swapaxes(ys, 0, 1)


def _ref_attention(q, kv, p):
    bk, nk, c = kv.shape
    hd = c // H
    kvp = (kv @ p["w_kv"].T).reshape(bk, nk, 2, H, hd)
    kvp = jnp.transpose(kvp, (2, 0, 3, 1, 4))
    k, v = kvp[0], kvp[1]
    qh = q.reshape(q.shape[0], H, q.shape[1], q.shape[2] // H)   # PyTorch raw reshape
    attn = jnp.einsum("bhqd,bhkd->bhqk", qh, k) * (hd ** (-0.5))
    attn = jax.nn.softmax(attn, axis=-1)
    x = jnp.einsum("bhqk,bhkd->bhqd", attn, v)
    x = jnp.transpose(x, (0, 2, 1, 3)).reshape(q.shape[0], qh.shape[2], c)
    return x @ p["w_proj"].T + p["b_proj"]


def ref_gru_attention(p, former_support_clip, former_query_clip, temple_memcach):
    kv_in = jnp.concatenate([temple_memcach[:, None, :], former_support_clip], axis=1)
    kv_gru = _ref_gru(kv_in, p["gru_w_ih"], p["gru_w_hh"], p["gru_b_ih"], p["gru_b_hh"])
    a = _ref_attention(_ref_ln(former_query_clip, p["ln1_g"], p["ln1_b"]),
                       _ref_ln(kv_gru, p["ln2_g"], p["ln2_b"]), p)
    rgb = former_query_clip + p["ls1"] * a
    xn = _ref_ln(rgb, p["ln3_g"], p["ln3_b"])
    h = jax.nn.gelu(xn @ p["w_fc1"].T + p["b_fc1"], approximate=False)
    y = h @ p["w_fc2"].T + p["b_fc2"]
    return rgb + p["ls2"] * y


# ==================================== main ======================================

if __name__ == "__main__":
    ks = jax.random.split(jax.random.PRNGKey(0), 24)

    def rnd(k, shape, s=0.05):
        return s * jax.random.normal(k, shape, dtype=jnp.float32)

    raw = dict(
        # nn.GRU(input=D, hidden=D, 1 layer), PyTorch layout (3D, D)
        gru_w_ih=rnd(ks[0], (3 * D, D)),
        gru_w_hh=rnd(ks[1], (3 * D, D)),
        gru_b_ih=rnd(ks[2], (3 * D,)),
        gru_b_hh=rnd(ks[3], (3 * D,)),
        # LayerNorms
        ln1_g=1.0 + rnd(ks[4], (D,), 0.1), ln1_b=rnd(ks[5], (D,), 0.1),
        ln2_g=1.0 + rnd(ks[6], (D,), 0.1), ln2_b=rnd(ks[7], (D,), 0.1),
        ln3_g=1.0 + rnd(ks[8], (D,), 0.1), ln3_b=rnd(ks[9], (D,), 0.1),
        # Attention
        w_kv=rnd(ks[10], (2 * D, D)),          # nn.Linear(dim, 2*dim, bias=False)
        w_proj=rnd(ks[11], (D, D)),            # nn.Linear(dim, dim)
        b_proj=rnd(ks[12], (D,)),
        # LayerScale gammas (module init is 1e-5; randomized so the attention/MLP
        # branches contribute meaningfully to the numeric check)
        ls1=0.5 + rnd(ks[13], (D,), 0.1),
        ls2=0.5 + rnd(ks[14], (D,), 0.1),
        # Mlp (dim -> 4*dim -> dim)
        w_fc1=rnd(ks[15], (DH, D)), b_fc1=rnd(ks[16], (DH,)),
        w_fc2=rnd(ks[17], (D, DH)), b_fc2=rnd(ks[18], (D,)),
    )

    former_support_clip = jax.random.normal(ks[19], (B, NS, D), jnp.float32)
    former_query_clip = jax.random.normal(ks[20], (B, NQ, D), jnp.float32)
    temple_memcach = jax.random.normal(ks[21], (B, D), jnp.float32)

    kp = prepare_params(raw)
    out = jax.block_until_ready(
        gru_attention_forward(kp, former_support_clip, former_query_clip, temple_memcach))

    ref = jax.block_until_ready(
        ref_gru_attention(raw, former_support_clip, former_query_clip, temple_memcach))

    assert out.shape == (B, NQ, D), out.shape
    max_err = float(jnp.max(jnp.abs(out - ref)))
    assert max_err < 2e-3, f"mismatch vs pure-JAX reference: max_err={max_err}"

    print("KERNEL_OK")
</pallas_src>

<mosaic_0001>
module attributes {stable_mosaic.version = 11 : i64} {
  func.func @_gru_kv_kernel(%arg0: i32, %arg1: memref<16x128xf32, #tpu.memory_space<vmem>>, %arg2: memref<128x384xf32, #tpu.memory_space<vmem>>, %arg3: memref<128x384xf32, #tpu.memory_space<vmem>>, %arg4: memref<1x384xf32, #tpu.memory_space<vmem>>, %arg5: memref<1x128xf32, #tpu.memory_space<vmem>>, %arg6: memref<1x128xf32, #tpu.memory_space<vmem>>, %arg7: memref<1x128xf32, #tpu.memory_space<vmem>>, %arg8: memref<128x256xf32, #tpu.memory_space<vmem>>, %arg9: memref<16x128xf32, #tpu.memory_space<vmem>>, %arg10: memref<1x128xf32, #tpu.memory_space<vmem>>, %arg11: memref<1x128xf32, #tpu.memory_space<vmem>>, %arg12: memref<16x256xf32, #tpu.memory_space<vmem>>, %arg13: memref<16x128xf32, #tpu.memory_space<vmem>>, %arg14: memref<16x128xf32, #tpu.memory_space<vmem>>) attributes {dimension_semantics = [#tpu.dimension_semantics<arbitrary>], iteration_bounds = array<i64: 1>, scalar_prefetch = 0 : i64, scratch_operands = 1 : i64, tpu.core_type = #tpu.core_type<tc>, window_params = [{pipeline_mode = #tpu.pipeline_mode<synchronous>, transform_indices = @transform_0, window_bounds = array<i64: 16, 128>}, {pipeline_mode = #tpu.pipeline_mode<synchronous>, transform_indices = @transform_1, window_bounds = array<i64: 128, 384>}, {pipeline_mode = #tpu.pipeline_mode<synchronous>, transform_indices = @transform_2, window_bounds = array<i64: 128, 384>}, {pipeline_mode = #tpu.pipeline_mode<synchronous>, transform_indices = @transform_3, window_bounds = array<i64: 1, 384>}, {pipeline_mode = #tpu.pipeline_mode<synchronous>, transform_indices = @transform_4, window_bounds = array<i64: 1, 128>}, {pipeline_mode = #tpu.pipeline_mode<synchronous>, transform_indices = @transform_5, window_bounds = array<i64: 1, 128>}, {pipeline_mode = #tpu.pipeline_mode<synchronous>, transform_indices = @transform_6, window_bounds = array<i64: 1, 128>}, {pipeline_mode = #tpu.pipeline_mode<synchronous>, transform_indices = @transform_7, window_bounds = array<i64: 128, 256>}, {pipeline_mode = #tpu.pipeline_mode<synchronous>, transform_indices = @transform_8, window_bounds = array<i64: 16, 128>}, {pipeline_mode = #tpu.pipeline_mode<synchronous>, transform_indices = @transform_9, window_bounds = array<i64: 1, 128>}, {pipeline_mode = #tpu.pipeline_mode<synchronous>, transform_indices = @transform_10, window_bounds = array<i64: 1, 128>}, {pipeline_mode = #tpu.pipeline_mode<synchronous>, transform_indices = @transform_11, window_bounds = array<i64: 16, 256>}, {pipeline_mode = #tpu.pipeline_mode<synchronous>, transform_indices = @transform_12, window_bounds = array<i64: 16, 128>}]} {
    %c0 = arith.constant 0 : index
    %c0_0 = arith.constant 0 : index
    %0 = vector.load %arg1[%c0, %c0_0] : memref<16x128xf32, #tpu.memory_space<vmem>>, vector<16x128xf32>
    %c0_1 = arith.constant 0 : index
    %c0_2 = arith.constant 0 : index
    %1 = vector.load %arg2[%c0_1, %c0_2] : memref<128x384xf32, #tpu.memory_space<vmem>>, vector<128x384xf32>
    %cst = arith.constant dense<0.000000e+00> : vector<16x384xf32>
    %2 = tpu.matmul %0, %1, %cst {dimension_numbers = #tpu.dot_dimension_numbers<[1], [0], [0], [1], [0, 0, 1, 1], [], []>} : vector<16x128xf32>, vector<128x384xf32>, vector<16x384xf32> -> vector<16x384xf32>
    %c0_3 = arith.constant 0 : index
    %c0_4 = arith.constant 0 : index
    %3 = vector.load %arg4[%c0_3, %c0_4] : memref<1x384xf32, #tpu.memory_space<vmem>>, vector<1x384xf32>
    %4 = vector.broadcast %3 : vector<1x384xf32> to vector<16x384xf32>
    %5 = arith.addf %2, %4 : vector<16x384xf32>
    %c0_5 = arith.constant 0 : index
    %c0_6 = arith.constant 0 : index
    %6 = vector.load %arg3[%c0_5, %c0_6] : memref<128x384xf32, #tpu.memory_space<vmem>>, vector<128x384xf32>
    %c0_7 = arith.constant 0 : index
    %c0_8 = arith.constant 0 : index
    %7 = vector.load %arg5[%c0_7, %c0_8] : memref<1x128xf32, #tpu.memory_space<vmem>>, vector<1x128xf32>
    %cst_9 = arith.constant 0.000000e+00 : f32
    %8 = vector.broadcast %cst_9 : f32 to vector<2x128xf32>
    %9 = vector.extract_strided_slice %5 {offsets = [0, 0], sizes = [2, 384], strides = [1, 1]} : vector<16x384xf32> to vector<2x384xf32>
    %cst_10 = arith.constant dense<0.000000e+00> : vector<2x384xf32>
    %10 = tpu.matmul %8, %6, %cst_10 {dimension_numbers = #tpu.dot_dimension_numbers<[1], [0], [0], [1], [0, 0, 1, 1], [], []>} : vector<2x128xf32>, vector<128x384xf32>, vector<2x384xf32> -> vector<2x384xf32>
    %11 = vector.extract_strided_slice %9 {offsets = [0, 0], sizes = [2, 128], strides = [1, 1]} : vector<2x384xf32> to vector<2x128xf32>
    %12 = vector.extract_strided_slice %10 {offsets = [0, 0], sizes = [2, 128], strides = [1, 1]} : vector<2x384xf32> to vector<2x128xf32>
    %13 = arith.addf %11, %12 : vector<2x128xf32>
    %14 = arith.negf %13 : vector<2x128xf32>
    %15 = math.exp %14 : vector<2x128xf32>
    %cst_11 = arith.constant 1.000000e+00 : f32
    %16 = vector.broadcast %cst_11 : f32 to vector<2x128xf32>
    %17 = arith.addf %16, %15 : vector<2x128xf32>
    %18 = arith.divf %16, %17 : vector<2x128xf32>
    %19 = vector.extract_strided_slice %9 {offsets = [0, 128], sizes = [2, 128], strides = [1, 1]} : vector<2x384xf32> to vector<2x128xf32>
    %20 = vector.extract_strided_slice %10 {offsets = [0, 128], sizes = [2, 128], strides = [1, 1]} : vector<2x384xf32> to vector<2x128xf32>
    %21 = arith.addf %19, %20 : vector<2x128xf32>
    %22 = arith.negf %21 : vector<2x128xf32>
    %23 = math.exp %22 : vector<2x128xf32>
    %cst_12 = arith.constant 1.000000e+00 : f32
    %24 = vector.broadcast %cst_12 : f32 to vector<2x128xf32>
    %25 = arith.addf %24, %23 : vector<2x128xf32>
    %26 = arith.divf %24, %25 : vector<2x128xf32>
    %27 = vector.extract_strided_slice %9 {offsets = [0, 256], sizes = [2, 128], strides = [1, 1]} : vector<2x384xf32> to vector<2x128xf32>
    %28 = vector.extract_strided_slice %10 {offsets = [0, 256], sizes = [2, 128], strides = [1, 1]} : vector<2x384xf32> to vector<2x128xf32>
    %29 = vector.broadcast %7 : vector<1x128xf32> to vector<2x128xf32>
    %30 = arith.addf %28, %29 : vector<2x128xf32>
    %31 = arith.mulf %18, %30 : vector<2x128xf32>
    %32 = arith.addf %27, %31 : vector<2x128xf32>
    %33 = math.tanh %32 : vector<2x128xf32>
    %cst_13 = arith.constant 1.000000e+00 : f32
    %34 = vector.broadcast %cst_13 : f32 to vector<2x128xf32>
    %35 = arith.subf %34, %26 : vector<2x128xf32>
    %36 = arith.mulf %35, %33 : vector<2x128xf32>
    %37 = arith.mulf %26, %8 : vector<2x128xf32>
    %38 = arith.addf %36, %37 : vector<2x128xf32>
    %c0_14 = arith.constant 0 : index
    %c0_15 = arith.constant 0 : index
    %39 = vector.load %arg14[%c0_14, %c0_15] : memref<16x128xf32, #tpu.memory_space<vmem>>, vector<2x128xf32>
    tpu.vector_store %arg14[%c0_14, %c0_15], %38 {strides = array<i32>} : memref<16x128xf32, #tpu.memory_space<vmem>>, vector<2x128xf32>,
    %40 = vector.extract_strided_slice %5 {offsets = [2, 0], sizes = [2, 384], strides = [1, 1]} : vector<16x384xf32> to vector<2x384xf32>
    %cst_16 = arith.constant dense<0.000000e+00> : vector<2x384xf32>
    %41 = tpu.matmul %38, %6, %cst_16 {dimension_numbers = #tpu.dot_dimension_numbers<[1], [0], [0], [1], [0, 0, 1, 1], [], []>} : vector<2x128xf32>, vector<128x384xf32>, vector<2x384xf32> -> vector<2x384xf32>
    %42 = vector.extract_strided_slice %40 {offsets = [0, 0], sizes = [2, 128], strides = [1, 1]} : vector<2x384xf32> to vector<2x128xf32>
    %43 = vector.extract_strided_slice %41 {offsets = [0, 0], sizes = [2, 128], strides = [1, 1]} : vector<2x384xf32> to vector<2x128xf32>
    %44 = arith.addf %42, %43 : vector<2x128xf32>
    %45 = arith.negf %44 : vector<2x128xf32>
    %46 = math.exp %45 : vector<2x128xf32>
    %cst_17 = arith.constant 1.000000e+00 : f32
    %47 = vector.broadcast %cst_17 : f32 to vector<2x128xf32>
    %48 = arith.addf %47, %46 : vector<2x128xf32>
    %49 = arith.divf %47, %48 : vector<2x128xf32>
    %50 = vector.extract_strided_slice %40 {offsets = [0, 128], sizes = [2, 128], strides = [1, 1]} : vector<2x384xf32> to vector<2x128xf32>
    %51 = vector.extract_strided_slice %41 {offsets = [0, 128], sizes = [2, 128], strides = [1, 1]} : vector<2x384xf32> to vector<2x128xf32>
    %52 = arith.addf %50, %51 : vector<2x128xf32>
    %53 = arith.negf %52 : vector<2x128xf32>
    %54 = math.exp %53 : vector<2x128xf32>
    %cst_18 = arith.constant 1.000000e+00 : f32
    %55 = vector.broadcast %cst_18 : f32 to vector<2x128xf32>
    %56 = arith.addf %55, %54 : vector<2x128xf32>
    %57 = arith.divf %55, %56 : vector<2x128xf32>
    %58 = vector.extract_strided_slice %40 {offsets = [0, 256], sizes = [2, 128], strides = [1, 1]} : vector<2x384xf32> to vector<2x128xf32>
    %59 = vector.extract_strided_slice %41 {offsets = [0, 256], sizes = [2, 128], strides = [1, 1]} : vector<2x384xf32> to vector<2x128xf32>
    %60 = vector.broadcast %7 : vector<1x128xf32> to vector<2x128xf32>
    %61 = arith.addf %59, %60 : vector<2x128xf32>
    %62 = arith.mulf %49, %61 : vector<2x128xf32>
    %63 = arith.addf %58, %62 : vector<2x128xf32>
    %64 = math.tanh %63 : vector<2x128xf32>
    %cst_19 = arith.constant 1.000000e+00 : f32
    %65 = vector.broadcast %cst_19 : f32 to vector<2x128xf32>
    %66 = arith.subf %65, %57 : vector<2x128xf32>
    %67 = arith.mulf %66, %64 : vector<2x128xf32>
    %68 = arith.mulf %57, %38 : vector<2x128xf32>
    %69 = arith.addf %67, %68 : vector<2x128xf32>
    %c2 = arith.constant 2 : index
    %c0_20 = arith.constant 0 : index
    %70 = vector.load %arg14[%c2, %c0_20] : memref<16x128xf32, #tpu.memory_space<vmem>>, vector<2x128xf32>
    tpu.vector_store %arg14[%c2, %c0_20], %69 {strides = array<i32>} : memref<16x128xf32, #tpu.memory_space<vmem>>, vector<2x128xf32>,
    %71 = vector.extract_strided_slice %5 {offsets = [4, 0], sizes = [2, 384], strides = [1, 1]} : vector<16x384xf32> to vector<2x384xf32>
    %cst_21 = arith.constant dense<0.000000e+00> : vector<2x384xf32>
    %72 = tpu.matmul %69, %6, %cst_21 {dimension_numbers = #tpu.dot_dimension_numbers<[1], [0], [0], [1], [0, 0, 1, 1], [], []>} : vector<2x128xf32>, vector<128x384xf32>, vector<2x384xf32> -> vector<2x384xf32>
    %73 = vector.extract_strided_slice %71 {offsets = [0, 0], sizes = [2, 128], strides = [1, 1]} : vector<2x384xf32> to vector<2x128xf32>
    %74 = vector.extract_strided_slice %72 {offsets = [0, 0], sizes = [2, 128], strides = [1, 1]} : vector<2x384xf32> to vector<2x128xf32>
    %75 = arith.addf %73, %74 : vector<2x128xf32>
    %76 = arith.negf %75 : vector<2x128xf32>
    %77 = math.exp %76 : vector<2x128xf32>
    %cst_22 = arith.constant 1.000000e+00 : f32
    %78 = vector.broadcast %cst_22 : f32 to vector<2x128xf32>
    %79 = arith.addf %78, %77 : vector<2x128xf32>
    %80 = arith.divf %78, %79 : vector<2x128xf32>
    %81 = vector.extract_strided_slice %71 {offsets = [0, 128], sizes = [2, 128], strides = [1, 1]} : vector<2x384xf32> to vector<2x128xf32>
    %82 = vector.extract_strided_slice %72 {offsets = [0, 128], sizes = [2, 128], strides = [1, 1]} : vector<2x384xf32> to vector<2x128xf32>
    %83 = arith.addf %81, %82 : vector<2x128xf32>
    %84 = arith.negf %83 : vector<2x128xf32>
    %85 = math.exp %84 : vector<2x128xf32>
    %cst_23 = arith.constant 1.000000e+00 : f32
    %86 = vector.broadcast %cst_23 : f32 to vector<2x128xf32>
    %87 = arith.addf %86, %85 : vector<2x128xf32>
    %88 = arith.divf %86, %87 : vector<2x128xf32>
    %89 = vector.extract_strided_slice %71 {offsets = [0, 256], sizes = [2, 128], strides = [1, 1]} : vector<2x384xf32> to vector<2x128xf32>
    %90 = vector.extract_strided_slice %72 {offsets = [0, 256], sizes = [2, 128], strides = [1, 1]} : vector<2x384xf32> to vector<2x128xf32>
    %91 = vector.broadcast %7 : vector<1x128xf32> to vector<2x128xf32>
    %92 = arith.addf %90, %91 : vector<2x128xf32>
    %93 = arith.mulf %80, %92 : vector<2x128xf32>
    %94 = arith.addf %89, %93 : vector<2x128xf32>
    %95 = math.tanh %94 : vector<2x128xf32>
    %cst_24 = arith.constant 1.000000e+00 : f32
    %96 = vector.broadcast %cst_24 : f32 to vector<2x128xf32>
    %97 = arith.subf %96, %88 : vector<2x128xf32>
    %98 = arith.mulf %97, %95 : vector<2x128xf32>
    %99 = arith.mulf %88, %69 : vector<2x128xf32>
    %100 = arith.addf %98, %99 : vector<2x128xf32>
    %c4 = arith.constant 4 : index
    %c0_25 = arith.constant 0 : index
    %101 = vector.load %arg14[%c4, %c0_25] : memref<16x128xf32, #tpu.memory_space<vmem>>, vector<2x128xf32>
    tpu.vector_store %arg14[%c4, %c0_25], %100 {strides = array<i32>} : memref<16x128xf32, #tpu.memory_space<vmem>>, vector<2x128xf32>,
    %102 = vector.extract_strided_slice %5 {offsets = [6, 0], sizes = [2, 384], strides = [1, 1]} : vector<16x384xf32> to vector<2x384xf32>
    %cst_26 = arith.constant dense<0.000000e+00> : vector<2x384xf32>
    %103 = tpu.matmul %100, %6, %cst_26 {dimension_numbers = #tpu.dot_dimension_numbers<[1], [0], [0], [1], [0, 0, 1, 1], [], []>} : vector<2x128xf32>, vector<128x384xf32>, vector<2x384xf32> -> vector<2x384xf32>
    %104 = vector.extract_strided_slice %102 {offsets = [0, 0], sizes = [2, 128], strides = [1, 1]} : vector<2x384xf32> to vector<2x128xf32>
    %105 = vector.extract_strided_slice %103 {offsets = [0, 0], sizes = [2, 128], strides = [1, 1]} : vector<2x384xf32> to vector<2x128xf32>
    %106 = arith.addf %104, %105 : vector<2x128xf32>
    %107 = arith.negf %106 : vector<2x128xf32>
    %108 = math.exp %107 : vector<2x128xf32>
    %cst_27 = arith.constant 1.000000e+00 : f32
    %109 = vector.broadcast %cst_27 : f32 to vector<2x128xf32>
    %110 = arith.addf %109, %108 : vector<2x128xf32>
    %111 = arith.divf %109, %110 : vector<2x128xf32>
    %112 = vector.extract_strided_slice %102 {offsets = [0, 128], sizes = [2, 128], strides = [1, 1]} : vector<2x384xf32> to vector<2x128xf32>
    %113 = vector.extract_strided_slice %103 {offsets = [0, 128], sizes = [2, 128], strides = [1, 1]} : vector<2x384xf32> to vector<2x128xf32>
    %114 = arith.addf %112, %113 : vector<2x128xf32>
    %115 = arith.negf %114 : vector<2x128xf32>
    %116 = math.exp %115 : vector<2x128xf32>
    %cst_28 = arith.constant 1.000000e+00 : f32
    %117 = vector.broadcast %cst_28 : f32 to vector<2x128xf32>
    %118 = arith.addf %117, %116 : vector<2x128xf32>
    %119 = arith.divf %117, %118 : vector<2x128xf32>
    %120 = vector.extract_strided_slice %102 {offsets = [0, 256], sizes = [2, 128], strides = [1, 1]} : vector<2x384xf32> to vector<2x128xf32>
    %121 = vector.extract_strided_slice %103 {offsets = [0, 256], sizes = [2, 128], strides = [1, 1]} : vector<2x384xf32> to vector<2x128xf32>
    %122 = vector.broadcast %7 : vector<1x128xf32> to vector<2x128xf32>
    %123 = arith.addf %121, %122 : vector<2x128xf32>
    %124 = arith.mulf %111, %123 : vector<2x128xf32>
    %125 = arith.addf %120, %124 : vector<2x128xf32>
    %126 = math.tanh %125 : vector<2x128xf32>
    %cst_29 = arith.constant 1.000000e+00 : f32
    %127 = vector.broadcast %cst_29 : f32 to vector<2x128xf32>
    %128 = arith.subf %127, %119 : vector<2x128xf32>
    %129 = arith.mulf %128, %126 : vector<2x128xf32>
    %130 = arith.mulf %119, %100 : vector<2x128xf32>
    %131 = arith.addf %129, %130 : vector<2x128xf32>
    %c6 = arith.constant 6 : index
    %c0_30 = arith.constant 0 : index
    %132 = vector.load %arg14[%c6, %c0_30] : memref<16x128xf32, #tpu.memory_space<vmem>>, vector<2x128xf32>
    tpu.vector_store %arg14[%c6, %c0_30], %131 {strides = array<i32>} : memref<16x128xf32, #tpu.memory_space<vmem>>, vector<2x128xf32>,
    %133 = vector.extract_strided_slice %5 {offsets = [8, 0], sizes = [2, 384], strides = [1, 1]} : vector<16x384xf32> to vector<2x384xf32>
    %cst_31 = arith.constant dense<0.000000e+00> : vector<2x384xf32>
    %134 = tpu.matmul %131, %6, %cst_31 {dimension_numbers = #tpu.dot_dimension_numbers<[1], [0], [0], [1], [0, 0, 1, 1], [], []>} : vector<2x128xf32>, vector<128x384xf32>, vector<2x384xf32> -> vector<2x384xf32>
    %135 = vector.extract_strided_slice %133 {offsets = [0, 0], sizes = [2, 128], strides = [1, 1]} : vector<2x384xf32> to vector<2x128xf32>
    %136 = vector.extract_strided_slice %134 {offsets = [0, 0], sizes = [2, 128], strides = [1, 1]} : vector<2x384xf32> to vector<2x128xf32>
    %137 = arith.addf %135, %136 : vector<2x128xf32>
    %138 = arith.negf %137 : vector<2x128xf32>
    %139 = math.exp %138 : vector<2x128xf32>
    %cst_32 = arith.constant 1.000000e+00 : f32
    %140 = vector.broadcast %cst_32 : f32 to vector<2x128xf32>
    %141 = arith.addf %140, %139 : vector<2x128xf32>
    %142 = arith.divf %140, %141 : vector<2x128xf32>
    %143 = vector.extract_strided_slice %133 {offsets = [0, 128], sizes = [2, 128], strides = [1, 1]} : vector<2x384xf32> to vector<2x128xf32>
    %144 = vector.extract_strided_slice %134 {offsets = [0, 128], sizes = [2, 128], strides = [1, 1]} : vector<2x384xf32> to vector<2x128xf32>
    %145 = arith.addf %143, %144 : vector<2x128xf32>
    %146 = arith.negf %145 : vector<2x128xf32>
    %147 = math.exp %146 : vector<2x128xf32>
    %cst_33 = arith.constant 1.000000e+00 : f32
    %148 = vector.broadcast %cst_33 : f32 to vector<2x128xf32>
    %149 = arith.addf %148, %147 : vector<2x128xf32>
    %150 = arith.divf %148, %149 : vector<2x128xf32>
    %151 = vector.extract_strided_slice %133 {offsets = [0, 256], sizes = [2, 128], strides = [1, 1]} : vector<2x384xf32> to vector<2x128xf32>
    %152 = vector.extract_strided_slice %134 {offsets = [0, 256], sizes = [2, 128], strides = [1, 1]} : vector<2x384xf32> to vector<2x128xf32>
    %153 = vector.broadcast %7 : vector<1x128xf32> to vector<2x128xf32>
    %154 = arith.addf %152, %153 : vector<2x128xf32>
    %155 = arith.mulf %142, %154 : vector<2x128xf32>
    %156 = arith.addf %151, %155 : vector<2x128xf32>
    %157 = math.tanh %156 : vector<2x128xf32>
    %cst_34 = arith.constant 1.000000e+00 : f32
    %158 = vector.broadcast %cst_34 : f32 to vector<2x128xf32>
    %159 = arith.subf %158, %150 : vector<2x128xf32>
    %160 = arith.mulf %159, %157 : vector<2x128xf32>
    %161 = arith.mulf %150, %131 : vector<2x128xf32>
    %162 = arith.addf %160, %161 : vector<2x128xf32>
    %c8 = arith.constant 8 : index
    %c0_35 = arith.constant 0 : index
    %163 = vector.load %arg14[%c8, %c0_35] : memref<16x128xf32, #tpu.memory_space<vmem>>, vector<2x128xf32>
    tpu.vector_store %arg14[%c8, %c0_35], %162 {strides = array<i32>} : memref<16x128xf32, #tpu.memory_space<vmem>>, vector<2x128xf32>,
    %164 = vector.extract_strided_slice %5 {offsets = [10, 0], sizes = [2, 384], strides = [1, 1]} : vector<16x384xf32> to vector<2x384xf32>
    %cst_36 = arith.constant dense<0.000000e+00> : vector<2x384xf32>
    %165 = tpu.matmul %162, %6, %cst_36 {dimension_numbers = #tpu.dot_dimension_numbers<[1], [0], [0], [1], [0, 0, 1, 1], [], []>} : vector<2x128xf32>, vector<128x384xf32>, vector<2x384xf32> -> vector<2x384xf32>
    %166 = vector.extract_strided_slice %164 {offsets = [0, 0], sizes = [2, 128], strides = [1, 1]} : vector<2x384xf32> to vector<2x128xf32>
    %167 = vector.extract_strided_slice %165 {offsets = [0, 0], sizes = [2, 128], strides = [1, 1]} : vector<2x384xf32> to vector<2x128xf32>
    %168 = arith.addf %166, %167 : vector<2x128xf32>
    %169 = arith.negf %168 : vector<2x128xf32>
    %170 = math.exp %169 : vector<2x128xf32>
    %cst_37 = arith.constant 1.000000e+00 : f32
    %171 = vector.broadcast %cst_37 : f32 to vector<2x128xf32>
    %172 = arith.addf %171, %170 : vector<2x128xf32>
    %173 = arith.divf %171, %172 : vector<2x128xf32>
    %174 = vector.extract_strided_slice %164 {offsets = [0, 128], sizes = [2, 128], strides = [1, 1]} : vector<2x384xf32> to vector<2x128xf32>
    %175 = vector.extract_strided_slice %165 {offsets = [0, 128], sizes = [2, 128], strides = [1, 1]} : vector<2x384xf32> to vector<2x128xf32>
    %176 = arith.addf %174, %175 : vector<2x128xf32>
    %177 = arith.negf %176 : vector<2x128xf32>
    %178 = math.exp %177 : vector<2x128xf32>
    %cst_38 = arith.constant 1.000000e+00 : f32
    %179 = vector.broadcast %cst_38 : f32 to vector<2x128xf32>
    %180 = arith.addf %179, %178 : vector<2x128xf32>
    %181 = arith.divf %179, %180 : vector<2x128xf32>
    %182 = vector.extract_strided_slice %164 {offsets = [0, 256], sizes = [2, 128], strides = [1, 1]} : vector<2x384xf32> to vector<2x128xf32>
    %183 = vector.extract_strided_slice %165 {offsets = [0, 256], sizes = [2, 128], strides = [1, 1]} : vector<2x384xf32> to vector<2x128xf32>
    %184 = vector.broadcast %7 : vector<1x128xf32> to vector<2x128xf32>
    %185 = arith.addf %183, %184 : vector<2x128xf32>
    %186 = arith.mulf %173, %185 : vector<2x128xf32>
    %187 = arith.addf %182, %186 : vector<2x128xf32>
    %188 = math.tanh %187 : vector<2x128xf32>
    %cst_39 = arith.constant 1.000000e+00 : f32
    %189 = vector.broadcast %cst_39 : f32 to vector<2x128xf32>
    %190 = arith.subf %189, %181 : vector<2x128xf32>
    %191 = arith.mulf %190, %188 : vector<2x128xf32>
    %192 = arith.mulf %181, %162 : vector<2x128xf32>
    %193 = arith.addf %191, %192 : vector<2x128xf32>
    %c10 = arith.constant 10 : index
    %c0_40 = arith.constant 0 : index
    %194 = vector.load %arg14[%c10, %c0_40] : memref<16x128xf32, #tpu.memory_space<vmem>>, vector<2x128xf32>
    tpu.vector_store %arg14[%c10, %c0_40], %193 {strides = array<i32>} : memref<16x128xf32, #tpu.memory_space<vmem>>, vector<2x128xf32>,
    %195 = vector.extract_strided_slice %5 {offsets = [12, 0], sizes = [2, 384], strides = [1, 1]} : vector<16x384xf32> to vector<2x384xf32>
    %cst_41 = arith.constant dense<0.000000e+00> : vector<2x384xf32>
    %196 = tpu.matmul %193, %6, %cst_41 {dimension_numbers = #tpu.dot_dimension_numbers<[1], [0], [0], [1], [0, 0, 1, 1], [], []>} : vector<2x128xf32>, vector<128x384xf32>, vector<2x384xf32> -> vector<2x384xf32>
    %197 = vector.extract_strided_slice %195 {offsets = [0, 0], sizes = [2, 128], strides = [1, 1]} : vector<2x384xf32> to vector<2x128xf32>
    %198 = vector.extract_strided_slice %196 {offsets = [0, 0], sizes = [2, 128], strides = [1, 1]} : vector<2x384xf32> to vector<2x128xf32>
    %199 = arith.addf %197, %198 : vector<2x128xf32>
    %200 = arith.negf %199 : vector<2x128xf32>
    %201 = math.exp %200 : vector<2x128xf32>
    %cst_42 = arith.constant 1.000000e+00 : f32
    %202 = vector.broadcast %cst_42 : f32 to vector<2x128xf32>
    %203 = arith.addf %202, %201 : vector<2x128xf32>
    %204 = arith.divf %202, %203 : vector<2x128xf32>
    %205 = vector.extract_strided_slice %195 {offsets = [0, 128], sizes = [2, 128], strides = [1, 1]} : vector<2x384xf32> to vector<2x128xf32>
    %206 = vector.extract_strided_slice %196 {offsets = [0, 128], sizes = [2, 128], strides = [1, 1]} : vector<2x384xf32> to vector<2x128xf32>
    %207 = arith.addf %205, %206 : vector<2x128xf32>
    %208 = arith.negf %207 : vector<2x128xf32>
    %209 = math.exp %208 : vector<2x128xf32>
    %cst_43 = arith.constant 1.000000e+00 : f32
    %210 = vector.broadcast %cst_43 : f32 to vector<2x128xf32>
    %211 = arith.addf %210, %209 : vector<2x128xf32>
    %212 = arith.divf %210, %211 : vector<2x128xf32>
    %213 = vector.extract_strided_slice %195 {offsets = [0, 256], sizes = [2, 128], strides = [1, 1]} : vector<2x384xf32> to vector<2x128xf32>
    %214 = vector.extract_strided_slice %196 {offsets = [0, 256], sizes = [2, 128], strides = [1, 1]} : vector<2x384xf32> to vector<2x128xf32>
    %215 = vector.broadcast %7 : vector<1x128xf32> to vector<2x128xf32>
    %216 = arith.addf %214, %215 : vector<2x128xf32>
    %217 = arith.mulf %204, %216 : vector<2x128xf32>
    %218 = arith.addf %213, %217 : vector<2x128xf32>
    %219 = math.tanh %218 : vector<2x128xf32>
    %cst_44 = arith.constant 1.000000e+00 : f32
    %220 = vector.broadcast %cst_44 : f32 to vector<2x128xf32>
    %221 = arith.subf %220, %212 : vector<2x128xf32>
    %222 = arith.mulf %221, %219 : vector<2x128xf32>
    %223 = arith.mulf %212, %193 : vector<2x128xf32>
    %224 = arith.addf %222, %223 : vector<2x128xf32>
    %c12 = arith.constant 12 : index
    %c0_45 = arith.constant 0 : index
    %225 = vector.load %arg14[%c12, %c0_45] : memref<16x128xf32, #tpu.memory_space<vmem>>, vector<2x128xf32>
    tpu.vector_store %arg14[%c12, %c0_45], %224 {strides = array<i32>} : memref<16x128xf32, #tpu.memory_space<vmem>>, vector<2x128xf32>,
    %226 = vector.extract_strided_slice %5 {offsets = [14, 0], sizes = [2, 384], strides = [1, 1]} : vector<16x384xf32> to vector<2x384xf32>
    %cst_46 = arith.constant dense<0.000000e+00> : vector<2x384xf32>
    %227 = tpu.matmul %224, %6, %cst_46 {dimension_numbers = #tpu.dot_dimension_numbers<[1], [0], [0], [1], [0, 0, 1, 1], [], []>} : vector<2x128xf32>, vector<128x384xf32>, vector<2x384xf32> -> vector<2x384xf32>
    %228 = vector.extract_strided_slice %226 {offsets = [0, 0], sizes = [2, 128], strides = [1, 1]} : vector<2x384xf32> to vector<2x128xf32>
    %229 = vector.extract_strided_slice %227 {offsets = [0, 0], sizes = [2, 128], strides = [1, 1]} : vector<2x384xf32> to vector<2x128xf32>
    %230 = arith.addf %228, %229 : vector<2x128xf32>
    %231 = arith.negf %230 : vector<2x128xf32>
    %232 = math.exp %231 : vector<2x128xf32>
    %cst_47 = arith.constant 1.000000e+00 : f32
    %233 = vector.broadcast %cst_47 : f32 to vector<2x128xf32>
    %234 = arith.addf %233, %232 : vector<2x128xf32>
    %235 = arith.divf %233, %234 : vector<2x128xf32>
    %236 = vector.extract_strided_slice %226 {offsets = [0, 128], sizes = [2, 128], strides = [1, 1]} : vector<2x384xf32> to vector<2x128xf32>
    %237 = vector.extract_strided_slice %227 {offsets = [0, 128], sizes = [2, 128], strides = [1, 1]} : vector<2x384xf32> to vector<2x128xf32>
    %238 = arith.addf %236, %237 : vector<2x128xf32>
    %239 = arith.negf %238 : vector<2x128xf32>
    %240 = math.exp %239 : vector<2x128xf32>
    %cst_48 = arith.constant 1.000000e+00 : f32
    %241 = vector.broadcast %cst_48 : f32 to vector<2x128xf32>
    %242 = arith.addf %241, %240 : vector<2x128xf32>
    %243 = arith.divf %241, %242 : vector<2x128xf32>
    %244 = vector.extract_strided_slice %226 {offsets = [0, 256], sizes = [2, 128], strides = [1, 1]} : vector<2x384xf32> to vector<2x128xf32>
    %245 = vector.extract_strided_slice %227 {offsets = [0, 256], sizes = [2, 128], strides = [1, 1]} : vector<2x384xf32> to vector<2x128xf32>
    %246 = vector.broadcast %7 : vector<1x128xf32> to vector<2x128xf32>
    %247 = arith.addf %245, %246 : vector<2x128xf32>
    %248 = arith.mulf %235, %247 : vector<2x128xf32>
    %249 = arith.addf %244, %248 : vector<2x128xf32>
    %250 = math.tanh %249 : vector<2x128xf32>
    %cst_49 = arith.constant 1.000000e+00 : f32
    %251 = vector.broadcast %cst_49 : f32 to vector<2x128xf32>
    %252 = arith.subf %251, %243 : vector<2x128xf32>
    %253 = arith.mulf %252, %250 : vector<2x128xf32>
    %254 = arith.mulf %243, %224 : vector<2x128xf32>
    %255 = arith.addf %253, %254 : vector<2x128xf32>
    %c14 = arith.constant 14 : index
    %c0_50 = arith.constant 0 : index
    %256 = vector.load %arg14[%c14, %c0_50] : memref<16x128xf32, #tpu.memory_space<vmem>>, vector<2x128xf32>
    tpu.vector_store %arg14[%c14, %c0_50], %255 {strides = array<i32>} : memref<16x128xf32, #tpu.memory_space<vmem>>, vector<2x128xf32>,
    %c0_51 = arith.constant 0 : index
    %c0_52 = arith.constant 0 : index
    %257 = vector.load %arg14[%c0_51, %c0_52] : memref<16x128xf32, #tpu.memory_space<vmem>>, vector<16x128xf32>
    %c0_53 = arith.constant 0 : index
    %c0_54 = arith.constant 0 : index
    %258 = vector.load %arg6[%c0_53, %c0_54] : memref<1x128xf32, #tpu.memory_space<vmem>>, vector<1x128xf32>
    %c0_55 = arith.constant 0 : index
    %c0_56 = arith.constant 0 : index
    %259 = vector.load %arg7[%c0_55, %c0_56] : memref<1x128xf32, #tpu.memory_space<vmem>>, vector<1x128xf32>
    %cst_57 = arith.constant dense<0.000000e+00> : vector<16xf32>
    %260 = vector.multi_reduction <add>, %257, %cst_57 [1] : vector<16x128xf32> to vector<16xf32>
    %261 = vector.shape_cast %260 : vector<16xf32> to vector<16x1xf32>
    %cst_58 = arith.constant 1.280000e+02 : f32
    %262 = vector.broadcast %cst_58 : f32 to vector<16x1xf32>
    %263 = arith.divf %261, %262 : vector<16x1xf32>
    %264 = vector.broadcast %263 : vector<16x1xf32> to vector<16x128xf32>
    %265 = arith.subf %257, %264 : vector<16x128xf32>
    %266 = arith.mulf %265, %265 : vector<16x128xf32>
    %cst_59 = arith.constant dense<0.000000e+00> : vector<16xf32>
    %267 = vector.multi_reduction <add>, %266, %cst_59 [1] : vector<16x128xf32> to vector<16xf32>
    %268 = vector.shape_cast %267 : vector<16xf32> to vector<16x1xf32>
    %cst_60 = arith.constant 1.280000e+02 : f32
    %269 = vector.broadcast %cst_60 : f32 to vector<16x1xf32>
    %270 = arith.divf %268, %269 : vector<16x1xf32>
    %cst_61 = arith.constant 9.99999974E-6 : f32
    %271 = vector.broadcast %cst_61 : f32 to vector<16x1xf32>
    %272 = arith.addf %270, %271 : vector<16x1xf32>
    %273 = math.rsqrt %272 : vector<16x1xf32>
    %274 = vector.broadcast %273 : vector<16x1xf32> to vector<16x128xf32>
    %275 = arith.mulf %265, %274 : vector<16x128xf32>
    %276 = vector.broadcast %258 : vector<1x128xf32> to vector<16x128xf32>
    %277 = arith.mulf %275, %276 : vector<16x128xf32>
    %278 = vector.broadcast %259 : vector<1x128xf32> to vector<16x128xf32>
    %279 = arith.addf %277, %278 : vector<16x128xf32>
    %c0_62 = arith.constant 0 : index
    %c0_63 = arith.constant 0 : index
    %280 = vector.load %arg8[%c0_62, %c0_63] : memref<128x256xf32, #tpu.memory_space<vmem>>, vector<128x256xf32>
    %cst_64 = arith.constant dense<0.000000e+00> : vector<16x256xf32>
    %281 = tpu.matmul %279, %280, %cst_64 {dimension_numbers = #tpu.dot_dimension_numbers<[1], [0], [0], [1], [0, 0, 1, 1], [], []>} : vector<16x128xf32>, vector<128x256xf32>, vector<16x256xf32> -> vector<16x256xf32>
    %c0_65 = arith.constant 0 : index
    %c0_66 = arith.constant 0 : index
    %282 = vector.load %arg12[%c0_65, %c0_66] : memref<16x256xf32, #tpu.memory_space<vmem>>, vector<16x256xf32>
    tpu.vector_store %arg12[%c0_65, %c0_66], %281 {strides = array<i32>} : memref<16x256xf32, #tpu.memory_space<vmem>>, vector<16x256xf32>,
    %c0_67 = arith.constant 0 : index
    %c0_68 = arith.constant 0 : index
    %283 = vector.load %arg9[%c0_67, %c0_68] : memref<16x128xf32, #tpu.memory_space<vmem>>, vector<16x128xf32>
    %c0_69 = arith.constant 0 : index
    %c0_70 = arith.constant 0 : index
    %284 = vector.load %arg10[%c0_69, %c0_70] : memref<1x128xf32, #tpu.memory_space<vmem>>, vector<1x128xf32>
    %c0_71 = arith.constant 0 : index
    %c0_72 = arith.constant 0 : index
    %285 = vector.load %arg11[%c0_71, %c0_72] : memref<1x128xf32, #tpu.memory_space<vmem>>, vector<1x128xf32>
    %cst_73 = arith.constant dense<0.000000e+00> : vector<16xf32>
    %286 = vector.multi_reduction <add>, %283, %cst_73 [1] : vector<16x128xf32> to vector<16xf32>
    %287 = vector.shape_cast %286 : vector<16xf32> to vector<16x1xf32>
    %cst_74 = arith.constant 1.280000e+02 : f32
    %288 = vector.broadcast %cst_74 : f32 to vector<16x1xf32>
    %289 = arith.divf %287, %288 : vector<16x1xf32>
    %290 = vector.broadcast %289 : vector<16x1xf32> to vector<16x128xf32>
    %291 = arith.subf %283, %290 : vector<16x128xf32>
    %292 = arith.mulf %291, %291 : vector<16x128xf32>
    %cst_75 = arith.constant dense<0.000000e+00> : vector<16xf32>
    %293 = vector.multi_reduction <add>, %292, %cst_75 [1] : vector<16x128xf32> to vector<16xf32>
    %294 = vector.shape_cast %293 : vector<16xf32> to vector<16x1xf32>
    %cst_76 = arith.constant 1.280000e+02 : f32
    %295 = vector.broadcast %cst_76 : f32 to vector<16x1xf32>
    %296 = arith.divf %294, %295 : vector<16x1xf32>
    %cst_77 = arith.constant 9.99999974E-6 : f32
    %297 = vector.broadcast %cst_77 : f32 to vector<16x1xf32>
    %298 = arith.addf %296, %297 : vector<16x1xf32>
    %299 = math.rsqrt %298 : vector<16x1xf32>
    %300 = vector.broadcast %299 : vector<16x1xf32> to vector<16x128xf32>
    %301 = arith.mulf %291, %300 : vector<16x128xf32>
    %302 = vector.broadcast %284 : vector<1x128xf32> to vector<16x128xf32>
    %303 = arith.mulf %301, %302 : vector<16x128xf32>
    %304 = vector.broadcast %285 : vector<1x128xf32> to vector<16x128xf32>
    %305 = arith.addf %303, %304 : vector<16x128xf32>
    %c0_78 = arith.constant 0 : index
    %c0_79 = arith.constant 0 : index
    %306 = vector.load %arg13[%c0_78, %c0_79] : memref<16x128xf32, #tpu.memory_space<vmem>>, vector<16x128xf32>
    tpu.vector_store %arg13[%c0_78, %c0_79], %305 {strides = array<i32>} : memref<16x128xf32, #tpu.memory_space<vmem>>, vector<16x128xf32>,
    return
  }
  func.func @transform_0(%arg0: i32) -> (i32, i32) {
    %c0_i32 = arith.constant 0 : i32
    %c0_i32_0 = arith.constant 0 : i32
    %c0_i32_1 = arith.constant 0 : i32
    return %c0_i32, %c0_i32_0 : i32, i32
  }
  func.func @transform_1(%arg0: i32) -> (i32, i32) {
    %c0_i32 = arith.constant 0 : i32
    %c0_i32_0 = arith.constant 0 : i32
    %c0_i32_1 = arith.constant 0 : i32
    return %c0_i32, %c0_i32_0 : i32, i32
  }
  func.func @transform_2(%arg0: i32) -> (i32, i32) {
    %c0_i32 = arith.constant 0 : i32
    %c0_i32_0 = arith.constant 0 : i32
    %c0_i32_1 = arith.constant 0 : i32
    return %c0_i32, %c0_i32_0 : i32, i32
  }
  func.func @transform_3(%arg0: i32) -> (i32, i32) {
    %c0_i32 = arith.constant 0 : i32
    %c0_i32_0 = arith.constant 0 : i32
    %c0_i32_1 = arith.constant 0 : i32
    return %c0_i32, %c0_i32_0 : i32, i32
  }
  func.func @transform_4(%arg0: i32) -> (i32, i32) {
    %c0_i32 = arith.constant 0 : i32
    %c0_i32_0 = arith.constant 0 : i32
    %c0_i32_1 = arith.constant 0 : i32
    return %c0_i32, %c0_i32_0 : i32, i32
  }
  func.func @transform_5(%arg0: i32) -> (i32, i32) {
    %c0_i32 = arith.constant 0 : i32
    %c0_i32_0 = arith.constant 0 : i32
    %c0_i32_1 = arith.constant 0 : i32
    return %c0_i32, %c0_i32_0 : i32, i32
  }
  func.func @transform_6(%arg0: i32) -> (i32, i32) {
    %c0_i32 = arith.constant 0 : i32
    %c0_i32_0 = arith.constant 0 : i32
    %c0_i32_1 = arith.constant 0 : i32
    return %c0_i32, %c0_i32_0 : i32, i32
  }
  func.func @transform_7(%arg0: i32) -> (i32, i32) {
    %c0_i32 = arith.constant 0 : i32
    %c0_i32_0 = arith.constant 0 : i32
    %c0_i32_1 = arith.constant 0 : i32
    return %c0_i32, %c0_i32_0 : i32, i32
  }
  func.func @transform_8(%arg0: i32) -> (i32, i32) {
    %c0_i32 = arith.constant 0 : i32
    %c0_i32_0 = arith.constant 0 : i32
    %c0_i32_1 = arith.constant 0 : i32
    return %c0_i32, %c0_i32_0 : i32, i32
  }
  func.func @transform_9(%arg0: i32) -> (i32, i32) {
    %c0_i32 = arith.constant 0 : i32
    %c0_i32_0 = arith.constant 0 : i32
    %c0_i32_1 = arith.constant 0 : i32
    return %c0_i32, %c0_i32_0 : i32, i32
  }
  func.func @transform_10(%arg0: i32) -> (i32, i32) {
    %c0_i32 = arith.constant 0 : i32
    %c0_i32_0 = arith.constant 0 : i32
    %c0_i32_1 = arith.constant 0 : i32
    return %c0_i32, %c0_i32_0 : i32, i32
  }
  func.func @transform_11(%arg0: i32) -> (i32, i32) {
    %c0_i32 = arith.constant 0 : i32
    %c0_i32_0 = arith.constant 0 : i32
    %c0_i32_1 = arith.constant 0 : i32
    return %c0_i32, %c0_i32_0 : i32, i32
  }
  func.func @transform_12(%arg0: i32) -> (i32, i32) {
    %c0_i32 = arith.constant 0 : i32
    %c0_i32_0 = arith.constant 0 : i32
    %c0_i32_1 = arith.constant 0 : i32
    return %c0_i32, %c0_i32_0 : i32, i32
  }
}

module attributes {stable_mosaic.version = 11 : i64} {
  func.func @_attn_mlp_kernel(%arg0: i32, %arg1: memref<2x8x8x16xf32, #tpu.memory_space<vmem>>, %arg2: memref<2x8x256xf32, #tpu.memory_space<vmem>>, %arg3: memref<16x128xf32, #tpu.memory_space<vmem>>, %arg4: memref<128x128xf32, #tpu.memory_space<vmem>>, %arg5: memref<1x128xf32, #tpu.memory_space<vmem>>, %arg6: memref<1x128xf32, #tpu.memory_space<vmem>>, %arg7: memref<1x128xf32, #tpu.memory_space<vmem>>, %arg8: memref<1x128xf32, #tpu.memory_space<vmem>>, %arg9: memref<128x512xf32, #tpu.memory_space<vmem>>, %arg10: memref<1x512xf32, #tpu.memory_space<vmem>>, %arg11: memref<512x128xf32, #tpu.memory_space<vmem>>, %arg12: memref<1x128xf32, #tpu.memory_space<vmem>>, %arg13: memref<1x128xf32, #tpu.memory_space<vmem>>, %arg14: memref<16x128xf32, #tpu.memory_space<vmem>>, %arg15: memref<2x8x128xf32, #tpu.memory_space<vmem>>) attributes {dimension_semantics = [#tpu.dimension_semantics<arbitrary>], iteration_bounds = array<i64: 1>, scalar_prefetch = 0 : i64, scratch_operands = 1 : i64, tpu.core_type = #tpu.core_type<tc>, window_params = [{pipeline_mode = #tpu.pipeline_mode<synchronous>, transform_indices = @transform_0, window_bounds = array<i64: 2, 8, 8, 16>}, {pipeline_mode = #tpu.pipeline_mode<synchronous>, transform_indices = @transform_1, window_bounds = array<i64: 2, 8, 256>}, {pipeline_mode = #tpu.pipeline_mode<synchronous>, transform_indices = @transform_2, window_bounds = array<i64: 16, 128>}, {pipeline_mode = #tpu.pipeline_mode<synchronous>, transform_indices = @transform_3, window_bounds = array<i64: 128, 128>}, {pipeline_mode = #tpu.pipeline_mode<synchronous>, transform_indices = @transform_4, window_bounds = array<i64: 1, 128>}, {pipeline_mode = #tpu.pipeline_mode<synchronous>, transform_indices = @transform_5, window_bounds = array<i64: 1, 128>}, {pipeline_mode = #tpu.pipeline_mode<synchronous>, transform_indices = @transform_6, window_bounds = array<i64: 1, 128>}, {pipeline_mode = #tpu.pipeline_mode<synchronous>, transform_indices = @transform_7, window_bounds = array<i64: 1, 128>}, {pipeline_mode = #tpu.pipeline_mode<synchronous>, transform_indices = @transform_8, window_bounds = array<i64: 128, 512>}, {pipeline_mode = #tpu.pipeline_mode<synchronous>, transform_indices = @transform_9, window_bounds = array<i64: 1, 512>}, {pipeline_mode = #tpu.pipeline_mode<synchronous>, transform_indices = @transform_10, window_bounds = array<i64: 512, 128>}, {pipeline_mode = #tpu.pipeline_mode<synchronous>, transform_indices = @transform_11, window_bounds = array<i64: 1, 128>}, {pipeline_mode = #tpu.pipeline_mode<synchronous>, transform_indices = @transform_12, window_bounds = array<i64: 1, 128>}, {pipeline_mode = #tpu.pipeline_mode<synchronous>, transform_indices = @transform_13, window_bounds = array<i64: 16, 128>}]} {
    %c0 = arith.constant 0 : index
    %c0_0 = arith.constant 0 : index
    %c0_1 = arith.constant 0 : index
    %c0_2 = arith.constant 0 : index
    %0 = vector.load %arg1[%c0, %c0_0, %c0_1, %c0_2] : memref<2x8x8x16xf32, #tpu.memory_space<vmem>>, vector<2x8x8x16xf32>
    %c0_3 = arith.constant 0 : index
    %c0_4 = arith.constant 0 : index
    %c0_5 = arith.constant 0 : index
    %1 = vector.load %arg2[%c0_3, %c0_4, %c0_5] : memref<2x8x256xf32, #tpu.memory_space<vmem>>, vector<2x8x256xf32>
    %2 = vector.extract_strided_slice %0 {offsets = [0, 0, 0, 0], sizes = [2, 1, 8, 16], strides = [1, 1, 1, 1]} : vector<2x8x8x16xf32> to vector<2x1x8x16xf32>
    %3 = vector.shape_cast %2 : vector<2x1x8x16xf32> to vector<2x8x16xf32>
    %4 = vector.extract_strided_slice %1 {offsets = [0, 0, 0], sizes = [2, 8, 16], strides = [1, 1, 1]} : vector<2x8x256xf32> to vector<2x8x16xf32>
    %5 = vector.extract_strided_slice %1 {offsets = [0, 0, 128], sizes = [2, 8, 16], strides = [1, 1, 1]} : vector<2x8x256xf32> to vector<2x8x16xf32>
    %cst = arith.constant dense<0.000000e+00> : vector<2x8x8xf32>
    %6 = tpu.matmul %3, %4, %cst {dimension_numbers = #tpu.dot_dimension_numbers<[2], [2], [1], [1], [0, 0, 0, 1, 1, 1], [0], [0]>} : vector<2x8x16xf32>, vector<2x8x16xf32>, vector<2x8x8xf32> -> vector<2x8x8xf32>
    %cst_6 = arith.constant 2.500000e-01 : f32
    %7 = vector.broadcast %cst_6 : f32 to vector<2x8x8xf32>
    %8 = arith.mulf %6, %7 : vector<2x8x8xf32>
    %cst_7 = arith.constant dense<0xFF800000> : vector<2x8xf32>
    %9 = vector.multi_reduction <maximumf>, %8, %cst_7 [2] : vector<2x8x8xf32> to vector<2x8xf32>
    %10 = vector.shape_cast %9 : vector<2x8xf32> to vector<2x8x1xf32>
    %11 = vector.broadcast %10 : vector<2x8x1xf32> to vector<2x8x8xf32>
    %12 = arith.subf %8, %11 : vector<2x8x8xf32>
    %13 = math.exp %12 : vector<2x8x8xf32>
    %cst_8 = arith.constant dense<0.000000e+00> : vector<2x8xf32>
    %14 = vector.multi_reduction <add>, %13, %cst_8 [2] : vector<2x8x8xf32> to vector<2x8xf32>
    %15 = vector.shape_cast %14 : vector<2x8xf32> to vector<2x8x1xf32>
    %16 = tpu.reciprocal %15 {approx = true} : vector<2x8x1xf32> -> vector<2x8x1xf32>
    %17 = vector.broadcast %16 : vector<2x8x1xf32> to vector<2x8x8xf32>
    %18 = arith.mulf %13, %17 : vector<2x8x8xf32>
    %cst_9 = arith.constant dense<0.000000e+00> : vector<2x8x16xf32>
    %19 = tpu.matmul %18, %5, %cst_9 {dimension_numbers = #tpu.dot_dimension_numbers<[2], [1], [1], [2], [0, 0, 0, 1, 1, 2], [0], [0]>} : vector<2x8x8xf32>, vector<2x8x16xf32>, vector<2x8x16xf32> -> vector<2x8x16xf32>
    %c0_10 = arith.constant 0 : index
    %c0_11 = arith.constant 0 : index
    %c0_12 = arith.constant 0 : index
    %20 = vector.load %arg15[%c0_10, %c0_11, %c0_12] : memref<2x8x128xf32, #tpu.memory_space<vmem>>, vector<2x8x16xf32>
    tpu.vector_store %arg15[%c0_10, %c0_11, %c0_12], %19 {strides = array<i32>} : memref<2x8x128xf32, #tpu.memory_space<vmem>>, vector<2x8x16xf32>,
    %21 = vector.extract_strided_slice %0 {offsets = [0, 1, 0, 0], sizes = [2, 1, 8, 16], strides = [1, 1, 1, 1]} : vector<2x8x8x16xf32> to vector<2x1x8x16xf32>
    %22 = vector.shape_cast %21 : vector<2x1x8x16xf32> to vector<2x8x16xf32>
    %23 = vector.extract_strided_slice %1 {offsets = [0, 0, 16], sizes = [2, 8, 16], strides = [1, 1, 1]} : vector<2x8x256xf32> to vector<2x8x16xf32>
    %24 = vector.extract_strided_slice %1 {offsets = [0, 0, 144], sizes = [2, 8, 16], strides = [1, 1, 1]} : vector<2x8x256xf32> to vector<2x8x16xf32>
    %cst_13 = arith.constant dense<0.000000e+00> : vector<2x8x8xf32>
    %25 = tpu.matmul %22, %23, %cst_13 {dimension_numbers = #tpu.dot_dimension_numbers<[2], [2], [1], [1], [0, 0, 0, 1, 1, 1], [0], [0]>} : vector<2x8x16xf32>, vector<2x8x16xf32>, vector<2x8x8xf32> -> vector<2x8x8xf32>
    %cst_14 = arith.constant 2.500000e-01 : f32
    %26 = vector.broadcast %cst_14 : f32 to vector<2x8x8xf32>
    %27 = arith.mulf %25, %26 : vector<2x8x8xf32>
    %cst_15 = arith.constant dense<0xFF800000> : vector<2x8xf32>
    %28 = vector.multi_reduction <maximumf>, %27, %cst_15 [2] : vector<2x8x8xf32> to vector<2x8xf32>
    %29 = vector.shape_cast %28 : vector<2x8xf32> to vector<2x8x1xf32>
    %30 = vector.broadcast %29 : vector<2x8x1xf32> to vector<2x8x8xf32>
    %31 = arith.subf %27, %30 : vector<2x8x8xf32>
    %32 = math.exp %31 : vector<2x8x8xf32>
    %cst_16 = arith.constant dense<0.000000e+00> : vector<2x8xf32>
    %33 = vector.multi_reduction <add>, %32, %cst_16 [2] : vector<2x8x8xf32> to vector<2x8xf32>
    %34 = vector.shape_cast %33 : vector<2x8xf32> to vector<2x8x1xf32>
    %35 = tpu.reciprocal %34 {approx = true} : vector<2x8x1xf32> -> vector<2x8x1xf32>
    %36 = vector.broadcast %35 : vector<2x8x1xf32> to vector<2x8x8xf32>
    %37 = arith.mulf %32, %36 : vector<2x8x8xf32>
    %cst_17 = arith.constant dense<0.000000e+00> : vector<2x8x16xf32>
    %38 = tpu.matmul %37, %24, %cst_17 {dimension_numbers = #tpu.dot_dimension_numbers<[2], [1], [1], [2], [0, 0, 0, 1, 1, 2], [0], [0]>} : vector<2x8x8xf32>, vector<2x8x16xf32>, vector<2x8x16xf32> -> vector<2x8x16xf32>
    %c0_18 = arith.constant 0 : index
    %c0_19 = arith.constant 0 : index
    %c16 = arith.constant 16 : index
    %39 = vector.load %arg15[%c0_18, %c0_19, %c16] : memref<2x8x128xf32, #tpu.memory_space<vmem>>, vector<2x8x16xf32>
    tpu.vector_store %arg15[%c0_18, %c0_19, %c16], %38 {strides = array<i32>} : memref<2x8x128xf32, #tpu.memory_space<vmem>>, vector<2x8x16xf32>,
    %40 = vector.extract_strided_slice %0 {offsets = [0, 2, 0, 0], sizes = [2, 1, 8, 16], strides = [1, 1, 1, 1]} : vector<2x8x8x16xf32> to vector<2x1x8x16xf32>
    %41 = vector.shape_cast %40 : vector<2x1x8x16xf32> to vector<2x8x16xf32>
    %42 = vector.extract_strided_slice %1 {offsets = [0, 0, 32], sizes = [2, 8, 16], strides = [1, 1, 1]} : vector<2x8x256xf32> to vector<2x8x16xf32>
    %43 = vector.extract_strided_slice %1 {offsets = [0, 0, 160], sizes = [2, 8, 16], strides = [1, 1, 1]} : vector<2x8x256xf32> to vector<2x8x16xf32>
    %cst_20 = arith.constant dense<0.000000e+00> : vector<2x8x8xf32>
    %44 = tpu.matmul %41, %42, %cst_20 {dimension_numbers = #tpu.dot_dimension_numbers<[2], [2], [1], [1], [0, 0, 0, 1, 1, 1], [0], [0]>} : vector<2x8x16xf32>, vector<2x8x16xf32>, vector<2x8x8xf32> -> vector<2x8x8xf32>
    %cst_21 = arith.constant 2.500000e-01 : f32
    %45 = vector.broadcast %cst_21 : f32 to vector<2x8x8xf32>
    %46 = arith.mulf %44, %45 : vector<2x8x8xf32>
    %cst_22 = arith.constant dense<0xFF800000> : vector<2x8xf32>
    %47 = vector.multi_reduction <maximumf>, %46, %cst_22 [2] : vector<2x8x8xf32> to vector<2x8xf32>
    %48 = vector.shape_cast %47 : vector<2x8xf32> to vector<2x8x1xf32>
    %49 = vector.broadcast %48 : vector<2x8x1xf32> to vector<2x8x8xf32>
    %50 = arith.subf %46, %49 : vector<2x8x8xf32>
    %51 = math.exp %50 : vector<2x8x8xf32>
    %cst_23 = arith.constant dense<0.000000e+00> : vector<2x8xf32>
    %52 = vector.multi_reduction <add>, %51, %cst_23 [2] : vector<2x8x8xf32> to vector<2x8xf32>
    %53 = vector.shape_cast %52 : vector<2x8xf32> to vector<2x8x1xf32>
    %54 = tpu.reciprocal %53 {approx = true} : vector<2x8x1xf32> -> vector<2x8x1xf32>
    %55 = vector.broadcast %54 : vector<2x8x1xf32> to vector<2x8x8xf32>
    %56 = arith.mulf %51, %55 : vector<2x8x8xf32>
    %cst_24 = arith.constant dense<0.000000e+00> : vector<2x8x16xf32>
    %57 = tpu.matmul %56, %43, %cst_24 {dimension_numbers = #tpu.dot_dimension_numbers<[2], [1], [1], [2], [0, 0, 0, 1, 1, 2], [0], [0]>} : vector<2x8x8xf32>, vector<2x8x16xf32>, vector<2x8x16xf32> -> vector<2x8x16xf32>
    %c0_25 = arith.constant 0 : index
    %c0_26 = arith.constant 0 : index
    %c32 = arith.constant 32 : index
    %58 = vector.load %arg15[%c0_25, %c0_26, %c32] : memref<2x8x128xf32, #tpu.memory_space<vmem>>, vector<2x8x16xf32>
    tpu.vector_store %arg15[%c0_25, %c0_26, %c32], %57 {strides = array<i32>} : memref<2x8x128xf32, #tpu.memory_space<vmem>>, vector<2x8x16xf32>,
    %59 = vector.extract_strided_slice %0 {offsets = [0, 3, 0, 0], sizes = [2, 1, 8, 16], strides = [1, 1, 1, 1]} : vector<2x8x8x16xf32> to vector<2x1x8x16xf32>
    %60 = vector.shape_cast %59 : vector<2x1x8x16xf32> to vector<2x8x16xf32>
    %61 = vector.extract_strided_slice %1 {offsets = [0, 0, 48], sizes = [2, 8, 16], strides = [1, 1, 1]} : vector<2x8x256xf32> to vector<2x8x16xf32>
    %62 = vector.extract_strided_slice %1 {offsets = [0, 0, 176], sizes = [2, 8, 16], strides = [1, 1, 1]} : vector<2x8x256xf32> to vector<2x8x16xf32>
    %cst_27 = arith.constant dense<0.000000e+00> : vector<2x8x8xf32>
    %63 = tpu.matmul %60, %61, %cst_27 {dimension_numbers = #tpu.dot_dimension_numbers<[2], [2], [1], [1], [0, 0, 0, 1, 1, 1], [0], [0]>} : vector<2x8x16xf32>, vector<2x8x16xf32>, vector<2x8x8xf32> -> vector<2x8x8xf32>
    %cst_28 = arith.constant 2.500000e-01 : f32
    %64 = vector.broadcast %cst_28 : f32 to vector<2x8x8xf32>
    %65 = arith.mulf %63, %64 : vector<2x8x8xf32>
    %cst_29 = arith.constant dense<0xFF800000> : vector<2x8xf32>
    %66 = vector.multi_reduction <maximumf>, %65, %cst_29 [2] : vector<2x8x8xf32> to vector<2x8xf32>
    %67 = vector.shape_cast %66 : vector<2x8xf32> to vector<2x8x1xf32>
    %68 = vector.broadcast %67 : vector<2x8x1xf32> to vector<2x8x8xf32>
    %69 = arith.subf %65, %68 : vector<2x8x8xf32>
    %70 = math.exp %69 : vector<2x8x8xf32>
    %cst_30 = arith.constant dense<0.000000e+00> : vector<2x8xf32>
    %71 = vector.multi_reduction <add>, %70, %cst_30 [2] : vector<2x8x8xf32> to vector<2x8xf32>
    %72 = vector.shape_cast %71 : vector<2x8xf32> to vector<2x8x1xf32>
    %73 = tpu.reciprocal %72 {approx = true} : vector<2x8x1xf32> -> vector<2x8x1xf32>
    %74 = vector.broadcast %73 : vector<2x8x1xf32> to vector<2x8x8xf32>
    %75 = arith.mulf %70, %74 : vector<2x8x8xf32>
    %cst_31 = arith.constant dense<0.000000e+00> : vector<2x8x16xf32>
    %76 = tpu.matmul %75, %62, %cst_31 {dimension_numbers = #tpu.dot_dimension_numbers<[2], [1], [1], [2], [0, 0, 0, 1, 1, 2], [0], [0]>} : vector<2x8x8xf32>, vector<2x8x16xf32>, vector<2x8x16xf32> -> vector<2x8x16xf32>
    %c0_32 = arith.constant 0 : index
    %c0_33 = arith.constant 0 : index
    %c48 = arith.constant 48 : index
    %77 = vector.load %arg15[%c0_32, %c0_33, %c48] : memref<2x8x128xf32, #tpu.memory_space<vmem>>, vector<2x8x16xf32>
    tpu.vector_store %arg15[%c0_32, %c0_33, %c48], %76 {strides = array<i32>} : memref<2x8x128xf32, #tpu.memory_space<vmem>>, vector<2x8x16xf32>,
    %78 = vector.extract_strided_slice %0 {offsets = [0, 4, 0, 0], sizes = [2, 1, 8, 16], strides = [1, 1, 1, 1]} : vector<2x8x8x16xf32> to vector<2x1x8x16xf32>
    %79 = vector.shape_cast %78 : vector<2x1x8x16xf32> to vector<2x8x16xf32>
    %80 = vector.extract_strided_slice %1 {offsets = [0, 0, 64], sizes = [2, 8, 16], strides = [1, 1, 1]} : vector<2x8x256xf32> to vector<2x8x16xf32>
    %81 = vector.extract_strided_slice %1 {offsets = [0, 0, 192], sizes = [2, 8, 16], strides = [1, 1, 1]} : vector<2x8x256xf32> to vector<2x8x16xf32>
    %cst_34 = arith.constant dense<0.000000e+00> : vector<2x8x8xf32>
    %82 = tpu.matmul %79, %80, %cst_34 {dimension_numbers = #tpu.dot_dimension_numbers<[2], [2], [1], [1], [0, 0, 0, 1, 1, 1], [0], [0]>} : vector<2x8x16xf32>, vector<2x8x16xf32>, vector<2x8x8xf32> -> vector<2x8x8xf32>
    %cst_35 = arith.constant 2.500000e-01 : f32
    %83 = vector.broadcast %cst_35 : f32 to vector<2x8x8xf32>
    %84 = arith.mulf %82, %83 : vector<2x8x8xf32>
    %cst_36 = arith.constant dense<0xFF800000> : vector<2x8xf32>
    %85 = vector.multi_reduction <maximumf>, %84, %cst_36 [2] : vector<2x8x8xf32> to vector<2x8xf32>
    %86 = vector.shape_cast %85 : vector<2x8xf32> to vector<2x8x1xf32>
    %87 = vector.broadcast %86 : vector<2x8x1xf32> to vector<2x8x8xf32>
    %88 = arith.subf %84, %87 : vector<2x8x8xf32>
    %89 = math.exp %88 : vector<2x8x8xf32>
    %cst_37 = arith.constant dense<0.000000e+00> : vector<2x8xf32>
    %90 = vector.multi_reduction <add>, %89, %cst_37 [2] : vector<2x8x8xf32> to vector<2x8xf32>
    %91 = vector.shape_cast %90 : vector<2x8xf32> to vector<2x8x1xf32>
    %92 = tpu.reciprocal %91 {approx = true} : vector<2x8x1xf32> -> vector<2x8x1xf32>
    %93 = vector.broadcast %92 : vector<2x8x1xf32> to vector<2x8x8xf32>
    %94 = arith.mulf %89, %93 : vector<2x8x8xf32>
    %cst_38 = arith.constant dense<0.000000e+00> : vector<2x8x16xf32>
    %95 = tpu.matmul %94, %81, %cst_38 {dimension_numbers = #tpu.dot_dimension_numbers<[2], [1], [1], [2], [0, 0, 0, 1, 1, 2], [0], [0]>} : vector<2x8x8xf32>, vector<2x8x16xf32>, vector<2x8x16xf32> -> vector<2x8x16xf32>
    %c0_39 = arith.constant 0 : index
    %c0_40 = arith.constant 0 : index
    %c64 = arith.constant 64 : index
    %96 = vector.load %arg15[%c0_39, %c0_40, %c64] : memref<2x8x128xf32, #tpu.memory_space<vmem>>, vector<2x8x16xf32>
    tpu.vector_store %arg15[%c0_39, %c0_40, %c64], %95 {strides = array<i32>} : memref<2x8x128xf32, #tpu.memory_space<vmem>>, vector<2x8x16xf32>,
    %97 = vector.extract_strided_slice %0 {offsets = [0, 5, 0, 0], sizes = [2, 1, 8, 16], strides = [1, 1, 1, 1]} : vector<2x8x8x16xf32> to vector<2x1x8x16xf32>
    %98 = vector.shape_cast %97 : vector<2x1x8x16xf32> to vector<2x8x16xf32>
    %99 = vector.extract_strided_slice %1 {offsets = [0, 0, 80], sizes = [2, 8, 16], strides = [1, 1, 1]} : vector<2x8x256xf32> to vector<2x8x16xf32>
    %100 = vector.extract_strided_slice %1 {offsets = [0, 0, 208], sizes = [2, 8, 16], strides = [1, 1, 1]} : vector<2x8x256xf32> to vector<2x8x16xf32>
    %cst_41 = arith.constant dense<0.000000e+00> : vector<2x8x8xf32>
    %101 = tpu.matmul %98, %99, %cst_41 {dimension_numbers = #tpu.dot_dimension_numbers<[2], [2], [1], [1], [0, 0, 0, 1, 1, 1], [0], [0]>} : vector<2x8x16xf32>, vector<2x8x16xf32>, vector<2x8x8xf32> -> vector<2x8x8xf32>
    %cst_42 = arith.constant 2.500000e-01 : f32
    %102 = vector.broadcast %cst_42 : f32 to vector<2x8x8xf32>
    %103 = arith.mulf %101, %102 : vector<2x8x8xf32>
    %cst_43 = arith.constant dense<0xFF800000> : vector<2x8xf32>
    %104 = vector.multi_reduction <maximumf>, %103, %cst_43 [2] : vector<2x8x8xf32> to vector<2x8xf32>
    %105 = vector.shape_cast %104 : vector<2x8xf32> to vector<2x8x1xf32>
    %106 = vector.broadcast %105 : vector<2x8x1xf32> to vector<2x8x8xf32>
    %107 = arith.subf %103, %106 : vector<2x8x8xf32>
    %108 = math.exp %107 : vector<2x8x8xf32>
    %cst_44 = arith.constant dense<0.000000e+00> : vector<2x8xf32>
    %109 = vector.multi_reduction <add>, %108, %cst_44 [2] : vector<2x8x8xf32> to vector<2x8xf32>
    %110 = vector.shape_cast %109 : vector<2x8xf32> to vector<2x8x1xf32>
    %111 = tpu.reciprocal %110 {approx = true} : vector<2x8x1xf32> -> vector<2x8x1xf32>
    %112 = vector.broadcast %111 : vector<2x8x1xf32> to vector<2x8x8xf32>
    %113 = arith.mulf %108, %112 : vector<2x8x8xf32>
    %cst_45 = arith.constant dense<0.000000e+00> : vector<2x8x16xf32>
    %114 = tpu.matmul %113, %100, %cst_45 {dimension_numbers = #tpu.dot_dimension_numbers<[2], [1], [1], [2], [0, 0, 0, 1, 1, 2], [0], [0]>} : vector<2x8x8xf32>, vector<2x8x16xf32>, vector<2x8x16xf32> -> vector<2x8x16xf32>
    %c0_46 = arith.constant 0 : index
    %c0_47 = arith.constant 0 : index
    %c80 = arith.constant 80 : index
    %115 = vector.load %arg15[%c0_46, %c0_47, %c80] : memref<2x8x128xf32, #tpu.memory_space<vmem>>, vector<2x8x16xf32>
    tpu.vector_store %arg15[%c0_46, %c0_47, %c80], %114 {strides = array<i32>} : memref<2x8x128xf32, #tpu.memory_space<vmem>>, vector<2x8x16xf32>,
    %116 = vector.extract_strided_slice %0 {offsets = [0, 6, 0, 0], sizes = [2, 1, 8, 16], strides = [1, 1, 1, 1]} : vector<2x8x8x16xf32> to vector<2x1x8x16xf32>
    %117 = vector.shape_cast %116 : vector<2x1x8x16xf32> to vector<2x8x16xf32>
    %118 = vector.extract_strided_slice %1 {offsets = [0, 0, 96], sizes = [2, 8, 16], strides = [1, 1, 1]} : vector<2x8x256xf32> to vector<2x8x16xf32>
    %119 = vector.extract_strided_slice %1 {offsets = [0, 0, 224], sizes = [2, 8, 16], strides = [1, 1, 1]} : vector<2x8x256xf32> to vector<2x8x16xf32>
    %cst_48 = arith.constant dense<0.000000e+00> : vector<2x8x8xf32>
    %120 = tpu.matmul %117, %118, %cst_48 {dimension_numbers = #tpu.dot_dimension_numbers<[2], [2], [1], [1], [0, 0, 0, 1, 1, 1], [0], [0]>} : vector<2x8x16xf32>, vector<2x8x16xf32>, vector<2x8x8xf32> -> vector<2x8x8xf32>
    %cst_49 = arith.constant 2.500000e-01 : f32
    %121 = vector.broadcast %cst_49 : f32 to vector<2x8x8xf32>
    %122 = arith.mulf %120, %121 : vector<2x8x8xf32>
    %cst_50 = arith.constant dense<0xFF800000> : vector<2x8xf32>
    %123 = vector.multi_reduction <maximumf>, %122, %cst_50 [2] : vector<2x8x8xf32> to vector<2x8xf32>
    %124 = vector.shape_cast %123 : vector<2x8xf32> to vector<2x8x1xf32>
    %125 = vector.broadcast %124 : vector<2x8x1xf32> to vector<2x8x8xf32>
    %126 = arith.subf %122, %125 : vector<2x8x8xf32>
    %127 = math.exp %126 : vector<2x8x8xf32>
    %cst_51 = arith.constant dense<0.000000e+00> : vector<2x8xf32>
    %128 = vector.multi_reduction <add>, %127, %cst_51 [2] : vector<2x8x8xf32> to vector<2x8xf32>
    %129 = vector.shape_cast %128 : vector<2x8xf32> to vector<2x8x1xf32>
    %130 = tpu.reciprocal %129 {approx = true} : vector<2x8x1xf32> -> vector<2x8x1xf32>
    %131 = vector.broadcast %130 : vector<2x8x1xf32> to vector<2x8x8xf32>
    %132 = arith.mulf %127, %131 : vector<2x8x8xf32>
    %cst_52 = arith.constant dense<0.000000e+00> : vector<2x8x16xf32>
    %133 = tpu.matmul %132, %119, %cst_52 {dimension_numbers = #tpu.dot_dimension_numbers<[2], [1], [1], [2], [0, 0, 0, 1, 1, 2], [0], [0]>} : vector<2x8x8xf32>, vector<2x8x16xf32>, vector<2x8x16xf32> -> vector<2x8x16xf32>
    %c0_53 = arith.constant 0 : index
    %c0_54 = arith.constant 0 : index
    %c96 = arith.constant 96 : index
    %134 = vector.load %arg15[%c0_53, %c0_54, %c96] : memref<2x8x128xf32, #tpu.memory_space<vmem>>, vector<2x8x16xf32>
    tpu.vector_store %arg15[%c0_53, %c0_54, %c96], %133 {strides = array<i32>} : memref<2x8x128xf32, #tpu.memory_space<vmem>>, vector<2x8x16xf32>,
    %135 = vector.extract_strided_slice %0 {offsets = [0, 7, 0, 0], sizes = [2, 1, 8, 16], strides = [1, 1, 1, 1]} : vector<2x8x8x16xf32> to vector<2x1x8x16xf32>
    %136 = vector.shape_cast %135 : vector<2x1x8x16xf32> to vector<2x8x16xf32>
    %137 = vector.extract_strided_slice %1 {offsets = [0, 0, 112], sizes = [2, 8, 16], strides = [1, 1, 1]} : vector<2x8x256xf32> to vector<2x8x16xf32>
    %138 = vector.extract_strided_slice %1 {offsets = [0, 0, 240], sizes = [2, 8, 16], strides = [1, 1, 1]} : vector<2x8x256xf32> to vector<2x8x16xf32>
    %cst_55 = arith.constant dense<0.000000e+00> : vector<2x8x8xf32>
    %139 = tpu.matmul %136, %137, %cst_55 {dimension_numbers = #tpu.dot_dimension_numbers<[2], [2], [1], [1], [0, 0, 0, 1, 1, 1], [0], [0]>} : vector<2x8x16xf32>, vector<2x8x16xf32>, vector<2x8x8xf32> -> vector<2x8x8xf32>
    %cst_56 = arith.constant 2.500000e-01 : f32
    %140 = vector.broadcast %cst_56 : f32 to vector<2x8x8xf32>
    %141 = arith.mulf %139, %140 : vector<2x8x8xf32>
    %cst_57 = arith.constant dense<0xFF800000> : vector<2x8xf32>
    %142 = vector.multi_reduction <maximumf>, %141, %cst_57 [2] : vector<2x8x8xf32> to vector<2x8xf32>
    %143 = vector.shape_cast %142 : vector<2x8xf32> to vector<2x8x1xf32>
    %144 = vector.broadcast %143 : vector<2x8x1xf32> to vector<2x8x8xf32>
    %145 = arith.subf %141, %144 : vector<2x8x8xf32>
    %146 = math.exp %145 : vector<2x8x8xf32>
    %cst_58 = arith.constant dense<0.000000e+00> : vector<2x8xf32>
    %147 = vector.multi_reduction <add>, %146, %cst_58 [2] : vector<2x8x8xf32> to vector<2x8xf32>
    %148 = vector.shape_cast %147 : vector<2x8xf32> to vector<2x8x1xf32>
    %149 = tpu.reciprocal %148 {approx = true} : vector<2x8x1xf32> -> vector<2x8x1xf32>
    %150 = vector.broadcast %149 : vector<2x8x1xf32> to vector<2x8x8xf32>
    %151 = arith.mulf %146, %150 : vector<2x8x8xf32>
    %cst_59 = arith.constant dense<0.000000e+00> : vector<2x8x16xf32>
    %152 = tpu.matmul %151, %138, %cst_59 {dimension_numbers = #tpu.dot_dimension_numbers<[2], [1], [1], [2], [0, 0, 0, 1, 1, 2], [0], [0]>} : vector<2x8x8xf32>, vector<2x8x16xf32>, vector<2x8x16xf32> -> vector<2x8x16xf32>
    %c0_60 = arith.constant 0 : index
    %c0_61 = arith.constant 0 : index
    %c112 = arith.constant 112 : index
    %153 = vector.load %arg15[%c0_60, %c0_61, %c112] : memref<2x8x128xf32, #tpu.memory_space<vmem>>, vector<2x8x16xf32>
    tpu.vector_store %arg15[%c0_60, %c0_61, %c112], %152 {strides = array<i32>} : memref<2x8x128xf32, #tpu.memory_space<vmem>>, vector<2x8x16xf32>,
    %c0_62 = arith.constant 0 : index
    %c0_63 = arith.constant 0 : index
    %c0_64 = arith.constant 0 : index
    %154 = vector.load %arg15[%c0_62, %c0_63, %c0_64] : memref<2x8x128xf32, #tpu.memory_space<vmem>>, vector<2x8x128xf32>
    %155 = vector.shape_cast %154 : vector<2x8x128xf32> to vector<16x128xf32>
    %c0_65 = arith.constant 0 : index
    %c0_66 = arith.constant 0 : index
    %156 = vector.load %arg4[%c0_65, %c0_66] : memref<128x128xf32, #tpu.memory_space<vmem>>, vector<128x128xf32>
    %cst_67 = arith.constant dense<0.000000e+00> : vector<16x128xf32>
    %157 = tpu.matmul %155, %156, %cst_67 {dimension_numbers = #tpu.dot_dimension_numbers<[1], [0], [0], [1], [0, 0, 1, 1], [], []>} : vector<16x128xf32>, vector<128x128xf32>, vector<16x128xf32> -> vector<16x128xf32>
    %c0_68 = arith.constant 0 : index
    %c0_69 = arith.constant 0 : index
    %158 = vector.load %arg5[%c0_68, %c0_69] : memref<1x128xf32, #tpu.memory_space<vmem>>, vector<1x128xf32>
    %159 = vector.broadcast %158 : vector<1x128xf32> to vector<16x128xf32>
    %160 = arith.addf %157, %159 : vector<16x128xf32>
    %c0_70 = arith.constant 0 : index
    %c0_71 = arith.constant 0 : index
    %161 = vector.load %arg3[%c0_70, %c0_71] : memref<16x128xf32, #tpu.memory_space<vmem>>, vector<16x128xf32>
    %c0_72 = arith.constant 0 : index
    %c0_73 = arith.constant 0 : index
    %162 = vector.load %arg6[%c0_72, %c0_73] : memref<1x128xf32, #tpu.memory_space<vmem>>, vector<1x128xf32>
    %163 = vector.broadcast %162 : vector<1x128xf32> to vector<16x128xf32>
    %164 = arith.mulf %163, %160 : vector<16x128xf32>
    %165 = arith.addf %161, %164 : vector<16x128xf32>
    %c0_74 = arith.constant 0 : index
    %c0_75 = arith.constant 0 : index
    %166 = vector.load %arg7[%c0_74, %c0_75] : memref<1x128xf32, #tpu.memory_space<vmem>>, vector<1x128xf32>
    %c0_76 = arith.constant 0 : index
    %c0_77 = arith.constant 0 : index
    %167 = vector.load %arg8[%c0_76, %c0_77] : memref<1x128xf32, #tpu.memory_space<vmem>>, vector<1x128xf32>
    %cst_78 = arith.constant dense<0.000000e+00> : vector<16xf32>
    %168 = vector.multi_reduction <add>, %165, %cst_78 [1] : vector<16x128xf32> to vector<16xf32>
    %169 = vector.shape_cast %168 : vector<16xf32> to vector<16x1xf32>
    %cst_79 = arith.constant 1.280000e+02 : f32
    %170 = vector.broadcast %cst_79 : f32 to vector<16x1xf32>
    %171 = arith.divf %169, %170 : vector<16x1xf32>
    %172 = vector.broadcast %171 : vector<16x1xf32> to vector<16x128xf32>
    %173 = arith.subf %165, %172 : vector<16x128xf32>
    %174 = arith.mulf %173, %173 : vector<16x128xf32>
    %cst_80 = arith.constant dense<0.000000e+00> : vector<16xf32>
    %175 = vector.multi_reduction <add>, %174, %cst_80 [1] : vector<16x128xf32> to vector<16xf32>
    %176 = vector.shape_cast %175 : vector<16xf32> to vector<16x1xf32>
    %cst_81 = arith.constant 1.280000e+02 : f32
    %177 = vector.broadcast %cst_81 : f32 to vector<16x1xf32>
    %178 = arith.divf %176, %177 : vector<16x1xf32>
    %cst_82 = arith.constant 9.99999974E-6 : f32
    %179 = vector.broadcast %cst_82 : f32 to vector<16x1xf32>
    %180 = arith.addf %178, %179 : vector<16x1xf32>
    %181 = math.rsqrt %180 : vector<16x1xf32>
    %182 = vector.broadcast %181 : vector<16x1xf32> to vector<16x128xf32>
    %183 = arith.mulf %173, %182 : vector<16x128xf32>
    %184 = vector.broadcast %166 : vector<1x128xf32> to vector<16x128xf32>
    %185 = arith.mulf %183, %184 : vector<16x128xf32>
    %186 = vector.broadcast %167 : vector<1x128xf32> to vector<16x128xf32>
    %187 = arith.addf %185, %186 : vector<16x128xf32>
    %c0_83 = arith.constant 0 : index
    %c0_84 = arith.constant 0 : index
    %188 = vector.load %arg9[%c0_83, %c0_84] : memref<128x512xf32, #tpu.memory_space<vmem>>, vector<128x512xf32>
    %cst_85 = arith.constant dense<0.000000e+00> : vector<16x512xf32>
    %189 = tpu.matmul %187, %188, %cst_85 {dimension_numbers = #tpu.dot_dimension_numbers<[1], [0], [0], [1], [0, 0, 1, 1], [], []>} : vector<16x128xf32>, vector<128x512xf32>, vector<16x512xf32> -> vector<16x512xf32>
    %c0_86 = arith.constant 0 : index
    %c0_87 = arith.constant 0 : index
    %190 = vector.load %arg10[%c0_86, %c0_87] : memref<1x512xf32, #tpu.memory_space<vmem>>, vector<1x512xf32>
    %191 = vector.broadcast %190 : vector<1x512xf32> to vector<16x512xf32>
    %192 = arith.addf %189, %191 : vector<16x512xf32>
    %cst_88 = arith.constant 5.000000e-01 : f32
    %193 = vector.broadcast %cst_88 : f32 to vector<16x512xf32>
    %194 = arith.mulf %193, %192 : vector<16x512xf32>
    %cst_89 = arith.constant 0.707106769 : f32
    %195 = vector.broadcast %cst_89 : f32 to vector<16x512xf32>
    %196 = arith.mulf %192, %195 : vector<16x512xf32>
    %197 = math.erf %196 : vector<16x512xf32>
    %cst_90 = arith.constant 1.000000e+00 : f32
    %198 = vector.broadcast %cst_90 : f32 to vector<16x512xf32>
    %199 = arith.addf %198, %197 : vector<16x512xf32>
    %200 = arith.mulf %194, %199 : vector<16x512xf32>
    %c0_91 = arith.constant 0 : index
    %c0_92 = arith.constant 0 : index
    %201 = vector.load %arg11[%c0_91, %c0_92] : memref<512x128xf32, #tpu.memory_space<vmem>>, vector<512x128xf32>
    %cst_93 = arith.constant dense<0.000000e+00> : vector<16x128xf32>
    %202 = tpu.matmul %200, %201, %cst_93 {dimension_numbers = #tpu.dot_dimension_numbers<[1], [0], [0], [1], [0, 0, 1, 1], [], []>} : vector<16x512xf32>, vector<512x128xf32>, vector<16x128xf32> -> vector<16x128xf32>
    %c0_94 = arith.constant 0 : index
    %c0_95 = arith.constant 0 : index
    %203 = vector.load %arg12[%c0_94, %c0_95] : memref<1x128xf32, #tpu.memory_space<vmem>>, vector<1x128xf32>
    %204 = vector.broadcast %203 : vector<1x128xf32> to vector<16x128xf32>
    %205 = arith.addf %202, %204 : vector<16x128xf32>
    %c0_96 = arith.constant 0 : index
    %c0_97 = arith.constant 0 : index
    %206 = vector.load %arg13[%c0_96, %c0_97] : memref<1x128xf32, #tpu.memory_space<vmem>>, vector<1x128xf32>
    %207 = vector.broadcast %206 : vector<1x128xf32> to vector<16x128xf32>
    %208 = arith.mulf %207, %205 : vector<16x128xf32>
    %209 = arith.addf %165, %208 : vector<16x128xf32>
    %c0_98 = arith.constant 0 : index
    %c0_99 = arith.constant 0 : index
    %210 = vector.load %arg14[%c0_98, %c0_99] : memref<16x128xf32, #tpu.memory_space<vmem>>, vector<16x128xf32>
    tpu.vector_store %arg14[%c0_98, %c0_99], %209 {strides = array<i32>} : memref<16x128xf32, #tpu.memory_space<vmem>>, vector<16x128xf32>,
    return
  }
  func.func @transform_0(%arg0: i32) -> (i32, i32, i32, i32) {
    %c0_i32 = arith.constant 0 : i32
    %c0_i32_0 = arith.constant 0 : i32
    %c0_i32_1 = arith.constant 0 : i32
    %c0_i32_2 = arith.constant 0 : i32
    %c0_i32_3 = arith.constant 0 : i32
    return %c0_i32, %c0_i32_0, %c0_i32_1, %c0_i32_2 : i32, i32, i32, i32
  }
  func.func @transform_1(%arg0: i32) -> (i32, i32, i32) {
    %c0_i32 = arith.constant 0 : i32
    %c0_i32_0 = arith.constant 0 : i32
    %c0_i32_1 = arith.constant 0 : i32
    %c0_i32_2 = arith.constant 0 : i32
    return %c0_i32, %c0_i32_0, %c0_i32_1 : i32, i32, i32
  }
  func.func @transform_2(%arg0: i32) -> (i32, i32) {
    %c0_i32 = arith.constant 0 : i32
    %c0_i32_0 = arith.constant 0 : i32
    %c0_i32_1 = arith.constant 0 : i32
    return %c0_i32, %c0_i32_0 : i32, i32
  }
  func.func @transform_3(%arg0: i32) -> (i32, i32) {
    %c0_i32 = arith.constant 0 : i32
    %c0_i32_0 = arith.constant 0 : i32
    %c0_i32_1 = arith.constant 0 : i32
    return %c0_i32, %c0_i32_0 : i32, i32
  }
  func.func @transform_4(%arg0: i32) -> (i32, i32) {
    %c0_i32 = arith.constant 0 : i32
    %c0_i32_0 = arith.constant 0 : i32
    %c0_i32_1 = arith.constant 0 : i32
    return %c0_i32, %c0_i32_0 : i32, i32
  }
  func.func @transform_5(%arg0: i32) -> (i32, i32) {
    %c0_i32 = arith.constant 0 : i32
    %c0_i32_0 = arith.constant 0 : i32
    %c0_i32_1 = arith.constant 0 : i32
    return %c0_i32, %c0_i32_0 : i32, i32
  }
  func.func @transform_6(%arg0: i32) -> (i32, i32) {
    %c0_i32 = arith.constant 0 : i32
    %c0_i32_0 = arith.constant 0 : i32
    %c0_i32_1 = arith.constant 0 : i32
    return %c0_i32, %c0_i32_0 : i32, i32
  }
  func.func @transform_7(%arg0: i32) -> (i32, i32) {
    %c0_i32 = arith.constant 0 : i32
    %c0_i32_0 = arith.constant 0 : i32
    %c0_i32_1 = arith.constant 0 : i32
    return %c0_i32, %c0_i32_0 : i32, i32
  }
  func.func @transform_8(%arg0: i32) -> (i32, i32) {
    %c0_i32 = arith.constant 0 : i32
    %c0_i32_0 = arith.constant 0 : i32
    %c0_i32_1 = arith.constant 0 : i32
    return %c0_i32, %c0_i32_0 : i32, i32
  }
  func.func @transform_9(%arg0: i32) -> (i32, i32) {
    %c0_i32 = arith.constant 0 : i32
    %c0_i32_0 = arith.constant 0 : i32
    %c0_i32_1 = arith.constant 0 : i32
    return %c0_i32, %c0_i32_0 : i32, i32
  }
  func.func @transform_10(%arg0: i32) -> (i32, i32) {
    %c0_i32 = arith.constant 0 : i32
    %c0_i32_0 = arith.constant 0 : i32
    %c0_i32_1 = arith.constant 0 : i32
    return %c0_i32, %c0_i32_0 : i32, i32
  }
  func.func @transform_11(%arg0: i32) -> (i32, i32) {
    %c0_i32 = arith.constant 0 : i32
    %c0_i32_0 = arith.constant 0 : i32
    %c0_i32_1 = arith.constant 0 : i32
    return %c0_i32, %c0_i32_0 : i32, i32
  }
  func.func @transform_12(%arg0: i32) -> (i32, i32) {
    %c0_i32 = arith.constant 0 : i32
    %c0_i32_0 = arith.constant 0 : i32
    %c0_i32_1 = arith.constant 0 : i32
    return %c0_i32, %c0_i32_0 : i32, i32
  }
  func.func @transform_13(%arg0: i32) -> (i32, i32) {
    %c0_i32 = arith.constant 0 : i32
    %c0_i32_0 = arith.constant 0 : i32
    %c0_i32_1 = arith.constant 0 : i32
    return %c0_i32, %c0_i32_0 : i32, i32
  }
}

</mosaic_0001>

<llo_original>
// kernel: gru_attention_forward.2
$region0: #{gru_attention_forward.2}
  #allocation0 [shape = 'u32[]', space=smem, size = 0x4, offset = 0x4, fixed_abs, tag = 'smem constant byte address 0x4 - core index']
  #allocation1 [shape = 'u32[144,128]{1,0:T(1,128)}', space=vmem, size = 0x12000, scoped, tag = 'internal scratch']
  #allocation2 [shape = 'f32[16,128]{1,0:T(8,128)}', space=vmem, size = 0x2000, scoped, tag = 'scratch operand']
  %s0 = inlined_call_operand.vmem [shape: f32[16,128], index: 0, kind: input, shape index: {}]
  %s1 = inlined_call_operand.hbm [shape: f32[128,384], index: 1, kind: input, shape index: {}]
  %s2 = inlined_call_operand.hbm [shape: f32[128,384], index: 2, kind: input, shape index: {}]
  %s3 = inlined_call_operand.vmem [shape: f32[1,384], index: 3, kind: input, shape index: {}]
  %s4 = inlined_call_operand.vmem [shape: f32[1,128], index: 4, kind: input, shape index: {}]
  %s5 = inlined_call_operand.vmem [shape: f32[1,128], index: 5, kind: input, shape index: {}]
  %s6 = inlined_call_operand.vmem [shape: f32[1,128], index: 6, kind: input, shape index: {}]
  %s7 = inlined_call_operand.hbm [shape: f32[128,256], index: 7, kind: input, shape index: {}]
  %s8 = inlined_call_operand.vmem [shape: f32[16,128], index: 8, kind: input, shape index: {}]
  %s9 = inlined_call_operand.vmem [shape: f32[1,128], index: 9, kind: input, shape index: {}]
  %s10 = inlined_call_operand.vmem [shape: f32[1,128], index: 10, kind: input, shape index: {}]
  %s11 = inlined_call_operand.vmem [shape: f32[16,256], index: 11, kind: output, shape index: {0}]
  %s12 = inlined_call_operand.vmem [shape: f32[16,128], index: 12, kind: output, shape index: {1}]
  %13 = xla_tuple %s11, %s12
  %s14 = sld [smem:[#allocation0]]
  $region74: #{gru_attention_forward.2} parent=0
    _
  %s16 = ssub.s32 1, %s14
  %s17 = scalar_select 0, %s16, %s14
  $region1: #{gru_attention_forward.2} parent=0
    #allocation3 [shape = 'u8[196608]{0}', space=vmem, size = 0x30000, scoped, tag = 'input window, operand 1, single buffered']
    #allocation4 [shape = 's32[1]{0}', space=sflag, size = 0x4, scoped, tag = 'scoped memory for gru_attention_forward.2']
    #allocation5 [shape = 'u8[196608]{0}', space=vmem, size = 0x30000, scoped, tag = 'input window, operand 2, single buffered']
    #allocation6 [shape = 's32[1]{0}', space=sflag, size = 0x4, scoped, tag = 'scoped memory for gru_attention_forward.2']
    #allocation7 [shape = 'u8[131072]{0}', space=vmem, size = 0x20000, scoped, tag = 'input window, operand 7, single buffered']
    %18 = vsyncpa [#allocation4], 0
    %19 = vsyncpa [#allocation6], 0
    // Predicated region
    $region2: #{gru_attention_forward.2} parent=1 // pred_check
      _
    $region3: #{gru_attention_forward.2} parent=1 // pred_check_branch
      %21 = sbr.rel (0) target = $region5
    $region4: #{gru_attention_forward.2} parent=1 // pred_region
      _
    $region5: #{gru_attention_forward.2} parent=1 // pred_fallthru
      _
    // Predicated region
    $region6: #{gru_attention_forward.2} parent=1 // pred_check
      _
    $region7: #{gru_attention_forward.2} parent=1 // pred_check_branch
      %23 = sbr.rel (0) target = $region9
    $region8: #{gru_attention_forward.2} parent=1 // pred_region
      %s25 = ssub.s32 6144, 6144
      %26 = vsyncadd [#allocation4], %s25
      %s27 = sshll.u32 [#allocation3], 4
      %s28 = int_to_ptr.vmem [resolvable:$true] %s27
      %33 = dma.hbm_to_vmem [thread:$0]  %s1, 6144, %s28, [#allocation4], 384, 384, 24
    $region9: #{gru_attention_forward.2} parent=1 // pred_fallthru
      _
    // Predicated region
    $region10: #{gru_attention_forward.2} parent=1 // pred_check
      _
    $region11: #{gru_attention_forward.2} parent=1 // pred_check_branch
      %35 = sbr.rel (0) target = $region13
    $region12: #{gru_attention_forward.2} parent=1 // pred_region
      %s37 = ssub.s32 6144, 6144
      %38 = vsyncadd [#allocation6], %s37
      %s39 = sshll.u32 [#allocation5], 4
      %s40 = int_to_ptr.vmem [resolvable:$true] %s39
      %45 = dma.hbm_to_vmem [thread:$0]  %s2, 6144, %s40, [#allocation6], 384, 384, 24
    $region13: #{gru_attention_forward.2} parent=1 // pred_fallthru
      _
    // Predicated region
    $region14: #{gru_attention_forward.2} parent=1 // pred_check
      _
    $region15: #{gru_attention_forward.2} parent=1 // pred_check_branch
      %47 = sbr.rel (0) target = $region17
    $region16: #{gru_attention_forward.2} parent=1 // pred_region
      _
    $region17: #{gru_attention_forward.2} parent=1 // pred_fallthru
      _
    // Predicated region
    $region18: #{gru_attention_forward.2} parent=1 // pred_check
      _
    $region19: #{gru_attention_forward.2} parent=1 // pred_check_branch
      %49 = sbr.rel (0) target = $region21
    $region20: #{gru_attention_forward.2} parent=1 // pred_region
      _
    $region21: #{gru_attention_forward.2} parent=1 // pred_fallthru
      _
    // Predicated region
    $region22: #{gru_attention_forward.2} parent=1 // pred_check
      _
    $region23: #{gru_attention_forward.2} parent=1 // pred_check_branch
      %51 = sbr.rel (0) target = $region25
    $region24: #{gru_attention_forward.2} parent=1 // pred_region
      _
    $region25: #{gru_attention_forward.2} parent=1 // pred_fallthru
      _
    // Predicated region
    $region26: #{gru_attention_forward.2} parent=1 // pred_check
      _
    $region27: #{gru_attention_forward.2} parent=1 // pred_check_branch
      %53 = sbr.rel (0) target = $region29
    $region28: #{gru_attention_forward.2} parent=1 // pred_region
      _
    $region29: #{gru_attention_forward.2} parent=1 // pred_fallthru
      _
    // Predicated region
    $region30: #{gru_attention_forward.2} parent=1 // pred_check
      _
    $region31: #{gru_attention_forward.2} parent=1 // pred_check_branch
      %55 = sbr.rel (0) target = $region33
    $region32: #{gru_attention_forward.2} parent=1 // pred_region
      %s57 = ssub.s32 4096, 4096
      %58 = vsyncadd [#allocation6], %s57
      %s59 = sshll.u32 [#allocation7], 4
      %s60 = int_to_ptr.vmem [resolvable:$true] %s59
      %65 = dma.hbm_to_vmem [thread:$0]  %s7, 4096, %s60, [#allocation6], 256, 256, 16
    $region33: #{gru_attention_forward.2} parent=1 // pred_fallthru
      _
    // Predicated region
    $region34: #{gru_attention_forward.2} parent=1 // pred_check
      _
    $region35: #{gru_attention_forward.2} parent=1 // pred_check_branch
      %67 = sbr.rel (0) target = $region37
    $region36: #{gru_attention_forward.2} parent=1 // pred_region
      _
    $region37: #{gru_attention_forward.2} parent=1 // pred_fallthru
      _
    // Predicated region
    $region38: #{gru_attention_forward.2} parent=1 // pred_check
      _
    $region39: #{gru_attention_forward.2} parent=1 // pred_check_branch
      %69 = sbr.rel (0) target = $region41
    $region40: #{gru_attention_forward.2} parent=1 // pred_region
      _
    $region41: #{gru_attention_forward.2} parent=1 // pred_fallthru
      _
    // Predicated region
    $region42: #{gru_attention_forward.2} parent=1 // pred_check
      _
    $region43: #{gru_attention_forward.2} parent=1 // pred_check_branch
      %71 = sbr.rel (0) target = $region45
    $region44: #{gru_attention_forward.2} parent=1 // pred_region
      _
    $region45: #{gru_attention_forward.2} parent=1 // pred_fallthru
      _
    // Predicated region
    $region46: #{gru_attention_forward.2} parent=1 // pred_check
      _
    $region47: #{gru_attention_forward.2} parent=1 // pred_check_branch
      %73 = sbr.rel (0) target = $region49
    $region48: #{gru_attention_forward.2} parent=1 // pred_region
      %74 = dma.done [#allocation4], 6144
    $region49: #{gru_attention_forward.2} parent=1 // pred_fallthru
      _
    // Predicated region
    $region50: #{gru_attention_forward.2} parent=1 // pred_check
      _
    $region51: #{gru_attention_forward.2} parent=1 // pred_check_branch
      %76 = sbr.rel (0) target = $region53
    $region52: #{gru_attention_forward.2} parent=1 // pred_region
      %77 = dma.done [#allocation6], 6144
    $region53: #{gru_attention_forward.2} parent=1 // pred_fallthru
      _
    // Predicated region
    $region54: #{gru_attention_forward.2} parent=1 // pred_check
      _
    $region55: #{gru_attention_forward.2} parent=1 // pred_check_branch
      %79 = sbr.rel (0) target = $region57
    $region56: #{gru_attention_forward.2} parent=1 // pred_region
      %80 = dma.done [#allocation6], 4096
    $region57: #{gru_attention_forward.2} parent=1 // pred_fallthru
      _
    %v81 = vld [vmem:[%s0] sm:$0xff]
    %v82 = vld [vmem:[%s0 + $0x8] sm:$0xff]
    %v83 = vld [vmem:[#allocation3] sm:$0xff]
    %v84 = vld [vmem:[#allocation3 + $0x8] sm:$0xff]
    %v85 = vld [vmem:[#allocation3 + $0x10] sm:$0xff]
    %v86 = vld [vmem:[#allocation3 + $0x18] sm:$0xff]
    %v87 = vld [vmem:[#allocation3 + $0x20] sm:$0xff]
    %v88 = vld [vmem:[#allocation3 + $0x28] sm:$0xff]
    %v89 = vld [vmem:[#allocation3 + $0x30] sm:$0xff]
    %v90 = vld [vmem:[#allocation3 + $0x38] sm:$0xff]
    %v91 = vld [vmem:[#allocation3 + $0x40] sm:$0xff]
    %v92 = vld [vmem:[#allocation3 + $0x48] sm:$0xff]
    %v93 = vld [vmem:[#allocation3 + $0x50] sm:$0xff]
    %v94 = vld [vmem:[#allocation3 + $0x58] sm:$0xff]
    %v95 = vld [vmem:[#allocation3 + $0x60] sm:$0xff]
    %v96 = vld [vmem:[#allocation3 + $0x68] sm:$0xff]
    %v97 = vld [vmem:[#allocation3 + $0x70] sm:$0xff]
    %v98 = vld [vmem:[#allocation3 + $0x78] sm:$0xff]
    %v99 = vld [vmem:[#allocation3 + $0x80] sm:$0xff]
    %v100 = vld [vmem:[#allocation3 + $0x88] sm:$0xff]
    %v101 = vld [vmem:[#allocation3 + $0x90] sm:$0xff]
    %v102 = vld [vmem:[#allocation3 + $0x98] sm:$0xff]
    %v103 = vld [vmem:[#allocation3 + $0xa0] sm:$0xff]
    %v104 = vld [vmem:[#allocation3 + $0xa8] sm:$0xff]
    %v105 = vld [vmem:[#allocation3 + $0xb0] sm:$0xff]
    %v106 = vld [vmem:[#allocation3 + $0xb8] sm:$0xff]
    %v107 = vld [vmem:[#allocation3 + $0xc0] sm:$0xff]
    %v108 = vld [vmem:[#allocation3 + $0xc8] sm:$0xff]
    %v109 = vld [vmem:[#allocation3 + $0xd0] sm:$0xff]
    %v110 = vld [vmem:[#allocation3 + $0xd8] sm:$0xff]
    %v111 = vld [vmem:[#allocation3 + $0xe0] sm:$0xff]
    %v112 = vld [vmem:[#allocation3 + $0xe8] sm:$0xff]
    %v113 = vld [vmem:[#allocation3 + $0xf0] sm:$0xff]
    %v114 = vld [vmem:[#allocation3 + $0xf8] sm:$0xff]
    %v115 = vld [vmem:[#allocation3 + $0x100] sm:$0xff]
    %v116 = vld [vmem:[#allocation3 + $0x108] sm:$0xff]
    %v117 = vld [vmem:[#allocation3 + $0x110] sm:$0xff]
    %v118 = vld [vmem:[#allocation3 + $0x118] sm:$0xff]
    %v119 = vld [vmem:[#allocation3 + $0x120] sm:$0xff]
    %v120 = vld [vmem:[#allocation3 + $0x128] sm:$0xff]
    %v121 = vld [vmem:[#allocation3 + $0x130] sm:$0xff]
    %v122 = vld [vmem:[#allocation3 + $0x138] sm:$0xff]
    %v123 = vld [vmem:[#allocation3 + $0x140] sm:$0xff]
    %v124 = vld [vmem:[#allocation3 + $0x148] sm:$0xff]
    %v125 = vld [vmem:[#allocation3 + $0x150] sm:$0xff]
    %v126 = vld [vmem:[#allocation3 + $0x158] sm:$0xff]
    %v127 = vld [vmem:[#allocation3 + $0x160] sm:$0xff]
    %v128 = vld [vmem:[#allocation3 + $0x168] sm:$0xff]
    %v129 = vld [vmem:[#allocation3 + $0x170] sm:$0xff]
    %v130 = vld [vmem:[#allocation3 + $0x178] sm:$0xff]
    %v131 = vld [vmem:[%s3] sm:$0x7]
    %v133 = vlaneseq
    %v134 = vshrl.u32 %v133, 7
    %v135 = vsub.s32 0, %v134
    %v136 = vrot.slane %v131, %v135
    %v137 = vlaneseq
    %v138 = vshrl.u32 %v137, 7
    %v139 = vsub.s32 1, %v138
    %v140 = vrot.slane %v131, %v139
    %v141 = vlaneseq
    %v142 = vshrl.u32 %v141, 7
    %v143 = vsub.s32 2, %v142
    %v144 = vrot.slane %v131, %v143
    %148 = vmatprep.subr.mxu0 %v84
    %149 = vmatpush1.msra.mxu0 %v83
    %150 = vmatprep.subr.mxu0 %v87
    %151 = vmatpush1.msra.mxu0 %v86
    %152 = vmatprep.subr.mxu0 %v90
    %153 = vmatpush1.msra.mxu0 %v89
    %154 = vmatprep.subr.mxu0 %v93
    %155 = vmatpush1.msra.mxu0 %v92
    %156 = vmatprep.subr.mxu0 %v96
    %157 = vmatpush1.msra.mxu0 %v95
    %158 = vmatprep.subr.mxu0 %v99
    %159 = vmatpush1.msra.mxu0 %v98
    %160 = vmatprep.subr.mxu0 %v102
    %161 = vmatpush1.msra.mxu0 %v101
    %162 = vmatprep.subr.mxu0 %v105
    %163 = vmatpush1.msra.mxu0 %v104
    %164 = vmatprep.subr.mxu0 %v108
    %165 = vmatpush1.msra.mxu0 %v107
    %166 = vmatprep.subr.mxu0 %v111
    %167 = vmatpush1.msra.mxu0 %v110
    %168 = vmatprep.subr.mxu0 %v114
    %169 = vmatpush1.msra.mxu0 %v113
    %170 = vmatprep.subr.mxu0 %v117
    %171 = vmatpush1.msra.mxu0 %v116
    %172 = vmatprep.subr.mxu0 %v120
    %173 = vmatpush1.msra.mxu0 %v119
    %174 = vmatprep.subr.mxu0 %v123
    %175 = vmatpush1.msra.mxu0 %v122
    %176 = vmatprep.subr.mxu0 %v126
    %177 = vmatpush1.msra.mxu0 %v125
    %178 = vmatprep.subr.mxu0 %v129
    %179 = vmatpush1.msra.mxu0 %v128
    %180 = vmatprep.subr.mxu0 0.0
    %181 = vmatpush1.msra.mxu0 0.0
    %182 = vmatprep.subr.mxu0 0.0
    %183 = vmatpush1.msra.mxu0 0.0
    %184 = vmatprep.subr.mxu0 0.0
    %185 = vmatpush1.msra.mxu0 0.0
    %186 = vmatprep.subr.mxu0 0.0
    %187 = vmatpush1.msra.mxu0 0.0
    %188 = vmatprep.subr.mxu0 0.0
    %189 = vmatpush1.msra.mxu0 0.0
    %190 = vmatprep.subr.mxu0 0.0
    %191 = vmatpush1.msra.mxu0 0.0
    %192 = vmatprep.subr.mxu0 0.0
    %193 = vmatpush1.msra.mxu0 0.0
    %194 = vmatprep.subr.mxu0 0.0
    %195 = vmatpush1.msra.mxu0 0.0
    %196 = vmatprep.subr.mxu0 0.0
    %197 = vmatpush1.msra.mxu0 0.0
    %198 = vmatprep.subr.mxu0 0.0
    %199 = vmatpush1.msra.mxu0 0.0
    %200 = vmatprep.subr.mxu0 0.0
    %201 = vmatpush1.msra.mxu0 0.0
    %202 = vmatprep.subr.mxu0 0.0
    %203 = vmatpush1.msra.mxu0 0.0
    %204 = vmatprep.subr.mxu0 0.0
    %205 = vmatpush1.msra.mxu0 0.0
    %206 = vmatprep.subr.mxu0 0.0
    %207 = vmatpush1.msra.mxu0 0.0
    %208 = vmatprep.subr.mxu0 0.0
    %209 = vmatpush1.msra.mxu0 0.0
    %210 = vmatprep.subr.mxu0 0.0
    %211 = vmatpush1.msra.mxu0 0.0
    %212 = vmatprep.mubr.f32.mxu0 0.0
    %213 = vmatmul.mubr.f32.gmra.mrb[0].mxu0 %v81
    %v214 = vpop.f32.mrb[0].mxu0
    %v215 = vadd.f32 %v136, %v214
    %v216 = vpop.f32.mrb[0].mxu0
    %v217 = vadd.f32 %v140, %v216
    %218 = vmatprep.mubr.f32.mxu0 0.0
    %219 = vmatmul.mubr.f32.gmra.mrb[0].mxu0 %v82
    %v220 = vpop.f32.mrb[0].mxu0
    %v221 = vadd.f32 %v136, %v220
    %v222 = vpop.f32.mrb[0].mxu0
    %v223 = vadd.f32 %v140, %v222
    %224 = vdwg.mxu0
    %225 = vmatprep.subr.mxu0 0.0
    %226 = vmatpush1.msra.mxu0 %v85
    %227 = vmatprep.subr.mxu0 0.0
    %228 = vmatpush1.msra.mxu0 %v88
    %229 = vmatprep.subr.mxu0 0.0
    %230 = vmatpush1.msra.mxu0 %v91
    %231 = vmatprep.subr.mxu0 0.0
    %232 = vmatpush1.msra.mxu0 %v94
    %233 = vmatprep.subr.mxu0 0.0
    %234 = vmatpush1.msra.mxu0 %v97
    %235 = vmatprep.subr.mxu0 0.0
    %236 = vmatpush1.msra.mxu0 %v100
    %237 = vmatprep.subr.mxu0 0.0
    %238 = vmatpush1.msra.mxu0 %v103
    %239 = vmatprep.subr.mxu0 0.0
    %240 = vmatpush1.msra.mxu0 %v106
    %241 = vmatprep.subr.mxu0 0.0
    %242 = vmatpush1.msra.mxu0 %v109
    %243 = vmatprep.subr.mxu0 0.0
    %244 = vmatpush1.msra.mxu0 %v112
    %245 = vmatprep.subr.mxu0 0.0
    %246 = vmatpush1.msra.mxu0 %v115
    %247 = vmatprep.subr.mxu0 0.0
    %248 = vmatpush1.msra.mxu0 %v118
    %249 = vmatprep.subr.mxu0 0.0
    %250 = vmatpush1.msra.mxu0 %v121
    %251 = vmatprep.subr.mxu0 0.0
    %252 = vmatpush1.msra.mxu0 %v124
    %253 = vmatprep.subr.mxu0 0.0
    %254 = vmatpush1.msra.mxu0 %v127
    %255 = vmatprep.subr.mxu0 0.0
    %256 = vmatpush1.msra.mxu0 %v130
    %257 = vmatprep.subr.mxu0 0.0
    %258 = vmatpush1.msra.mxu0 0.0
    %259 = vmatprep.subr.mxu0 0.0
    %260 = vmatpush1.msra.mxu0 0.0
    %261 = vmatprep.subr.mxu0 0.0
    %262 = vmatpush1.msra.mxu0 0.0
    %263 = vmatprep.subr.mxu0 0.0
    %264 = vmatpush1.msra.mxu0 0.0
    %265 = vmatprep.subr.mxu0 0.0
    %266 = vmatpush1.msra.mxu0 0.0
    %267 = vmatprep.subr.mxu0 0.0
    %268 = vmatpush1.msra.mxu0 0.0
    %269 = vmatprep.subr.mxu0 0.0
    %270 = vmatpush1.msra.mxu0 0.0
    %271 = vmatprep.subr.mxu0 0.0
    %272 = vmatpush1.msra.mxu0 0.0
    %273 = vmatprep.subr.mxu0 0.0
    %274 = vmatpush1.msra.mxu0 0.0
    %275 = vmatprep.subr.mxu0 0.0
    %276 = vmatpush1.msra.mxu0 0.0
    %277 = vmatprep.subr.mxu0 0.0
    %278 = vmatpush1.msra.mxu0 0.0
    %279 = vmatprep.subr.mxu0 0.0
    %280 = vmatpush1.msra.mxu0 0.0
    %281 = vmatprep.subr.mxu0 0.0
    %282 = vmatpush1.msra.mxu0 0.0
    %283 = vmatprep.subr.mxu0 0.0
    %284 = vmatpush1.msra.mxu0 0.0
    %285 = vmatprep.subr.mxu0 0.0
    %286 = vmatpush1.msra.mxu0 0.0
    %287 = vmatprep.subr.mxu0 0.0
    %288 = vmatpush1.msra.mxu0 0.0
    %289 = vmatprep.mubr.f32.mxu0 0.0
    %290 = vmatmul.mubr.f32.gmra.mrb[0].mxu0 %v81
    %v291 = vpop.f32.mrb[0].mxu0
    %v292 = vadd.f32 %v144, %v291
    %v293 = vpop.f32.mrb[0].mxu0
    %294 = vmatprep.mubr.f32.mxu0 0.0
    %295 = vmatmul.mubr.f32.gmra.mrb[0].mxu0 %v82
    %v296 = vpop.f32.mrb[0].mxu0
    %v297 = vadd.f32 %v144, %v296
    %v298 = vpop.f32.mrb[0].mxu0
    %299 = vdwg.mxu0
    %v300 = vld [vmem:[#allocation5] sm:$0xff]
    %v301 = vld [vmem:[#allocation5 + $0x8] sm:$0xff]
    %v302 = vld [vmem:[#allocation5 + $0x10] sm:$0xff]
    %v303 = vld [vmem:[#allocation5 + $0x18] sm:$0xff]
    %v304 = vld [vmem:[#allocation5 + $0x20] sm:$0xff]
    %v305 = vld [vmem:[#allocation5 + $0x28] sm:$0xff]
    %v306 = vld [vmem:[#allocation5 + $0x30] sm:$0xff]
    %v307 = vld [vmem:[#allocation5 + $0x38] sm:$0xff]
    %v308 = vld [vmem:[#allocation5 + $0x40] sm:$0xff]
    %v309 = vld [vmem:[#allocation5 + $0x48] sm:$0xff]
    %v310 = vld [vmem:[#allocation5 + $0x50] sm:$0xff]
    %v311 = vld [vmem:[#allocation5 + $0x58] sm:$0xff]
    %v312 = vld [vmem:[#allocation5 + $0x60] sm:$0xff]
    %v313 = vld [vmem:[#allocation5 + $0x68] sm:$0xff]
    %v314 = vld [vmem:[#allocation5 + $0x70] sm:$0xff]
    %v315 = vld [vmem:[#allocation5 + $0x78] sm:$0xff]
    %v316 = vld [vmem:[#allocation5 + $0x80] sm:$0xff]
    %v317 = vld [vmem:[#allocation5 + $0x88] sm:$0xff]
    %v318 = vld [vmem:[#allocation5 + $0x90] sm:$0xff]
    %v319 = vld [vmem:[#allocation5 + $0x98] sm:$0xff]
    %v320 = vld [vmem:[#allocation5 + $0xa0] sm:$0xff]
    %v321 = vld [vmem:[#allocation5 + $0xa8] sm:$0xff]
    %v322 = vld [vmem:[#allocation5 + $0xb0] sm:$0xff]
    %v323 = vld [vmem:[#allocation5 + $0xb8] sm:$0xff]
    %v324 = vld [vmem:[#allocation5 + $0xc0] sm:$0xff]
    %v325 = vld [vmem:[#allocation5 + $0xc8] sm:$0xff]
    %v326 = vld [vmem:[#allocation5 + $0xd0] sm:$0xff]
    %v327 = vld [vmem:[#allocation5 + $0xd8] sm:$0xff]
    %v328 = vld [vmem:[#allocation5 + $0xe0] sm:$0xff]
    %v329 = vld [vmem:[#allocation5 + $0xe8] sm:$0xff]
    %v330 = vld [vmem:[#allocation5 + $0xf0] sm:$0xff]
    %v331 = vld [vmem:[#allocation5 + $0xf8] sm:$0xff]
    %v332 = vld [vmem:[#allocation5 + $0x100] sm:$0xff]
    %v333 = vld [vmem:[#allocation5 + $0x108] sm:$0xff]
    %v334 = vld [vmem:[#allocation5 + $0x110] sm:$0xff]
    %v335 = vld [vmem:[#allocation5 + $0x118] sm:$0xff]
    %v336 = vld [vmem:[#allocation5 + $0x120] sm:$0xff]
    %v337 = vld [vmem:[#allocation5 + $0x128] sm:$0xff]
    %v338 = vld [vmem:[#allocation5 + $0x130] sm:$0xff]
    %v339 = vld [vmem:[#allocation5 + $0x138] sm:$0xff]
    %v340 = vld [vmem:[#allocation5 + $0x140] sm:$0xff]
    %v341 = vld [vmem:[#allocation5 + $0x148] sm:$0xff]
    %v342 = vld [vmem:[#allocation5 + $0x150] sm:$0xff]
    %v343 = vld [vmem:[#allocation5 + $0x158] sm:$0xff]
    %v344 = vld [vmem:[#allocation5 + $0x160] sm:$0xff]
    %v345 = vld [vmem:[#allocation5 + $0x168] sm:$0xff]
    %v346 = vld [vmem:[#allocation5 + $0x170] sm:$0xff]
    %v347 = vld [vmem:[#allocation5 + $0x178] sm:$0xff]
    %v348 = vld [vmem:[%s4] sm:$0x1]
    %349 = vmatprep.subr.mxu0 %v301
    %350 = vmatpush1.msra.mxu0 %v300
    %351 = vmatprep.subr.mxu0 %v304
    %352 = vmatpush1.msra.mxu0 %v303
    %353 = vmatprep.subr.mxu0 %v307
    %354 = vmatpush1.msra.mxu0 %v306
    %355 = vmatprep.subr.mxu0 %v310
    %356 = vmatpush1.msra.mxu0 %v309
    %357 = vmatprep.subr.mxu0 %v313
    %358 = vmatpush1.msra.mxu0 %v312
    %359 = vmatprep.subr.mxu0 %v316
    %360 = vmatpush1.msra.mxu0 %v315
    %361 = vmatprep.subr.mxu0 %v319
    %362 = vmatpush1.msra.mxu0 %v318
    %363 = vmatprep.subr.mxu0 %v322
    %364 = vmatpush1.msra.mxu0 %v321
    %365 = vmatprep.subr.mxu0 %v325
    %366 = vmatpush1.msra.mxu0 %v324
    %367 = vmatprep.subr.mxu0 %v328
    %368 = vmatpush1.msra.mxu0 %v327
    %369 = vmatprep.subr.mxu0 %v331
    %370 = vmatpush1.msra.mxu0 %v330
    %371 = vmatprep.subr.mxu0 %v334
    %372 = vmatpush1.msra.mxu0 %v333
    %373 = vmatprep.subr.mxu0 %v337
    %374 = vmatpush1.msra.mxu0 %v336
    %375 = vmatprep.subr.mxu0 %v340
    %376 = vmatpush1.msra.mxu0 %v339
    %377 = vmatprep.subr.mxu0 %v343
    %378 = vmatpush1.msra.mxu0 %v342
    %379 = vmatprep.subr.mxu0 %v346
    %380 = vmatpush1.msra.mxu0 %v345
    %381 = vmatprep.subr.mxu0 0.0
    %382 = vmatpush1.msra.mxu0 0.0
    %383 = vmatprep.subr.mxu0 0.0
    %384 = vmatpush1.msra.mxu0 0.0
    %385 = vmatprep.subr.mxu0 0.0
    %386 = vmatpush1.msra.mxu0 0.0
    %387 = vmatprep.subr.mxu0 0.0
    %388 = vmatpush1.msra.mxu0 0.0
    %389 = vmatprep.subr.mxu0 0.0
    %390 = vmatpush1.msra.mxu0 0.0
    %391 = vmatprep.subr.mxu0 0.0
    %392 = vmatpush1.msra.mxu0 0.0
    %393 = vmatprep.subr.mxu0 0.0
    %394 = vmatpush1.msra.mxu0 0.0
    %395 = vmatprep.subr.mxu0 0.0
    %396 = vmatpush1.msra.mxu0 0.0
    %397 = vmatprep.subr.mxu0 0.0
    %398 = vmatpush1.msra.mxu0 0.0
    %399 = vmatprep.subr.mxu0 0.0
    %400 = vmatpush1.msra.mxu0 0.0
    %401 = vmatprep.subr.mxu0 0.0
    %402 = vmatpush1.msra.mxu0 0.0
    %403 = vmatprep.subr.mxu0 0.0
    %404 = vmatpush1.msra.mxu0 0.0
    %405 = vmatprep.subr.mxu0 0.0
    %406 = vmatpush1.msra.mxu0 0.0
    %407 = vmatprep.subr.mxu0 0.0
    %408 = vmatpush1.msra.mxu0 0.0
    %409 = vmatprep.subr.mxu0 0.0
    %410 = vmatpush1.msra.mxu0 0.0
    %411 = vmatprep.subr.mxu0 0.0
    %412 = vmatpush1.msra.mxu0 0.0
    %413 = vmatprep.mubr.f32.mxu0 0.0
    %414 = vmatmul.mubr.f32.gmra.mrb[0].mxu0 0.0
    %v415 = vpop.f32.mrb[0].mxu0
    %v416 = vadd.f32 0.0, %v415
    %v417 = vpop.f32.mrb[0].mxu0
    %v418 = vadd.f32 0.0, %v417
    %419 = vdwg.mxu0
    %420 = vmatprep.subr.mxu0 0.0
    %421 = vmatpush1.msra.mxu0 %v302
    %422 = vmatprep.subr.mxu0 0.0
    %423 = vmatpush1.msra.mxu0 %v305
    %424 = vmatprep.subr.mxu0 0.0
    %425 = vmatpush1.msra.mxu0 %v308
    %426 = vmatprep.subr.mxu0 0.0
    %427 = vmatpush1.msra.mxu0 %v311
    %428 = vmatprep.subr.mxu0 0.0
    %429 = vmatpush1.msra.mxu0 %v314
    %430 = vmatprep.subr.mxu0 0.0
    %431 = vmatpush1.msra.mxu0 %v317
    %432 = vmatprep.subr.mxu0 0.0
    %433 = vmatpush1.msra.mxu0 %v320
    %434 = vmatprep.subr.mxu0 0.0
    %435 = vmatpush1.msra.mxu0 %v323
    %436 = vmatprep.subr.mxu0 0.0
    %437 = vmatpush1.msra.mxu0 %v326
    %438 = vmatprep.subr.mxu0 0.0
    %439 = vmatpush1.msra.mxu0 %v329
    %440 = vmatprep.subr.mxu0 0.0
    %441 = vmatpush1.msra.mxu0 %v332
    %442 = vmatprep.subr.mxu0 0.0
    %443 = vmatpush1.msra.mxu0 %v335
    %444 = vmatprep.subr.mxu0 0.0
    %445 = vmatpush1.msra.mxu0 %v338
    %446 = vmatprep.subr.mxu0 0.0
    %447 = vmatpush1.msra.mxu0 %v341
    %448 = vmatprep.subr.mxu0 0.0
    %449 = vmatpush1.msra.mxu0 %v344
    %450 = vmatprep.subr.mxu0 0.0
    %451 = vmatpush1.msra.mxu0 %v347
    %452 = vmatprep.subr.mxu0 0.0
    %453 = vmatpush1.msra.mxu0 0.0
    %454 = vmatprep.subr.mxu0 0.0
    %455 = vmatpush1.msra.mxu0 0.0
    %456 = vmatprep.subr.mxu0 0.0
    %457 = vmatpush1.msra.mxu0 0.0
    %458 = vmatprep.subr.mxu0 0.0
    %459 = vmatpush1.msra.mxu0 0.0
    %460 = vmatprep.subr.mxu0 0.0
    %461 = vmatpush1.msra.mxu0 0.0
    %462 = vmatprep.subr.mxu0 0.0
    %463 = vmatpush1.msra.mxu0 0.0
    %464 = vmatprep.subr.mxu0 0.0
    %465 = vmatpush1.msra.mxu0 0.0
    %466 = vmatprep.subr.mxu0 0.0
    %467 = vmatpush1.msra.mxu0 0.0
    %468 = vmatprep.subr.mxu0 0.0
    %469 = vmatpush1.msra.mxu0 0.0
    %470 = vmatprep.subr.mxu0 0.0
    %471 = vmatpush1.msra.mxu0 0.0
    %472 = vmatprep.subr.mxu0 0.0
    %473 = vmatpush1.msra.mxu0 0.0
    %474 = vmatprep.subr.mxu0 0.0
    %475 = vmatpush1.msra.mxu0 0.0
    %476 = vmatprep.subr.mxu0 0.0
    %477 = vmatpush1.msra.mxu0 0.0
    %478 = vmatprep.subr.mxu0 0.0
    %479 = vmatpush1.msra.mxu0 0.0
    %480 = vmatprep.subr.mxu0 0.0
    %481 = vmatpush1.msra.mxu0 0.0
    %482 = vmatprep.subr.mxu0 0.0
    %483 = vmatpush1.msra.mxu0 0.0
    %484 = vmatprep.mubr.f32.mxu0 0.0
    %485 = vmatmul.mubr.f32.gmra.mrb[0].mxu0 0.0
    %v486 = vpop.f32.mrb[0].mxu0
    %v487 = vadd.f32 0.0, %v486
    %v488 = vpop.f32.mrb[0].mxu0
    %489 = vdwg.mxu0
    %v490 = vadd.f32 %v215, %v416
    %v491 = vxor.u32 %v490, 2147483648
    %v492 = vmul.f32 %v491, 1.442695
    %v493 = vpow.pop %v492
    %v494 = vadd.f32 %v493, 1.0
    %v495 = vrcp.pop %v494
    %v496 = vmul.f32 1.0, %v495
    %v497 = vadd.f32 %v217, %v418
    %v498 = vxor.u32 %v497, 2147483648
    %v499 = vmul.f32 %v498, 1.442695
    %v500 = vpow.pop %v499
    %v501 = vadd.f32 %v500, 1.0
    %v502 = vrcp.pop %v501
    %v503 = vmul.f32 1.0, %v502
    %v505 = vlaneseq
    %v506 = vshrl.u32 %v505, 7
    %v507 = vsub.s32 0, %v506
    %v508 = vrot.slane %v348, %v507
    %v510 = vadd.f32 %v487, %v508
    %v511 = vmul.f32 %v496, %v510
    %v512 = vadd.f32 %v292, %v511
    %v513 = vtanh.pop %v512
    %v514 = vsub.f32 1.0, %v503
    %v515 = vmul.f32 %v514, %v513
    %v516 = vmul.f32 %v503, 0.0
    %v517 = vadd.f32 %v515, %v516
    %518 = vst [vmem:[#allocation2] sm:$0x3] %v517
    %519 = vmatprep.subr.mxu0 %v301
    %520 = vmatpush1.msra.mxu0 %v300
    %521 = vmatprep.subr.mxu0 %v304
    %522 = vmatpush1.msra.mxu0 %v303
    %523 = vmatprep.subr.mxu0 %v307
    %524 = vmatpush1.msra.mxu0 %v306
    %525 = vmatprep.subr.mxu0 %v310
    %526 = vmatpush1.msra.mxu0 %v309
    %527 = vmatprep.subr.mxu0 %v313
    %528 = vmatpush1.msra.mxu0 %v312
    %529 = vmatprep.subr.mxu0 %v316
    %530 = vmatpush1.msra.mxu0 %v315
    %531 = vmatprep.subr.mxu0 %v319
    %532 = vmatpush1.msra.mxu0 %v318
    %533 = vmatprep.subr.mxu0 %v322
    %534 = vmatpush1.msra.mxu0 %v321
    %535 = vmatprep.subr.mxu0 %v325
    %536 = vmatpush1.msra.mxu0 %v324
    %537 = vmatprep.subr.mxu0 %v328
    %538 = vmatpush1.msra.mxu0 %v327
    %539 = vmatprep.subr.mxu0 %v331
    %540 = vmatpush1.msra.mxu0 %v330
    %541 = vmatprep.subr.mxu0 %v334
    %542 = vmatpush1.msra.mxu0 %v333
    %543 = vmatprep.subr.mxu0 %v337
    %544 = vmatpush1.msra.mxu0 %v336
    %545 = vmatprep.subr.mxu0 %v340
    %546 = vmatpush1.msra.mxu0 %v339
    %547 = vmatprep.subr.mxu0 %v343
    %548 = vmatpush1.msra.mxu0 %v342
    %549 = vmatprep.subr.mxu0 %v346
    %550 = vmatpush1.msra.mxu0 %v345
    %551 = vmatprep.subr.mxu0 0.0
    %552 = vmatpush1.msra.mxu0 0.0
    %553 = vmatprep.subr.mxu0 0.0
    %554 = vmatpush1.msra.mxu0 0.0
    %555 = vmatprep.subr.mxu0 0.0
    %556 = vmatpush1.msra.mxu0 0.0
    %557 = vmatprep.subr.mxu0 0.0
    %558 = vmatpush1.msra.mxu0 0.0
    %559 = vmatprep.subr.mxu0 0.0
    %560 = vmatpush1.msra.mxu0 0.0
    %561 = vmatprep.subr.mxu0 0.0
    %562 = vmatpush1.msra.mxu0 0.0
    %563 = vmatprep.subr.mxu0 0.0
    %564 = vmatpush1.msra.mxu0 0.0
    %565 = vmatprep.subr.mxu0 0.0
    %566 = vmatpush1.msra.mxu0 0.0
    %567 = vmatprep.subr.mxu0 0.0
    %568 = vmatpush1.msra.mxu0 0.0
    %569 = vmatprep.subr.mxu0 0.0
    %570 = vmatpush1.msra.mxu0 0.0
    %571 = vmatprep.subr.mxu0 0.0
    %572 = vmatpush1.msra.mxu0 0.0
    %573 = vmatprep.subr.mxu0 0.0
    %574 = vmatpush1.msra.mxu0 0.0
    %575 = vmatprep.subr.mxu0 0.0
    %576 = vmatpush1.msra.mxu0 0.0
    %577 = vmatprep.subr.mxu0 0.0
    %578 = vmatpush1.msra.mxu0 0.0
    %579 = vmatprep.subr.mxu0 0.0
    %580 = vmatpush1.msra.mxu0 0.0
    %581 = vmatprep.subr.mxu0 0.0
    %582 = vmatpush1.msra.mxu0 0.0
    %583 = vmatprep.mubr.f32.mxu0 0.0
    %584 = vmatmul.mubr.f32.gmra.mrb[0].mxu0 %v517
    %v585 = vpop.f32.mrb[0].mxu0
    %v586 = vadd.f32 0.0, %v585
    %v587 = vpop.f32.mrb[0].mxu0
    %v588 = vadd.f32 0.0, %v587
    %589 = vdwg.mxu0
    %590 = vmatprep.subr.mxu0 0.0
    %591 = vmatpush1.msra.mxu0 %v302
    %592 = vmatprep.subr.mxu0 0.0
    %593 = vmatpush1.msra.mxu0 %v305
    %594 = vmatprep.subr.mxu0 0.0
    %595 = vmatpush1.msra.mxu0 %v308
    %596 = vmatprep.subr.mxu0 0.0
    %597 = vmatpush1.msra.mxu0 %v311
    %598 = vmatprep.subr.mxu0 0.0
    %599 = vmatpush1.msra.mxu0 %v314
    %600 = vmatprep.subr.mxu0 0.0
    %601 = vmatpush1.msra.mxu0 %v317
    %602 = vmatprep.subr.mxu0 0.0
    %603 = vmatpush1.msra.mxu0 %v320
    %604 = vmatprep.subr.mxu0 0.0
    %605 = vmatpush1.msra.mxu0 %v323
    %606 = vmatprep.subr.mxu0 0.0
    %607 = vmatpush1.msra.mxu0 %v326
    %608 = vmatprep.subr.mxu0 0.0
    %609 = vmatpush1.msra.mxu0 %v329
    %610 = vmatprep.subr.mxu0 0.0
    %611 = vmatpush1.msra.mxu0 %v332
    %612 = vmatprep.subr.mxu0 0.0
    %613 = vmatpush1.msra.mxu0 %v335
    %614 = vmatprep.subr.mxu0 0.0
    %615 = vmatpush1.msra.mxu0 %v338
    %616 = vmatprep.subr.mxu0 0.0
    %617 = vmatpush1.msra.mxu0 %v341
    %618 = vmatprep.subr.mxu0 0.0
    %619 = vmatpush1.msra.mxu0 %v344
    %620 = vmatprep.subr.mxu0 0.0
    %621 = vmatpush1.msra.mxu0 %v347
    %622 = vmatprep.subr.mxu0 0.0
    %623 = vmatpush1.msra.mxu0 0.0
    %624 = vmatprep.subr.mxu0 0.0
    %625 = vmatpush1.msra.mxu0 0.0
    %626 = vmatprep.subr.mxu0 0.0
    %627 = vmatpush1.msra.mxu0 0.0
    %628 = vmatprep.subr.mxu0 0.0
    %629 = vmatpush1.msra.mxu0 0.0
    %630 = vmatprep.subr.mxu0 0.0
    %631 = vmatpush1.msra.mxu0 0.0
    %632 = vmatprep.subr.mxu0 0.0
    %633 = vmatpush1.msra.mxu0 0.0
    %634 = vmatprep.subr.mxu0 0.0
    %635 = vmatpush1.msra.mxu0 0.0
    %636 = vmatprep.subr.mxu0 0.0
    %637 = vmatpush1.msra.mxu0 0.0
    %638 = vmatprep.subr.mxu0 0.0
    %639 = vmatpush1.msra.mxu0 0.0
    %640 = vmatprep.subr.mxu0 0.0
    %641 = vmatpush1.msra.mxu0 0.0
    %642 = vmatprep.subr.mxu0 0.0
    %643 = vmatpush1.msra.mxu0 0.0
    %644 = vmatprep.subr.mxu0 0.0
    %645 = vmatpush1.msra.mxu0 0.0
    %646 = vmatprep.subr.mxu0 0.0
    %647 = vmatpush1.msra.mxu0 0.0
    %648 = vmatprep.subr.mxu0 0.0
    %649 = vmatpush1.msra.mxu0 0.0
    %650 = vmatprep.subr.mxu0 0.0
    %651 = vmatpush1.msra.mxu0 0.0
    %652 = vmatprep.subr.mxu0 0.0
    %653 = vmatpush1.msra.mxu0 0.0
    %654 = vmatprep.mubr.f32.mxu0 0.0
    %655 = vmatmul.mubr.f32.gmra.mrb[0].mxu0 %v517
    %v656 = vpop.f32.mrb[0].mxu0
    %v657 = vadd.f32 0.0, %v656
    %v658 = vpop.f32.mrb[0].mxu0
    %659 = vdwg.mxu0
    %v661 = vrot.slane %v586, 6
    %v663 = vadd.f32 %v215, %v661
    %v664 = vxor.u32 %v663, 2147483648
    %v665 = vmul.f32 %v664, 1.442695
    %v666 = vpow.pop %v665
    %v667 = vadd.f32 %v666, 1.0
    %v668 = vrcp.pop %v667
    %v669 = vmul.f32 1.0, %v668
    %v671 = vrot.slane %v588, 6
    %v673 = vadd.f32 %v217, %v671
    %v674 = vxor.u32 %v673, 2147483648
    %v675 = vmul.f32 %v674, 1.442695
    %v676 = vpow.pop %v675
    %v677 = vadd.f32 %v676, 1.0
    %v678 = vrcp.pop %v677
    %v679 = vmul.f32 1.0, %v678
    %v680 = vadd.f32 %v657, %v508
    %v682 = vrot.slane %v680, 6
    %v684 = vmul.f32 %v669, %v682
    %v685 = vadd.f32 %v292, %v684
    %v686 = vtanh.pop %v685
    %v687 = vsub.f32 1.0, %v679
    %v688 = vmul.f32 %v687, %v686
    %v690 = vrot.slane %v517, 6
    %v692 = vmul.f32 %v679, %v690
    %v693 = vadd.f32 %v688, %v692
    %694 = vst [vmem:[#allocation2] sm:$0xc] %v693
    %v696 = vrot.slane %v693, 2
    %698 = vmatprep.subr.mxu0 %v301
    %699 = vmatpush1.msra.mxu0 %v300
    %700 = vmatprep.subr.mxu0 %v304
    %701 = vmatpush1.msra.mxu0 %v303
    %702 = vmatprep.subr.mxu0 %v307
    %703 = vmatpush1.msra.mxu0 %v306
    %704 = vmatprep.subr.mxu0 %v310
    %705 = vmatpush1.msra.mxu0 %v309
    %706 = vmatprep.subr.mxu0 %v313
    %707 = vmatpush1.msra.mxu0 %v312
    %708 = vmatprep.subr.mxu0 %v316
    %709 = vmatpush1.msra.mxu0 %v315
    %710 = vmatprep.subr.mxu0 %v319
    %711 = vmatpush1.msra.mxu0 %v318
    %712 = vmatprep.subr.mxu0 %v322
    %713 = vmatpush1.msra.mxu0 %v321
    %714 = vmatprep.subr.mxu0 %v325
    %715 = vmatpush1.msra.mxu0 %v324
    %716 = vmatprep.subr.mxu0 %v328
    %717 = vmatpush1.msra.mxu0 %v327
    %718 = vmatprep.subr.mxu0 %v331
    %719 = vmatpush1.msra.mxu0 %v330
    %720 = vmatprep.subr.mxu0 %v334
    %721 = vmatpush1.msra.mxu0 %v333
    %722 = vmatprep.subr.mxu0 %v337
    %723 = vmatpush1.msra.mxu0 %v336
    %724 = vmatprep.subr.mxu0 %v340
    %725 = vmatpush1.msra.mxu0 %v339
    %726 = vmatprep.subr.mxu0 %v343
    %727 = vmatpush1.msra.mxu0 %v342
    %728 = vmatprep.subr.mxu0 %v346
    %729 = vmatpush1.msra.mxu0 %v345
    %730 = vmatprep.subr.mxu0 0.0
    %731 = vmatpush1.msra.mxu0 0.0
    %732 = vmatprep.subr.mxu0 0.0
    %733 = vmatpush1.msra.mxu0 0.0
    %734 = vmatprep.subr.mxu0 0.0
    %735 = vmatpush1.msra.mxu0 0.0
    %736 = vmatprep.subr.mxu0 0.0
    %737 = vmatpush1.msra.mxu0 0.0
    %738 = vmatprep.subr.mxu0 0.0
    %739 = vmatpush1.msra.mxu0 0.0
    %740 = vmatprep.subr.mxu0 0.0
    %741 = vmatpush1.msra.mxu0 0.0
    %742 = vmatprep.subr.mxu0 0.0
    %743 = vmatpush1.msra.mxu0 0.0
    %744 = vmatprep.subr.mxu0 0.0
    %745 = vmatpush1.msra.mxu0 0.0
    %746 = vmatprep.subr.mxu0 0.0
    %747 = vmatpush1.msra.mxu0 0.0
    %748 = vmatprep.subr.mxu0 0.0
    %749 = vmatpush1.msra.mxu0 0.0
    %750 = vmatprep.subr.mxu0 0.0
    %751 = vmatpush1.msra.mxu0 0.0
    %752 = vmatprep.subr.mxu0 0.0
    %753 = vmatpush1.msra.mxu0 0.0
    %754 = vmatprep.subr.mxu0 0.0
    %755 = vmatpush1.msra.mxu0 0.0
    %756 = vmatprep.subr.mxu0 0.0
    %757 = vmatpush1.msra.mxu0 0.0
    %758 = vmatprep.subr.mxu0 0.0
    %759 = vmatpush1.msra.mxu0 0.0
    %760 = vmatprep.subr.mxu0 0.0
    %761 = vmatpush1.msra.mxu0 0.0
    %762 = vmatprep.mubr.f32.mxu0 0.0
    %763 = vmatmul.mubr.f32.gmra.mrb[0].mxu0 %v696
    %v764 = vpop.f32.mrb[0].mxu0
    %v765 = vadd.f32 0.0, %v764
    %v766 = vpop.f32.mrb[0].mxu0
    %v767 = vadd.f32 0.0, %v766
    %768 = vdwg.mxu0
    %769 = vmatprep.subr.mxu0 0.0
    %770 = vmatpush1.msra.mxu0 %v302
    %771 = vmatprep.subr.mxu0 0.0
    %772 = vmatpush1.msra.mxu0 %v305
    %773 = vmatprep.subr.mxu0 0.0
    %774 = vmatpush1.msra.mxu0 %v308
    %775 = vmatprep.subr.mxu0 0.0
    %776 = vmatpush1.msra.mxu0 %v311
    %777 = vmatprep.subr.mxu0 0.0
    %778 = vmatpush1.msra.mxu0 %v314
    %779 = vmatprep.subr.mxu0 0.0
    %780 = vmatpush1.msra.mxu0 %v317
    %781 = vmatprep.subr.mxu0 0.0
    %782 = vmatpush1.msra.mxu0 %v320
    %783 = vmatprep.subr.mxu0 0.0
    %784 = vmatpush1.msra.mxu0 %v323
    %785 = vmatprep.subr.mxu0 0.0
    %786 = vmatpush1.msra.mxu0 %v326
    %787 = vmatprep.subr.mxu0 0.0
    %788 = vmatpush1.msra.mxu0 %v329
    %789 = vmatprep.subr.mxu0 0.0
    %790 = vmatpush1.msra.mxu0 %v332
    %791 = vmatprep.subr.mxu0 0.0
    %792 = vmatpush1.msra.mxu0 %v335
    %793 = vmatprep.subr.mxu0 0.0
    %794 = vmatpush1.msra.mxu0 %v338
    %795 = vmatprep.subr.mxu0 0.0
    %796 = vmatpush1.msra.mxu0 %v341
    %797 = vmatprep.subr.mxu0 0.0
    %798 = vmatpush1.msra.mxu0 %v344
    %799 = vmatprep.subr.mxu0 0.0
    %800 = vmatpush1.msra.mxu0 %v347
    %801 = vmatprep.subr.mxu0 0.0
    %802 = vmatpush1.msra.mxu0 0.0
    %803 = vmatprep.subr.mxu0 0.0
    %804 = vmatpush1.msra.mxu0 0.0
    %805 = vmatprep.subr.mxu0 0.0
    %806 = vmatpush1.msra.mxu0 0.0
    %807 = vmatprep.subr.mxu0 0.0
    %808 = vmatpush1.msra.mxu0 0.0
    %809 = vmatprep.subr.mxu0 0.0
    %810 = vmatpush1.msra.mxu0 0.0
    %811 = vmatprep.subr.mxu0 0.0
    %812 = vmatpush1.msra.mxu0 0.0
    %813 = vmatprep.subr.mxu0 0.0
    %814 = vmatpush1.msra.mxu0 0.0
    %815 = vmatprep.subr.mxu0 0.0
    %816 = vmatpush1.msra.mxu0 0.0
    %817 = vmatprep.subr.mxu0 0.0
    %818 = vmatpush1.msra.mxu0 0.0
    %819 = vmatprep.subr.mxu0 0.0
    %820 = vmatpush1.msra.mxu0 0.0
    %821 = vmatprep.subr.mxu0 0.0
    %822 = vmatpush1.msra.mxu0 0.0
    %823 = vmatprep.subr.mxu0 0.0
    %824 = vmatpush1.msra.mxu0 0.0
    %825 = vmatprep.subr.mxu0 0.0
    %826 = vmatpush1.msra.mxu0 0.0
    %827 = vmatprep.subr.mxu0 0.0
    %828 = vmatpush1.msra.mxu0 0.0
    %829 = vmatprep.subr.mxu0 0.0
    %830 = vmatpush1.msra.mxu0 0.0
    %831 = vmatprep.subr.mxu0 0.0
    %832 = vmatpush1.msra.mxu0 0.0
    %833 = vmatprep.mubr.f32.mxu0 0.0
    %834 = vmatmul.mubr.f32.gmra.mrb[0].mxu0 %v696
    %v835 = vpop.f32.mrb[0].mxu0
    %v836 = vadd.f32 0.0, %v835
    %v837 = vpop.f32.mrb[0].mxu0
    %838 = vdwg.mxu0
    %v840 = vrot.slane %v765, 4
    %v842 = vadd.f32 %v215, %v840
    %v843 = vxor.u32 %v842, 2147483648
    %v844 = vmul.f32 %v843, 1.442695
    %v845 = vpow.pop %v844
    %v846 = vadd.f32 %v845, 1.0
    %v847 = vrcp.pop %v846
    %v848 = vmul.f32 1.0, %v847
    %v850 = vrot.slane %v767, 4
    %v852 = vadd.f32 %v217, %v850
    %v853 = vxor.u32 %v852, 2147483648
    %v854 = vmul.f32 %v853, 1.442695
    %v855 = vpow.pop %v854
    %v856 = vadd.f32 %v855, 1.0
    %v857 = vrcp.pop %v856
    %v858 = vmul.f32 1.0, %v857
    %v859 = vadd.f32 %v836, %v508
    %v861 = vrot.slane %v859, 4
    %v863 = vmul.f32 %v848, %v861
    %v864 = vadd.f32 %v292, %v863
    %v865 = vtanh.pop %v864
    %v866 = vsub.f32 1.0, %v858
    %v867 = vmul.f32 %v866, %v865
    %v868 = vrot.slane %v693, 6
    %v870 = vmul.f32 %v858, %v868
    %v871 = vadd.f32 %v867, %v870
    %872 = vst [vmem:[#allocation2] sm:$0x30] %v871
    %v874 = vrot.slane %v871, 4
    %876 = vmatprep.subr.mxu0 %v301
    %877 = vmatpush1.msra.mxu0 %v300
    %878 = vmatprep.subr.mxu0 %v304
    %879 = vmatpush1.msra.mxu0 %v303
    %880 = vmatprep.subr.mxu0 %v307
    %881 = vmatpush1.msra.mxu0 %v306
    %882 = vmatprep.subr.mxu0 %v310
    %883 = vmatpush1.msra.mxu0 %v309
    %884 = vmatprep.subr.mxu0 %v313
    %885 = vmatpush1.msra.mxu0 %v312
    %886 = vmatprep.subr.mxu0 %v316
    %887 = vmatpush1.msra.mxu0 %v315
    %888 = vmatprep.subr.mxu0 %v319
    %889 = vmatpush1.msra.mxu0 %v318
    %890 = vmatprep.subr.mxu0 %v322
    %891 = vmatpush1.msra.mxu0 %v321
    %892 = vmatprep.subr.mxu0 %v325
    %893 = vmatpush1.msra.mxu0 %v324
    %894 = vmatprep.subr.mxu0 %v328
    %895 = vmatpush1.msra.mxu0 %v327
    %896 = vmatprep.subr.mxu0 %v331
    %897 = vmatpush1.msra.mxu0 %v330
    %898 = vmatprep.subr.mxu0 %v334
    %899 = vmatpush1.msra.mxu0 %v333
    %900 = vmatprep.subr.mxu0 %v337
    %901 = vmatpush1.msra.mxu0 %v336
    %902 = vmatprep.subr.mxu0 %v340
    %903 = vmatpush1.msra.mxu0 %v339
    %904 = vmatprep.subr.mxu0 %v343
    %905 = vmatpush1.msra.mxu0 %v342
    %906 = vmatprep.subr.mxu0 %v346
    %907 = vmatpush1.msra.mxu0 %v345
    %908 = vmatprep.subr.mxu0 0.0
    %909 = vmatpush1.msra.mxu0 0.0
    %910 = vmatprep.subr.mxu0 0.0
    %911 = vmatpush1.msra.mxu0 0.0
    %912 = vmatprep.subr.mxu0 0.0
    %913 = vmatpush1.msra.mxu0 0.0
    %914 = vmatprep.subr.mxu0 0.0
    %915 = vmatpush1.msra.mxu0 0.0
    %916 = vmatprep.subr.mxu0 0.0
    %917 = vmatpush1.msra.mxu0 0.0
    %918 = vmatprep.subr.mxu0 0.0
    %919 = vmatpush1.msra.mxu0 0.0
    %920 = vmatprep.subr.mxu0 0.0
    %921 = vmatpush1.msra.mxu0 0.0
    %922 = vmatprep.subr.mxu0 0.0
    %923 = vmatpush1.msra.mxu0 0.0
    %924 = vmatprep.subr.mxu0 0.0
    %925 = vmatpush1.msra.mxu0 0.0
    %926 = vmatprep.subr.mxu0 0.0
    %927 = vmatpush1.msra.mxu0 0.0
    %928 = vmatprep.subr.mxu0 0.0
    %929 = vmatpush1.msra.mxu0 0.0
    %930 = vmatprep.subr.mxu0 0.0
    %931 = vmatpush1.msra.mxu0 0.0
    %932 = vmatprep.subr.mxu0 0.0
    %933 = vmatpush1.msra.mxu0 0.0
    %934 = vmatprep.subr.mxu0 0.0
    %935 = vmatpush1.msra.mxu0 0.0
    %936 = vmatprep.subr.mxu0 0.0
    %937 = vmatpush1.msra.mxu0 0.0
    %938 = vmatprep.subr.mxu0 0.0
    %939 = vmatpush1.msra.mxu0 0.0
    %940 = vmatprep.mubr.f32.mxu0 0.0
    %941 = vmatmul.mubr.f32.gmra.mrb[0].mxu0 %v874
    %v942 = vpop.f32.mrb[0].mxu0
    %v943 = vadd.f32 0.0, %v942
    %v944 = vpop.f32.mrb[0].mxu0
    %v945 = vadd.f32 0.0, %v944
    %946 = vdwg.mxu0
    %947 = vmatprep.subr.mxu0 0.0
    %948 = vmatpush1.msra.mxu0 %v302
    %949 = vmatprep.subr.mxu0 0.0
    %950 = vmatpush1.msra.mxu0 %v305
    %951 = vmatprep.subr.mxu0 0.0
    %952 = vmatpush1.msra.mxu0 %v308
    %953 = vmatprep.subr.mxu0 0.0
    %954 = vmatpush1.msra.mxu0 %v311
    %955 = vmatprep.subr.mxu0 0.0
    %956 = vmatpush1.msra.mxu0 %v314
    %957 = vmatprep.subr.mxu0 0.0
    %958 = vmatpush1.msra.mxu0 %v317
    %959 = vmatprep.subr.mxu0 0.0
    %960 = vmatpush1.msra.mxu0 %v320
    %961 = vmatprep.subr.mxu0 0.0
    %962 = vmatpush1.msra.mxu0 %v323
    %963 = vmatprep.subr.mxu0 0.0
    %964 = vmatpush1.msra.mxu0 %v326
    %965 = vmatprep.subr.mxu0 0.0
    %966 = vmatpush1.msra.mxu0 %v329
    %967 = vmatprep.subr.mxu0 0.0
    %968 = vmatpush1.msra.mxu0 %v332
    %969 = vmatprep.subr.mxu0 0.0
    %970 = vmatpush1.msra.mxu0 %v335
    %971 = vmatprep.subr.mxu0 0.0
    %972 = vmatpush1.msra.mxu0 %v338
    %973 = vmatprep.subr.mxu0 0.0
    %974 = vmatpush1.msra.mxu0 %v341
    %975 = vmatprep.subr.mxu0 0.0
    %976 = vmatpush1.msra.mxu0 %v344
    %977 = vmatprep.subr.mxu0 0.0
    %978 = vmatpush1.msra.mxu0 %v347
    %979 = vmatprep.subr.mxu0 0.0
    %980 = vmatpush1.msra.mxu0 0.0
    %981 = vmatprep.subr.mxu0 0.0
    %982 = vmatpush1.msra.mxu0 0.0
    %983 = vmatprep.subr.mxu0 0.0
    %984 = vmatpush1.msra.mxu0 0.0
    %985 = vmatprep.subr.mxu0 0.0
    %986 = vmatpush1.msra.mxu0 0.0
    %987 = vmatprep.subr.mxu0 0.0
    %988 = vmatpush1.msra.mxu0 0.0
    %989 = vmatprep.subr.mxu0 0.0
    %990 = vmatpush1.msra.mxu0 0.0
    %991 = vmatprep.subr.mxu0 0.0
    %992 = vmatpush1.msra.mxu0 0.0
    %993 = vmatprep.subr.mxu0 0.0
    %994 = vmatpush1.msra.mxu0 0.0
    %995 = vmatprep.subr.mxu0 0.0
    %996 = vmatpush1.msra.mxu0 0.0
    %997 = vmatprep.subr.mxu0 0.0
    %998 = vmatpush1.msra.mxu0 0.0
    %999 = vmatprep.subr.mxu0 0.0
    %1000 = vmatpush1.msra.mxu0 0.0
    %1001 = vmatprep.subr.mxu0 0.0
    %1002 = vmatpush1.msra.mxu0 0.0
    %1003 = vmatprep.subr.mxu0 0.0
    %1004 = vmatpush1.msra.mxu0 0.0
    %1005 = vmatprep.subr.mxu0 0.0
    %1006 = vmatpush1.msra.mxu0 0.0
    %1007 = vmatprep.subr.mxu0 0.0
    %1008 = vmatpush1.msra.mxu0 0.0
    %1009 = vmatprep.subr.mxu0 0.0
    %1010 = vmatpush1.msra.mxu0 0.0
    %1011 = vmatprep.mubr.f32.mxu0 0.0
    %1012 = vmatmul.mubr.f32.gmra.mrb[0].mxu0 %v874
    %v1013 = vpop.f32.mrb[0].mxu0
    %v1014 = vadd.f32 0.0, %v1013
    %v1015 = vpop.f32.mrb[0].mxu0
    %1016 = vdwg.mxu0
    %v1018 = vrot.slane %v943, 2
    %v1020 = vadd.f32 %v215, %v1018
    %v1021 = vxor.u32 %v1020, 2147483648
    %v1022 = vmul.f32 %v1021, 1.442695
    %v1023 = vpow.pop %v1022
    %v1024 = vadd.f32 %v1023, 1.0
    %v1025 = vrcp.pop %v1024
    %v1026 = vmul.f32 1.0, %v1025
    %v1028 = vrot.slane %v945, 2
    %v1030 = vadd.f32 %v217, %v1028
    %v1031 = vxor.u32 %v1030, 2147483648
    %v1032 = vmul.f32 %v1031, 1.442695
    %v1033 = vpow.pop %v1032
    %v1034 = vadd.f32 %v1033, 1.0
    %v1035 = vrcp.pop %v1034
    %v1036 = vmul.f32 1.0, %v1035
    %v1037 = vadd.f32 %v1014, %v508
    %v1039 = vrot.slane %v1037, 2
    %v1041 = vmul.f32 %v1026, %v1039
    %v1042 = vadd.f32 %v292, %v1041
    %v1043 = vtanh.pop %v1042
    %v1044 = vsub.f32 1.0, %v1036
    %v1045 = vmul.f32 %v1044, %v1043
    %v1046 = vrot.slane %v871, 6
    %v1048 = vmul.f32 %v1036, %v1046
    %v1049 = vadd.f32 %v1045, %v1048
    %1050 = vst [vmem:[#allocation2] sm:$0xc0] %v1049
    %v1052 = vrot.slane %v1049, 6
    %1054 = vmatprep.subr.mxu0 %v301
    %1055 = vmatpush1.msra.mxu0 %v300
    %1056 = vmatprep.subr.mxu0 %v304
    %1057 = vmatpush1.msra.mxu0 %v303
    %1058 = vmatprep.subr.mxu0 %v307
    %1059 = vmatpush1.msra.mxu0 %v306
    %1060 = vmatprep.subr.mxu0 %v310
    %1061 = vmatpush1.msra.mxu0 %v309
    %1062 = vmatprep.subr.mxu0 %v313
    %1063 = vmatpush1.msra.mxu0 %v312
    %1064 = vmatprep.subr.mxu0 %v316
    %1065 = vmatpush1.msra.mxu0 %v315
    %1066 = vmatprep.subr.mxu0 %v319
    %1067 = vmatpush1.msra.mxu0 %v318
    %1068 = vmatprep.subr.mxu0 %v322
    %1069 = vmatpush1.msra.mxu0 %v321
    %1070 = vmatprep.subr.mxu0 %v325
    %1071 = vmatpush1.msra.mxu0 %v324
    %1072 = vmatprep.subr.mxu0 %v328
    %1073 = vmatpush1.msra.mxu0 %v327
    %1074 = vmatprep.subr.mxu0 %v331
    %1075 = vmatpush1.msra.mxu0 %v330
    %1076 = vmatprep.subr.mxu0 %v334
    %1077 = vmatpush1.msra.mxu0 %v333
    %1078 = vmatprep.subr.mxu0 %v337
    %1079 = vmatpush1.msra.mxu0 %v336
    %1080 = vmatprep.subr.mxu0 %v340
    %1081 = vmatpush1.msra.mxu0 %v339
    %1082 = vmatprep.subr.mxu0 %v343
    %1083 = vmatpush1.msra.mxu0 %v342
    %1084 = vmatprep.subr.mxu0 %v346
    %1085 = vmatpush1.msra.mxu0 %v345
    %1086 = vmatprep.subr.mxu0 0.0
    %1087 = vmatpush1.msra.mxu0 0.0
    %1088 = vmatprep.subr.mxu0 0.0
    %1089 = vmatpush1.msra.mxu0 0.0
    %1090 = vmatprep.subr.mxu0 0.0
    %1091 = vmatpush1.msra.mxu0 0.0
    %1092 = vmatprep.subr.mxu0 0.0
    %1093 = vmatpush1.msra.mxu0 0.0
    %1094 = vmatprep.subr.mxu0 0.0
    %1095 = vmatpush1.msra.mxu0 0.0
    %1096 = vmatprep.subr.mxu0 0.0
    %1097 = vmatpush1.msra.mxu0 0.0
    %1098 = vmatprep.subr.mxu0 0.0
    %1099 = vmatpush1.msra.mxu0 0.0
    %1100 = vmatprep.subr.mxu0 0.0
    %1101 = vmatpush1.msra.mxu0 0.0
    %1102 = vmatprep.subr.mxu0 0.0
    %1103 = vmatpush1.msra.mxu0 0.0
    %1104 = vmatprep.subr.mxu0 0.0
    %1105 = vmatpush1.msra.mxu0 0.0
    %1106 = vmatprep.subr.mxu0 0.0
    %1107 = vmatpush1.msra.mxu0 0.0
    %1108 = vmatprep.subr.mxu0 0.0
    %1109 = vmatpush1.msra.mxu0 0.0
    %1110 = vmatprep.subr.mxu0 0.0
    %1111 = vmatpush1.msra.mxu0 0.0
    %1112 = vmatprep.subr.mxu0 0.0
    %1113 = vmatpush1.msra.mxu0 0.0
    %1114 = vmatprep.subr.mxu0 0.0
    %1115 = vmatpush1.msra.mxu0 0.0
    %1116 = vmatprep.subr.mxu0 0.0
    %1117 = vmatpush1.msra.mxu0 0.0
    %1118 = vmatprep.mubr.f32.mxu0 0.0
    %1119 = vmatmul.mubr.f32.gmra.mrb[0].mxu0 %v1052
    %v1120 = vpop.f32.mrb[0].mxu0
    %v1121 = vadd.f32 0.0, %v1120
    %v1122 = vpop.f32.mrb[0].mxu0
    %v1123 = vadd.f32 0.0, %v1122
    %1124 = vdwg.mxu0
    %1125 = vmatprep.subr.mxu0 0.0
    %1126 = vmatpush1.msra.mxu0 %v302
    %1127 = vmatprep.subr.mxu0 0.0
    %1128 = vmatpush1.msra.mxu0 %v305
    %1129 = vmatprep.subr.mxu0 0.0
    %1130 = vmatpush1.msra.mxu0 %v308
    %1131 = vmatprep.subr.mxu0 0.0
    %1132 = vmatpush1.msra.mxu0 %v311
    %1133 = vmatprep.subr.mxu0 0.0
    %1134 = vmatpush1.msra.mxu0 %v314
    %1135 = vmatprep.subr.mxu0 0.0
    %1136 = vmatpush1.msra.mxu0 %v317
    %1137 = vmatprep.subr.mxu0 0.0
    %1138 = vmatpush1.msra.mxu0 %v320
    %1139 = vmatprep.subr.mxu0 0.0
    %1140 = vmatpush1.msra.mxu0 %v323
    %1141 = vmatprep.subr.mxu0 0.0
    %1142 = vmatpush1.msra.mxu0 %v326
    %1143 = vmatprep.subr.mxu0 0.0
    %1144 = vmatpush1.msra.mxu0 %v329
    %1145 = vmatprep.subr.mxu0 0.0
    %1146 = vmatpush1.msra.mxu0 %v332
    %1147 = vmatprep.subr.mxu0 0.0
    %1148 = vmatpush1.msra.mxu0 %v335
    %1149 = vmatprep.subr.mxu0 0.0
    %1150 = vmatpush1.msra.mxu0 %v338
    %1151 = vmatprep.subr.mxu0 0.0
    %1152 = vmatpush1.msra.mxu0 %v341
    %1153 = vmatprep.subr.mxu0 0.0
    %1154 = vmatpush1.msra.mxu0 %v344
    %1155 = vmatprep.subr.mxu0 0.0
    %1156 = vmatpush1.msra.mxu0 %v347
    %1157 = vmatprep.subr.mxu0 0.0
    %1158 = vmatpush1.msra.mxu0 0.0
    %1159 = vmatprep.subr.mxu0 0.0
    %1160 = vmatpush1.msra.mxu0 0.0
    %1161 = vmatprep.subr.mxu0 0.0
    %1162 = vmatpush1.msra.mxu0 0.0
    %1163 = vmatprep.subr.mxu0 0.0
    %1164 = vmatpush1.msra.mxu0 0.0
    %1165 = vmatprep.subr.mxu0 0.0
    %1166 = vmatpush1.msra.mxu0 0.0
    %1167 = vmatprep.subr.mxu0 0.0
    %1168 = vmatpush1.msra.mxu0 0.0
    %1169 = vmatprep.subr.mxu0 0.0
    %1170 = vmatpush1.msra.mxu0 0.0
    %1171 = vmatprep.subr.mxu0 0.0
    %1172 = vmatpush1.msra.mxu0 0.0
    %1173 = vmatprep.subr.mxu0 0.0
    %1174 = vmatpush1.msra.mxu0 0.0
    %1175 = vmatprep.subr.mxu0 0.0
    %1176 = vmatpush1.msra.mxu0 0.0
    %1177 = vmatprep.subr.mxu0 0.0
    %1178 = vmatpush1.msra.mxu0 0.0
    %1179 = vmatprep.subr.mxu0 0.0
    %1180 = vmatpush1.msra.mxu0 0.0
    %1181 = vmatprep.subr.mxu0 0.0
    %1182 = vmatpush1.msra.mxu0 0.0
    %1183 = vmatprep.subr.mxu0 0.0
    %1184 = vmatpush1.msra.mxu0 0.0
    %1185 = vmatprep.subr.mxu0 0.0
    %1186 = vmatpush1.msra.mxu0 0.0
    %1187 = vmatprep.subr.mxu0 0.0
    %1188 = vmatpush1.msra.mxu0 0.0
    %1189 = vmatprep.mubr.f32.mxu0 0.0
    %1190 = vmatmul.mubr.f32.gmra.mrb[0].mxu0 %v1052
    %v1191 = vpop.f32.mrb[0].mxu0
    %v1192 = vadd.f32 0.0, %v1191
    %v1193 = vpop.f32.mrb[0].mxu0
    %1194 = vdwg.mxu0
    %v1195 = vadd.f32 %v221, %v1121
    %v1196 = vxor.u32 %v1195, 2147483648
    %v1197 = vmul.f32 %v1196, 1.442695
    %v1198 = vpow.pop %v1197
    %v1199 = vadd.f32 %v1198, 1.0
    %v1200 = vrcp.pop %v1199
    %v1201 = vmul.f32 1.0, %v1200
    %v1202 = vadd.f32 %v223, %v1123
    %v1203 = vxor.u32 %v1202, 2147483648
    %v1204 = vmul.f32 %v1203, 1.442695
    %v1205 = vpow.pop %v1204
    %v1206 = vadd.f32 %v1205, 1.0
    %v1207 = vrcp.pop %v1206
    %v1208 = vmul.f32 1.0, %v1207
    %v1209 = vadd.f32 %v1192, %v508
    %v1210 = vmul.f32 %v1201, %v1209
    %v1211 = vadd.f32 %v297, %v1210
    %v1212 = vtanh.pop %v1211
    %v1213 = vsub.f32 1.0, %v1208
    %v1214 = vmul.f32 %v1213, %v1212
    %v1215 = vmul.f32 %v1208, %v1052
    %v1216 = vadd.f32 %v1214, %v1215
    %1217 = vst [vmem:[#allocation2 + $0x8] sm:$0x3] %v1216
    %1218 = vmatprep.subr.mxu0 %v301
    %1219 = vmatpush1.msra.mxu0 %v300
    %1220 = vmatprep.subr.mxu0 %v304
    %1221 = vmatpush1.msra.mxu0 %v303
    %1222 = vmatprep.subr.mxu0 %v307
    %1223 = vmatpush1.msra.mxu0 %v306
    %1224 = vmatprep.subr.mxu0 %v310
    %1225 = vmatpush1.msra.mxu0 %v309
    %1226 = vmatprep.subr.mxu0 %v313
    %1227 = vmatpush1.msra.mxu0 %v312
    %1228 = vmatprep.subr.mxu0 %v316
    %1229 = vmatpush1.msra.mxu0 %v315
    %1230 = vmatprep.subr.mxu0 %v319
    %1231 = vmatpush1.msra.mxu0 %v318
    %1232 = vmatprep.subr.mxu0 %v322
    %1233 = vmatpush1.msra.mxu0 %v321
    %1234 = vmatprep.subr.mxu0 %v325
    %1235 = vmatpush1.msra.mxu0 %v324
    %1236 = vmatprep.subr.mxu0 %v328
    %1237 = vmatpush1.msra.mxu0 %v327
    %1238 = vmatprep.subr.mxu0 %v331
    %1239 = vmatpush1.msra.mxu0 %v330
    %1240 = vmatprep.subr.mxu0 %v334
    %1241 = vmatpush1.msra.mxu0 %v333
    %1242 = vmatprep.subr.mxu0 %v337
    %1243 = vmatpush1.msra.mxu0 %v336
    %1244 = vmatprep.subr.mxu0 %v340
    %1245 = vmatpush1.msra.mxu0 %v339
    %1246 = vmatprep.subr.mxu0 %v343
    %1247 = vmatpush1.msra.mxu0 %v342
    %1248 = vmatprep.subr.mxu0 %v346
    %1249 = vmatpush1.msra.mxu0 %v345
    %1250 = vmatprep.subr.mxu0 0.0
    %1251 = vmatpush1.msra.mxu0 0.0
    %1252 = vmatprep.subr.mxu0 0.0
    %1253 = vmatpush1.msra.mxu0 0.0
    %1254 = vmatprep.subr.mxu0 0.0
    %1255 = vmatpush1.msra.mxu0 0.0
    %1256 = vmatprep.subr.mxu0 0.0
    %1257 = vmatpush1.msra.mxu0 0.0
    %1258 = vmatprep.subr.mxu0 0.0
    %1259 = vmatpush1.msra.mxu0 0.0
    %1260 = vmatprep.subr.mxu0 0.0
    %1261 = vmatpush1.msra.mxu0 0.0
    %1262 = vmatprep.subr.mxu0 0.0
    %1263 = vmatpush1.msra.mxu0 0.0
    %1264 = vmatprep.subr.mxu0 0.0
    %1265 = vmatpush1.msra.mxu0 0.0
    %1266 = vmatprep.subr.mxu0 0.0
    %1267 = vmatpush1.msra.mxu0 0.0
    %1268 = vmatprep.subr.mxu0 0.0
    %1269 = vmatpush1.msra.mxu0 0.0
    %1270 = vmatprep.subr.mxu0 0.0
    %1271 = vmatpush1.msra.mxu0 0.0
    %1272 = vmatprep.subr.mxu0 0.0
    %1273 = vmatpush1.msra.mxu0 0.0
    %1274 = vmatprep.subr.mxu0 0.0
    %1275 = vmatpush1.msra.mxu0 0.0
    %1276 = vmatprep.subr.mxu0 0.0
    %1277 = vmatpush1.msra.mxu0 0.0
    %1278 = vmatprep.subr.mxu0 0.0
    %1279 = vmatpush1.msra.mxu0 0.0
    %1280 = vmatprep.subr.mxu0 0.0
    %1281 = vmatpush1.msra.mxu0 0.0
    %1282 = vmatprep.mubr.f32.mxu0 0.0
    %1283 = vmatmul.mubr.f32.gmra.mrb[0].mxu0 %v1216
    %v1284 = vpop.f32.mrb[0].mxu0
    %v1285 = vadd.f32 0.0, %v1284
    %v1286 = vpop.f32.mrb[0].mxu0
    %v1287 = vadd.f32 0.0, %v1286
    %1288 = vdwg.mxu0
    %1289 = vmatprep.subr.mxu0 0.0
    %1290 = vmatpush1.msra.mxu0 %v302
    %1291 = vmatprep.subr.mxu0 0.0
    %1292 = vmatpush1.msra.mxu0 %v305
    %1293 = vmatprep.subr.mxu0 0.0
    %1294 = vmatpush1.msra.mxu0 %v308
    %1295 = vmatprep.subr.mxu0 0.0
    %1296 = vmatpush1.msra.mxu0 %v311
    %1297 = vmatprep.subr.mxu0 0.0
    %1298 = vmatpush1.msra.mxu0 %v314
    %1299 = vmatprep.subr.mxu0 0.0
    %1300 = vmatpush1.msra.mxu0 %v317
    %1301 = vmatprep.subr.mxu0 0.0
    %1302 = vmatpush1.msra.mxu0 %v320
    %1303 = vmatprep.subr.mxu0 0.0
    %1304 = vmatpush1.msra.mxu0 %v323
    %1305 = vmatprep.subr.mxu0 0.0
    %1306 = vmatpush1.msra.mxu0 %v326
    %1307 = vmatprep.subr.mxu0 0.0
    %1308 = vmatpush1.msra.mxu0 %v329
    %1309 = vmatprep.subr.mxu0 0.0
    %1310 = vmatpush1.msra.mxu0 %v332
    %1311 = vmatprep.subr.mxu0 0.0
    %1312 = vmatpush1.msra.mxu0 %v335
    %1313 = vmatprep.subr.mxu0 0.0
    %1314 = vmatpush1.msra.mxu0 %v338
    %1315 = vmatprep.subr.mxu0 0.0
    %1316 = vmatpush1.msra.mxu0 %v341
    %1317 = vmatprep.subr.mxu0 0.0
    %1318 = vmatpush1.msra.mxu0 %v344
    %1319 = vmatprep.subr.mxu0 0.0
    %1320 = vmatpush1.msra.mxu0 %v347
    %1321 = vmatprep.subr.mxu0 0.0
    %1322 = vmatpush1.msra.mxu0 0.0
    %1323 = vmatprep.subr.mxu0 0.0
    %1324 = vmatpush1.msra.mxu0 0.0
    %1325 = vmatprep.subr.mxu0 0.0
    %1326 = vmatpush1.msra.mxu0 0.0
    %1327 = vmatprep.subr.mxu0 0.0
    %1328 = vmatpush1.msra.mxu0 0.0
    %1329 = vmatprep.subr.mxu0 0.0
    %1330 = vmatpush1.msra.mxu0 0.0
    %1331 = vmatprep.subr.mxu0 0.0
    %1332 = vmatpush1.msra.mxu0 0.0
    %1333 = vmatprep.subr.mxu0 0.0
    %1334 = vmatpush1.msra.mxu0 0.0
    %1335 = vmatprep.subr.mxu0 0.0
    %1336 = vmatpush1.msra.mxu0 0.0
    %1337 = vmatprep.subr.mxu0 0.0
    %1338 = vmatpush1.msra.mxu0 0.0
    %1339 = vmatprep.subr.mxu0 0.0
    %1340 = vmatpush1.msra.mxu0 0.0
    %1341 = vmatprep.subr.mxu0 0.0
    %1342 = vmatpush1.msra.mxu0 0.0
    %1343 = vmatprep.subr.mxu0 0.0
    %1344 = vmatpush1.msra.mxu0 0.0
    %1345 = vmatprep.subr.mxu0 0.0
    %1346 = vmatpush1.msra.mxu0 0.0
    %1347 = vmatprep.subr.mxu0 0.0
    %1348 = vmatpush1.msra.mxu0 0.0
    %1349 = vmatprep.subr.mxu0 0.0
    %1350 = vmatpush1.msra.mxu0 0.0
    %1351 = vmatprep.subr.mxu0 0.0
    %1352 = vmatpush1.msra.mxu0 0.0
    %1353 = vmatprep.mubr.f32.mxu0 0.0
    %1354 = vmatmul.mubr.f32.gmra.mrb[0].mxu0 %v1216
    %v1355 = vpop.f32.mrb[0].mxu0
    %v1356 = vadd.f32 0.0, %v1355
    %v1357 = vpop.f32.mrb[0].mxu0
    %1358 = vdwg.mxu0
    %v1360 = vrot.slane %v1285, 6
    %v1362 = vadd.f32 %v221, %v1360
    %v1363 = vxor.u32 %v1362, 2147483648
    %v1364 = vmul.f32 %v1363, 1.442695
    %v1365 = vpow.pop %v1364
    %v1366 = vadd.f32 %v1365, 1.0
    %v1367 = vrcp.pop %v1366
    %v1368 = vmul.f32 1.0, %v1367
    %v1370 = vrot.slane %v1287, 6
    %v1372 = vadd.f32 %v223, %v1370
    %v1373 = vxor.u32 %v1372, 2147483648
    %v1374 = vmul.f32 %v1373, 1.442695
    %v1375 = vpow.pop %v1374
    %v1376 = vadd.f32 %v1375, 1.0
    %v1377 = vrcp.pop %v1376
    %v1378 = vmul.f32 1.0, %v1377
    %v1379 = vadd.f32 %v1356, %v508
    %v1381 = vrot.slane %v1379, 6
    %v1383 = vmul.f32 %v1368, %v1381
    %v1384 = vadd.f32 %v297, %v1383
    %v1385 = vtanh.pop %v1384
    %v1386 = vsub.f32 1.0, %v1378
    %v1387 = vmul.f32 %v1386, %v1385
    %v1389 = vrot.slane %v1216, 6
    %v1391 = vmul.f32 %v1378, %v1389
    %v1392 = vadd.f32 %v1387, %v1391
    %1393 = vst [vmem:[#allocation2 + $0x8] sm:$0xc] %v1392
    %v1395 = vrot.slane %v1392, 2
    %1397 = vmatprep.subr.mxu0 %v301
    %1398 = vmatpush1.msra.mxu0 %v300
    %1399 = vmatprep.subr.mxu0 %v304
    %1400 = vmatpush1.msra.mxu0 %v303
    %1401 = vmatprep.subr.mxu0 %v307
    %1402 = vmatpush1.msra.mxu0 %v306
    %1403 = vmatprep.subr.mxu0 %v310
    %1404 = vmatpush1.msra.mxu0 %v309
    %1405 = vmatprep.subr.mxu0 %v313
    %1406 = vmatpush1.msra.mxu0 %v312
    %1407 = vmatprep.subr.mxu0 %v316
    %1408 = vmatpush1.msra.mxu0 %v315
    %1409 = vmatprep.subr.mxu0 %v319
    %1410 = vmatpush1.msra.mxu0 %v318
    %1411 = vmatprep.subr.mxu0 %v322
    %1412 = vmatpush1.msra.mxu0 %v321
    %1413 = vmatprep.subr.mxu0 %v325
    %1414 = vmatpush1.msra.mxu0 %v324
    %1415 = vmatprep.subr.mxu0 %v328
    %1416 = vmatpush1.msra.mxu0 %v327
    %1417 = vmatprep.subr.mxu0 %v331
    %1418 = vmatpush1.msra.mxu0 %v330
    %1419 = vmatprep.subr.mxu0 %v334
    %1420 = vmatpush1.msra.mxu0 %v333
    %1421 = vmatprep.subr.mxu0 %v337
    %1422 = vmatpush1.msra.mxu0 %v336
    %1423 = vmatprep.subr.mxu0 %v340
    %1424 = vmatpush1.msra.mxu0 %v339
    %1425 = vmatprep.subr.mxu0 %v343
    %1426 = vmatpush1.msra.mxu0 %v342
    %1427 = vmatprep.subr.mxu0 %v346
    %1428 = vmatpush1.msra.mxu0 %v345
    %1429 = vmatprep.subr.mxu0 0.0
    %1430 = vmatpush1.msra.mxu0 0.0
    %1431 = vmatprep.subr.mxu0 0.0
    %1432 = vmatpush1.msra.mxu0 0.0
    %1433 = vmatprep.subr.mxu0 0.0
    %1434 = vmatpush1.msra.mxu0 0.0
    %1435 = vmatprep.subr.mxu0 0.0
    %1436 = vmatpush1.msra.mxu0 0.0
    %1437 = vmatprep.subr.mxu0 0.0
    %1438 = vmatpush1.msra.mxu0 0.0
    %1439 = vmatprep.subr.mxu0 0.0
    %1440 = vmatpush1.msra.mxu0 0.0
    %1441 = vmatprep.subr.mxu0 0.0
    %1442 = vmatpush1.msra.mxu0 0.0
    %1443 = vmatprep.subr.mxu0 0.0
    %1444 = vmatpush1.msra.mxu0 0.0
    %1445 = vmatprep.subr.mxu0 0.0
    %1446 = vmatpush1.msra.mxu0 0.0
    %1447 = vmatprep.subr.mxu0 0.0
    %1448 = vmatpush1.msra.mxu0 0.0
    %1449 = vmatprep.subr.mxu0 0.0
    %1450 = vmatpush1.msra.mxu0 0.0
    %1451 = vmatprep.subr.mxu0 0.0
    %1452 = vmatpush1.msra.mxu0 0.0
    %1453 = vmatprep.subr.mxu0 0.0
    %1454 = vmatpush1.msra.mxu0 0.0
    %1455 = vmatprep.subr.mxu0 0.0
    %1456 = vmatpush1.msra.mxu0 0.0
    %1457 = vmatprep.subr.mxu0 0.0
    %1458 = vmatpush1.msra.mxu0 0.0
    %1459 = vmatprep.subr.mxu0 0.0
    %1460 = vmatpush1.msra.mxu0 0.0
    %1461 = vmatprep.mubr.f32.mxu0 0.0
    %1462 = vmatmul.mubr.f32.gmra.mrb[0].mxu0 %v1395
    %v1463 = vpop.f32.mrb[0].mxu0
    %v1464 = vadd.f32 0.0, %v1463
    %v1465 = vpop.f32.mrb[0].mxu0
    %v1466 = vadd.f32 0.0, %v1465
    %1467 = vdwg.mxu0
    %1468 = vmatprep.subr.mxu0 0.0
    %1469 = vmatpush1.msra.mxu0 %v302
    %1470 = vmatprep.subr.mxu0 0.0
    %1471 = vmatpush1.msra.mxu0 %v305
    %1472 = vmatprep.subr.mxu0 0.0
    %1473 = vmatpush1.msra.mxu0 %v308
    %1474 = vmatprep.subr.mxu0 0.0
    %1475 = vmatpush1.msra.mxu0 %v311
    %1476 = vmatprep.subr.mxu0 0.0
    %1477 = vmatpush1.msra.mxu0 %v314
    %1478 = vmatprep.subr.mxu0 0.0
    %1479 = vmatpush1.msra.mxu0 %v317
    %1480 = vmatprep.subr.mxu0 0.0
    %1481 = vmatpush1.msra.mxu0 %v320
    %1482 = vmatprep.subr.mxu0 0.0
    %1483 = vmatpush1.msra.mxu0 %v323
    %1484 = vmatprep.subr.mxu0 0.0
    %1485 = vmatpush1.msra.mxu0 %v326
    %1486 = vmatprep.subr.mxu0 0.0
    %1487 = vmatpush1.msra.mxu0 %v329
    %1488 = vmatprep.subr.mxu0 0.0
    %1489 = vmatpush1.msra.mxu0 %v332
    %1490 = vmatprep.subr.mxu0 0.0
    %1491 = vmatpush1.msra.mxu0 %v335
    %1492 = vmatprep.subr.mxu0 0.0
    %1493 = vmatpush1.msra.mxu0 %v338
    %1494 = vmatprep.subr.mxu0 0.0
    %1495 = vmatpush1.msra.mxu0 %v341
    %1496 = vmatprep.subr.mxu0 0.0
    %1497 = vmatpush1.msra.mxu0 %v344
    %1498 = vmatprep.subr.mxu0 0.0
    %1499 = vmatpush1.msra.mxu0 %v347
    %1500 = vmatprep.subr.mxu0 0.0
    %1501 = vmatpush1.msra.mxu0 0.0
    %1502 = vmatprep.subr.mxu0 0.0
    %1503 = vmatpush1.msra.mxu0 0.0
    %1504 = vmatprep.subr.mxu0 0.0
    %1505 = vmatpush1.msra.mxu0 0.0
    %1506 = vmatprep.subr.mxu0 0.0
    %1507 = vmatpush1.msra.mxu0 0.0
    %1508 = vmatprep.subr.mxu0 0.0
    %1509 = vmatpush1.msra.mxu0 0.0
    %1510 = vmatprep.subr.mxu0 0.0
    %1511 = vmatpush1.msra.mxu0 0.0
    %1512 = vmatprep.subr.mxu0 0.0
    %1513 = vmatpush1.msra.mxu0 0.0
    %1514 = vmatprep.subr.mxu0 0.0
    %1515 = vmatpush1.msra.mxu0 0.0
    %1516 = vmatprep.subr.mxu0 0.0
    %1517 = vmatpush1.msra.mxu0 0.0
    %1518 = vmatprep.subr.mxu0 0.0
    %1519 = vmatpush1.msra.mxu0 0.0
    %1520 = vmatprep.subr.mxu0 0.0
    %1521 = vmatpush1.msra.mxu0 0.0
    %1522 = vmatprep.subr.mxu0 0.0
    %1523 = vmatpush1.msra.mxu0 0.0
    %1524 = vmatprep.subr.mxu0 0.0
    %1525 = vmatpush1.msra.mxu0 0.0
    %1526 = vmatprep.subr.mxu0 0.0
    %1527 = vmatpush1.msra.mxu0 0.0
    %1528 = vmatprep.subr.mxu0 0.0
    %1529 = vmatpush1.msra.mxu0 0.0
    %1530 = vmatprep.subr.mxu0 0.0
    %1531 = vmatpush1.msra.mxu0 0.0
    %1532 = vmatprep.mubr.f32.mxu0 0.0
    %1533 = vmatmul.mubr.f32.gmra.mrb[0].mxu0 %v1395
    %v1534 = vpop.f32.mrb[0].mxu0
    %v1535 = vadd.f32 0.0, %v1534
    %v1536 = vpop.f32.mrb[0].mxu0
    %1537 = vdwg.mxu0
    %v1539 = vrot.slane %v1464, 4
    %v1541 = vadd.f32 %v221, %v1539
    %v1542 = vxor.u32 %v1541, 2147483648
    %v1543 = vmul.f32 %v1542, 1.442695
    %v1544 = vpow.pop %v1543
    %v1545 = vadd.f32 %v1544, 1.0
    %v1546 = vrcp.pop %v1545
    %v1547 = vmul.f32 1.0, %v1546
    %v1549 = vrot.slane %v1466, 4
    %v1551 = vadd.f32 %v223, %v1549
    %v1552 = vxor.u32 %v1551, 2147483648
    %v1553 = vmul.f32 %v1552, 1.442695
    %v1554 = vpow.pop %v1553
    %v1555 = vadd.f32 %v1554, 1.0
    %v1556 = vrcp.pop %v1555
    %v1557 = vmul.f32 1.0, %v1556
    %v1558 = vadd.f32 %v1535, %v508
    %v1560 = vrot.slane %v1558, 4
    %v1562 = vmul.f32 %v1547, %v1560
    %v1563 = vadd.f32 %v297, %v1562
    %v1564 = vtanh.pop %v1563
    %v1565 = vsub.f32 1.0, %v1557
    %v1566 = vmul.f32 %v1565, %v1564
    %v1567 = vrot.slane %v1392, 6
    %v1569 = vmul.f32 %v1557, %v1567
    %v1570 = vadd.f32 %v1566, %v1569
    %1571 = vst [vmem:[#allocation2 + $0x8] sm:$0x30] %v1570
    %v1573 = vrot.slane %v1570, 4
    %1575 = vmatprep.subr.mxu0 %v301
    %1576 = vmatpush1.msra.mxu0 %v300
    %1577 = vmatprep.subr.mxu0 %v304
    %1578 = vmatpush1.msra.mxu0 %v303
    %1579 = vmatprep.subr.mxu0 %v307
    %1580 = vmatpush1.msra.mxu0 %v306
    %1581 = vmatprep.subr.mxu0 %v310
    %1582 = vmatpush1.msra.mxu0 %v309
    %1583 = vmatprep.subr.mxu0 %v313
    %1584 = vmatpush1.msra.mxu0 %v312
    %1585 = vmatprep.subr.mxu0 %v316
    %1586 = vmatpush1.msra.mxu0 %v315
    %1587 = vmatprep.subr.mxu0 %v319
    %1588 = vmatpush1.msra.mxu0 %v318
    %1589 = vmatprep.subr.mxu0 %v322
    %1590 = vmatpush1.msra.mxu0 %v321
    %1591 = vmatprep.subr.mxu0 %v325
    %1592 = vmatpush1.msra.mxu0 %v324
    %1593 = vmatprep.subr.mxu0 %v328
    %1594 = vmatpush1.msra.mxu0 %v327
    %1595 = vmatprep.subr.mxu0 %v331
    %1596 = vmatpush1.msra.mxu0 %v330
    %1597 = vmatprep.subr.mxu0 %v334
    %1598 = vmatpush1.msra.mxu0 %v333
    %1599 = vmatprep.subr.mxu0 %v337
    %1600 = vmatpush1.msra.mxu0 %v336
    %1601 = vmatprep.subr.mxu0 %v340
    %1602 = vmatpush1.msra.mxu0 %v339
    %1603 = vmatprep.subr.mxu0 %v343
    %1604 = vmatpush1.msra.mxu0 %v342
    %1605 = vmatprep.subr.mxu0 %v346
    %1606 = vmatpush1.msra.mxu0 %v345
    %1607 = vmatprep.subr.mxu0 0.0
    %1608 = vmatpush1.msra.mxu0 0.0
    %1609 = vmatprep.subr.mxu0 0.0
    %1610 = vmatpush1.msra.mxu0 0.0
    %1611 = vmatprep.subr.mxu0 0.0
    %1612 = vmatpush1.msra.mxu0 0.0
    %1613 = vmatprep.subr.mxu0 0.0
    %1614 = vmatpush1.msra.mxu0 0.0
    %1615 = vmatprep.subr.mxu0 0.0
    %1616 = vmatpush1.msra.mxu0 0.0
    %1617 = vmatprep.subr.mxu0 0.0
    %1618 = vmatpush1.msra.mxu0 0.0
    %1619 = vmatprep.subr.mxu0 0.0
    %1620 = vmatpush1.msra.mxu0 0.0
    %1621 = vmatprep.subr.mxu0 0.0
    %1622 = vmatpush1.msra.mxu0 0.0
    %1623 = vmatprep.subr.mxu0 0.0
    %1624 = vmatpush1.msra.mxu0 0.0
    %1625 = vmatprep.subr.mxu0 0.0
    %1626 = vmatpush1.msra.mxu0 0.0
    %1627 = vmatprep.subr.mxu0 0.0
    %1628 = vmatpush1.msra.mxu0 0.0
    %1629 = vmatprep.subr.mxu0 0.0
    %1630 = vmatpush1.msra.mxu0 0.0
    %1631 = vmatprep.subr.mxu0 0.0
    %1632 = vmatpush1.msra.mxu0 0.0
    %1633 = vmatprep.subr.mxu0 0.0
    %1634 = vmatpush1.msra.mxu0 0.0
    %1635 = vmatprep.subr.mxu0 0.0
    %1636 = vmatpush1.msra.mxu0 0.0
    %1637 = vmatprep.subr.mxu0 0.0
    %1638 = vmatpush1.msra.mxu0 0.0
    %1639 = vmatprep.mubr.f32.mxu0 0.0
    %1640 = vmatmul.mubr.f32.gmra.mrb[0].mxu0 %v1573
    %v1641 = vpop.f32.mrb[0].mxu0
    %v1642 = vadd.f32 0.0, %v1641
    %v1643 = vpop.f32.mrb[0].mxu0
    %v1644 = vadd.f32 0.0, %v1643
    %1645 = vdwg.mxu0
    %1646 = vmatprep.subr.mxu0 0.0
    %1647 = vmatpush1.msra.mxu0 %v302
    %1648 = vmatprep.subr.mxu0 0.0
    %1649 = vmatpush1.msra.mxu0 %v305
    %1650 = vmatprep.subr.mxu0 0.0
    %1651 = vmatpush1.msra.mxu0 %v308
    %1652 = vmatprep.subr.mxu0 0.0
    %1653 = vmatpush1.msra.mxu0 %v311
    %1654 = vmatprep.subr.mxu0 0.0
    %1655 = vmatpush1.msra.mxu0 %v314
    %1656 = vmatprep.subr.mxu0 0.0
    %1657 = vmatpush1.msra.mxu0 %v317
    %1658 = vmatprep.subr.mxu0 0.0
    %1659 = vmatpush1.msra.mxu0 %v320
    %1660 = vmatprep.subr.mxu0 0.0
    %1661 = vmatpush1.msra.mxu0 %v323
    %1662 = vmatprep.subr.mxu0 0.0
    %1663 = vmatpush1.msra.mxu0 %v326
    %1664 = vmatprep.subr.mxu0 0.0
    %1665 = vmatpush1.msra.mxu0 %v329
    %1666 = vmatprep.subr.mxu0 0.0
    %1667 = vmatpush1.msra.mxu0 %v332
    %1668 = vmatprep.subr.mxu0 0.0
    %1669 = vmatpush1.msra.mxu0 %v335
    %1670 = vmatprep.subr.mxu0 0.0
    %1671 = vmatpush1.msra.mxu0 %v338
    %1672 = vmatprep.subr.mxu0 0.0
    %1673 = vmatpush1.msra.mxu0 %v341
    %1674 = vmatprep.subr.mxu0 0.0
    %1675 = vmatpush1.msra.mxu0 %v344
    %1676 = vmatprep.subr.mxu0 0.0
    %1677 = vmatpush1.msra.mxu0 %v347
    %1678 = vmatprep.subr.mxu0 0.0
    %1679 = vmatpush1.msra.mxu0 0.0
    %1680 = vmatprep.subr.mxu0 0.0
    %1681 = vmatpush1.msra.mxu0 0.0
    %1682 = vmatprep.subr.mxu0 0.0
    %1683 = vmatpush1.msra.mxu0 0.0
    %1684 = vmatprep.subr.mxu0 0.0
    %1685 = vmatpush1.msra.mxu0 0.0
    %1686 = vmatprep.subr.mxu0 0.0
    %1687 = vmatpush1.msra.mxu0 0.0
    %1688 = vmatprep.subr.mxu0 0.0
    %1689 = vmatpush1.msra.mxu0 0.0
    %1690 = vmatprep.subr.mxu0 0.0
    %1691 = vmatpush1.msra.mxu0 0.0
    %1692 = vmatprep.subr.mxu0 0.0
    %1693 = vmatpush1.msra.mxu0 0.0
    %1694 = vmatprep.subr.mxu0 0.0
    %1695 = vmatpush1.msra.mxu0 0.0
    %1696 = vmatprep.subr.mxu0 0.0
    %1697 = vmatpush1.msra.mxu0 0.0
    %1698 = vmatprep.subr.mxu0 0.0
    %1699 = vmatpush1.msra.mxu0 0.0
    %1700 = vmatprep.subr.mxu0 0.0
    %1701 = vmatpush1.msra.mxu0 0.0
    %1702 = vmatprep.subr.mxu0 0.0
    %1703 = vmatpush1.msra.mxu0 0.0
    %1704 = vmatprep.subr.mxu0 0.0
    %1705 = vmatpush1.msra.mxu0 0.0
    %1706 = vmatprep.subr.mxu0 0.0
    %1707 = vmatpush1.msra.mxu0 0.0
    %1708 = vmatprep.subr.mxu0 0.0
    %1709 = vmatpush1.msra.mxu0 0.0
    %1710 = vmatprep.mubr.f32.mxu0 0.0
    %1711 = vmatmul.mubr.f32.gmra.mrb[0].mxu0 %v1573
    %v1712 = vpop.f32.mrb[0].mxu0
    %v1713 = vadd.f32 0.0, %v1712
    %v1714 = vpop.f32.mrb[0].mxu0
    %1715 = vdwg.mxu0
    %v1717 = vrot.slane %v1642, 2
    %v1719 = vadd.f32 %v221, %v1717
    %v1720 = vxor.u32 %v1719, 2147483648
    %v1721 = vmul.f32 %v1720, 1.442695
    %v1722 = vpow.pop %v1721
    %v1723 = vadd.f32 %v1722, 1.0
    %v1724 = vrcp.pop %v1723
    %v1725 = vmul.f32 1.0, %v1724
    %v1727 = vrot.slane %v1644, 2
    %v1729 = vadd.f32 %v223, %v1727
    %v1730 = vxor.u32 %v1729, 2147483648
    %v1731 = vmul.f32 %v1730, 1.442695
    %v1732 = vpow.pop %v1731
    %v1733 = vadd.f32 %v1732, 1.0
    %v1734 = vrcp.pop %v1733
    %v1735 = vmul.f32 1.0, %v1734
    %v1736 = vadd.f32 %v1713, %v508
    %v1738 = vrot.slane %v1736, 2
    %v1740 = vmul.f32 %v1725, %v1738
    %v1741 = vadd.f32 %v297, %v1740
    %v1742 = vtanh.pop %v1741
    %v1743 = vsub.f32 1.0, %v1735
    %v1744 = vmul.f32 %v1743, %v1742
    %v1745 = vrot.slane %v1570, 6
    %v1747 = vmul.f32 %v1735, %v1745
    %v1748 = vadd.f32 %v1744, %v1747
    %1749 = vst [vmem:[#allocation2 + $0x8] sm:$0xc0] %v1748
    %v1750 = vld [vmem:[#allocation2] sm:$0xff]
    %v1751 = vld [vmem:[#allocation2 + $0x8] sm:$0xff]
    %v1752 = vld [vmem:[%s5] sm:$0x1]
    %v1753 = vld [vmem:[%s6] sm:$0x1]
    %1754 = vadd.xlane.f32.xlu0 %v1750
    %v1755 = vpop.xlane.xlu0 %1754
    %1756 = vadd.xlane.f32.xlu0 %v1751
    %v1757 = vpop.xlane.xlu0 %1756
    %v1758 = vrcp.pop 128.0
    %v1759 = vmul.f32 %v1755, %v1758
    %v1760 = vmul.f32 %v1757, %v1758
    %v1761 = vsub.f32 %v1750, %v1759
    %v1762 = vsub.f32 %v1751, %v1760
    %v1763 = vmul.f32 %v1761, %v1761
    %v1764 = vmul.f32 %v1762, %v1762
    %1765 = vadd.xlane.f32.xlu0 %v1763
    %v1766 = vpop.xlane.xlu0 %1765
    %1767 = vadd.xlane.f32.xlu0 %v1764
    %v1768 = vpop.xlane.xlu0 %1767
    %v1769 = vmul.f32 %v1766, %v1758
    %v1770 = vmul.f32 %v1768, %v1758
    %v1771 = vadd.f32 %v1769, 1e-05
    %v1772 = vadd.f32 %v1770, 1e-05
    %v1773 = vrsqrt.pop %v1771
    %v1774 = vrsqrt.pop %v1772
    %v1775 = vmul.f32 %v1761, %v1773
    %v1776 = vmul.f32 %v1762, %v1774
    %v1778 = vlaneseq
    %v1779 = vshrl.u32 %v1778, 7
    %v1780 = vsub.s32 0, %v1779
    %v1781 = vrot.slane %v1752, %v1780
    %v1783 = vmul.f32 %v1775, %v1781
    %v1784 = vmul.f32 %v1776, %v1781
    %v1786 = vlaneseq
    %v1787 = vshrl.u32 %v1786, 7
    %v1788 = vsub.s32 0, %v1787
    %v1789 = vrot.slane %v1753, %v1788
    %v1791 = vadd.f32 %v1783, %v1789
    %v1792 = vadd.f32 %v1784, %v1789
    %v1793 = vld [vmem:[#allocation7] sm:$0xff]
    %v1794 = vld [vmem:[#allocation7 + $0x8] sm:$0xff]
    %v1795 = vld [vmem:[#allocation7 + $0x10] sm:$0xff]
    %v1796 = vld [vmem:[#allocation7 + $0x18] sm:$0xff]
    %v1797 = vld [vmem:[#allocation7 + $0x20] sm:$0xff]
    %v1798 = vld [vmem:[#allocation7 + $0x28] sm:$0xff]
    %v1799 = vld [vmem:[#allocation7 + $0x30] sm:$0xff]
    %v1800 = vld [vmem:[#allocation7 + $0x38] sm:$0xff]
    %v1801 = vld [vmem:[#allocation7 + $0x40] sm:$0xff]
    %v1802 = vld [vmem:[#allocation7 + $0x48] sm:$0xff]
    %v1803 = vld [vmem:[#allocation7 + $0x50] sm:$0xff]
    %v1804 = vld [vmem:[#allocation7 + $0x58] sm:$0xff]
    %v1805 = vld [vmem:[#allocation7 + $0x60] sm:$0xff]
    %v1806 = vld [vmem:[#allocation7 + $0x68] sm:$0xff]
    %v1807 = vld [vmem:[#allocation7 + $0x70] sm:$0xff]
    %v1808 = vld [vmem:[#allocation7 + $0x78] sm:$0xff]
    %v1809 = vld [vmem:[#allocation7 + $0x80] sm:$0xff]
    %v1810 = vld [vmem:[#allocation7 + $0x88] sm:$0xff]
    %v1811 = vld [vmem:[#allocation7 + $0x90] sm:$0xff]
    %v1812 = vld [vmem:[#allocation7 + $0x98] sm:$0xff]
    %v1813 = vld [vmem:[#allocation7 + $0xa0] sm:$0xff]
    %v1814 = vld [vmem:[#allocation7 + $0xa8] sm:$0xff]
    %v1815 = vld [vmem:[#allocation7 + $0xb0] sm:$0xff]
    %v1816 = vld [vmem:[#allocation7 + $0xb8] sm:$0xff]
    %v1817 = vld [vmem:[#allocation7 + $0xc0] sm:$0xff]
    %v1818 = vld [vmem:[#allocation7 + $0xc8] sm:$0xff]
    %v1819 = vld [vmem:[#allocation7 + $0xd0] sm:$0xff]
    %v1820 = vld [vmem:[#allocation7 + $0xd8] sm:$0xff]
    %v1821 = vld [vmem:[#allocation7 + $0xe0] sm:$0xff]
    %v1822 = vld [vmem:[#allocation7 + $0xe8] sm:$0xff]
    %v1823 = vld [vmem:[#allocation7 + $0xf0] sm:$0xff]
    %v1824 = vld [vmem:[#allocation7 + $0xf8] sm:$0xff]
    %1825 = vmatprep.subr.mxu0 %v1794
    %1826 = vmatpush1.msra.mxu0 %v1793
    %1827 = vmatprep.subr.mxu0 %v1796
    %1828 = vmatpush1.msra.mxu0 %v1795
    %1829 = vmatprep.subr.mxu0 %v1798
    %1830 = vmatpush1.msra.mxu0 %v1797
    %1831 = vmatprep.subr.mxu0 %v1800
    %1832 = vmatpush1.msra.mxu0 %v1799
    %1833 = vmatprep.subr.mxu0 %v1802
    %1834 = vmatpush1.msra.mxu0 %v1801
    %1835 = vmatprep.subr.mxu0 %v1804
    %1836 = vmatpush1.msra.mxu0 %v1803
    %1837 = vmatprep.subr.mxu0 %v1806
    %1838 = vmatpush1.msra.mxu0 %v1805
    %1839 = vmatprep.subr.mxu0 %v1808
    %1840 = vmatpush1.msra.mxu0 %v1807
    %1841 = vmatprep.subr.mxu0 %v1810
    %1842 = vmatpush1.msra.mxu0 %v1809
    %1843 = vmatprep.subr.mxu0 %v1812
    %1844 = vmatpush1.msra.mxu0 %v1811
    %1845 = vmatprep.subr.mxu0 %v1814
    %1846 = vmatpush1.msra.mxu0 %v1813
    %1847 = vmatprep.subr.mxu0 %v1816
    %1848 = vmatpush1.msra.mxu0 %v1815
    %1849 = vmatprep.subr.mxu0 %v1818
    %1850 = vmatpush1.msra.mxu0 %v1817
    %1851 = vmatprep.subr.mxu0 %v1820
    %1852 = vmatpush1.msra.mxu0 %v1819
    %1853 = vmatprep.subr.mxu0 %v1822
    %1854 = vmatpush1.msra.mxu0 %v1821
    %1855 = vmatprep.subr.mxu0 %v1824
    %1856 = vmatpush1.msra.mxu0 %v1823
    %1857 = vmatprep.subr.mxu0 0.0
    %1858 = vmatpush1.msra.mxu0 0.0
    %1859 = vmatprep.subr.mxu0 0.0
    %1860 = vmatpush1.msra.mxu0 0.0
    %1861 = vmatprep.subr.mxu0 0.0
    %1862 = vmatpush1.msra.mxu0 0.0
    %1863 = vmatprep.subr.mxu0 0.0
    %1864 = vmatpush1.msra.mxu0 0.0
    %1865 = vmatprep.subr.mxu0 0.0
    %1866 = vmatpush1.msra.mxu0 0.0
    %1867 = vmatprep.subr.mxu0 0.0
    %1868 = vmatpush1.msra.mxu0 0.0
    %1869 = vmatprep.subr.mxu0 0.0
    %1870 = vmatpush1.msra.mxu0 0.0
    %1871 = vmatprep.subr.mxu0 0.0
    %1872 = vmatpush1.msra.mxu0 0.0
    %1873 = vmatprep.subr.mxu0 0.0
    %1874 = vmatpush1.msra.mxu0 0.0
    %1875 = vmatprep.subr.mxu0 0.0
    %1876 = vmatpush1.msra.mxu0 0.0
    %1877 = vmatprep.subr.mxu0 0.0
    %1878 = vmatpush1.msra.mxu0 0.0
    %1879 = vmatprep.subr.mxu0 0.0
    %1880 = vmatpush1.msra.mxu0 0.0
    %1881 = vmatprep.subr.mxu0 0.0
    %1882 = vmatpush1.msra.mxu0 0.0
    %1883 = vmatprep.subr.mxu0 0.0
    %1884 = vmatpush1.msra.mxu0 0.0
    %1885 = vmatprep.subr.mxu0 0.0
    %1886 = vmatpush1.msra.mxu0 0.0
    %1887 = vmatprep.subr.mxu0 0.0
    %1888 = vmatpush1.msra.mxu0 0.0
    %1889 = vmatprep.mubr.f32.mxu0 0.0
    %1890 = vmatmul.mubr.f32.gmra.mrb[0].mxu0 %v1791
    %v1891 = vpop.f32.mrb[0].mxu0
    %v1892 = vadd.f32 0.0, %v1891
    %v1893 = vpop.f32.mrb[0].mxu0
    %v1894 = vadd.f32 0.0, %v1893
    %1895 = vmatprep.mubr.f32.mxu0 0.0
    %1896 = vmatmul.mubr.f32.gmra.mrb[0].mxu0 %v1792
    %v1897 = vpop.f32.mrb[0].mxu0
    %v1898 = vadd.f32 0.0, %v1897
    %v1899 = vpop.f32.mrb[0].mxu0
    %v1900 = vadd.f32 0.0, %v1899
    %1901 = vdwg.mxu0
    %1902 = vst [vmem:[%s11] sm:$0xff] %v1892
    %1903 = vst [vmem:[%s11 + $0x8] sm:$0xff] %v1894
    %1904 = vst [vmem:[%s11 + $0x10] sm:$0xff] %v1898
    %1905 = vst [vmem:[%s11 + $0x18] sm:$0xff] %v1900
    %v1906 = vld [vmem:[%s8] sm:$0xff]
    %v1907 = vld [vmem:[%s8 + $0x8] sm:$0xff]
    %v1908 = vld [vmem:[%s9] sm:$0x1]
    %v1909 = vld [vmem:[%s10] sm:$0x1]
    %1910 = vadd.xlane.f32.xlu0 %v1906
    %v1911 = vpop.xlane.xlu0 %1910
    %1912 = vadd.xlane.f32.xlu0 %v1907
    %v1913 = vpop.xlane.xlu0 %1912
    %v1914 = vmul.f32 %v1911, %v1758
    %v1915 = vmul.f32 %v1913, %v1758
    %v1916 = vsub.f32 %v1906, %v1914
    %v1917 = vsub.f32 %v1907, %v1915
    %v1918 = vmul.f32 %v1916, %v1916
    %v1919 = vmul.f32 %v1917, %v1917
    %1920 = vadd.xlane.f32.xlu0 %v1918
    %v1921 = vpop.xlane.xlu0 %1920
    %1922 = vadd.xlane.f32.xlu0 %v1919
    %v1923 = vpop.xlane.xlu0 %1922
    %v1924 = vmul.f32 %v1921, %v1758
    %v1925 = vmul.f32 %v1923, %v1758
    %v1926 = vadd.f32 %v1924, 1e-05
    %v1927 = vadd.f32 %v1925, 1e-05
    %v1928 = vrsqrt.pop %v1926
    %v1929 = vrsqrt.pop %v1927
    %v1930 = vmul.f32 %v1916, %v1928
    %v1931 = vmul.f32 %v1917, %v1929
    %v1933 = vlaneseq
    %v1934 = vshrl.u32 %v1933, 7
    %v1935 = vsub.s32 0, %v1934
    %v1936 = vrot.slane %v1908, %v1935
    %v1938 = vmul.f32 %v1930, %v1936
    %v1939 = vmul.f32 %v1931, %v1936
    %v1941 = vlaneseq
    %v1942 = vshrl.u32 %v1941, 7
    %v1943 = vsub.s32 0, %v1942
    %v1944 = vrot.slane %v1909, %v1943
    %v1946 = vadd.f32 %v1938, %v1944
    %v1947 = vadd.f32 %v1939, %v1944
    %1948 = vst [vmem:[%s12] sm:$0xff] %v1946
    %1949 = vst [vmem:[%s12 + $0x8] sm:$0xff] %v1947
    // Predicated region
    $region58: #{gru_attention_forward.2} parent=1 // pred_check
      _
    $region59: #{gru_attention_forward.2} parent=1 // pred_check_branch
      %1951 = sbr.rel (0) target = $region61
    $region60: #{gru_attention_forward.2} parent=1 // pred_region
      _
    $region61: #{gru_attention_forward.2} parent=1 // pred_fallthru
      _
    // Predicated region
    $region62: #{gru_attention_forward.2} parent=1 // pred_check
      _
    $region63: #{gru_attention_forward.2} parent=1 // pred_check_branch
      %1953 = sbr.rel (0) target = $region65
    $region64: #{gru_attention_forward.2} parent=1 // pred_region
      _
    $region65: #{gru_attention_forward.2} parent=1 // pred_fallthru
      _
    // Predicated region
    $region66: #{gru_attention_forward.2} parent=1 // pred_check
      _
    $region67: #{gru_attention_forward.2} parent=1 // pred_check_branch
      %1955 = sbr.rel (0) target = $region69
    $region68: #{gru_attention_forward.2} parent=1 // pred_region
      _
    $region69: #{gru_attention_forward.2} parent=1 // pred_fallthru
      _
    // Predicated region
    $region70: #{gru_attention_forward.2} parent=1 // pred_check
      _
    $region71: #{gru_attention_forward.2} parent=1 // pred_check_branch
      %1957 = sbr.rel (0) target = $region73
    $region72: #{gru_attention_forward.2} parent=1 // pred_region
      _
    $region73: #{gru_attention_forward.2} parent=1 // pred_fallthru
      _
    %1958 = vsyncpa [#allocation4], 1
    %1959 = vsyncpa [#allocation6], 1

// kernel: gru_attention_forward.3
$region0: #{gru_attention_forward.3}
  #allocation0 [shape = 'u32[]', space=smem, size = 0x4, offset = 0x4, fixed_abs, tag = 'smem constant byte address 0x4 - core index']
  #allocation1 [shape = 'u32[144,128]{1,0:T(1,128)}', space=vmem, size = 0x12000, scoped, tag = 'internal scratch']
  #allocation2 [shape = 'f32[2,8,128]{2,1,0:T(8,128)}', space=vmem, size = 0x2000, scoped, tag = 'scratch operand']
  %s0 = inlined_call_operand.vmem [shape: f32[2,8,8,16], index: 0, kind: input, shape index: {}]
  %s1 = inlined_call_operand.vmem [shape: f32[2,8,256], index: 1, kind: input, shape index: {}]
  %s2 = inlined_call_operand.vmem [shape: f32[16,128], index: 2, kind: input, shape index: {}]
  %s3 = inlined_call_operand.vmem [shape: f32[128,128], index: 3, kind: input, shape index: {}]
  %s4 = inlined_call_operand.vmem [shape: f32[1,128], index: 4, kind: input, shape index: {}]
  %s5 = inlined_call_operand.vmem [shape: f32[1,128], index: 5, kind: input, shape index: {}]
  %s6 = inlined_call_operand.vmem [shape: f32[1,128], index: 6, kind: input, shape index: {}]
  %s7 = inlined_call_operand.vmem [shape: f32[1,128], index: 7, kind: input, shape index: {}]
  %s8 = inlined_call_operand.vmem [shape: f32[128,512], index: 8, kind: input, shape index: {}]
  %s9 = inlined_call_operand.vmem [shape: f32[1,512], index: 9, kind: input, shape index: {}]
  %s10 = inlined_call_operand.vmem [shape: f32[512,128], index: 10, kind: input, shape index: {}]
  %s11 = inlined_call_operand.vmem [shape: f32[1,128], index: 11, kind: input, shape index: {}]
  %s12 = inlined_call_operand.vmem [shape: f32[1,128], index: 12, kind: input, shape index: {}]
  %s13 = inlined_call_operand.hbm [shape: f32[16,128], index: 13, kind: output, shape index: {}]
  %s14 = sld [smem:[#allocation0]]
  $region62: #{gru_attention_forward.3} parent=0
    _
  %s16 = ssub.s32 1, %s14
  %s17 = scalar_select 0, %s16, %s14
  $region1: #{gru_attention_forward.3} parent=0
    #allocation3 [shape = 'u8[8192]{0}', space=vmem, size = 0x2000, scoped, tag = 'output window, operand 0, single buffered']
    #allocation4 [shape = 's32[1]{0}', space=sflag, size = 0x4, scoped, tag = 'scoped memory for gru_attention_forward.3']
    %18 = vsyncpa [#allocation4], 0
    // Predicated region
    $region2: #{gru_attention_forward.3} parent=1 // pred_check
      _
    $region3: #{gru_attention_forward.3} parent=1 // pred_check_branch
      %20 = sbr.rel (0) target = $region5
    $region4: #{gru_attention_forward.3} parent=1 // pred_region
      _
    $region5: #{gru_attention_forward.3} parent=1 // pred_fallthru
      _
    // Predicated region
    $region6: #{gru_attention_forward.3} parent=1 // pred_check
      _
    $region7: #{gru_attention_forward.3} parent=1 // pred_check_branch
      %22 = sbr.rel (0) target = $region9
    $region8: #{gru_attention_forward.3} parent=1 // pred_region
      _
    $region9: #{gru_attention_forward.3} parent=1 // pred_fallthru
      _
    // Predicated region
    $region10: #{gru_attention_forward.3} parent=1 // pred_check
      _
    $region11: #{gru_attention_forward.3} parent=1 // pred_check_branch
      %24 = sbr.rel (0) target = $region13
    $region12: #{gru_attention_forward.3} parent=1 // pred_region
      _
    $region13: #{gru_attention_forward.3} parent=1 // pred_fallthru
      _
    // Predicated region
    $region14: #{gru_attention_forward.3} parent=1 // pred_check
      _
    $region15: #{gru_attention_forward.3} parent=1 // pred_check_branch
      %26 = sbr.rel (0) target = $region17
    $region16: #{gru_attention_forward.3} parent=1 // pred_region
      _
    $region17: #{gru_attention_forward.3} parent=1 // pred_fallthru
      _
    // Predicated region
    $region18: #{gru_attention_forward.3} parent=1 // pred_check
      _
    $region19: #{gru_attention_forward.3} parent=1 // pred_check_branch
      %28 = sbr.rel (0) target = $region21
    $region20: #{gru_attention_forward.3} parent=1 // pred_region
      _
    $region21: #{gru_attention_forward.3} parent=1 // pred_fallthru
      _
    // Predicated region
    $region22: #{gru_attention_forward.3} parent=1 // pred_check
      _
    $region23: #{gru_attention_forward.3} parent=1 // pred_check_branch
      %30 = sbr.rel (0) target = $region25
    $region24: #{gru_attention_forward.3} parent=1 // pred_region
      _
    $region25: #{gru_attention_forward.3} parent=1 // pred_fallthru
      _
    // Predicated region
    $region26: #{gru_attention_forward.3} parent=1 // pred_check
      _
    $region27: #{gru_attention_forward.3} parent=1 // pred_check_branch
      %32 = sbr.rel (0) target = $region29
    $region28: #{gru_attention_forward.3} parent=1 // pred_region
      _
    $region29: #{gru_attention_forward.3} parent=1 // pred_fallthru
      _
    // Predicated region
    $region30: #{gru_attention_forward.3} parent=1 // pred_check
      _
    $region31: #{gru_attention_forward.3} parent=1 // pred_check_branch
      %34 = sbr.rel (0) target = $region33
    $region32: #{gru_attention_forward.3} parent=1 // pred_region
      _
    $region33: #{gru_attention_forward.3} parent=1 // pred_fallthru
      _
    // Predicated region
    $region34: #{gru_attention_forward.3} parent=1 // pred_check
      _
    $region35: #{gru_attention_forward.3} parent=1 // pred_check_branch
      %36 = sbr.rel (0) target = $region37
    $region36: #{gru_attention_forward.3} parent=1 // pred_region
      _
    $region37: #{gru_attention_forward.3} parent=1 // pred_fallthru
      _
    // Predicated region
    $region38: #{gru_attention_forward.3} parent=1 // pred_check
      _
    $region39: #{gru_attention_forward.3} parent=1 // pred_check_branch
      %38 = sbr.rel (0) target = $region41
    $region40: #{gru_attention_forward.3} parent=1 // pred_region
      _
    $region41: #{gru_attention_forward.3} parent=1 // pred_fallthru
      _
    // Predicated region
    $region42: #{gru_attention_forward.3} parent=1 // pred_check
      _
    $region43: #{gru_attention_forward.3} parent=1 // pred_check_branch
      %40 = sbr.rel (0) target = $region45
    $region44: #{gru_attention_forward.3} parent=1 // pred_region
      _
    $region45: #{gru_attention_forward.3} parent=1 // pred_fallthru
      _
    // Predicated region
    $region46: #{gru_attention_forward.3} parent=1 // pred_check
      _
    $region47: #{gru_attention_forward.3} parent=1 // pred_check_branch
      %42 = sbr.rel (0) target = $region49
    $region48: #{gru_attention_forward.3} parent=1 // pred_region
      _
    $region49: #{gru_attention_forward.3} parent=1 // pred_fallthru
      _
    // Predicated region
    $region50: #{gru_attention_forward.3} parent=1 // pred_check
      _
    $region51: #{gru_attention_forward.3} parent=1 // pred_check_branch
      %44 = sbr.rel (0) target = $region53
    $region52: #{gru_attention_forward.3} parent=1 // pred_region
      _
    $region53: #{gru_attention_forward.3} parent=1 // pred_fallthru
      _
    %v45 = vld [vmem:[%s0] sm:$0xff]
    %v46 = vld [vmem:[%s0 + $0x8] sm:$0xff]
    %v47 = vld [vmem:[%s0 + $0x10] sm:$0xff]
    %v48 = vld [vmem:[%s0 + $0x18] sm:$0xff]
    %v49 = vld [vmem:[%s0 + $0x20] sm:$0xff]
    %v50 = vld [vmem:[%s0 + $0x28] sm:$0xff]
    %v51 = vld [vmem:[%s0 + $0x30] sm:$0xff]
    %v52 = vld [vmem:[%s0 + $0x38] sm:$0xff]
    %v53 = vld [vmem:[%s0 + $0x40] sm:$0xff]
    %v54 = vld [vmem:[%s0 + $0x48] sm:$0xff]
    %v55 = vld [vmem:[%s0 + $0x50] sm:$0xff]
    %v56 = vld [vmem:[%s0 + $0x58] sm:$0xff]
    %v57 = vld [vmem:[%s0 + $0x60] sm:$0xff]
    %v58 = vld [vmem:[%s0 + $0x68] sm:$0xff]
    %v59 = vld [vmem:[%s0 + $0x70] sm:$0xff]
    %v60 = vld [vmem:[%s0 + $0x78] sm:$0xff]
    %v61 = vld [vmem:[%s1] sm:$0xff]
    %v62 = vld [vmem:[%s1 + $0x8] sm:$0xff]
    %v63 = vld [vmem:[%s1 + $0x10] sm:$0xff]
    %v64 = vld [vmem:[%s1 + $0x18] sm:$0xff]
    %vm65 = vcmask 130048
    %v67 = vsel %vm65, %v45, 0
    %v70 = vsel %vm65, %v61, 0
    %72 = vmatprep.subr.mxu0 0.0
    %73 = vmatpush1.xpose.msra.mxu0 %v70
    %74 = vmatprep.subr.mxu0 0.0
    %75 = vmatpush1.xpose.msra.mxu0 0.0
    %76 = vmatprep.subr.mxu0 0.0
    %77 = vmatpush1.xpose.msra.mxu0 0.0
    %78 = vmatprep.subr.mxu0 0.0
    %79 = vmatpush1.xpose.msra.mxu0 0.0
    %80 = vmatprep.subr.mxu0 0.0
    %81 = vmatpush1.xpose.msra.mxu0 0.0
    %82 = vmatprep.subr.mxu0 0.0
    %83 = vmatpush1.xpose.msra.mxu0 0.0
    %84 = vmatprep.subr.mxu0 0.0
    %85 = vmatpush1.xpose.msra.mxu0 0.0
    %86 = vmatprep.subr.mxu0 0.0
    %87 = vmatpush1.xpose.msra.mxu0 0.0
    %88 = vmatprep.subr.mxu0 0.0
    %89 = vmatpush1.xpose.msra.mxu0 0.0
    %90 = vmatprep.subr.mxu0 0.0
    %91 = vmatpush1.xpose.msra.mxu0 0.0
    %92 = vmatprep.subr.mxu0 0.0
    %93 = vmatpush1.xpose.msra.mxu0 0.0
    %94 = vmatprep.subr.mxu0 0.0
    %95 = vmatpush1.xpose.msra.mxu0 0.0
    %96 = vmatprep.subr.mxu0 0.0
    %97 = vmatpush1.xpose.msra.mxu0 0.0
    %98 = vmatprep.subr.mxu0 0.0
    %99 = vmatpush1.xpose.msra.mxu0 0.0
    %100 = vmatprep.subr.mxu0 0.0
    %101 = vmatpush1.xpose.msra.mxu0 0.0
    %102 = vmatprep.subr.mxu0 0.0
    %103 = vmatpush1.xpose.msra.mxu0 0.0
    %104 = vmatprep.subr.mxu0 0.0
    %105 = vmatpush1.xpose.msra.mxu0 0.0
    %106 = vmatprep.subr.mxu0 0.0
    %107 = vmatpush1.xpose.msra.mxu0 0.0
    %108 = vmatprep.subr.mxu0 0.0
    %109 = vmatpush1.xpose.msra.mxu0 0.0
    %110 = vmatprep.subr.mxu0 0.0
    %111 = vmatpush1.xpose.msra.mxu0 0.0
    %112 = vmatprep.subr.mxu0 0.0
    %113 = vmatpush1.xpose.msra.mxu0 0.0
    %114 = vmatprep.subr.mxu0 0.0
    %115 = vmatpush1.xpose.msra.mxu0 0.0
    %116 = vmatprep.subr.mxu0 0.0
    %117 = vmatpush1.xpose.msra.mxu0 0.0
    %118 = vmatprep.subr.mxu0 0.0
    %119 = vmatpush1.xpose.msra.mxu0 0.0
    %120 = vmatprep.subr.mxu0 0.0
    %121 = vmatpush1.xpose.msra.mxu0 0.0
    %122 = vmatprep.subr.mxu0 0.0
    %123 = vmatpush1.xpose.msra.mxu0 0.0
    %124 = vmatprep.subr.mxu0 0.0
    %125 = vmatpush1.xpose.msra.mxu0 0.0
    %126 = vmatprep.subr.mxu0 0.0
    %127 = vmatpush1.xpose.msra.mxu0 0.0
    %128 = vmatprep.subr.mxu0 0.0
    %129 = vmatpush1.xpose.msra.mxu0 0.0
    %130 = vmatprep.subr.mxu0 0.0
    %131 = vmatpush1.xpose.msra.mxu0 0.0
    %132 = vmatprep.subr.mxu0 0.0
    %133 = vmatpush1.xpose.msra.mxu0 0.0
    %134 = vmatprep.subr.mxu0 0.0
    %135 = vmatpush1.xpose.msra.mxu0 0.0
    %136 = vmatprep.mubr.f32.mxu0 0.0
    %137 = vmatmul.mubr.f32.gmra.mrb[0].mxu0 %v67
    %v138 = vpop.f32.mrb[0].mxu0
    %v139 = vadd.f32 0.0, %v138
    %v140 = vpop.f32.mrb[0].mxu0
    %141 = vdwg.mxu0
    %v143 = vsel %vm65, %v53, 0
    %v146 = vsel %vm65, %v63, 0
    %148 = vmatprep.subr.mxu0 0.0
    %149 = vmatpush1.xpose.msra.mxu0 %v146
    %150 = vmatprep.subr.mxu0 0.0
    %151 = vmatpush1.xpose.msra.mxu0 0.0
    %152 = vmatprep.subr.mxu0 0.0
    %153 = vmatpush1.xpose.msra.mxu0 0.0
    %154 = vmatprep.subr.mxu0 0.0
    %155 = vmatpush1.xpose.msra.mxu0 0.0
    %156 = vmatprep.subr.mxu0 0.0
    %157 = vmatpush1.xpose.msra.mxu0 0.0
    %158 = vmatprep.subr.mxu0 0.0
    %159 = vmatpush1.xpose.msra.mxu0 0.0
    %160 = vmatprep.subr.mxu0 0.0
    %161 = vmatpush1.xpose.msra.mxu0 0.0
    %162 = vmatprep.subr.mxu0 0.0
    %163 = vmatpush1.xpose.msra.mxu0 0.0
    %164 = vmatprep.subr.mxu0 0.0
    %165 = vmatpush1.xpose.msra.mxu0 0.0
    %166 = vmatprep.subr.mxu0 0.0
    %167 = vmatpush1.xpose.msra.mxu0 0.0
    %168 = vmatprep.subr.mxu0 0.0
    %169 = vmatpush1.xpose.msra.mxu0 0.0
    %170 = vmatprep.subr.mxu0 0.0
    %171 = vmatpush1.xpose.msra.mxu0 0.0
    %172 = vmatprep.subr.mxu0 0.0
    %173 = vmatpush1.xpose.msra.mxu0 0.0
    %174 = vmatprep.subr.mxu0 0.0
    %175 = vmatpush1.xpose.msra.mxu0 0.0
    %176 = vmatprep.subr.mxu0 0.0
    %177 = vmatpush1.xpose.msra.mxu0 0.0
    %178 = vmatprep.subr.mxu0 0.0
    %179 = vmatpush1.xpose.msra.mxu0 0.0
    %180 = vmatprep.subr.mxu0 0.0
    %181 = vmatpush1.xpose.msra.mxu0 0.0
    %182 = vmatprep.subr.mxu0 0.0
    %183 = vmatpush1.xpose.msra.mxu0 0.0
    %184 = vmatprep.subr.mxu0 0.0
    %185 = vmatpush1.xpose.msra.mxu0 0.0
    %186 = vmatprep.subr.mxu0 0.0
    %187 = vmatpush1.xpose.msra.mxu0 0.0
    %188 = vmatprep.subr.mxu0 0.0
    %189 = vmatpush1.xpose.msra.mxu0 0.0
    %190 = vmatprep.subr.mxu0 0.0
    %191 = vmatpush1.xpose.msra.mxu0 0.0
    %192 = vmatprep.subr.mxu0 0.0
    %193 = vmatpush1.xpose.msra.mxu0 0.0
    %194 = vmatprep.subr.mxu0 0.0
    %195 = vmatpush1.xpose.msra.mxu0 0.0
    %196 = vmatprep.subr.mxu0 0.0
    %197 = vmatpush1.xpose.msra.mxu0 0.0
    %198 = vmatprep.subr.mxu0 0.0
    %199 = vmatpush1.xpose.msra.mxu0 0.0
    %200 = vmatprep.subr.mxu0 0.0
    %201 = vmatpush1.xpose.msra.mxu0 0.0
    %202 = vmatprep.subr.mxu0 0.0
    %203 = vmatpush1.xpose.msra.mxu0 0.0
    %204 = vmatprep.subr.mxu0 0.0
    %205 = vmatpush1.xpose.msra.mxu0 0.0
    %206 = vmatprep.subr.mxu0 0.0
    %207 = vmatpush1.xpose.msra.mxu0 0.0
    %208 = vmatprep.subr.mxu0 0.0
    %209 = vmatpush1.xpose.msra.mxu0 0.0
    %210 = vmatprep.subr.mxu0 0.0
    %211 = vmatpush1.xpose.msra.mxu0 0.0
    %212 = vmatprep.mubr.f32.mxu0 0.0
    %213 = vmatmul.mubr.f32.gmra.mrb[0].mxu0 %v143
    %v214 = vpop.f32.mrb[0].mxu0
    %v215 = vadd.f32 0.0, %v214
    %v216 = vpop.f32.mrb[0].mxu0
    %217 = vdwg.mxu0
    %v218 = vmul.f32 %v139, 0.25
    %v219 = vmul.f32 %v215, 0.25
    %vm220 = vcmask 64512
    %v221 = vsel %vm220, %v218, -inf
    %222 = vmax.xlane.f32.xlu0 %v221
    %v223 = vpop.xlane.xlu0 %222
    %v224 = vsel %vm220, %v219, -inf
    %225 = vmax.xlane.f32.xlu0 %v224
    %v226 = vpop.xlane.xlu0 %225
    %v227 = vsub.f32 %v218, %v223
    %v228 = vsub.f32 %v219, %v226
    %v229 = vmul.f32 %v227, 1.442695
    %v230 = vpow.pop %v229
    %v231 = vmul.f32 %v228, 1.442695
    %v232 = vpow.pop %v231
    %v233 = vsel %vm220, %v230, 0.0
    %234 = vadd.xlane.f32.xlu0 %v233
    %v235 = vpop.xlane.xlu0 %234
    %v236 = vsel %vm220, %v232, 0.0
    %237 = vadd.xlane.f32.xlu0 %v236
    %v238 = vpop.xlane.xlu0 %237
    %v239 = vrcp.pop %v235
    %v240 = vrcp.pop %v238
    %v241 = vmul.f32 %v230, %v239
    %v242 = vmul.f32 %v232, %v240
    %v244 = vsel %vm220, %v241, 0
    %246 = vmatprep.subr.mxu0 0.0
    %247 = vmatpush1.msra.mxu0 %v62
    %248 = vmatprep.subr.mxu0 0.0
    %249 = vmatpush1.msra.mxu0 0.0
    %250 = vmatprep.subr.mxu0 0.0
    %251 = vmatpush1.msra.mxu0 0.0
    %252 = vmatprep.subr.mxu0 0.0
    %253 = vmatpush1.msra.mxu0 0.0
    %254 = vmatprep.subr.mxu0 0.0
    %255 = vmatpush1.msra.mxu0 0.0
    %256 = vmatprep.subr.mxu0 0.0
    %257 = vmatpush1.msra.mxu0 0.0
    %258 = vmatprep.subr.mxu0 0.0
    %259 = vmatpush1.msra.mxu0 0.0
    %260 = vmatprep.subr.mxu0 0.0
    %261 = vmatpush1.msra.mxu0 0.0
    %262 = vmatprep.subr.mxu0 0.0
    %263 = vmatpush1.msra.mxu0 0.0
    %264 = vmatprep.subr.mxu0 0.0
    %265 = vmatpush1.msra.mxu0 0.0
    %266 = vmatprep.subr.mxu0 0.0
    %267 = vmatpush1.msra.mxu0 0.0
    %268 = vmatprep.subr.mxu0 0.0
    %269 = vmatpush1.msra.mxu0 0.0
    %270 = vmatprep.subr.mxu0 0.0
    %271 = vmatpush1.msra.mxu0 0.0
    %272 = vmatprep.subr.mxu0 0.0
    %273 = vmatpush1.msra.mxu0 0.0
    %274 = vmatprep.subr.mxu0 0.0
    %275 = vmatpush1.msra.mxu0 0.0
    %276 = vmatprep.subr.mxu0 0.0
    %277 = vmatpush1.msra.mxu0 0.0
    %278 = vmatprep.subr.mxu0 0.0
    %279 = vmatpush1.msra.mxu0 0.0
    %280 = vmatprep.subr.mxu0 0.0
    %281 = vmatpush1.msra.mxu0 0.0
    %282 = vmatprep.subr.mxu0 0.0
    %283 = vmatpush1.msra.mxu0 0.0
    %284 = vmatprep.subr.mxu0 0.0
    %285 = vmatpush1.msra.mxu0 0.0
    %286 = vmatprep.subr.mxu0 0.0
    %287 = vmatpush1.msra.mxu0 0.0
    %288 = vmatprep.subr.mxu0 0.0
    %289 = vmatpush1.msra.mxu0 0.0
    %290 = vmatprep.subr.mxu0 0.0
    %291 = vmatpush1.msra.mxu0 0.0
    %292 = vmatprep.subr.mxu0 0.0
    %293 = vmatpush1.msra.mxu0 0.0
    %294 = vmatprep.subr.mxu0 0.0
    %295 = vmatpush1.msra.mxu0 0.0
    %296 = vmatprep.subr.mxu0 0.0
    %297 = vmatpush1.msra.mxu0 0.0
    %298 = vmatprep.subr.mxu0 0.0
    %299 = vmatpush1.msra.mxu0 0.0
    %300 = vmatprep.subr.mxu0 0.0
    %301 = vmatpush1.msra.mxu0 0.0
    %302 = vmatprep.subr.mxu0 0.0
    %303 = vmatpush1.msra.mxu0 0.0
    %304 = vmatprep.subr.mxu0 0.0
    %305 = vmatpush1.msra.mxu0 0.0
    %306 = vmatprep.subr.mxu0 0.0
    %307 = vmatpush1.msra.mxu0 0.0
    %308 = vmatprep.subr.mxu0 0.0
    %309 = vmatpush1.msra.mxu0 0.0
    %310 = vmatprep.mubr.f32.mxu0 0.0
    %311 = vmatmul.mubr.f32.gmra.mrb[0].mxu0 %v244
    %v312 = vpop.f32.mrb[0].mxu0
    %v313 = vadd.f32 0.0, %v312
    %v314 = vpop.f32.mrb[0].mxu0
    %315 = vdwg.mxu0
    %v317 = vsel %vm220, %v242, 0
    %319 = vmatprep.subr.mxu0 0.0
    %320 = vmatpush1.msra.mxu0 %v64
    %321 = vmatprep.subr.mxu0 0.0
    %322 = vmatpush1.msra.mxu0 0.0
    %323 = vmatprep.subr.mxu0 0.0
    %324 = vmatpush1.msra.mxu0 0.0
    %325 = vmatprep.subr.mxu0 0.0
    %326 = vmatpush1.msra.mxu0 0.0
    %327 = vmatprep.subr.mxu0 0.0
    %328 = vmatpush1.msra.mxu0 0.0
    %329 = vmatprep.subr.mxu0 0.0
    %330 = vmatpush1.msra.mxu0 0.0
    %331 = vmatprep.subr.mxu0 0.0
    %332 = vmatpush1.msra.mxu0 0.0
    %333 = vmatprep.subr.mxu0 0.0
    %334 = vmatpush1.msra.mxu0 0.0
    %335 = vmatprep.subr.mxu0 0.0
    %336 = vmatpush1.msra.mxu0 0.0
    %337 = vmatprep.subr.mxu0 0.0
    %338 = vmatpush1.msra.mxu0 0.0
    %339 = vmatprep.subr.mxu0 0.0
    %340 = vmatpush1.msra.mxu0 0.0
    %341 = vmatprep.subr.mxu0 0.0
    %342 = vmatpush1.msra.mxu0 0.0
    %343 = vmatprep.subr.mxu0 0.0
    %344 = vmatpush1.msra.mxu0 0.0
    %345 = vmatprep.subr.mxu0 0.0
    %346 = vmatpush1.msra.mxu0 0.0
    %347 = vmatprep.subr.mxu0 0.0
    %348 = vmatpush1.msra.mxu0 0.0
    %349 = vmatprep.subr.mxu0 0.0
    %350 = vmatpush1.msra.mxu0 0.0
    %351 = vmatprep.subr.mxu0 0.0
    %352 = vmatpush1.msra.mxu0 0.0
    %353 = vmatprep.subr.mxu0 0.0
    %354 = vmatpush1.msra.mxu0 0.0
    %355 = vmatprep.subr.mxu0 0.0
    %356 = vmatpush1.msra.mxu0 0.0
    %357 = vmatprep.subr.mxu0 0.0
    %358 = vmatpush1.msra.mxu0 0.0
    %359 = vmatprep.subr.mxu0 0.0
    %360 = vmatpush1.msra.mxu0 0.0
    %361 = vmatprep.subr.mxu0 0.0
    %362 = vmatpush1.msra.mxu0 0.0
    %363 = vmatprep.subr.mxu0 0.0
    %364 = vmatpush1.msra.mxu0 0.0
    %365 = vmatprep.subr.mxu0 0.0
    %366 = vmatpush1.msra.mxu0 0.0
    %367 = vmatprep.subr.mxu0 0.0
    %368 = vmatpush1.msra.mxu0 0.0
    %369 = vmatprep.subr.mxu0 0.0
    %370 = vmatpush1.msra.mxu0 0.0
    %371 = vmatprep.subr.mxu0 0.0
    %372 = vmatpush1.msra.mxu0 0.0
    %373 = vmatprep.subr.mxu0 0.0
    %374 = vmatpush1.msra.mxu0 0.0
    %375 = vmatprep.subr.mxu0 0.0
    %376 = vmatpush1.msra.mxu0 0.0
    %377 = vmatprep.subr.mxu0 0.0
    %378 = vmatpush1.msra.mxu0 0.0
    %379 = vmatprep.subr.mxu0 0.0
    %380 = vmatpush1.msra.mxu0 0.0
    %381 = vmatprep.subr.mxu0 0.0
    %382 = vmatpush1.msra.mxu0 0.0
    %383 = vmatprep.mubr.f32.mxu0 0.0
    %384 = vmatmul.mubr.f32.gmra.mrb[0].mxu0 %v317
    %v385 = vpop.f32.mrb[0].mxu0
    %v386 = vadd.f32 0.0, %v385
    %v387 = vpop.f32.mrb[0].mxu0
    %388 = vdwg.mxu0
    %389 = vst.msk [vmem:[#allocation2] sm:$0xff] %vm65, %v313
    %390 = vst.msk [vmem:[#allocation2 + $0x8] sm:$0xff] %vm65, %v386
    %391 = vrot.lane.b32.xlu0 %v61, 112
    %v392 = vpop.permute.xlu0 %391
    %v394 = vsel %vm65, %v46, 0
    %v396 = vsel %vm65, %v392, 0
    %398 = vmatprep.subr.mxu0 0.0
    %399 = vmatpush1.xpose.msra.mxu0 %v396
    %400 = vmatprep.subr.mxu0 0.0
    %401 = vmatpush1.xpose.msra.mxu0 0.0
    %402 = vmatprep.subr.mxu0 0.0
    %403 = vmatpush1.xpose.msra.mxu0 0.0
    %404 = vmatprep.subr.mxu0 0.0
    %405 = vmatpush1.xpose.msra.mxu0 0.0
    %406 = vmatprep.subr.mxu0 0.0
    %407 = vmatpush1.xpose.msra.mxu0 0.0
    %408 = vmatprep.subr.mxu0 0.0
    %409 = vmatpush1.xpose.msra.mxu0 0.0
    %410 = vmatprep.subr.mxu0 0.0
    %411 = vmatpush1.xpose.msra.mxu0 0.0
    %412 = vmatprep.subr.mxu0 0.0
    %413 = vmatpush1.xpose.msra.mxu0 0.0
    %414 = vmatprep.subr.mxu0 0.0
    %415 = vmatpush1.xpose.msra.mxu0 0.0
    %416 = vmatprep.subr.mxu0 0.0
    %417 = vmatpush1.xpose.msra.mxu0 0.0
    %418 = vmatprep.subr.mxu0 0.0
    %419 = vmatpush1.xpose.msra.mxu0 0.0
    %420 = vmatprep.subr.mxu0 0.0
    %421 = vmatpush1.xpose.msra.mxu0 0.0
    %422 = vmatprep.subr.mxu0 0.0
    %423 = vmatpush1.xpose.msra.mxu0 0.0
    %424 = vmatprep.subr.mxu0 0.0
    %425 = vmatpush1.xpose.msra.mxu0 0.0
    %426 = vmatprep.subr.mxu0 0.0
    %427 = vmatpush1.xpose.msra.mxu0 0.0
    %428 = vmatprep.subr.mxu0 0.0
    %429 = vmatpush1.xpose.msra.mxu0 0.0
    %430 = vmatprep.subr.mxu0 0.0
    %431 = vmatpush1.xpose.msra.mxu0 0.0
    %432 = vmatprep.subr.mxu0 0.0
    %433 = vmatpush1.xpose.msra.mxu0 0.0
    %434 = vmatprep.subr.mxu0 0.0
    %435 = vmatpush1.xpose.msra.mxu0 0.0
    %436 = vmatprep.subr.mxu0 0.0
    %437 = vmatpush1.xpose.msra.mxu0 0.0
    %438 = vmatprep.subr.mxu0 0.0
    %439 = vmatpush1.xpose.msra.mxu0 0.0
    %440 = vmatprep.subr.mxu0 0.0
    %441 = vmatpush1.xpose.msra.mxu0 0.0
    %442 = vmatprep.subr.mxu0 0.0
    %443 = vmatpush1.xpose.msra.mxu0 0.0
    %444 = vmatprep.subr.mxu0 0.0
    %445 = vmatpush1.xpose.msra.mxu0 0.0
    %446 = vmatprep.subr.mxu0 0.0
    %447 = vmatpush1.xpose.msra.mxu0 0.0
    %448 = vmatprep.subr.mxu0 0.0
    %449 = vmatpush1.xpose.msra.mxu0 0.0
    %450 = vmatprep.subr.mxu0 0.0
    %451 = vmatpush1.xpose.msra.mxu0 0.0
    %452 = vmatprep.subr.mxu0 0.0
    %453 = vmatpush1.xpose.msra.mxu0 0.0
    %454 = vmatprep.subr.mxu0 0.0
    %455 = vmatpush1.xpose.msra.mxu0 0.0
    %456 = vmatprep.subr.mxu0 0.0
    %457 = vmatpush1.xpose.msra.mxu0 0.0
    %458 = vmatprep.subr.mxu0 0.0
    %459 = vmatpush1.xpose.msra.mxu0 0.0
    %460 = vmatprep.subr.mxu0 0.0
    %461 = vmatpush1.xpose.msra.mxu0 0.0
    %462 = vmatprep.mubr.f32.mxu0 0.0
    %463 = vmatmul.mubr.f32.gmra.mrb[0].mxu0 %v394
    %v464 = vpop.f32.mrb[0].mxu0
    %v465 = vadd.f32 0.0, %v464
    %v466 = vpop.f32.mrb[0].mxu0
    %467 = vdwg.mxu0
    %468 = vrot.lane.b32.xlu0 %v63, 112
    %v469 = vpop.permute.xlu0 %468
    %v471 = vsel %vm65, %v54, 0
    %v473 = vsel %vm65, %v469, 0
    %475 = vmatprep.subr.mxu0 0.0
    %476 = vmatpush1.xpose.msra.mxu0 %v473
    %477 = vmatprep.subr.mxu0 0.0
    %478 = vmatpush1.xpose.msra.mxu0 0.0
    %479 = vmatprep.subr.mxu0 0.0
    %480 = vmatpush1.xpose.msra.mxu0 0.0
    %481 = vmatprep.subr.mxu0 0.0
    %482 = vmatpush1.xpose.msra.mxu0 0.0
    %483 = vmatprep.subr.mxu0 0.0
    %484 = vmatpush1.xpose.msra.mxu0 0.0
    %485 = vmatprep.subr.mxu0 0.0
    %486 = vmatpush1.xpose.msra.mxu0 0.0
    %487 = vmatprep.subr.mxu0 0.0
    %488 = vmatpush1.xpose.msra.mxu0 0.0
    %489 = vmatprep.subr.mxu0 0.0
    %490 = vmatpush1.xpose.msra.mxu0 0.0
    %491 = vmatprep.subr.mxu0 0.0
    %492 = vmatpush1.xpose.msra.mxu0 0.0
    %493 = vmatprep.subr.mxu0 0.0
    %494 = vmatpush1.xpose.msra.mxu0 0.0
    %495 = vmatprep.subr.mxu0 0.0
    %496 = vmatpush1.xpose.msra.mxu0 0.0
    %497 = vmatprep.subr.mxu0 0.0
    %498 = vmatpush1.xpose.msra.mxu0 0.0
    %499 = vmatprep.subr.mxu0 0.0
    %500 = vmatpush1.xpose.msra.mxu0 0.0
    %501 = vmatprep.subr.mxu0 0.0
    %502 = vmatpush1.xpose.msra.mxu0 0.0
    %503 = vmatprep.subr.mxu0 0.0
    %504 = vmatpush1.xpose.msra.mxu0 0.0
    %505 = vmatprep.subr.mxu0 0.0
    %506 = vmatpush1.xpose.msra.mxu0 0.0
    %507 = vmatprep.subr.mxu0 0.0
    %508 = vmatpush1.xpose.msra.mxu0 0.0
    %509 = vmatprep.subr.mxu0 0.0
    %510 = vmatpush1.xpose.msra.mxu0 0.0
    %511 = vmatprep.subr.mxu0 0.0
    %512 = vmatpush1.xpose.msra.mxu0 0.0
    %513 = vmatprep.subr.mxu0 0.0
    %514 = vmatpush1.xpose.msra.mxu0 0.0
    %515 = vmatprep.subr.mxu0 0.0
    %516 = vmatpush1.xpose.msra.mxu0 0.0
    %517 = vmatprep.subr.mxu0 0.0
    %518 = vmatpush1.xpose.msra.mxu0 0.0
    %519 = vmatprep.subr.mxu0 0.0
    %520 = vmatpush1.xpose.msra.mxu0 0.0
    %521 = vmatprep.subr.mxu0 0.0
    %522 = vmatpush1.xpose.msra.mxu0 0.0
    %523 = vmatprep.subr.mxu0 0.0
    %524 = vmatpush1.xpose.msra.mxu0 0.0
    %525 = vmatprep.subr.mxu0 0.0
    %526 = vmatpush1.xpose.msra.mxu0 0.0
    %527 = vmatprep.subr.mxu0 0.0
    %528 = vmatpush1.xpose.msra.mxu0 0.0
    %529 = vmatprep.subr.mxu0 0.0
    %530 = vmatpush1.xpose.msra.mxu0 0.0
    %531 = vmatprep.subr.mxu0 0.0
    %532 = vmatpush1.xpose.msra.mxu0 0.0
    %533 = vmatprep.subr.mxu0 0.0
    %534 = vmatpush1.xpose.msra.mxu0 0.0
    %535 = vmatprep.subr.mxu0 0.0
    %536 = vmatpush1.xpose.msra.mxu0 0.0
    %537 = vmatprep.subr.mxu0 0.0
    %538 = vmatpush1.xpose.msra.mxu0 0.0
    %539 = vmatprep.mubr.f32.mxu0 0.0
    %540 = vmatmul.mubr.f32.gmra.mrb[0].mxu0 %v471
    %v541 = vpop.f32.mrb[0].mxu0
    %v542 = vadd.f32 0.0, %v541
    %v543 = vpop.f32.mrb[0].mxu0
    %544 = vdwg.mxu0
    %v545 = vmul.f32 %v465, 0.25
    %v546 = vmul.f32 %v542, 0.25
    %v547 = vsel %vm220, %v545, -inf
    %548 = vmax.xlane.f32.xlu0 %v547
    %v549 = vpop.xlane.xlu0 %548
    %v550 = vsel %vm220, %v546, -inf
    %551 = vmax.xlane.f32.xlu0 %v550
    %v552 = vpop.xlane.xlu0 %551
    %v553 = vsub.f32 %v545, %v549
    %v554 = vsub.f32 %v546, %v552
    %v555 = vmul.f32 %v553, 1.442695
    %v556 = vpow.pop %v555
    %v557 = vmul.f32 %v554, 1.442695
    %v558 = vpow.pop %v557
    %v559 = vsel %vm220, %v556, 0.0
    %560 = vadd.xlane.f32.xlu0 %v559
    %v561 = vpop.xlane.xlu0 %560
    %v562 = vsel %vm220, %v558, 0.0
    %563 = vadd.xlane.f32.xlu0 %v562
    %v564 = vpop.xlane.xlu0 %563
    %v565 = vrcp.pop %v561
    %v566 = vrcp.pop %v564
    %v567 = vmul.f32 %v556, %v565
    %v568 = vmul.f32 %v558, %v566
    %570 = vrot.lane.b32.xlu0 %v62, 112
    %v571 = vpop.permute.xlu0 %570
    %v574 = vsel %vm220, %v567, 0
    %576 = vmatprep.subr.mxu0 0.0
    %577 = vmatpush1.msra.mxu0 %v571
    %578 = vmatprep.subr.mxu0 0.0
    %579 = vmatpush1.msra.mxu0 0.0
    %580 = vmatprep.subr.mxu0 0.0
    %581 = vmatpush1.msra.mxu0 0.0
    %582 = vmatprep.subr.mxu0 0.0
    %583 = vmatpush1.msra.mxu0 0.0
    %584 = vmatprep.subr.mxu0 0.0
    %585 = vmatpush1.msra.mxu0 0.0
    %586 = vmatprep.subr.mxu0 0.0
    %587 = vmatpush1.msra.mxu0 0.0
    %588 = vmatprep.subr.mxu0 0.0
    %589 = vmatpush1.msra.mxu0 0.0
    %590 = vmatprep.subr.mxu0 0.0
    %591 = vmatpush1.msra.mxu0 0.0
    %592 = vmatprep.subr.mxu0 0.0
    %593 = vmatpush1.msra.mxu0 0.0
    %594 = vmatprep.subr.mxu0 0.0
    %595 = vmatpush1.msra.mxu0 0.0
    %596 = vmatprep.subr.mxu0 0.0
    %597 = vmatpush1.msra.mxu0 0.0
    %598 = vmatprep.subr.mxu0 0.0
    %599 = vmatpush1.msra.mxu0 0.0
    %600 = vmatprep.subr.mxu0 0.0
    %601 = vmatpush1.msra.mxu0 0.0
    %602 = vmatprep.subr.mxu0 0.0
    %603 = vmatpush1.msra.mxu0 0.0
    %604 = vmatprep.subr.mxu0 0.0
    %605 = vmatpush1.msra.mxu0 0.0
    %606 = vmatprep.subr.mxu0 0.0
    %607 = vmatpush1.msra.mxu0 0.0
    %608 = vmatprep.subr.mxu0 0.0
    %609 = vmatpush1.msra.mxu0 0.0
    %610 = vmatprep.subr.mxu0 0.0
    %611 = vmatpush1.msra.mxu0 0.0
    %612 = vmatprep.subr.mxu0 0.0
    %613 = vmatpush1.msra.mxu0 0.0
    %614 = vmatprep.subr.mxu0 0.0
    %615 = vmatpush1.msra.mxu0 0.0
    %616 = vmatprep.subr.mxu0 0.0
    %617 = vmatpush1.msra.mxu0 0.0
    %618 = vmatprep.subr.mxu0 0.0
    %619 = vmatpush1.msra.mxu0 0.0
    %620 = vmatprep.subr.mxu0 0.0
    %621 = vmatpush1.msra.mxu0 0.0
    %622 = vmatprep.subr.mxu0 0.0
    %623 = vmatpush1.msra.mxu0 0.0
    %624 = vmatprep.subr.mxu0 0.0
    %625 = vmatpush1.msra.mxu0 0.0
    %626 = vmatprep.subr.mxu0 0.0
    %627 = vmatpush1.msra.mxu0 0.0
    %628 = vmatprep.subr.mxu0 0.0
    %629 = vmatpush1.msra.mxu0 0.0
    %630 = vmatprep.subr.mxu0 0.0
    %631 = vmatpush1.msra.mxu0 0.0
    %632 = vmatprep.subr.mxu0 0.0
    %633 = vmatpush1.msra.mxu0 0.0
    %634 = vmatprep.subr.mxu0 0.0
    %635 = vmatpush1.msra.mxu0 0.0
    %636 = vmatprep.subr.mxu0 0.0
    %637 = vmatpush1.msra.mxu0 0.0
    %638 = vmatprep.subr.mxu0 0.0
    %639 = vmatpush1.msra.mxu0 0.0
    %640 = vmatprep.mubr.f32.mxu0 0.0
    %641 = vmatmul.mubr.f32.gmra.mrb[0].mxu0 %v574
    %v642 = vpop.f32.mrb[0].mxu0
    %v643 = vadd.f32 0.0, %v642
    %v644 = vpop.f32.mrb[0].mxu0
    %645 = vdwg.mxu0
    %647 = vrot.lane.b32.xlu0 %v64, 112
    %v648 = vpop.permute.xlu0 %647
    %v651 = vsel %vm220, %v568, 0
    %653 = vmatprep.subr.mxu0 0.0
    %654 = vmatpush1.msra.mxu0 %v648
    %655 = vmatprep.subr.mxu0 0.0
    %656 = vmatpush1.msra.mxu0 0.0
    %657 = vmatprep.subr.mxu0 0.0
    %658 = vmatpush1.msra.mxu0 0.0
    %659 = vmatprep.subr.mxu0 0.0
    %660 = vmatpush1.msra.mxu0 0.0
    %661 = vmatprep.subr.mxu0 0.0
    %662 = vmatpush1.msra.mxu0 0.0
    %663 = vmatprep.subr.mxu0 0.0
    %664 = vmatpush1.msra.mxu0 0.0
    %665 = vmatprep.subr.mxu0 0.0
    %666 = vmatpush1.msra.mxu0 0.0
    %667 = vmatprep.subr.mxu0 0.0
    %668 = vmatpush1.msra.mxu0 0.0
    %669 = vmatprep.subr.mxu0 0.0
    %670 = vmatpush1.msra.mxu0 0.0
    %671 = vmatprep.subr.mxu0 0.0
    %672 = vmatpush1.msra.mxu0 0.0
    %673 = vmatprep.subr.mxu0 0.0
    %674 = vmatpush1.msra.mxu0 0.0
    %675 = vmatprep.subr.mxu0 0.0
    %676 = vmatpush1.msra.mxu0 0.0
    %677 = vmatprep.subr.mxu0 0.0
    %678 = vmatpush1.msra.mxu0 0.0
    %679 = vmatprep.subr.mxu0 0.0
    %680 = vmatpush1.msra.mxu0 0.0
    %681 = vmatprep.subr.mxu0 0.0
    %682 = vmatpush1.msra.mxu0 0.0
    %683 = vmatprep.subr.mxu0 0.0
    %684 = vmatpush1.msra.mxu0 0.0
    %685 = vmatprep.subr.mxu0 0.0
    %686 = vmatpush1.msra.mxu0 0.0
    %687 = vmatprep.subr.mxu0 0.0
    %688 = vmatpush1.msra.mxu0 0.0
    %689 = vmatprep.subr.mxu0 0.0
    %690 = vmatpush1.msra.mxu0 0.0
    %691 = vmatprep.subr.mxu0 0.0
    %692 = vmatpush1.msra.mxu0 0.0
    %693 = vmatprep.subr.mxu0 0.0
    %694 = vmatpush1.msra.mxu0 0.0
    %695 = vmatprep.subr.mxu0 0.0
    %696 = vmatpush1.msra.mxu0 0.0
    %697 = vmatprep.subr.mxu0 0.0
    %698 = vmatpush1.msra.mxu0 0.0
    %699 = vmatprep.subr.mxu0 0.0
    %700 = vmatpush1.msra.mxu0 0.0
    %701 = vmatprep.subr.mxu0 0.0
    %702 = vmatpush1.msra.mxu0 0.0
    %703 = vmatprep.subr.mxu0 0.0
    %704 = vmatpush1.msra.mxu0 0.0
    %705 = vmatprep.subr.mxu0 0.0
    %706 = vmatpush1.msra.mxu0 0.0
    %707 = vmatprep.subr.mxu0 0.0
    %708 = vmatpush1.msra.mxu0 0.0
    %709 = vmatprep.subr.mxu0 0.0
    %710 = vmatpush1.msra.mxu0 0.0
    %711 = vmatprep.subr.mxu0 0.0
    %712 = vmatpush1.msra.mxu0 0.0
    %713 = vmatprep.subr.mxu0 0.0
    %714 = vmatpush1.msra.mxu0 0.0
    %715 = vmatprep.subr.mxu0 0.0
    %716 = vmatpush1.msra.mxu0 0.0
    %717 = vmatprep.mubr.f32.mxu0 0.0
    %718 = vmatmul.mubr.f32.gmra.mrb[0].mxu0 %v651
    %v719 = vpop.f32.mrb[0].mxu0
    %v720 = vadd.f32 0.0, %v719
    %v721 = vpop.f32.mrb[0].mxu0
    %722 = vdwg.mxu0
    %725 = vrot.lane.b32.xlu0 %v643, 16
    %v726 = vpop.permute.xlu0 %725
    %727 = vrot.lane.b32.xlu0 %v720, 16
    %v728 = vpop.permute.xlu0 %727
    %vm731 = vcmask 261248
    %732 = vst.msk [vmem:[#allocation2] sm:$0xff] %vm731, %v726
    %733 = vst.msk [vmem:[#allocation2 + $0x8] sm:$0xff] %vm731, %v728
    %734 = vrot.lane.b32.xlu0 %v61, 96
    %v735 = vpop.permute.xlu0 %734
    %v737 = vsel %vm65, %v47, 0
    %v739 = vsel %vm65, %v735, 0
    %741 = vmatprep.subr.mxu0 0.0
    %742 = vmatpush1.xpose.msra.mxu0 %v739
    %743 = vmatprep.subr.mxu0 0.0
    %744 = vmatpush1.xpose.msra.mxu0 0.0
    %745 = vmatprep.subr.mxu0 0.0
    %746 = vmatpush1.xpose.msra.mxu0 0.0
    %747 = vmatprep.subr.mxu0 0.0
    %748 = vmatpush1.xpose.msra.mxu0 0.0
    %749 = vmatprep.subr.mxu0 0.0
    %750 = vmatpush1.xpose.msra.mxu0 0.0
    %751 = vmatprep.subr.mxu0 0.0
    %752 = vmatpush1.xpose.msra.mxu0 0.0
    %753 = vmatprep.subr.mxu0 0.0
    %754 = vmatpush1.xpose.msra.mxu0 0.0
    %755 = vmatprep.subr.mxu0 0.0
    %756 = vmatpush1.xpose.msra.mxu0 0.0
    %757 = vmatprep.subr.mxu0 0.0
    %758 = vmatpush1.xpose.msra.mxu0 0.0
    %759 = vmatprep.subr.mxu0 0.0
    %760 = vmatpush1.xpose.msra.mxu0 0.0
    %761 = vmatprep.subr.mxu0 0.0
    %762 = vmatpush1.xpose.msra.mxu0 0.0
    %763 = vmatprep.subr.mxu0 0.0
    %764 = vmatpush1.xpose.msra.mxu0 0.0
    %765 = vmatprep.subr.mxu0 0.0
    %766 = vmatpush1.xpose.msra.mxu0 0.0
    %767 = vmatprep.subr.mxu0 0.0
    %768 = vmatpush1.xpose.msra.mxu0 0.0
    %769 = vmatprep.subr.mxu0 0.0
    %770 = vmatpush1.xpose.msra.mxu0 0.0
    %771 = vmatprep.subr.mxu0 0.0
    %772 = vmatpush1.xpose.msra.mxu0 0.0
    %773 = vmatprep.subr.mxu0 0.0
    %774 = vmatpush1.xpose.msra.mxu0 0.0
    %775 = vmatprep.subr.mxu0 0.0
    %776 = vmatpush1.xpose.msra.mxu0 0.0
    %777 = vmatprep.subr.mxu0 0.0
    %778 = vmatpush1.xpose.msra.mxu0 0.0
    %779 = vmatprep.subr.mxu0 0.0
    %780 = vmatpush1.xpose.msra.mxu0 0.0
    %781 = vmatprep.subr.mxu0 0.0
    %782 = vmatpush1.xpose.msra.mxu0 0.0
    %783 = vmatprep.subr.mxu0 0.0
    %784 = vmatpush1.xpose.msra.mxu0 0.0
    %785 = vmatprep.subr.mxu0 0.0
    %786 = vmatpush1.xpose.msra.mxu0 0.0
    %787 = vmatprep.subr.mxu0 0.0
    %788 = vmatpush1.xpose.msra.mxu0 0.0
    %789 = vmatprep.subr.mxu0 0.0
    %790 = vmatpush1.xpose.msra.mxu0 0.0
    %791 = vmatprep.subr.mxu0 0.0
    %792 = vmatpush1.xpose.msra.mxu0 0.0
    %793 = vmatprep.subr.mxu0 0.0
    %794 = vmatpush1.xpose.msra.mxu0 0.0
    %795 = vmatprep.subr.mxu0 0.0
    %796 = vmatpush1.xpose.msra.mxu0 0.0
    %797 = vmatprep.subr.mxu0 0.0
    %798 = vmatpush1.xpose.msra.mxu0 0.0
    %799 = vmatprep.subr.mxu0 0.0
    %800 = vmatpush1.xpose.msra.mxu0 0.0
    %801 = vmatprep.subr.mxu0 0.0
    %802 = vmatpush1.xpose.msra.mxu0 0.0
    %803 = vmatprep.subr.mxu0 0.0
    %804 = vmatpush1.xpose.msra.mxu0 0.0
    %805 = vmatprep.mubr.f32.mxu0 0.0
    %806 = vmatmul.mubr.f32.gmra.mrb[0].mxu0 %v737
    %v807 = vpop.f32.mrb[0].mxu0
    %v808 = vadd.f32 0.0, %v807
    %v809 = vpop.f32.mrb[0].mxu0
    %810 = vdwg.mxu0
    %811 = vrot.lane.b32.xlu0 %v63, 96
    %v812 = vpop.permute.xlu0 %811
    %v814 = vsel %vm65, %v55, 0
    %v816 = vsel %vm65, %v812, 0
    %818 = vmatprep.subr.mxu0 0.0
    %819 = vmatpush1.xpose.msra.mxu0 %v816
    %820 = vmatprep.subr.mxu0 0.0
    %821 = vmatpush1.xpose.msra.mxu0 0.0
    %822 = vmatprep.subr.mxu0 0.0
    %823 = vmatpush1.xpose.msra.mxu0 0.0
    %824 = vmatprep.subr.mxu0 0.0
    %825 = vmatpush1.xpose.msra.mxu0 0.0
    %826 = vmatprep.subr.mxu0 0.0
    %827 = vmatpush1.xpose.msra.mxu0 0.0
    %828 = vmatprep.subr.mxu0 0.0
    %829 = vmatpush1.xpose.msra.mxu0 0.0
    %830 = vmatprep.subr.mxu0 0.0
    %831 = vmatpush1.xpose.msra.mxu0 0.0
    %832 = vmatprep.subr.mxu0 0.0
    %833 = vmatpush1.xpose.msra.mxu0 0.0
    %834 = vmatprep.subr.mxu0 0.0
    %835 = vmatpush1.xpose.msra.mxu0 0.0
    %836 = vmatprep.subr.mxu0 0.0
    %837 = vmatpush1.xpose.msra.mxu0 0.0
    %838 = vmatprep.subr.mxu0 0.0
    %839 = vmatpush1.xpose.msra.mxu0 0.0
    %840 = vmatprep.subr.mxu0 0.0
    %841 = vmatpush1.xpose.msra.mxu0 0.0
    %842 = vmatprep.subr.mxu0 0.0
    %843 = vmatpush1.xpose.msra.mxu0 0.0
    %844 = vmatprep.subr.mxu0 0.0
    %845 = vmatpush1.xpose.msra.mxu0 0.0
    %846 = vmatprep.subr.mxu0 0.0
    %847 = vmatpush1.xpose.msra.mxu0 0.0
    %848 = vmatprep.subr.mxu0 0.0
    %849 = vmatpush1.xpose.msra.mxu0 0.0
    %850 = vmatprep.subr.mxu0 0.0
    %851 = vmatpush1.xpose.msra.mxu0 0.0
    %852 = vmatprep.subr.mxu0 0.0
    %853 = vmatpush1.xpose.msra.mxu0 0.0
    %854 = vmatprep.subr.mxu0 0.0
    %855 = vmatpush1.xpose.msra.mxu0 0.0
    %856 = vmatprep.subr.mxu0 0.0
    %857 = vmatpush1.xpose.msra.mxu0 0.0
    %858 = vmatprep.subr.mxu0 0.0
    %859 = vmatpush1.xpose.msra.mxu0 0.0
    %860 = vmatprep.subr.mxu0 0.0
    %861 = vmatpush1.xpose.msra.mxu0 0.0
    %862 = vmatprep.subr.mxu0 0.0
    %863 = vmatpush1.xpose.msra.mxu0 0.0
    %864 = vmatprep.subr.mxu0 0.0
    %865 = vmatpush1.xpose.msra.mxu0 0.0
    %866 = vmatprep.subr.mxu0 0.0
    %867 = vmatpush1.xpose.msra.mxu0 0.0
    %868 = vmatprep.subr.mxu0 0.0
    %869 = vmatpush1.xpose.msra.mxu0 0.0
    %870 = vmatprep.subr.mxu0 0.0
    %871 = vmatpush1.xpose.msra.mxu0 0.0
    %872 = vmatprep.subr.mxu0 0.0
    %873 = vmatpush1.xpose.msra.mxu0 0.0
    %874 = vmatprep.subr.mxu0 0.0
    %875 = vmatpush1.xpose.msra.mxu0 0.0
    %876 = vmatprep.subr.mxu0 0.0
    %877 = vmatpush1.xpose.msra.mxu0 0.0
    %878 = vmatprep.subr.mxu0 0.0
    %879 = vmatpush1.xpose.msra.mxu0 0.0
    %880 = vmatprep.subr.mxu0 0.0
    %881 = vmatpush1.xpose.msra.mxu0 0.0
    %882 = vmatprep.mubr.f32.mxu0 0.0
    %883 = vmatmul.mubr.f32.gmra.mrb[0].mxu0 %v814
    %v884 = vpop.f32.mrb[0].mxu0
    %v885 = vadd.f32 0.0, %v884
    %v886 = vpop.f32.mrb[0].mxu0
    %887 = vdwg.mxu0
    %v888 = vmul.f32 %v808, 0.25
    %v889 = vmul.f32 %v885, 0.25
    %v890 = vsel %vm220, %v888, -inf
    %891 = vmax.xlane.f32.xlu0 %v890
    %v892 = vpop.xlane.xlu0 %891
    %v893 = vsel %vm220, %v889, -inf
    %894 = vmax.xlane.f32.xlu0 %v893
    %v895 = vpop.xlane.xlu0 %894
    %v896 = vsub.f32 %v888, %v892
    %v897 = vsub.f32 %v889, %v895
    %v898 = vmul.f32 %v896, 1.442695
    %v899 = vpow.pop %v898
    %v900 = vmul.f32 %v897, 1.442695
    %v901 = vpow.pop %v900
    %v902 = vsel %vm220, %v899, 0.0
    %903 = vadd.xlane.f32.xlu0 %v902
    %v904 = vpop.xlane.xlu0 %903
    %v905 = vsel %vm220, %v901, 0.0
    %906 = vadd.xlane.f32.xlu0 %v905
    %v907 = vpop.xlane.xlu0 %906
    %v908 = vrcp.pop %v904
    %v909 = vrcp.pop %v907
    %v910 = vmul.f32 %v899, %v908
    %v911 = vmul.f32 %v901, %v909
    %912 = vrot.lane.b32.xlu0 %v62, 96
    %v913 = vpop.permute.xlu0 %912
    %v916 = vsel %vm220, %v910, 0
    %918 = vmatprep.subr.mxu0 0.0
    %919 = vmatpush1.msra.mxu0 %v913
    %920 = vmatprep.subr.mxu0 0.0
    %921 = vmatpush1.msra.mxu0 0.0
    %922 = vmatprep.subr.mxu0 0.0
    %923 = vmatpush1.msra.mxu0 0.0
    %924 = vmatprep.subr.mxu0 0.0
    %925 = vmatpush1.msra.mxu0 0.0
    %926 = vmatprep.subr.mxu0 0.0
    %927 = vmatpush1.msra.mxu0 0.0
    %928 = vmatprep.subr.mxu0 0.0
    %929 = vmatpush1.msra.mxu0 0.0
    %930 = vmatprep.subr.mxu0 0.0
    %931 = vmatpush1.msra.mxu0 0.0
    %932 = vmatprep.subr.mxu0 0.0
    %933 = vmatpush1.msra.mxu0 0.0
    %934 = vmatprep.subr.mxu0 0.0
    %935 = vmatpush1.msra.mxu0 0.0
    %936 = vmatprep.subr.mxu0 0.0
    %937 = vmatpush1.msra.mxu0 0.0
    %938 = vmatprep.subr.mxu0 0.0
    %939 = vmatpush1.msra.mxu0 0.0
    %940 = vmatprep.subr.mxu0 0.0
    %941 = vmatpush1.msra.mxu0 0.0
    %942 = vmatprep.subr.mxu0 0.0
    %943 = vmatpush1.msra.mxu0 0.0
    %944 = vmatprep.subr.mxu0 0.0
    %945 = vmatpush1.msra.mxu0 0.0
    %946 = vmatprep.subr.mxu0 0.0
    %947 = vmatpush1.msra.mxu0 0.0
    %948 = vmatprep.subr.mxu0 0.0
    %949 = vmatpush1.msra.mxu0 0.0
    %950 = vmatprep.subr.mxu0 0.0
    %951 = vmatpush1.msra.mxu0 0.0
    %952 = vmatprep.subr.mxu0 0.0
    %953 = vmatpush1.msra.mxu0 0.0
    %954 = vmatprep.subr.mxu0 0.0
    %955 = vmatpush1.msra.mxu0 0.0
    %956 = vmatprep.subr.mxu0 0.0
    %957 = vmatpush1.msra.mxu0 0.0
    %958 = vmatprep.subr.mxu0 0.0
    %959 = vmatpush1.msra.mxu0 0.0
    %960 = vmatprep.subr.mxu0 0.0
    %961 = vmatpush1.msra.mxu0 0.0
    %962 = vmatprep.subr.mxu0 0.0
    %963 = vmatpush1.msra.mxu0 0.0
    %964 = vmatprep.subr.mxu0 0.0
    %965 = vmatpush1.msra.mxu0 0.0
    %966 = vmatprep.subr.mxu0 0.0
    %967 = vmatpush1.msra.mxu0 0.0
    %968 = vmatprep.subr.mxu0 0.0
    %969 = vmatpush1.msra.mxu0 0.0
    %970 = vmatprep.subr.mxu0 0.0
    %971 = vmatpush1.msra.mxu0 0.0
    %972 = vmatprep.subr.mxu0 0.0
    %973 = vmatpush1.msra.mxu0 0.0
    %974 = vmatprep.subr.mxu0 0.0
    %975 = vmatpush1.msra.mxu0 0.0
    %976 = vmatprep.subr.mxu0 0.0
    %977 = vmatpush1.msra.mxu0 0.0
    %978 = vmatprep.subr.mxu0 0.0
    %979 = vmatpush1.msra.mxu0 0.0
    %980 = vmatprep.subr.mxu0 0.0
    %981 = vmatpush1.msra.mxu0 0.0
    %982 = vmatprep.mubr.f32.mxu0 0.0
    %983 = vmatmul.mubr.f32.gmra.mrb[0].mxu0 %v916
    %v984 = vpop.f32.mrb[0].mxu0
    %v985 = vadd.f32 0.0, %v984
    %v986 = vpop.f32.mrb[0].mxu0
    %987 = vdwg.mxu0
    %988 = vrot.lane.b32.xlu0 %v64, 96
    %v989 = vpop.permute.xlu0 %988
    %v992 = vsel %vm220, %v911, 0
    %994 = vmatprep.subr.mxu0 0.0
    %995 = vmatpush1.msra.mxu0 %v989
    %996 = vmatprep.subr.mxu0 0.0
    %997 = vmatpush1.msra.mxu0 0.0
    %998 = vmatprep.subr.mxu0 0.0
    %999 = vmatpush1.msra.mxu0 0.0
    %1000 = vmatprep.subr.mxu0 0.0
    %1001 = vmatpush1.msra.mxu0 0.0
    %1002 = vmatprep.subr.mxu0 0.0
    %1003 = vmatpush1.msra.mxu0 0.0
    %1004 = vmatprep.subr.mxu0 0.0
    %1005 = vmatpush1.msra.mxu0 0.0
    %1006 = vmatprep.subr.mxu0 0.0
    %1007 = vmatpush1.msra.mxu0 0.0
    %1008 = vmatprep.subr.mxu0 0.0
    %1009 = vmatpush1.msra.mxu0 0.0
    %1010 = vmatprep.subr.mxu0 0.0
    %1011 = vmatpush1.msra.mxu0 0.0
    %1012 = vmatprep.subr.mxu0 0.0
    %1013 = vmatpush1.msra.mxu0 0.0
    %1014 = vmatprep.subr.mxu0 0.0
    %1015 = vmatpush1.msra.mxu0 0.0
    %1016 = vmatprep.subr.mxu0 0.0
    %1017 = vmatpush1.msra.mxu0 0.0
    %1018 = vmatprep.subr.mxu0 0.0
    %1019 = vmatpush1.msra.mxu0 0.0
    %1020 = vmatprep.subr.mxu0 0.0
    %1021 = vmatpush1.msra.mxu0 0.0
    %1022 = vmatprep.subr.mxu0 0.0
    %1023 = vmatpush1.msra.mxu0 0.0
    %1024 = vmatprep.subr.mxu0 0.0
    %1025 = vmatpush1.msra.mxu0 0.0
    %1026 = vmatprep.subr.mxu0 0.0
    %1027 = vmatpush1.msra.mxu0 0.0
    %1028 = vmatprep.subr.mxu0 0.0
    %1029 = vmatpush1.msra.mxu0 0.0
    %1030 = vmatprep.subr.mxu0 0.0
    %1031 = vmatpush1.msra.mxu0 0.0
    %1032 = vmatprep.subr.mxu0 0.0
    %1033 = vmatpush1.msra.mxu0 0.0
    %1034 = vmatprep.subr.mxu0 0.0
    %1035 = vmatpush1.msra.mxu0 0.0
    %1036 = vmatprep.subr.mxu0 0.0
    %1037 = vmatpush1.msra.mxu0 0.0
    %1038 = vmatprep.subr.mxu0 0.0
    %1039 = vmatpush1.msra.mxu0 0.0
    %1040 = vmatprep.subr.mxu0 0.0
    %1041 = vmatpush1.msra.mxu0 0.0
    %1042 = vmatprep.subr.mxu0 0.0
    %1043 = vmatpush1.msra.mxu0 0.0
    %1044 = vmatprep.subr.mxu0 0.0
    %1045 = vmatpush1.msra.mxu0 0.0
    %1046 = vmatprep.subr.mxu0 0.0
    %1047 = vmatpush1.msra.mxu0 0.0
    %1048 = vmatprep.subr.mxu0 0.0
    %1049 = vmatpush1.msra.mxu0 0.0
    %1050 = vmatprep.subr.mxu0 0.0
    %1051 = vmatpush1.msra.mxu0 0.0
    %1052 = vmatprep.subr.mxu0 0.0
    %1053 = vmatpush1.msra.mxu0 0.0
    %1054 = vmatprep.subr.mxu0 0.0
    %1055 = vmatpush1.msra.mxu0 0.0
    %1056 = vmatprep.subr.mxu0 0.0
    %1057 = vmatpush1.msra.mxu0 0.0
    %1058 = vmatprep.mubr.f32.mxu0 0.0
    %1059 = vmatmul.mubr.f32.gmra.mrb[0].mxu0 %v992
    %v1060 = vpop.f32.mrb[0].mxu0
    %v1061 = vadd.f32 0.0, %v1060
    %v1062 = vpop.f32.mrb[0].mxu0
    %1063 = vdwg.mxu0
    %1066 = vrot.lane.b32.xlu0 %v985, 32
    %v1067 = vpop.permute.xlu0 %1066
    %1068 = vrot.lane.b32.xlu0 %v1061, 32
    %v1069 = vpop.permute.xlu0 %1068
    %vm1072 = vcmask 392448
    %1073 = vst.msk [vmem:[#allocation2] sm:$0xff] %vm1072, %v1067
    %1074 = vst.msk [vmem:[#allocation2 + $0x8] sm:$0xff] %vm1072, %v1069
    %1075 = vrot.lane.b32.xlu0 %v61, 80
    %v1076 = vpop.permute.xlu0 %1075
    %v1078 = vsel %vm65, %v48, 0
    %v1080 = vsel %vm65, %v1076, 0
    %1082 = vmatprep.subr.mxu0 0.0
    %1083 = vmatpush1.xpose.msra.mxu0 %v1080
    %1084 = vmatprep.subr.mxu0 0.0
    %1085 = vmatpush1.xpose.msra.mxu0 0.0
    %1086 = vmatprep.subr.mxu0 0.0
    %1087 = vmatpush1.xpose.msra.mxu0 0.0
    %1088 = vmatprep.subr.mxu0 0.0
    %1089 = vmatpush1.xpose.msra.mxu0 0.0
    %1090 = vmatprep.subr.mxu0 0.0
    %1091 = vmatpush1.xpose.msra.mxu0 0.0
    %1092 = vmatprep.subr.mxu0 0.0
    %1093 = vmatpush1.xpose.msra.mxu0 0.0
    %1094 = vmatprep.subr.mxu0 0.0
    %1095 = vmatpush1.xpose.msra.mxu0 0.0
    %1096 = vmatprep.subr.mxu0 0.0
    %1097 = vmatpush1.xpose.msra.mxu0 0.0
    %1098 = vmatprep.subr.mxu0 0.0
    %1099 = vmatpush1.xpose.msra.mxu0 0.0
    %1100 = vmatprep.subr.mxu0 0.0
    %1101 = vmatpush1.xpose.msra.mxu0 0.0
    %1102 = vmatprep.subr.mxu0 0.0
    %1103 = vmatpush1.xpose.msra.mxu0 0.0
    %1104 = vmatprep.subr.mxu0 0.0
    %1105 = vmatpush1.xpose.msra.mxu0 0.0
    %1106 = vmatprep.subr.mxu0 0.0
    %1107 = vmatpush1.xpose.msra.mxu0 0.0
    %1108 = vmatprep.subr.mxu0 0.0
    %1109 = vmatpush1.xpose.msra.mxu0 0.0
    %1110 = vmatprep.subr.mxu0 0.0
    %1111 = vmatpush1.xpose.msra.mxu0 0.0
    %1112 = vmatprep.subr.mxu0 0.0
    %1113 = vmatpush1.xpose.msra.mxu0 0.0
    %1114 = vmatprep.subr.mxu0 0.0
    %1115 = vmatpush1.xpose.msra.mxu0 0.0
    %1116 = vmatprep.subr.mxu0 0.0
    %1117 = vmatpush1.xpose.msra.mxu0 0.0
    %1118 = vmatprep.subr.mxu0 0.0
    %1119 = vmatpush1.xpose.msra.mxu0 0.0
    %1120 = vmatprep.subr.mxu0 0.0
    %1121 = vmatpush1.xpose.msra.mxu0 0.0
    %1122 = vmatprep.subr.mxu0 0.0
    %1123 = vmatpush1.xpose.msra.mxu0 0.0
    %1124 = vmatprep.subr.mxu0 0.0
    %1125 = vmatpush1.xpose.msra.mxu0 0.0
    %1126 = vmatprep.subr.mxu0 0.0
    %1127 = vmatpush1.xpose.msra.mxu0 0.0
    %1128 = vmatprep.subr.mxu0 0.0
    %1129 = vmatpush1.xpose.msra.mxu0 0.0
    %1130 = vmatprep.subr.mxu0 0.0
    %1131 = vmatpush1.xpose.msra.mxu0 0.0
    %1132 = vmatprep.subr.mxu0 0.0
    %1133 = vmatpush1.xpose.msra.mxu0 0.0
    %1134 = vmatprep.subr.mxu0 0.0
    %1135 = vmatpush1.xpose.msra.mxu0 0.0
    %1136 = vmatprep.subr.mxu0 0.0
    %1137 = vmatpush1.xpose.msra.mxu0 0.0
    %1138 = vmatprep.subr.mxu0 0.0
    %1139 = vmatpush1.xpose.msra.mxu0 0.0
    %1140 = vmatprep.subr.mxu0 0.0
    %1141 = vmatpush1.xpose.msra.mxu0 0.0
    %1142 = vmatprep.subr.mxu0 0.0
    %1143 = vmatpush1.xpose.msra.mxu0 0.0
    %1144 = vmatprep.subr.mxu0 0.0
    %1145 = vmatpush1.xpose.msra.mxu0 0.0
    %1146 = vmatprep.mubr.f32.mxu0 0.0
    %1147 = vmatmul.mubr.f32.gmra.mrb[0].mxu0 %v1078
    %v1148 = vpop.f32.mrb[0].mxu0
    %v1149 = vadd.f32 0.0, %v1148
    %v1150 = vpop.f32.mrb[0].mxu0
    %1151 = vdwg.mxu0
    %1152 = vrot.lane.b32.xlu0 %v63, 80
    %v1153 = vpop.permute.xlu0 %1152
    %v1155 = vsel %vm65, %v56, 0
    %v1157 = vsel %vm65, %v1153, 0
    %1159 = vmatprep.subr.mxu0 0.0
    %1160 = vmatpush1.xpose.msra.mxu0 %v1157
    %1161 = vmatprep.subr.mxu0 0.0
    %1162 = vmatpush1.xpose.msra.mxu0 0.0
    %1163 = vmatprep.subr.mxu0 0.0
    %1164 = vmatpush1.xpose.msra.mxu0 0.0
    %1165 = vmatprep.subr.mxu0 0.0
    %1166 = vmatpush1.xpose.msra.mxu0 0.0
    %1167 = vmatprep.subr.mxu0 0.0
    %1168 = vmatpush1.xpose.msra.mxu0 0.0
    %1169 = vmatprep.subr.mxu0 0.0
    %1170 = vmatpush1.xpose.msra.mxu0 0.0
    %1171 = vmatprep.subr.mxu0 0.0
    %1172 = vmatpush1.xpose.msra.mxu0 0.0
    %1173 = vmatprep.subr.mxu0 0.0
    %1174 = vmatpush1.xpose.msra.mxu0 0.0
    %1175 = vmatprep.subr.mxu0 0.0
    %1176 = vmatpush1.xpose.msra.mxu0 0.0
    %1177 = vmatprep.subr.mxu0 0.0
    %1178 = vmatpush1.xpose.msra.mxu0 0.0
    %1179 = vmatprep.subr.mxu0 0.0
    %1180 = vmatpush1.xpose.msra.mxu0 0.0
    %1181 = vmatprep.subr.mxu0 0.0
    %1182 = vmatpush1.xpose.msra.mxu0 0.0
    %1183 = vmatprep.subr.mxu0 0.0
    %1184 = vmatpush1.xpose.msra.mxu0 0.0
    %1185 = vmatprep.subr.mxu0 0.0
    %1186 = vmatpush1.xpose.msra.mxu0 0.0
    %1187 = vmatprep.subr.mxu0 0.0
    %1188 = vmatpush1.xpose.msra.mxu0 0.0
    %1189 = vmatprep.subr.mxu0 0.0
    %1190 = vmatpush1.xpose.msra.mxu0 0.0
    %1191 = vmatprep.subr.mxu0 0.0
    %1192 = vmatpush1.xpose.msra.mxu0 0.0
    %1193 = vmatprep.subr.mxu0 0.0
    %1194 = vmatpush1.xpose.msra.mxu0 0.0
    %1195 = vmatprep.subr.mxu0 0.0
    %1196 = vmatpush1.xpose.msra.mxu0 0.0
    %1197 = vmatprep.subr.mxu0 0.0
    %1198 = vmatpush1.xpose.msra.mxu0 0.0
    %1199 = vmatprep.subr.mxu0 0.0
    %1200 = vmatpush1.xpose.msra.mxu0 0.0
    %1201 = vmatprep.subr.mxu0 0.0
    %1202 = vmatpush1.xpose.msra.mxu0 0.0
    %1203 = vmatprep.subr.mxu0 0.0
    %1204 = vmatpush1.xpose.msra.mxu0 0.0
    %1205 = vmatprep.subr.mxu0 0.0
    %1206 = vmatpush1.xpose.msra.mxu0 0.0
    %1207 = vmatprep.subr.mxu0 0.0
    %1208 = vmatpush1.xpose.msra.mxu0 0.0
    %1209 = vmatprep.subr.mxu0 0.0
    %1210 = vmatpush1.xpose.msra.mxu0 0.0
    %1211 = vmatprep.subr.mxu0 0.0
    %1212 = vmatpush1.xpose.msra.mxu0 0.0
    %1213 = vmatprep.subr.mxu0 0.0
    %1214 = vmatpush1.xpose.msra.mxu0 0.0
    %1215 = vmatprep.subr.mxu0 0.0
    %1216 = vmatpush1.xpose.msra.mxu0 0.0
    %1217 = vmatprep.subr.mxu0 0.0
    %1218 = vmatpush1.xpose.msra.mxu0 0.0
    %1219 = vmatprep.subr.mxu0 0.0
    %1220 = vmatpush1.xpose.msra.mxu0 0.0
    %1221 = vmatprep.subr.mxu0 0.0
    %1222 = vmatpush1.xpose.msra.mxu0 0.0
    %1223 = vmatprep.mubr.f32.mxu0 0.0
    %1224 = vmatmul.mubr.f32.gmra.mrb[0].mxu0 %v1155
    %v1225 = vpop.f32.mrb[0].mxu0
    %v1226 = vadd.f32 0.0, %v1225
    %v1227 = vpop.f32.mrb[0].mxu0
    %1228 = vdwg.mxu0
    %v1229 = vmul.f32 %v1149, 0.25
    %v1230 = vmul.f32 %v1226, 0.25
    %v1231 = vsel %vm220, %v1229, -inf
    %1232 = vmax.xlane.f32.xlu0 %v1231
    %v1233 = vpop.xlane.xlu0 %1232
    %v1234 = vsel %vm220, %v1230, -inf
    %1235 = vmax.xlane.f32.xlu0 %v1234
    %v1236 = vpop.xlane.xlu0 %1235
    %v1237 = vsub.f32 %v1229, %v1233
    %v1238 = vsub.f32 %v1230, %v1236
    %v1239 = vmul.f32 %v1237, 1.442695
    %v1240 = vpow.pop %v1239
    %v1241 = vmul.f32 %v1238, 1.442695
    %v1242 = vpow.pop %v1241
    %v1243 = vsel %vm220, %v1240, 0.0
    %1244 = vadd.xlane.f32.xlu0 %v1243
    %v1245 = vpop.xlane.xlu0 %1244
    %v1246 = vsel %vm220, %v1242, 0.0
    %1247 = vadd.xlane.f32.xlu0 %v1246
    %v1248 = vpop.xlane.xlu0 %1247
    %v1249 = vrcp.pop %v1245
    %v1250 = vrcp.pop %v1248
    %v1251 = vmul.f32 %v1240, %v1249
    %v1252 = vmul.f32 %v1242, %v1250
    %1253 = vrot.lane.b32.xlu0 %v62, 80
    %v1254 = vpop.permute.xlu0 %1253
    %v1257 = vsel %vm220, %v1251, 0
    %1259 = vmatprep.subr.mxu0 0.0
    %1260 = vmatpush1.msra.mxu0 %v1254
    %1261 = vmatprep.subr.mxu0 0.0
    %1262 = vmatpush1.msra.mxu0 0.0
    %1263 = vmatprep.subr.mxu0 0.0
    %1264 = vmatpush1.msra.mxu0 0.0
    %1265 = vmatprep.subr.mxu0 0.0
    %1266 = vmatpush1.msra.mxu0 0.0
    %1267 = vmatprep.subr.mxu0 0.0
    %1268 = vmatpush1.msra.mxu0 0.0
    %1269 = vmatprep.subr.mxu0 0.0
    %1270 = vmatpush1.msra.mxu0 0.0
    %1271 = vmatprep.subr.mxu0 0.0
    %1272 = vmatpush1.msra.mxu0 0.0
    %1273 = vmatprep.subr.mxu0 0.0
    %1274 = vmatpush1.msra.mxu0 0.0
    %1275 = vmatprep.subr.mxu0 0.0
    %1276 = vmatpush1.msra.mxu0 0.0
    %1277 = vmatprep.subr.mxu0 0.0
    %1278 = vmatpush1.msra.mxu0 0.0
    %1279 = vmatprep.subr.mxu0 0.0
    %1280 = vmatpush1.msra.mxu0 0.0
    %1281 = vmatprep.subr.mxu0 0.0
    %1282 = vmatpush1.msra.mxu0 0.0
    %1283 = vmatprep.subr.mxu0 0.0
    %1284 = vmatpush1.msra.mxu0 0.0
    %1285 = vmatprep.subr.mxu0 0.0
    %1286 = vmatpush1.msra.mxu0 0.0
    %1287 = vmatprep.subr.mxu0 0.0
    %1288 = vmatpush1.msra.mxu0 0.0
    %1289 = vmatprep.subr.mxu0 0.0
    %1290 = vmatpush1.msra.mxu0 0.0
    %1291 = vmatprep.subr.mxu0 0.0
    %1292 = vmatpush1.msra.mxu0 0.0
    %1293 = vmatprep.subr.mxu0 0.0
    %1294 = vmatpush1.msra.mxu0 0.0
    %1295 = vmatprep.subr.mxu0 0.0
    %1296 = vmatpush1.msra.mxu0 0.0
    %1297 = vmatprep.subr.mxu0 0.0
    %1298 = vmatpush1.msra.mxu0 0.0
    %1299 = vmatprep.subr.mxu0 0.0
    %1300 = vmatpush1.msra.mxu0 0.0
    %1301 = vmatprep.subr.mxu0 0.0
    %1302 = vmatpush1.msra.mxu0 0.0
    %1303 = vmatprep.subr.mxu0 0.0
    %1304 = vmatpush1.msra.mxu0 0.0
    %1305 = vmatprep.subr.mxu0 0.0
    %1306 = vmatpush1.msra.mxu0 0.0
    %1307 = vmatprep.subr.mxu0 0.0
    %1308 = vmatpush1.msra.mxu0 0.0
    %1309 = vmatprep.subr.mxu0 0.0
    %1310 = vmatpush1.msra.mxu0 0.0
    %1311 = vmatprep.subr.mxu0 0.0
    %1312 = vmatpush1.msra.mxu0 0.0
    %1313 = vmatprep.subr.mxu0 0.0
    %1314 = vmatpush1.msra.mxu0 0.0
    %1315 = vmatprep.subr.mxu0 0.0
    %1316 = vmatpush1.msra.mxu0 0.0
    %1317 = vmatprep.subr.mxu0 0.0
    %1318 = vmatpush1.msra.mxu0 0.0
    %1319 = vmatprep.subr.mxu0 0.0
    %1320 = vmatpush1.msra.mxu0 0.0
    %1321 = vmatprep.subr.mxu0 0.0
    %1322 = vmatpush1.msra.mxu0 0.0
    %1323 = vmatprep.mubr.f32.mxu0 0.0
    %1324 = vmatmul.mubr.f32.gmra.mrb[0].mxu0 %v1257
    %v1325 = vpop.f32.mrb[0].mxu0
    %v1326 = vadd.f32 0.0, %v1325
    %v1327 = vpop.f32.mrb[0].mxu0
    %1328 = vdwg.mxu0
    %1329 = vrot.lane.b32.xlu0 %v64, 80
    %v1330 = vpop.permute.xlu0 %1329
    %v1333 = vsel %vm220, %v1252, 0
    %1335 = vmatprep.subr.mxu0 0.0
    %1336 = vmatpush1.msra.mxu0 %v1330
    %1337 = vmatprep.subr.mxu0 0.0
    %1338 = vmatpush1.msra.mxu0 0.0
    %1339 = vmatprep.subr.mxu0 0.0
    %1340 = vmatpush1.msra.mxu0 0.0
    %1341 = vmatprep.subr.mxu0 0.0
    %1342 = vmatpush1.msra.mxu0 0.0
    %1343 = vmatprep.subr.mxu0 0.0
    %1344 = vmatpush1.msra.mxu0 0.0
    %1345 = vmatprep.subr.mxu0 0.0
    %1346 = vmatpush1.msra.mxu0 0.0
    %1347 = vmatprep.subr.mxu0 0.0
    %1348 = vmatpush1.msra.mxu0 0.0
    %1349 = vmatprep.subr.mxu0 0.0
    %1350 = vmatpush1.msra.mxu0 0.0
    %1351 = vmatprep.subr.mxu0 0.0
    %1352 = vmatpush1.msra.mxu0 0.0
    %1353 = vmatprep.subr.mxu0 0.0
    %1354 = vmatpush1.msra.mxu0 0.0
    %1355 = vmatprep.subr.mxu0 0.0
    %1356 = vmatpush1.msra.mxu0 0.0
    %1357 = vmatprep.subr.mxu0 0.0
    %1358 = vmatpush1.msra.mxu0 0.0
    %1359 = vmatprep.subr.mxu0 0.0
    %1360 = vmatpush1.msra.mxu0 0.0
    %1361 = vmatprep.subr.mxu0 0.0
    %1362 = vmatpush1.msra.mxu0 0.0
    %1363 = vmatprep.subr.mxu0 0.0
    %1364 = vmatpush1.msra.mxu0 0.0
    %1365 = vmatprep.subr.mxu0 0.0
    %1366 = vmatpush1.msra.mxu0 0.0
    %1367 = vmatprep.subr.mxu0 0.0
    %1368 = vmatpush1.msra.mxu0 0.0
    %1369 = vmatprep.subr.mxu0 0.0
    %1370 = vmatpush1.msra.mxu0 0.0
    %1371 = vmatprep.subr.mxu0 0.0
    %1372 = vmatpush1.msra.mxu0 0.0
    %1373 = vmatprep.subr.mxu0 0.0
    %1374 = vmatpush1.msra.mxu0 0.0
    %1375 = vmatprep.subr.mxu0 0.0
    %1376 = vmatpush1.msra.mxu0 0.0
    %1377 = vmatprep.subr.mxu0 0.0
    %1378 = vmatpush1.msra.mxu0 0.0
    %1379 = vmatprep.subr.mxu0 0.0
    %1380 = vmatpush1.msra.mxu0 0.0
    %1381 = vmatprep.subr.mxu0 0.0
    %1382 = vmatpush1.msra.mxu0 0.0
    %1383 = vmatprep.subr.mxu0 0.0
    %1384 = vmatpush1.msra.mxu0 0.0
    %1385 = vmatprep.subr.mxu0 0.0
    %1386 = vmatpush1.msra.mxu0 0.0
    %1387 = vmatprep.subr.mxu0 0.0
    %1388 = vmatpush1.msra.mxu0 0.0
    %1389 = vmatprep.subr.mxu0 0.0
    %1390 = vmatpush1.msra.mxu0 0.0
    %1391 = vmatprep.subr.mxu0 0.0
    %1392 = vmatpush1.msra.mxu0 0.0
    %1393 = vmatprep.subr.mxu0 0.0
    %1394 = vmatpush1.msra.mxu0 0.0
    %1395 = vmatprep.subr.mxu0 0.0
    %1396 = vmatpush1.msra.mxu0 0.0
    %1397 = vmatprep.subr.mxu0 0.0
    %1398 = vmatpush1.msra.mxu0 0.0
    %1399 = vmatprep.mubr.f32.mxu0 0.0
    %1400 = vmatmul.mubr.f32.gmra.mrb[0].mxu0 %v1333
    %v1401 = vpop.f32.mrb[0].mxu0
    %v1402 = vadd.f32 0.0, %v1401
    %v1403 = vpop.f32.mrb[0].mxu0
    %1404 = vdwg.mxu0
    %1407 = vrot.lane.b32.xlu0 %v1326, 48
    %v1408 = vpop.permute.xlu0 %1407
    %1409 = vrot.lane.b32.xlu0 %v1402, 48
    %v1410 = vpop.permute.xlu0 %1409
    %vm1413 = vcmask 523648
    %1414 = vst.msk [vmem:[#allocation2] sm:$0xff] %vm1413, %v1408
    %1415 = vst.msk [vmem:[#allocation2 + $0x8] sm:$0xff] %vm1413, %v1410
    %1416 = vrot.lane.b32.xlu0 %v61, 64
    %v1417 = vpop.permute.xlu0 %1416
    %v1419 = vsel %vm65, %v49, 0
    %v1421 = vsel %vm65, %v1417, 0
    %1423 = vmatprep.subr.mxu0 0.0
    %1424 = vmatpush1.xpose.msra.mxu0 %v1421
    %1425 = vmatprep.subr.mxu0 0.0
    %1426 = vmatpush1.xpose.msra.mxu0 0.0
    %1427 = vmatprep.subr.mxu0 0.0
    %1428 = vmatpush1.xpose.msra.mxu0 0.0
    %1429 = vmatprep.subr.mxu0 0.0
    %1430 = vmatpush1.xpose.msra.mxu0 0.0
    %1431 = vmatprep.subr.mxu0 0.0
    %1432 = vmatpush1.xpose.msra.mxu0 0.0
    %1433 = vmatprep.subr.mxu0 0.0
    %1434 = vmatpush1.xpose.msra.mxu0 0.0
    %1435 = vmatprep.subr.mxu0 0.0
    %1436 = vmatpush1.xpose.msra.mxu0 0.0
    %1437 = vmatprep.subr.mxu0 0.0
    %1438 = vmatpush1.xpose.msra.mxu0 0.0
    %1439 = vmatprep.subr.mxu0 0.0
    %1440 = vmatpush1.xpose.msra.mxu0 0.0
    %1441 = vmatprep.subr.mxu0 0.0
    %1442 = vmatpush1.xpose.msra.mxu0 0.0
    %1443 = vmatprep.subr.mxu0 0.0
    %1444 = vmatpush1.xpose.msra.mxu0 0.0
    %1445 = vmatprep.subr.mxu0 0.0
    %1446 = vmatpush1.xpose.msra.mxu0 0.0
    %1447 = vmatprep.subr.mxu0 0.0
    %1448 = vmatpush1.xpose.msra.mxu0 0.0
    %1449 = vmatprep.subr.mxu0 0.0
    %1450 = vmatpush1.xpose.msra.mxu0 0.0
    %1451 = vmatprep.subr.mxu0 0.0
    %1452 = vmatpush1.xpose.msra.mxu0 0.0
    %1453 = vmatprep.subr.mxu0 0.0
    %1454 = vmatpush1.xpose.msra.mxu0 0.0
    %1455 = vmatprep.subr.mxu0 0.0
    %1456 = vmatpush1.xpose.msra.mxu0 0.0
    %1457 = vmatprep.subr.mxu0 0.0
    %1458 = vmatpush1.xpose.msra.mxu0 0.0
    %1459 = vmatprep.subr.mxu0 0.0
    %1460 = vmatpush1.xpose.msra.mxu0 0.0
    %1461 = vmatprep.subr.mxu0 0.0
    %1462 = vmatpush1.xpose.msra.mxu0 0.0
    %1463 = vmatprep.subr.mxu0 0.0
    %1464 = vmatpush1.xpose.msra.mxu0 0.0
    %1465 = vmatprep.subr.mxu0 0.0
    %1466 = vmatpush1.xpose.msra.mxu0 0.0
    %1467 = vmatprep.subr.mxu0 0.0
    %1468 = vmatpush1.xpose.msra.mxu0 0.0
    %1469 = vmatprep.subr.mxu0 0.0
    %1470 = vmatpush1.xpose.msra.mxu0 0.0
    %1471 = vmatprep.subr.mxu0 0.0
    %1472 = vmatpush1.xpose.msra.mxu0 0.0
    %1473 = vmatprep.subr.mxu0 0.0
    %1474 = vmatpush1.xpose.msra.mxu0 0.0
    %1475 = vmatprep.subr.mxu0 0.0
    %1476 = vmatpush1.xpose.msra.mxu0 0.0
    %1477 = vmatprep.subr.mxu0 0.0
    %1478 = vmatpush1.xpose.msra.mxu0 0.0
    %1479 = vmatprep.subr.mxu0 0.0
    %1480 = vmatpush1.xpose.msra.mxu0 0.0
    %1481 = vmatprep.subr.mxu0 0.0
    %1482 = vmatpush1.xpose.msra.mxu0 0.0
    %1483 = vmatprep.subr.mxu0 0.0
    %1484 = vmatpush1.xpose.msra.mxu0 0.0
    %1485 = vmatprep.subr.mxu0 0.0
    %1486 = vmatpush1.xpose.msra.mxu0 0.0
    %1487 = vmatprep.mubr.f32.mxu0 0.0
    %1488 = vmatmul.mubr.f32.gmra.mrb[0].mxu0 %v1419
    %v1489 = vpop.f32.mrb[0].mxu0
    %v1490 = vadd.f32 0.0, %v1489
    %v1491 = vpop.f32.mrb[0].mxu0
    %1492 = vdwg.mxu0
    %1493 = vrot.lane.b32.xlu0 %v63, 64
    %v1494 = vpop.permute.xlu0 %1493
    %v1496 = vsel %vm65, %v57, 0
    %v1498 = vsel %vm65, %v1494, 0
    %1500 = vmatprep.subr.mxu0 0.0
    %1501 = vmatpush1.xpose.msra.mxu0 %v1498
    %1502 = vmatprep.subr.mxu0 0.0
    %1503 = vmatpush1.xpose.msra.mxu0 0.0
    %1504 = vmatprep.subr.mxu0 0.0
    %1505 = vmatpush1.xpose.msra.mxu0 0.0
    %1506 = vmatprep.subr.mxu0 0.0
    %1507 = vmatpush1.xpose.msra.mxu0 0.0
    %1508 = vmatprep.subr.mxu0 0.0
    %1509 = vmatpush1.xpose.msra.mxu0 0.0
    %1510 = vmatprep.subr.mxu0 0.0
    %1511 = vmatpush1.xpose.msra.mxu0 0.0
    %1512 = vmatprep.subr.mxu0 0.0
    %1513 = vmatpush1.xpose.msra.mxu0 0.0
    %1514 = vmatprep.subr.mxu0 0.0
    %1515 = vmatpush1.xpose.msra.mxu0 0.0
    %1516 = vmatprep.subr.mxu0 0.0
    %1517 = vmatpush1.xpose.msra.mxu0 0.0
    %1518 = vmatprep.subr.mxu0 0.0
    %1519 = vmatpush1.xpose.msra.mxu0 0.0
    %1520 = vmatprep.subr.mxu0 0.0
    %1521 = vmatpush1.xpose.msra.mxu0 0.0
    %1522 = vmatprep.subr.mxu0 0.0
    %1523 = vmatpush1.xpose.msra.mxu0 0.0
    %1524 = vmatprep.subr.mxu0 0.0
    %1525 = vmatpush1.xpose.msra.mxu0 0.0
    %1526 = vmatprep.subr.mxu0 0.0
    %1527 = vmatpush1.xpose.msra.mxu0 0.0
    %1528 = vmatprep.subr.mxu0 0.0
    %1529 = vmatpush1.xpose.msra.mxu0 0.0
    %1530 = vmatprep.subr.mxu0 0.0
    %1531 = vmatpush1.xpose.msra.mxu0 0.0
    %1532 = vmatprep.subr.mxu0 0.0
    %1533 = vmatpush1.xpose.msra.mxu0 0.0
    %1534 = vmatprep.subr.mxu0 0.0
    %1535 = vmatpush1.xpose.msra.mxu0 0.0
    %1536 = vmatprep.subr.mxu0 0.0
    %1537 = vmatpush1.xpose.msra.mxu0 0.0
    %1538 = vmatprep.subr.mxu0 0.0
    %1539 = vmatpush1.xpose.msra.mxu0 0.0
    %1540 = vmatprep.subr.mxu0 0.0
    %1541 = vmatpush1.xpose.msra.mxu0 0.0
    %1542 = vmatprep.subr.mxu0 0.0
    %1543 = vmatpush1.xpose.msra.mxu0 0.0
    %1544 = vmatprep.subr.mxu0 0.0
    %1545 = vmatpush1.xpose.msra.mxu0 0.0
    %1546 = vmatprep.subr.mxu0 0.0
    %1547 = vmatpush1.xpose.msra.mxu0 0.0
    %1548 = vmatprep.subr.mxu0 0.0
    %1549 = vmatpush1.xpose.msra.mxu0 0.0
    %1550 = vmatprep.subr.mxu0 0.0
    %1551 = vmatpush1.xpose.msra.mxu0 0.0
    %1552 = vmatprep.subr.mxu0 0.0
    %1553 = vmatpush1.xpose.msra.mxu0 0.0
    %1554 = vmatprep.subr.mxu0 0.0
    %1555 = vmatpush1.xpose.msra.mxu0 0.0
    %1556 = vmatprep.subr.mxu0 0.0
    %1557 = vmatpush1.xpose.msra.mxu0 0.0
    %1558 = vmatprep.subr.mxu0 0.0
    %1559 = vmatpush1.xpose.msra.mxu0 0.0
    %1560 = vmatprep.subr.mxu0 0.0
    %1561 = vmatpush1.xpose.msra.mxu0 0.0
    %1562 = vmatprep.subr.mxu0 0.0
    %1563 = vmatpush1.xpose.msra.mxu0 0.0
    %1564 = vmatprep.mubr.f32.mxu0 0.0
    %1565 = vmatmul.mubr.f32.gmra.mrb[0].mxu0 %v1496
    %v1566 = vpop.f32.mrb[0].mxu0
    %v1567 = vadd.f32 0.0, %v1566
    %v1568 = vpop.f32.mrb[0].mxu0
    %1569 = vdwg.mxu0
    %v1570 = vmul.f32 %v1490, 0.25
    %v1571 = vmul.f32 %v1567, 0.25
    %v1572 = vsel %vm220, %v1570, -inf
    %1573 = vmax.xlane.f32.xlu0 %v1572
    %v1574 = vpop.xlane.xlu0 %1573
    %v1575 = vsel %vm220, %v1571, -inf
    %1576 = vmax.xlane.f32.xlu0 %v1575
    %v1577 = vpop.xlane.xlu0 %1576
    %v1578 = vsub.f32 %v1570, %v1574
    %v1579 = vsub.f32 %v1571, %v1577
    %v1580 = vmul.f32 %v1578, 1.442695
    %v1581 = vpow.pop %v1580
    %v1582 = vmul.f32 %v1579, 1.442695
    %v1583 = vpow.pop %v1582
    %v1584 = vsel %vm220, %v1581, 0.0
    %1585 = vadd.xlane.f32.xlu0 %v1584
    %v1586 = vpop.xlane.xlu0 %1585
    %v1587 = vsel %vm220, %v1583, 0.0
    %1588 = vadd.xlane.f32.xlu0 %v1587
    %v1589 = vpop.xlane.xlu0 %1588
    %v1590 = vrcp.pop %v1586
    %v1591 = vrcp.pop %v1589
    %v1592 = vmul.f32 %v1581, %v1590
    %v1593 = vmul.f32 %v1583, %v1591
    %1594 = vrot.lane.b32.xlu0 %v62, 64
    %v1595 = vpop.permute.xlu0 %1594
    %v1598 = vsel %vm220, %v1592, 0
    %1600 = vmatprep.subr.mxu0 0.0
    %1601 = vmatpush1.msra.mxu0 %v1595
    %1602 = vmatprep.subr.mxu0 0.0
    %1603 = vmatpush1.msra.mxu0 0.0
    %1604 = vmatprep.subr.mxu0 0.0
    %1605 = vmatpush1.msra.mxu0 0.0
    %1606 = vmatprep.subr.mxu0 0.0
    %1607 = vmatpush1.msra.mxu0 0.0
    %1608 = vmatprep.subr.mxu0 0.0
    %1609 = vmatpush1.msra.mxu0 0.0
    %1610 = vmatprep.subr.mxu0 0.0
    %1611 = vmatpush1.msra.mxu0 0.0
    %1612 = vmatprep.subr.mxu0 0.0
    %1613 = vmatpush1.msra.mxu0 0.0
    %1614 = vmatprep.subr.mxu0 0.0
    %1615 = vmatpush1.msra.mxu0 0.0
    %1616 = vmatprep.subr.mxu0 0.0
    %1617 = vmatpush1.msra.mxu0 0.0
    %1618 = vmatprep.subr.mxu0 0.0
    %1619 = vmatpush1.msra.mxu0 0.0
    %1620 = vmatprep.subr.mxu0 0.0
    %1621 = vmatpush1.msra.mxu0 0.0
    %1622 = vmatprep.subr.mxu0 0.0
    %1623 = vmatpush1.msra.mxu0 0.0
    %1624 = vmatprep.subr.mxu0 0.0
    %1625 = vmatpush1.msra.mxu0 0.0
    %1626 = vmatprep.subr.mxu0 0.0
    %1627 = vmatpush1.msra.mxu0 0.0
    %1628 = vmatprep.subr.mxu0 0.0
    %1629 = vmatpush1.msra.mxu0 0.0
    %1630 = vmatprep.subr.mxu0 0.0
    %1631 = vmatpush1.msra.mxu0 0.0
    %1632 = vmatprep.subr.mxu0 0.0
    %1633 = vmatpush1.msra.mxu0 0.0
    %1634 = vmatprep.subr.mxu0 0.0
    %1635 = vmatpush1.msra.mxu0 0.0
    %1636 = vmatprep.subr.mxu0 0.0
    %1637 = vmatpush1.msra.mxu0 0.0
    %1638 = vmatprep.subr.mxu0 0.0
    %1639 = vmatpush1.msra.mxu0 0.0
    %1640 = vmatprep.subr.mxu0 0.0
    %1641 = vmatpush1.msra.mxu0 0.0
    %1642 = vmatprep.subr.mxu0 0.0
    %1643 = vmatpush1.msra.mxu0 0.0
    %1644 = vmatprep.subr.mxu0 0.0
    %1645 = vmatpush1.msra.mxu0 0.0
    %1646 = vmatprep.subr.mxu0 0.0
    %1647 = vmatpush1.msra.mxu0 0.0
    %1648 = vmatprep.subr.mxu0 0.0
    %1649 = vmatpush1.msra.mxu0 0.0
    %1650 = vmatprep.subr.mxu0 0.0
    %1651 = vmatpush1.msra.mxu0 0.0
    %1652 = vmatprep.subr.mxu0 0.0
    %1653 = vmatpush1.msra.mxu0 0.0
    %1654 = vmatprep.subr.mxu0 0.0
    %1655 = vmatpush1.msra.mxu0 0.0
    %1656 = vmatprep.subr.mxu0 0.0
    %1657 = vmatpush1.msra.mxu0 0.0
    %1658 = vmatprep.subr.mxu0 0.0
    %1659 = vmatpush1.msra.mxu0 0.0
    %1660 = vmatprep.subr.mxu0 0.0
    %1661 = vmatpush1.msra.mxu0 0.0
    %1662 = vmatprep.subr.mxu0 0.0
    %1663 = vmatpush1.msra.mxu0 0.0
    %1664 = vmatprep.mubr.f32.mxu0 0.0
    %1665 = vmatmul.mubr.f32.gmra.mrb[0].mxu0 %v1598
    %v1666 = vpop.f32.mrb[0].mxu0
    %v1667 = vadd.f32 0.0, %v1666
    %v1668 = vpop.f32.mrb[0].mxu0
    %1669 = vdwg.mxu0
    %1670 = vrot.lane.b32.xlu0 %v64, 64
    %v1671 = vpop.permute.xlu0 %1670
    %v1674 = vsel %vm220, %v1593, 0
    %1676 = vmatprep.subr.mxu0 0.0
    %1677 = vmatpush1.msra.mxu0 %v1671
    %1678 = vmatprep.subr.mxu0 0.0
    %1679 = vmatpush1.msra.mxu0 0.0
    %1680 = vmatprep.subr.mxu0 0.0
    %1681 = vmatpush1.msra.mxu0 0.0
    %1682 = vmatprep.subr.mxu0 0.0
    %1683 = vmatpush1.msra.mxu0 0.0
    %1684 = vmatprep.subr.mxu0 0.0
    %1685 = vmatpush1.msra.mxu0 0.0
    %1686 = vmatprep.subr.mxu0 0.0
    %1687 = vmatpush1.msra.mxu0 0.0
    %1688 = vmatprep.subr.mxu0 0.0
    %1689 = vmatpush1.msra.mxu0 0.0
    %1690 = vmatprep.subr.mxu0 0.0
    %1691 = vmatpush1.msra.mxu0 0.0
    %1692 = vmatprep.subr.mxu0 0.0
    %1693 = vmatpush1.msra.mxu0 0.0
    %1694 = vmatprep.subr.mxu0 0.0
    %1695 = vmatpush1.msra.mxu0 0.0
    %1696 = vmatprep.subr.mxu0 0.0
    %1697 = vmatpush1.msra.mxu0 0.0
    %1698 = vmatprep.subr.mxu0 0.0
    %1699 = vmatpush1.msra.mxu0 0.0
    %1700 = vmatprep.subr.mxu0 0.0
    %1701 = vmatpush1.msra.mxu0 0.0
    %1702 = vmatprep.subr.mxu0 0.0
    %1703 = vmatpush1.msra.mxu0 0.0
    %1704 = vmatprep.subr.mxu0 0.0
    %1705 = vmatpush1.msra.mxu0 0.0
    %1706 = vmatprep.subr.mxu0 0.0
    %1707 = vmatpush1.msra.mxu0 0.0
    %1708 = vmatprep.subr.mxu0 0.0
    %1709 = vmatpush1.msra.mxu0 0.0
    %1710 = vmatprep.subr.mxu0 0.0
    %1711 = vmatpush1.msra.mxu0 0.0
    %1712 = vmatprep.subr.mxu0 0.0
    %1713 = vmatpush1.msra.mxu0 0.0
    %1714 = vmatprep.subr.mxu0 0.0
    %1715 = vmatpush1.msra.mxu0 0.0
    %1716 = vmatprep.subr.mxu0 0.0
    %1717 = vmatpush1.msra.mxu0 0.0
    %1718 = vmatprep.subr.mxu0 0.0
    %1719 = vmatpush1.msra.mxu0 0.0
    %1720 = vmatprep.subr.mxu0 0.0
    %1721 = vmatpush1.msra.mxu0 0.0
    %1722 = vmatprep.subr.mxu0 0.0
    %1723 = vmatpush1.msra.mxu0 0.0
    %1724 = vmatprep.subr.mxu0 0.0
    %1725 = vmatpush1.msra.mxu0 0.0
    %1726 = vmatprep.subr.mxu0 0.0
    %1727 = vmatpush1.msra.mxu0 0.0
    %1728 = vmatprep.subr.mxu0 0.0
    %1729 = vmatpush1.msra.mxu0 0.0
    %1730 = vmatprep.subr.mxu0 0.0
    %1731 = vmatpush1.msra.mxu0 0.0
    %1732 = vmatprep.subr.mxu0 0.0
    %1733 = vmatpush1.msra.mxu0 0.0
    %1734 = vmatprep.subr.mxu0 0.0
    %1735 = vmatpush1.msra.mxu0 0.0
    %1736 = vmatprep.subr.mxu0 0.0
    %1737 = vmatpush1.msra.mxu0 0.0
    %1738 = vmatprep.subr.mxu0 0.0
    %1739 = vmatpush1.msra.mxu0 0.0
    %1740 = vmatprep.mubr.f32.mxu0 0.0
    %1741 = vmatmul.mubr.f32.gmra.mrb[0].mxu0 %v1674
    %v1742 = vpop.f32.mrb[0].mxu0
    %v1743 = vadd.f32 0.0, %v1742
    %v1744 = vpop.f32.mrb[0].mxu0
    %1745 = vdwg.mxu0
    %1748 = vrot.lane.b32.xlu0 %v1667, 64
    %v1749 = vpop.permute.xlu0 %1748
    %1750 = vrot.lane.b32.xlu0 %v1743, 64
    %v1751 = vpop.permute.xlu0 %1750
    %vm1754 = vcmask 654848
    %1755 = vst.msk [vmem:[#allocation2] sm:$0xff] %vm1754, %v1749
    %1756 = vst.msk [vmem:[#allocation2 + $0x8] sm:$0xff] %vm1754, %v1751
    %1757 = vrot.lane.b32.xlu0 %v61, 48
    %v1758 = vpop.permute.xlu0 %1757
    %v1760 = vsel %vm65, %v50, 0
    %v1762 = vsel %vm65, %v1758, 0
    %1764 = vmatprep.subr.mxu0 0.0
    %1765 = vmatpush1.xpose.msra.mxu0 %v1762
    %1766 = vmatprep.subr.mxu0 0.0
    %1767 = vmatpush1.xpose.msra.mxu0 0.0
    %1768 = vmatprep.subr.mxu0 0.0
    %1769 = vmatpush1.xpose.msra.mxu0 0.0
    %1770 = vmatprep.subr.mxu0 0.0
    %1771 = vmatpush1.xpose.msra.mxu0 0.0
    %1772 = vmatprep.subr.mxu0 0.0
    %1773 = vmatpush1.xpose.msra.mxu0 0.0
    %1774 = vmatprep.subr.mxu0 0.0
    %1775 = vmatpush1.xpose.msra.mxu0 0.0
    %1776 = vmatprep.subr.mxu0 0.0
    %1777 = vmatpush1.xpose.msra.mxu0 0.0
    %1778 = vmatprep.subr.mxu0 0.0
    %1779 = vmatpush1.xpose.msra.mxu0 0.0
    %1780 = vmatprep.subr.mxu0 0.0
    %1781 = vmatpush1.xpose.msra.mxu0 0.0
    %1782 = vmatprep.subr.mxu0 0.0
    %1783 = vmatpush1.xpose.msra.mxu0 0.0
    %1784 = vmatprep.subr.mxu0 0.0
    %1785 = vmatpush1.xpose.msra.mxu0 0.0
    %1786 = vmatprep.subr.mxu0 0.0
    %1787 = vmatpush1.xpose.msra.mxu0 0.0
    %1788 = vmatprep.subr.mxu0 0.0
    %1789 = vmatpush1.xpose.msra.mxu0 0.0
    %1790 = vmatprep.subr.mxu0 0.0
    %1791 = vmatpush1.xpose.msra.mxu0 0.0
    %1792 = vmatprep.subr.mxu0 0.0
    %1793 = vmatpush1.xpose.msra.mxu0 0.0
    %1794 = vmatprep.subr.mxu0 0.0
    %1795 = vmatpush1.xpose.msra.mxu0 0.0
    %1796 = vmatprep.subr.mxu0 0.0
    %1797 = vmatpush1.xpose.msra.mxu0 0.0
    %1798 = vmatprep.subr.mxu0 0.0
    %1799 = vmatpush1.xpose.msra.mxu0 0.0
    %1800 = vmatprep.subr.mxu0 0.0
    %1801 = vmatpush1.xpose.msra.mxu0 0.0
    %1802 = vmatprep.subr.mxu0 0.0
    %1803 = vmatpush1.xpose.msra.mxu0 0.0
    %1804 = vmatprep.subr.mxu0 0.0
    %1805 = vmatpush1.xpose.msra.mxu0 0.0
    %1806 = vmatprep.subr.mxu0 0.0
    %1807 = vmatpush1.xpose.msra.mxu0 0.0
    %1808 = vmatprep.subr.mxu0 0.0
    %1809 = vmatpush1.xpose.msra.mxu0 0.0
    %1810 = vmatprep.subr.mxu0 0.0
    %1811 = vmatpush1.xpose.msra.mxu0 0.0
    %1812 = vmatprep.subr.mxu0 0.0
    %1813 = vmatpush1.xpose.msra.mxu0 0.0
    %1814 = vmatprep.subr.mxu0 0.0
    %1815 = vmatpush1.xpose.msra.mxu0 0.0
    %1816 = vmatprep.subr.mxu0 0.0
    %1817 = vmatpush1.xpose.msra.mxu0 0.0
    %1818 = vmatprep.subr.mxu0 0.0
    %1819 = vmatpush1.xpose.msra.mxu0 0.0
    %1820 = vmatprep.subr.mxu0 0.0
    %1821 = vmatpush1.xpose.msra.mxu0 0.0
    %1822 = vmatprep.subr.mxu0 0.0
    %1823 = vmatpush1.xpose.msra.mxu0 0.0
    %1824 = vmatprep.subr.mxu0 0.0
    %1825 = vmatpush1.xpose.msra.mxu0 0.0
    %1826 = vmatprep.subr.mxu0 0.0
    %1827 = vmatpush1.xpose.msra.mxu0 0.0
    %1828 = vmatprep.mubr.f32.mxu0 0.0
    %1829 = vmatmul.mubr.f32.gmra.mrb[0].mxu0 %v1760
    %v1830 = vpop.f32.mrb[0].mxu0
    %v1831 = vadd.f32 0.0, %v1830
    %v1832 = vpop.f32.mrb[0].mxu0
    %1833 = vdwg.mxu0
    %1834 = vrot.lane.b32.xlu0 %v63, 48
    %v1835 = vpop.permute.xlu0 %1834
    %v1837 = vsel %vm65, %v58, 0
    %v1839 = vsel %vm65, %v1835, 0
    %1841 = vmatprep.subr.mxu0 0.0
    %1842 = vmatpush1.xpose.msra.mxu0 %v1839
    %1843 = vmatprep.subr.mxu0 0.0
    %1844 = vmatpush1.xpose.msra.mxu0 0.0
    %1845 = vmatprep.subr.mxu0 0.0
    %1846 = vmatpush1.xpose.msra.mxu0 0.0
    %1847 = vmatprep.subr.mxu0 0.0
    %1848 = vmatpush1.xpose.msra.mxu0 0.0
    %1849 = vmatprep.subr.mxu0 0.0
    %1850 = vmatpush1.xpose.msra.mxu0 0.0
    %1851 = vmatprep.subr.mxu0 0.0
    %1852 = vmatpush1.xpose.msra.mxu0 0.0
    %1853 = vmatprep.subr.mxu0 0.0
    %1854 = vmatpush1.xpose.msra.mxu0 0.0
    %1855 = vmatprep.subr.mxu0 0.0
    %1856 = vmatpush1.xpose.msra.mxu0 0.0
    %1857 = vmatprep.subr.mxu0 0.0
    %1858 = vmatpush1.xpose.msra.mxu0 0.0
    %1859 = vmatprep.subr.mxu0 0.0
    %1860 = vmatpush1.xpose.msra.mxu0 0.0
    %1861 = vmatprep.subr.mxu0 0.0
    %1862 = vmatpush1.xpose.msra.mxu0 0.0
    %1863 = vmatprep.subr.mxu0 0.0
    %1864 = vmatpush1.xpose.msra.mxu0 0.0
    %1865 = vmatprep.subr.mxu0 0.0
    %1866 = vmatpush1.xpose.msra.mxu0 0.0
    %1867 = vmatprep.subr.mxu0 0.0
    %1868 = vmatpush1.xpose.msra.mxu0 0.0
    %1869 = vmatprep.subr.mxu0 0.0
    %1870 = vmatpush1.xpose.msra.mxu0 0.0
    %1871 = vmatprep.subr.mxu0 0.0
    %1872 = vmatpush1.xpose.msra.mxu0 0.0
    %1873 = vmatprep.subr.mxu0 0.0
    %1874 = vmatpush1.xpose.msra.mxu0 0.0
    %1875 = vmatprep.subr.mxu0 0.0
    %1876 = vmatpush1.xpose.msra.mxu0 0.0
    %1877 = vmatprep.subr.mxu0 0.0
    %1878 = vmatpush1.xpose.msra.mxu0 0.0
    %1879 = vmatprep.subr.mxu0 0.0
    %1880 = vmatpush1.xpose.msra.mxu0 0.0
    %1881 = vmatprep.subr.mxu0 0.0
    %1882 = vmatpush1.xpose.msra.mxu0 0.0
    %1883 = vmatprep.subr.mxu0 0.0
    %1884 = vmatpush1.xpose.msra.mxu0 0.0
    %1885 = vmatprep.subr.mxu0 0.0
    %1886 = vmatpush1.xpose.msra.mxu0 0.0
    %1887 = vmatprep.subr.mxu0 0.0
    %1888 = vmatpush1.xpose.msra.mxu0 0.0
    %1889 = vmatprep.subr.mxu0 0.0
    %1890 = vmatpush1.xpose.msra.mxu0 0.0
    %1891 = vmatprep.subr.mxu0 0.0
    %1892 = vmatpush1.xpose.msra.mxu0 0.0
    %1893 = vmatprep.subr.mxu0 0.0
    %1894 = vmatpush1.xpose.msra.mxu0 0.0
    %1895 = vmatprep.subr.mxu0 0.0
    %1896 = vmatpush1.xpose.msra.mxu0 0.0
    %1897 = vmatprep.subr.mxu0 0.0
    %1898 = vmatpush1.xpose.msra.mxu0 0.0
    %1899 = vmatprep.subr.mxu0 0.0
    %1900 = vmatpush1.xpose.msra.mxu0 0.0
    %1901 = vmatprep.subr.mxu0 0.0
    %1902 = vmatpush1.xpose.msra.mxu0 0.0
    %1903 = vmatprep.subr.mxu0 0.0
    %1904 = vmatpush1.xpose.msra.mxu0 0.0
    %1905 = vmatprep.mubr.f32.mxu0 0.0
    %1906 = vmatmul.mubr.f32.gmra.mrb[0].mxu0 %v1837
    %v1907 = vpop.f32.mrb[0].mxu0
    %v1908 = vadd.f32 0.0, %v1907
    %v1909 = vpop.f32.mrb[0].mxu0
    %1910 = vdwg.mxu0
    %v1911 = vmul.f32 %v1831, 0.25
    %v1912 = vmul.f32 %v1908, 0.25
    %v1913 = vsel %vm220, %v1911, -inf
    %1914 = vmax.xlane.f32.xlu0 %v1913
    %v1915 = vpop.xlane.xlu0 %1914
    %v1916 = vsel %vm220, %v1912, -inf
    %1917 = vmax.xlane.f32.xlu0 %v1916
    %v1918 = vpop.xlane.xlu0 %1917
    %v1919 = vsub.f32 %v1911, %v1915
    %v1920 = vsub.f32 %v1912, %v1918
    %v1921 = vmul.f32 %v1919, 1.442695
    %v1922 = vpow.pop %v1921
    %v1923 = vmul.f32 %v1920, 1.442695
    %v1924 = vpow.pop %v1923
    %v1925 = vsel %vm220, %v1922, 0.0
    %1926 = vadd.xlane.f32.xlu0 %v1925
    %v1927 = vpop.xlane.xlu0 %1926
    %v1928 = vsel %vm220, %v1924, 0.0
    %1929 = vadd.xlane.f32.xlu0 %v1928
    %v1930 = vpop.xlane.xlu0 %1929
    %v1931 = vrcp.pop %v1927
    %v1932 = vrcp.pop %v1930
    %v1933 = vmul.f32 %v1922, %v1931
    %v1934 = vmul.f32 %v1924, %v1932
    %1935 = vrot.lane.b32.xlu0 %v62, 48
    %v1936 = vpop.permute.xlu0 %1935
    %v1939 = vsel %vm220, %v1933, 0
    %1941 = vmatprep.subr.mxu0 0.0
    %1942 = vmatpush1.msra.mxu0 %v1936
    %1943 = vmatprep.subr.mxu0 0.0
    %1944 = vmatpush1.msra.mxu0 0.0
    %1945 = vmatprep.subr.mxu0 0.0
    %1946 = vmatpush1.msra.mxu0 0.0
    %1947 = vmatprep.subr.mxu0 0.0
    %1948 = vmatpush1.msra.mxu0 0.0
    %1949 = vmatprep.subr.mxu0 0.0
    %1950 = vmatpush1.msra.mxu0 0.0
    %1951 = vmatprep.subr.mxu0 0.0
    %1952 = vmatpush1.msra.mxu0 0.0
    %1953 = vmatprep.subr.mxu0 0.0
    %1954 = vmatpush1.msra.mxu0 0.0
    %1955 = vmatprep.subr.mxu0 0.0
    %1956 = vmatpush1.msra.mxu0 0.0
    %1957 = vmatprep.subr.mxu0 0.0
    %1958 = vmatpush1.msra.mxu0 0.0
    %1959 = vmatprep.subr.mxu0 0.0
    %1960 = vmatpush1.msra.mxu0 0.0
    %1961 = vmatprep.subr.mxu0 0.0
    %1962 = vmatpush1.msra.mxu0 0.0
    %1963 = vmatprep.subr.mxu0 0.0
    %1964 = vmatpush1.msra.mxu0 0.0
    %1965 = vmatprep.subr.mxu0 0.0
    %1966 = vmatpush1.msra.mxu0 0.0
    %1967 = vmatprep.subr.mxu0 0.0
    %1968 = vmatpush1.msra.mxu0 0.0
    %1969 = vmatprep.subr.mxu0 0.0
    %1970 = vmatpush1.msra.mxu0 0.0
    %1971 = vmatprep.subr.mxu0 0.0
    %1972 = vmatpush1.msra.mxu0 0.0
    %1973 = vmatprep.subr.mxu0 0.0
    %1974 = vmatpush1.msra.mxu0 0.0
    %1975 = vmatprep.subr.mxu0 0.0
    %1976 = vmatpush1.msra.mxu0 0.0
    %1977 = vmatprep.subr.mxu0 0.0
    %1978 = vmatpush1.msra.mxu0 0.0
    %1979 = vmatprep.subr.mxu0 0.0
    %1980 = vmatpush1.msra.mxu0 0.0
    %1981 = vmatprep.subr.mxu0 0.0
    %1982 = vmatpush1.msra.mxu0 0.0
    %1983 = vmatprep.subr.mxu0 0.0
    %1984 = vmatpush1.msra.mxu0 0.0
    %1985 = vmatprep.subr.mxu0 0.0
    %1986 = vmatpush1.msra.mxu0 0.0
    %1987 = vmatprep.subr.mxu0 0.0
    %1988 = vmatpush1.msra.mxu0 0.0
    %1989 = vmatprep.subr.mxu0 0.0
    %1990 = vmatpush1.msra.mxu0 0.0
    %1991 = vmatprep.subr.mxu0 0.0
    %1992 = vmatpush1.msra.mxu0 0.0
    %1993 = vmatprep.subr.mxu0 0.0
    %1994 = vmatpush1.msra.mxu0 0.0
    %1995 = vmatprep.subr.mxu0 0.0
    %1996 = vmatpush1.msra.mxu0 0.0
    %1997 = vmatprep.subr.mxu0 0.0
    %1998 = vmatpush1.msra.mxu0 0.0
    %1999 = vmatprep.subr.mxu0 0.0
    %2000 = vmatpush1.msra.mxu0 0.0
    %2001 = vmatprep.subr.mxu0 0.0
    %2002 = vmatpush1.msra.mxu0 0.0
    %2003 = vmatprep.subr.mxu0 0.0
    %2004 = vmatpush1.msra.mxu0 0.0
    %2005 = vmatprep.mubr.f32.mxu0 0.0
    %2006 = vmatmul.mubr.f32.gmra.mrb[0].mxu0 %v1939
    %v2007 = vpop.f32.mrb[0].mxu0
    %v2008 = vadd.f32 0.0, %v2007
    %v2009 = vpop.f32.mrb[0].mxu0
    %2010 = vdwg.mxu0
    %2011 = vrot.lane.b32.xlu0 %v64, 48
    %v2012 = vpop.permute.xlu0 %2011
    %v2015 = vsel %vm220, %v1934, 0
    %2017 = vmatprep.subr.mxu0 0.0
    %2018 = vmatpush1.msra.mxu0 %v2012
    %2019 = vmatprep.subr.mxu0 0.0
    %2020 = vmatpush1.msra.mxu0 0.0
    %2021 = vmatprep.subr.mxu0 0.0
    %2022 = vmatpush1.msra.mxu0 0.0
    %2023 = vmatprep.subr.mxu0 0.0
    %2024 = vmatpush1.msra.mxu0 0.0
    %2025 = vmatprep.subr.mxu0 0.0
    %2026 = vmatpush1.msra.mxu0 0.0
    %2027 = vmatprep.subr.mxu0 0.0
    %2028 = vmatpush1.msra.mxu0 0.0
    %2029 = vmatprep.subr.mxu0 0.0
    %2030 = vmatpush1.msra.mxu0 0.0
    %2031 = vmatprep.subr.mxu0 0.0
    %2032 = vmatpush1.msra.mxu0 0.0
    %2033 = vmatprep.subr.mxu0 0.0
    %2034 = vmatpush1.msra.mxu0 0.0
    %2035 = vmatprep.subr.mxu0 0.0
    %2036 = vmatpush1.msra.mxu0 0.0
    %2037 = vmatprep.subr.mxu0 0.0
    %2038 = vmatpush1.msra.mxu0 0.0
    %2039 = vmatprep.subr.mxu0 0.0
    %2040 = vmatpush1.msra.mxu0 0.0
    %2041 = vmatprep.subr.mxu0 0.0
    %2042 = vmatpush1.msra.mxu0 0.0
    %2043 = vmatprep.subr.mxu0 0.0
    %2044 = vmatpush1.msra.mxu0 0.0
    %2045 = vmatprep.subr.mxu0 0.0
    %2046 = vmatpush1.msra.mxu0 0.0
    %2047 = vmatprep.subr.mxu0 0.0
    %2048 = vmatpush1.msra.mxu0 0.0
    %2049 = vmatprep.subr.mxu0 0.0
    %2050 = vmatpush1.msra.mxu0 0.0
    %2051 = vmatprep.subr.mxu0 0.0
    %2052 = vmatpush1.msra.mxu0 0.0
    %2053 = vmatprep.subr.mxu0 0.0
    %2054 = vmatpush1.msra.mxu0 0.0
    %2055 = vmatprep.subr.mxu0 0.0
    %2056 = vmatpush1.msra.mxu0 0.0
    %2057 = vmatprep.subr.mxu0 0.0
    %2058 = vmatpush1.msra.mxu0 0.0
    %2059 = vmatprep.subr.mxu0 0.0
    %2060 = vmatpush1.msra.mxu0 0.0
    %2061 = vmatprep.subr.mxu0 0.0
    %2062 = vmatpush1.msra.mxu0 0.0
    %2063 = vmatprep.subr.mxu0 0.0
    %2064 = vmatpush1.msra.mxu0 0.0
    %2065 = vmatprep.subr.mxu0 0.0
    %2066 = vmatpush1.msra.mxu0 0.0
    %2067 = vmatprep.subr.mxu0 0.0
    %2068 = vmatpush1.msra.mxu0 0.0
    %2069 = vmatprep.subr.mxu0 0.0
    %2070 = vmatpush1.msra.mxu0 0.0
    %2071 = vmatprep.subr.mxu0 0.0
    %2072 = vmatpush1.msra.mxu0 0.0
    %2073 = vmatprep.subr.mxu0 0.0
    %2074 = vmatpush1.msra.mxu0 0.0
    %2075 = vmatprep.subr.mxu0 0.0
    %2076 = vmatpush1.msra.mxu0 0.0
    %2077 = vmatprep.subr.mxu0 0.0
    %2078 = vmatpush1.msra.mxu0 0.0
    %2079 = vmatprep.subr.mxu0 0.0
    %2080 = vmatpush1.msra.mxu0 0.0
    %2081 = vmatprep.mubr.f32.mxu0 0.0
    %2082 = vmatmul.mubr.f32.gmra.mrb[0].mxu0 %v2015
    %v2083 = vpop.f32.mrb[0].mxu0
    %v2084 = vadd.f32 0.0, %v2083
    %v2085 = vpop.f32.mrb[0].mxu0
    %2086 = vdwg.mxu0
    %2089 = vrot.lane.b32.xlu0 %v2008, 80
    %v2090 = vpop.permute.xlu0 %2089
    %2091 = vrot.lane.b32.xlu0 %v2084, 80
    %v2092 = vpop.permute.xlu0 %2091
    %vm2095 = vcmask 786048
    %2096 = vst.msk [vmem:[#allocation2] sm:$0xff] %vm2095, %v2090
    %2097 = vst.msk [vmem:[#allocation2 + $0x8] sm:$0xff] %vm2095, %v2092
    %2098 = vrot.lane.b32.xlu0 %v61, 32
    %v2099 = vpop.permute.xlu0 %2098
    %v2101 = vsel %vm65, %v51, 0
    %v2103 = vsel %vm65, %v2099, 0
    %2105 = vmatprep.subr.mxu0 0.0
    %2106 = vmatpush1.xpose.msra.mxu0 %v2103
    %2107 = vmatprep.subr.mxu0 0.0
    %2108 = vmatpush1.xpose.msra.mxu0 0.0
    %2109 = vmatprep.subr.mxu0 0.0
    %2110 = vmatpush1.xpose.msra.mxu0 0.0
    %2111 = vmatprep.subr.mxu0 0.0
    %2112 = vmatpush1.xpose.msra.mxu0 0.0
    %2113 = vmatprep.subr.mxu0 0.0
    %2114 = vmatpush1.xpose.msra.mxu0 0.0
    %2115 = vmatprep.subr.mxu0 0.0
    %2116 = vmatpush1.xpose.msra.mxu0 0.0
    %2117 = vmatprep.subr.mxu0 0.0
    %2118 = vmatpush1.xpose.msra.mxu0 0.0
    %2119 = vmatprep.subr.mxu0 0.0
    %2120 = vmatpush1.xpose.msra.mxu0 0.0
    %2121 = vmatprep.subr.mxu0 0.0
    %2122 = vmatpush1.xpose.msra.mxu0 0.0
    %2123 = vmatprep.subr.mxu0 0.0
    %2124 = vmatpush1.xpose.msra.mxu0 0.0
    %2125 = vmatprep.subr.mxu0 0.0
    %2126 = vmatpush1.xpose.msra.mxu0 0.0
    %2127 = vmatprep.subr.mxu0 0.0
    %2128 = vmatpush1.xpose.msra.mxu0 0.0
    %2129 = vmatprep.subr.mxu0 0.0
    %2130 = vmatpush1.xpose.msra.mxu0 0.0
    %2131 = vmatprep.subr.mxu0 0.0
    %2132 = vmatpush1.xpose.msra.mxu0 0.0
    %2133 = vmatprep.subr.mxu0 0.0
    %2134 = vmatpush1.xpose.msra.mxu0 0.0
    %2135 = vmatprep.subr.mxu0 0.0
    %2136 = vmatpush1.xpose.msra.mxu0 0.0
    %2137 = vmatprep.subr.mxu0 0.0
    %2138 = vmatpush1.xpose.msra.mxu0 0.0
    %2139 = vmatprep.subr.mxu0 0.0
    %2140 = vmatpush1.xpose.msra.mxu0 0.0
    %2141 = vmatprep.subr.mxu0 0.0
    %2142 = vmatpush1.xpose.msra.mxu0 0.0
    %2143 = vmatprep.subr.mxu0 0.0
    %2144 = vmatpush1.xpose.msra.mxu0 0.0
    %2145 = vmatprep.subr.mxu0 0.0
    %2146 = vmatpush1.xpose.msra.mxu0 0.0
    %2147 = vmatprep.subr.mxu0 0.0
    %2148 = vmatpush1.xpose.msra.mxu0 0.0
    %2149 = vmatprep.subr.mxu0 0.0
    %2150 = vmatpush1.xpose.msra.mxu0 0.0
    %2151 = vmatprep.subr.mxu0 0.0
    %2152 = vmatpush1.xpose.msra.mxu0 0.0
    %2153 = vmatprep.subr.mxu0 0.0
    %2154 = vmatpush1.xpose.msra.mxu0 0.0
    %2155 = vmatprep.subr.mxu0 0.0
    %2156 = vmatpush1.xpose.msra.mxu0 0.0
    %2157 = vmatprep.subr.mxu0 0.0
    %2158 = vmatpush1.xpose.msra.mxu0 0.0
    %2159 = vmatprep.subr.mxu0 0.0
    %2160 = vmatpush1.xpose.msra.mxu0 0.0
    %2161 = vmatprep.subr.mxu0 0.0
    %2162 = vmatpush1.xpose.msra.mxu0 0.0
    %2163 = vmatprep.subr.mxu0 0.0
    %2164 = vmatpush1.xpose.msra.mxu0 0.0
    %2165 = vmatprep.subr.mxu0 0.0
    %2166 = vmatpush1.xpose.msra.mxu0 0.0
    %2167 = vmatprep.subr.mxu0 0.0
    %2168 = vmatpush1.xpose.msra.mxu0 0.0
    %2169 = vmatprep.mubr.f32.mxu0 0.0
    %2170 = vmatmul.mubr.f32.gmra.mrb[0].mxu0 %v2101
    %v2171 = vpop.f32.mrb[0].mxu0
    %v2172 = vadd.f32 0.0, %v2171
    %v2173 = vpop.f32.mrb[0].mxu0
    %2174 = vdwg.mxu0
    %2175 = vrot.lane.b32.xlu0 %v63, 32
    %v2176 = vpop.permute.xlu0 %2175
    %v2178 = vsel %vm65, %v59, 0
    %v2180 = vsel %vm65, %v2176, 0
    %2182 = vmatprep.subr.mxu0 0.0
    %2183 = vmatpush1.xpose.msra.mxu0 %v2180
    %2184 = vmatprep.subr.mxu0 0.0
    %2185 = vmatpush1.xpose.msra.mxu0 0.0
    %2186 = vmatprep.subr.mxu0 0.0
    %2187 = vmatpush1.xpose.msra.mxu0 0.0
    %2188 = vmatprep.subr.mxu0 0.0
    %2189 = vmatpush1.xpose.msra.mxu0 0.0
    %2190 = vmatprep.subr.mxu0 0.0
    %2191 = vmatpush1.xpose.msra.mxu0 0.0
    %2192 = vmatprep.subr.mxu0 0.0
    %2193 = vmatpush1.xpose.msra.mxu0 0.0
    %2194 = vmatprep.subr.mxu0 0.0
    %2195 = vmatpush1.xpose.msra.mxu0 0.0
    %2196 = vmatprep.subr.mxu0 0.0
    %2197 = vmatpush1.xpose.msra.mxu0 0.0
    %2198 = vmatprep.subr.mxu0 0.0
    %2199 = vmatpush1.xpose.msra.mxu0 0.0
    %2200 = vmatprep.subr.mxu0 0.0
    %2201 = vmatpush1.xpose.msra.mxu0 0.0
    %2202 = vmatprep.subr.mxu0 0.0
    %2203 = vmatpush1.xpose.msra.mxu0 0.0
    %2204 = vmatprep.subr.mxu0 0.0
    %2205 = vmatpush1.xpose.msra.mxu0 0.0
    %2206 = vmatprep.subr.mxu0 0.0
    %2207 = vmatpush1.xpose.msra.mxu0 0.0
    %2208 = vmatprep.subr.mxu0 0.0
    %2209 = vmatpush1.xpose.msra.mxu0 0.0
    %2210 = vmatprep.subr.mxu0 0.0
    %2211 = vmatpush1.xpose.msra.mxu0 0.0
    %2212 = vmatprep.subr.mxu0 0.0
    %2213 = vmatpush1.xpose.msra.mxu0 0.0
    %2214 = vmatprep.subr.mxu0 0.0
    %2215 = vmatpush1.xpose.msra.mxu0 0.0
    %2216 = vmatprep.subr.mxu0 0.0
    %2217 = vmatpush1.xpose.msra.mxu0 0.0
    %2218 = vmatprep.subr.mxu0 0.0
    %2219 = vmatpush1.xpose.msra.mxu0 0.0
    %2220 = vmatprep.subr.mxu0 0.0
    %2221 = vmatpush1.xpose.msra.mxu0 0.0
    %2222 = vmatprep.subr.mxu0 0.0
    %2223 = vmatpush1.xpose.msra.mxu0 0.0
    %2224 = vmatprep.subr.mxu0 0.0
    %2225 = vmatpush1.xpose.msra.mxu0 0.0
    %2226 = vmatprep.subr.mxu0 0.0
    %2227 = vmatpush1.xpose.msra.mxu0 0.0
    %2228 = vmatprep.subr.mxu0 0.0
    %2229 = vmatpush1.xpose.msra.mxu0 0.0
    %2230 = vmatprep.subr.mxu0 0.0
    %2231 = vmatpush1.xpose.msra.mxu0 0.0
    %2232 = vmatprep.subr.mxu0 0.0
    %2233 = vmatpush1.xpose.msra.mxu0 0.0
    %2234 = vmatprep.subr.mxu0 0.0
    %2235 = vmatpush1.xpose.msra.mxu0 0.0
    %2236 = vmatprep.subr.mxu0 0.0
    %2237 = vmatpush1.xpose.msra.mxu0 0.0
    %2238 = vmatprep.subr.mxu0 0.0
    %2239 = vmatpush1.xpose.msra.mxu0 0.0
    %2240 = vmatprep.subr.mxu0 0.0
    %2241 = vmatpush1.xpose.msra.mxu0 0.0
    %2242 = vmatprep.subr.mxu0 0.0
    %2243 = vmatpush1.xpose.msra.mxu0 0.0
    %2244 = vmatprep.subr.mxu0 0.0
    %2245 = vmatpush1.xpose.msra.mxu0 0.0
    %2246 = vmatprep.mubr.f32.mxu0 0.0
    %2247 = vmatmul.mubr.f32.gmra.mrb[0].mxu0 %v2178
    %v2248 = vpop.f32.mrb[0].mxu0
    %v2249 = vadd.f32 0.0, %v2248
    %v2250 = vpop.f32.mrb[0].mxu0
    %2251 = vdwg.mxu0
    %v2252 = vmul.f32 %v2172, 0.25
    %v2253 = vmul.f32 %v2249, 0.25
    %v2254 = vsel %vm220, %v2252, -inf
    %2255 = vmax.xlane.f32.xlu0 %v2254
    %v2256 = vpop.xlane.xlu0 %2255
    %v2257 = vsel %vm220, %v2253, -inf
    %2258 = vmax.xlane.f32.xlu0 %v2257
    %v2259 = vpop.xlane.xlu0 %2258
    %v2260 = vsub.f32 %v2252, %v2256
    %v2261 = vsub.f32 %v2253, %v2259
    %v2262 = vmul.f32 %v2260, 1.442695
    %v2263 = vpow.pop %v2262
    %v2264 = vmul.f32 %v2261, 1.442695
    %v2265 = vpow.pop %v2264
    %v2266 = vsel %vm220, %v2263, 0.0
    %2267 = vadd.xlane.f32.xlu0 %v2266
    %v2268 = vpop.xlane.xlu0 %2267
    %v2269 = vsel %vm220, %v2265, 0.0
    %2270 = vadd.xlane.f32.xlu0 %v2269
    %v2271 = vpop.xlane.xlu0 %2270
    %v2272 = vrcp.pop %v2268
    %v2273 = vrcp.pop %v2271
    %v2274 = vmul.f32 %v2263, %v2272
    %v2275 = vmul.f32 %v2265, %v2273
    %2276 = vrot.lane.b32.xlu0 %v62, 32
    %v2277 = vpop.permute.xlu0 %2276
    %v2280 = vsel %vm220, %v2274, 0
    %2282 = vmatprep.subr.mxu0 0.0
    %2283 = vmatpush1.msra.mxu0 %v2277
    %2284 = vmatprep.subr.mxu0 0.0
    %2285 = vmatpush1.msra.mxu0 0.0
    %2286 = vmatprep.subr.mxu0 0.0
    %2287 = vmatpush1.msra.mxu0 0.0
    %2288 = vmatprep.subr.mxu0 0.0
    %2289 = vmatpush1.msra.mxu0 0.0
    %2290 = vmatprep.subr.mxu0 0.0
    %2291 = vmatpush1.msra.mxu0 0.0
    %2292 = vmatprep.subr.mxu0 0.0
    %2293 = vmatpush1.msra.mxu0 0.0
    %2294 = vmatprep.subr.mxu0 0.0
    %2295 = vmatpush1.msra.mxu0 0.0
    %2296 = vmatprep.subr.mxu0 0.0
    %2297 = vmatpush1.msra.mxu0 0.0
    %2298 = vmatprep.subr.mxu0 0.0
    %2299 = vmatpush1.msra.mxu0 0.0
    %2300 = vmatprep.subr.mxu0 0.0
    %2301 = vmatpush1.msra.mxu0 0.0
    %2302 = vmatprep.subr.mxu0 0.0
    %2303 = vmatpush1.msra.mxu0 0.0
    %2304 = vmatprep.subr.mxu0 0.0
    %2305 = vmatpush1.msra.mxu0 0.0
    %2306 = vmatprep.subr.mxu0 0.0
    %2307 = vmatpush1.msra.mxu0 0.0
    %2308 = vmatprep.subr.mxu0 0.0
    %2309 = vmatpush1.msra.mxu0 0.0
    %2310 = vmatprep.subr.mxu0 0.0
    %2311 = vmatpush1.msra.mxu0 0.0
    %2312 = vmatprep.subr.mxu0 0.0
    %2313 = vmatpush1.msra.mxu0 0.0
    %2314 = vmatprep.subr.mxu0 0.0
    %2315 = vmatpush1.msra.mxu0 0.0
    %2316 = vmatprep.subr.mxu0 0.0
    %2317 = vmatpush1.msra.mxu0 0.0
    %2318 = vmatprep.subr.mxu0 0.0
    %2319 = vmatpush1.msra.mxu0 0.0
    %2320 = vmatprep.subr.mxu0 0.0
    %2321 = vmatpush1.msra.mxu0 0.0
    %2322 = vmatprep.subr.mxu0 0.0
    %2323 = vmatpush1.msra.mxu0 0.0
    %2324 = vmatprep.subr.mxu0 0.0
    %2325 = vmatpush1.msra.mxu0 0.0
    %2326 = vmatprep.subr.mxu0 0.0
    %2327 = vmatpush1.msra.mxu0 0.0
    %2328 = vmatprep.subr.mxu0 0.0
    %2329 = vmatpush1.msra.mxu0 0.0
    %2330 = vmatprep.subr.mxu0 0.0
    %2331 = vmatpush1.msra.mxu0 0.0
    %2332 = vmatprep.subr.mxu0 0.0
    %2333 = vmatpush1.msra.mxu0 0.0
    %2334 = vmatprep.subr.mxu0 0.0
    %2335 = vmatpush1.msra.mxu0 0.0
    %2336 = vmatprep.subr.mxu0 0.0
    %2337 = vmatpush1.msra.mxu0 0.0
    %2338 = vmatprep.subr.mxu0 0.0
    %2339 = vmatpush1.msra.mxu0 0.0
    %2340 = vmatprep.subr.mxu0 0.0
    %2341 = vmatpush1.msra.mxu0 0.0
    %2342 = vmatprep.subr.mxu0 0.0
    %2343 = vmatpush1.msra.mxu0 0.0
    %2344 = vmatprep.subr.mxu0 0.0
    %2345 = vmatpush1.msra.mxu0 0.0
    %2346 = vmatprep.mubr.f32.mxu0 0.0
    %2347 = vmatmul.mubr.f32.gmra.mrb[0].mxu0 %v2280
    %v2348 = vpop.f32.mrb[0].mxu0
    %v2349 = vadd.f32 0.0, %v2348
    %v2350 = vpop.f32.mrb[0].mxu0
    %2351 = vdwg.mxu0
    %2352 = vrot.lane.b32.xlu0 %v64, 32
    %v2353 = vpop.permute.xlu0 %2352
    %v2356 = vsel %vm220, %v2275, 0
    %2358 = vmatprep.subr.mxu0 0.0
    %2359 = vmatpush1.msra.mxu0 %v2353
    %2360 = vmatprep.subr.mxu0 0.0
    %2361 = vmatpush1.msra.mxu0 0.0
    %2362 = vmatprep.subr.mxu0 0.0
    %2363 = vmatpush1.msra.mxu0 0.0
    %2364 = vmatprep.subr.mxu0 0.0
    %2365 = vmatpush1.msra.mxu0 0.0
    %2366 = vmatprep.subr.mxu0 0.0
    %2367 = vmatpush1.msra.mxu0 0.0
    %2368 = vmatprep.subr.mxu0 0.0
    %2369 = vmatpush1.msra.mxu0 0.0
    %2370 = vmatprep.subr.mxu0 0.0
    %2371 = vmatpush1.msra.mxu0 0.0
    %2372 = vmatprep.subr.mxu0 0.0
    %2373 = vmatpush1.msra.mxu0 0.0
    %2374 = vmatprep.subr.mxu0 0.0
    %2375 = vmatpush1.msra.mxu0 0.0
    %2376 = vmatprep.subr.mxu0 0.0
    %2377 = vmatpush1.msra.mxu0 0.0
    %2378 = vmatprep.subr.mxu0 0.0
    %2379 = vmatpush1.msra.mxu0 0.0
    %2380 = vmatprep.subr.mxu0 0.0
    %2381 = vmatpush1.msra.mxu0 0.0
    %2382 = vmatprep.subr.mxu0 0.0
    %2383 = vmatpush1.msra.mxu0 0.0
    %2384 = vmatprep.subr.mxu0 0.0
    %2385 = vmatpush1.msra.mxu0 0.0
    %2386 = vmatprep.subr.mxu0 0.0
    %2387 = vmatpush1.msra.mxu0 0.0
    %2388 = vmatprep.subr.mxu0 0.0
    %2389 = vmatpush1.msra.mxu0 0.0
    %2390 = vmatprep.subr.mxu0 0.0
    %2391 = vmatpush1.msra.mxu0 0.0
    %2392 = vmatprep.subr.mxu0 0.0
    %2393 = vmatpush1.msra.mxu0 0.0
    %2394 = vmatprep.subr.mxu0 0.0
    %2395 = vmatpush1.msra.mxu0 0.0
    %2396 = vmatprep.subr.mxu0 0.0
    %2397 = vmatpush1.msra.mxu0 0.0
    %2398 = vmatprep.subr.mxu0 0.0
    %2399 = vmatpush1.msra.mxu0 0.0
    %2400 = vmatprep.subr.mxu0 0.0
    %2401 = vmatpush1.msra.mxu0 0.0
    %2402 = vmatprep.subr.mxu0 0.0
    %2403 = vmatpush1.msra.mxu0 0.0
    %2404 = vmatprep.subr.mxu0 0.0
    %2405 = vmatpush1.msra.mxu0 0.0
    %2406 = vmatprep.subr.mxu0 0.0
    %2407 = vmatpush1.msra.mxu0 0.0
    %2408 = vmatprep.subr.mxu0 0.0
    %2409 = vmatpush1.msra.mxu0 0.0
    %2410 = vmatprep.subr.mxu0 0.0
    %2411 = vmatpush1.msra.mxu0 0.0
    %2412 = vmatprep.subr.mxu0 0.0
    %2413 = vmatpush1.msra.mxu0 0.0
    %2414 = vmatprep.subr.mxu0 0.0
    %2415 = vmatpush1.msra.mxu0 0.0
    %2416 = vmatprep.subr.mxu0 0.0
    %2417 = vmatpush1.msra.mxu0 0.0
    %2418 = vmatprep.subr.mxu0 0.0
    %2419 = vmatpush1.msra.mxu0 0.0
    %2420 = vmatprep.subr.mxu0 0.0
    %2421 = vmatpush1.msra.mxu0 0.0
    %2422 = vmatprep.mubr.f32.mxu0 0.0
    %2423 = vmatmul.mubr.f32.gmra.mrb[0].mxu0 %v2356
    %v2424 = vpop.f32.mrb[0].mxu0
    %v2425 = vadd.f32 0.0, %v2424
    %v2426 = vpop.f32.mrb[0].mxu0
    %2427 = vdwg.mxu0
    %2430 = vrot.lane.b32.xlu0 %v2349, 96
    %v2431 = vpop.permute.xlu0 %2430
    %2432 = vrot.lane.b32.xlu0 %v2425, 96
    %v2433 = vpop.permute.xlu0 %2432
    %vm2436 = vcmask 917248
    %2437 = vst.msk [vmem:[#allocation2] sm:$0xff] %vm2436, %v2431
    %2438 = vst.msk [vmem:[#allocation2 + $0x8] sm:$0xff] %vm2436, %v2433
    %2439 = vrot.lane.b32.xlu0 %v61, 16
    %v2440 = vpop.permute.xlu0 %2439
    %v2442 = vsel %vm65, %v52, 0
    %v2444 = vsel %vm65, %v2440, 0
    %2446 = vmatprep.subr.mxu0 0.0
    %2447 = vmatpush1.xpose.msra.mxu0 %v2444
    %2448 = vmatprep.subr.mxu0 0.0
    %2449 = vmatpush1.xpose.msra.mxu0 0.0
    %2450 = vmatprep.subr.mxu0 0.0
    %2451 = vmatpush1.xpose.msra.mxu0 0.0
    %2452 = vmatprep.subr.mxu0 0.0
    %2453 = vmatpush1.xpose.msra.mxu0 0.0
    %2454 = vmatprep.subr.mxu0 0.0
    %2455 = vmatpush1.xpose.msra.mxu0 0.0
    %2456 = vmatprep.subr.mxu0 0.0
    %2457 = vmatpush1.xpose.msra.mxu0 0.0
    %2458 = vmatprep.subr.mxu0 0.0
    %2459 = vmatpush1.xpose.msra.mxu0 0.0
    %2460 = vmatprep.subr.mxu0 0.0
    %2461 = vmatpush1.xpose.msra.mxu0 0.0
    %2462 = vmatprep.subr.mxu0 0.0
    %2463 = vmatpush1.xpose.msra.mxu0 0.0
    %2464 = vmatprep.subr.mxu0 0.0
    %2465 = vmatpush1.xpose.msra.mxu0 0.0
    %2466 = vmatprep.subr.mxu0 0.0
    %2467 = vmatpush1.xpose.msra.mxu0 0.0
    %2468 = vmatprep.subr.mxu0 0.0
    %2469 = vmatpush1.xpose.msra.mxu0 0.0
    %2470 = vmatprep.subr.mxu0 0.0
    %2471 = vmatpush1.xpose.msra.mxu0 0.0
    %2472 = vmatprep.subr.mxu0 0.0
    %2473 = vmatpush1.xpose.msra.mxu0 0.0
    %2474 = vmatprep.subr.mxu0 0.0
    %2475 = vmatpush1.xpose.msra.mxu0 0.0
    %2476 = vmatprep.subr.mxu0 0.0
    %2477 = vmatpush1.xpose.msra.mxu0 0.0
    %2478 = vmatprep.subr.mxu0 0.0
    %2479 = vmatpush1.xpose.msra.mxu0 0.0
    %2480 = vmatprep.subr.mxu0 0.0
    %2481 = vmatpush1.xpose.msra.mxu0 0.0
    %2482 = vmatprep.subr.mxu0 0.0
    %2483 = vmatpush1.xpose.msra.mxu0 0.0
    %2484 = vmatprep.subr.mxu0 0.0
    %2485 = vmatpush1.xpose.msra.mxu0 0.0
    %2486 = vmatprep.subr.mxu0 0.0
    %2487 = vmatpush1.xpose.msra.mxu0 0.0
    %2488 = vmatprep.subr.mxu0 0.0
    %2489 = vmatpush1.xpose.msra.mxu0 0.0
    %2490 = vmatprep.subr.mxu0 0.0
    %2491 = vmatpush1.xpose.msra.mxu0 0.0
    %2492 = vmatprep.subr.mxu0 0.0
    %2493 = vmatpush1.xpose.msra.mxu0 0.0
    %2494 = vmatprep.subr.mxu0 0.0
    %2495 = vmatpush1.xpose.msra.mxu0 0.0
    %2496 = vmatprep.subr.mxu0 0.0
    %2497 = vmatpush1.xpose.msra.mxu0 0.0
    %2498 = vmatprep.subr.mxu0 0.0
    %2499 = vmatpush1.xpose.msra.mxu0 0.0
    %2500 = vmatprep.subr.mxu0 0.0
    %2501 = vmatpush1.xpose.msra.mxu0 0.0
    %2502 = vmatprep.subr.mxu0 0.0
    %2503 = vmatpush1.xpose.msra.mxu0 0.0
    %2504 = vmatprep.subr.mxu0 0.0
    %2505 = vmatpush1.xpose.msra.mxu0 0.0
    %2506 = vmatprep.subr.mxu0 0.0
    %2507 = vmatpush1.xpose.msra.mxu0 0.0
    %2508 = vmatprep.subr.mxu0 0.0
    %2509 = vmatpush1.xpose.msra.mxu0 0.0
    %2510 = vmatprep.mubr.f32.mxu0 0.0
    %2511 = vmatmul.mubr.f32.gmra.mrb[0].mxu0 %v2442
    %v2512 = vpop.f32.mrb[0].mxu0
    %v2513 = vadd.f32 0.0, %v2512
    %v2514 = vpop.f32.mrb[0].mxu0
    %2515 = vdwg.mxu0
    %2516 = vrot.lane.b32.xlu0 %v63, 16
    %v2517 = vpop.permute.xlu0 %2516
    %v2519 = vsel %vm65, %v60, 0
    %v2521 = vsel %vm65, %v2517, 0
    %2523 = vmatprep.subr.mxu0 0.0
    %2524 = vmatpush1.xpose.msra.mxu0 %v2521
    %2525 = vmatprep.subr.mxu0 0.0
    %2526 = vmatpush1.xpose.msra.mxu0 0.0
    %2527 = vmatprep.subr.mxu0 0.0
    %2528 = vmatpush1.xpose.msra.mxu0 0.0
    %2529 = vmatprep.subr.mxu0 0.0
    %2530 = vmatpush1.xpose.msra.mxu0 0.0
    %2531 = vmatprep.subr.mxu0 0.0
    %2532 = vmatpush1.xpose.msra.mxu0 0.0
    %2533 = vmatprep.subr.mxu0 0.0
    %2534 = vmatpush1.xpose.msra.mxu0 0.0
    %2535 = vmatprep.subr.mxu0 0.0
    %2536 = vmatpush1.xpose.msra.mxu0 0.0
    %2537 = vmatprep.subr.mxu0 0.0
    %2538 = vmatpush1.xpose.msra.mxu0 0.0
    %2539 = vmatprep.subr.mxu0 0.0
    %2540 = vmatpush1.xpose.msra.mxu0 0.0
    %2541 = vmatprep.subr.mxu0 0.0
    %2542 = vmatpush1.xpose.msra.mxu0 0.0
    %2543 = vmatprep.subr.mxu0 0.0
    %2544 = vmatpush1.xpose.msra.mxu0 0.0
    %2545 = vmatprep.subr.mxu0 0.0
    %2546 = vmatpush1.xpose.msra.mxu0 0.0
    %2547 = vmatprep.subr.mxu0 0.0
    %2548 = vmatpush1.xpose.msra.mxu0 0.0
    %2549 = vmatprep.subr.mxu0 0.0
    %2550 = vmatpush1.xpose.msra.mxu0 0.0
    %2551 = vmatprep.subr.mxu0 0.0
    %2552 = vmatpush1.xpose.msra.mxu0 0.0
    %2553 = vmatprep.subr.mxu0 0.0
    %2554 = vmatpush1.xpose.msra.mxu0 0.0
    %2555 = vmatprep.subr.mxu0 0.0
    %2556 = vmatpush1.xpose.msra.mxu0 0.0
    %2557 = vmatprep.subr.mxu0 0.0
    %2558 = vmatpush1.xpose.msra.mxu0 0.0
    %2559 = vmatprep.subr.mxu0 0.0
    %2560 = vmatpush1.xpose.msra.mxu0 0.0
    %2561 = vmatprep.subr.mxu0 0.0
    %2562 = vmatpush1.xpose.msra.mxu0 0.0
    %2563 = vmatprep.subr.mxu0 0.0
    %2564 = vmatpush1.xpose.msra.mxu0 0.0
    %2565 = vmatprep.subr.mxu0 0.0
    %2566 = vmatpush1.xpose.msra.mxu0 0.0
    %2567 = vmatprep.subr.mxu0 0.0
    %2568 = vmatpush1.xpose.msra.mxu0 0.0
    %2569 = vmatprep.subr.mxu0 0.0
    %2570 = vmatpush1.xpose.msra.mxu0 0.0
    %2571 = vmatprep.subr.mxu0 0.0
    %2572 = vmatpush1.xpose.msra.mxu0 0.0
    %2573 = vmatprep.subr.mxu0 0.0
    %2574 = vmatpush1.xpose.msra.mxu0 0.0
    %2575 = vmatprep.subr.mxu0 0.0
    %2576 = vmatpush1.xpose.msra.mxu0 0.0
    %2577 = vmatprep.subr.mxu0 0.0
    %2578 = vmatpush1.xpose.msra.mxu0 0.0
    %2579 = vmatprep.subr.mxu0 0.0
    %2580 = vmatpush1.xpose.msra.mxu0 0.0
    %2581 = vmatprep.subr.mxu0 0.0
    %2582 = vmatpush1.xpose.msra.mxu0 0.0
    %2583 = vmatprep.subr.mxu0 0.0
    %2584 = vmatpush1.xpose.msra.mxu0 0.0
    %2585 = vmatprep.subr.mxu0 0.0
    %2586 = vmatpush1.xpose.msra.mxu0 0.0
    %2587 = vmatprep.mubr.f32.mxu0 0.0
    %2588 = vmatmul.mubr.f32.gmra.mrb[0].mxu0 %v2519
    %v2589 = vpop.f32.mrb[0].mxu0
    %v2590 = vadd.f32 0.0, %v2589
    %v2591 = vpop.f32.mrb[0].mxu0
    %2592 = vdwg.mxu0
    %v2593 = vmul.f32 %v2513, 0.25
    %v2594 = vmul.f32 %v2590, 0.25
    %v2595 = vsel %vm220, %v2593, -inf
    %2596 = vmax.xlane.f32.xlu0 %v2595
    %v2597 = vpop.xlane.xlu0 %2596
    %v2598 = vsel %vm220, %v2594, -inf
    %2599 = vmax.xlane.f32.xlu0 %v2598
    %v2600 = vpop.xlane.xlu0 %2599
    %v2601 = vsub.f32 %v2593, %v2597
    %v2602 = vsub.f32 %v2594, %v2600
    %v2603 = vmul.f32 %v2601, 1.442695
    %v2604 = vpow.pop %v2603
    %v2605 = vmul.f32 %v2602, 1.442695
    %v2606 = vpow.pop %v2605
    %v2607 = vsel %vm220, %v2604, 0.0
    %2608 = vadd.xlane.f32.xlu0 %v2607
    %v2609 = vpop.xlane.xlu0 %2608
    %v2610 = vsel %vm220, %v2606, 0.0
    %2611 = vadd.xlane.f32.xlu0 %v2610
    %v2612 = vpop.xlane.xlu0 %2611
    %v2613 = vrcp.pop %v2609
    %v2614 = vrcp.pop %v2612
    %v2615 = vmul.f32 %v2604, %v2613
    %v2616 = vmul.f32 %v2606, %v2614
    %2617 = vrot.lane.b32.xlu0 %v62, 16
    %v2618 = vpop.permute.xlu0 %2617
    %v2621 = vsel %vm220, %v2615, 0
    %2623 = vmatprep.subr.mxu0 0.0
    %2624 = vmatpush1.msra.mxu0 %v2618
    %2625 = vmatprep.subr.mxu0 0.0
    %2626 = vmatpush1.msra.mxu0 0.0
    %2627 = vmatprep.subr.mxu0 0.0
    %2628 = vmatpush1.msra.mxu0 0.0
    %2629 = vmatprep.subr.mxu0 0.0
    %2630 = vmatpush1.msra.mxu0 0.0
    %2631 = vmatprep.subr.mxu0 0.0
    %2632 = vmatpush1.msra.mxu0 0.0
    %2633 = vmatprep.subr.mxu0 0.0
    %2634 = vmatpush1.msra.mxu0 0.0
    %2635 = vmatprep.subr.mxu0 0.0
    %2636 = vmatpush1.msra.mxu0 0.0
    %2637 = vmatprep.subr.mxu0 0.0
    %2638 = vmatpush1.msra.mxu0 0.0
    %2639 = vmatprep.subr.mxu0 0.0
    %2640 = vmatpush1.msra.mxu0 0.0
    %2641 = vmatprep.subr.mxu0 0.0
    %2642 = vmatpush1.msra.mxu0 0.0
    %2643 = vmatprep.subr.mxu0 0.0
    %2644 = vmatpush1.msra.mxu0 0.0
    %2645 = vmatprep.subr.mxu0 0.0
    %2646 = vmatpush1.msra.mxu0 0.0
    %2647 = vmatprep.subr.mxu0 0.0
    %2648 = vmatpush1.msra.mxu0 0.0
    %2649 = vmatprep.subr.mxu0 0.0
    %2650 = vmatpush1.msra.mxu0 0.0
    %2651 = vmatprep.subr.mxu0 0.0
    %2652 = vmatpush1.msra.mxu0 0.0
    %2653 = vmatprep.subr.mxu0 0.0
    %2654 = vmatpush1.msra.mxu0 0.0
    %2655 = vmatprep.subr.mxu0 0.0
    %2656 = vmatpush1.msra.mxu0 0.0
    %2657 = vmatprep.subr.mxu0 0.0
    %2658 = vmatpush1.msra.mxu0 0.0
    %2659 = vmatprep.subr.mxu0 0.0
    %2660 = vmatpush1.msra.mxu0 0.0
    %2661 = vmatprep.subr.mxu0 0.0
    %2662 = vmatpush1.msra.mxu0 0.0
    %2663 = vmatprep.subr.mxu0 0.0
    %2664 = vmatpush1.msra.mxu0 0.0
    %2665 = vmatprep.subr.mxu0 0.0
    %2666 = vmatpush1.msra.mxu0 0.0
    %2667 = vmatprep.subr.mxu0 0.0
    %2668 = vmatpush1.msra.mxu0 0.0
    %2669 = vmatprep.subr.mxu0 0.0
    %2670 = vmatpush1.msra.mxu0 0.0
    %2671 = vmatprep.subr.mxu0 0.0
    %2672 = vmatpush1.msra.mxu0 0.0
    %2673 = vmatprep.subr.mxu0 0.0
    %2674 = vmatpush1.msra.mxu0 0.0
    %2675 = vmatprep.subr.mxu0 0.0
    %2676 = vmatpush1.msra.mxu0 0.0
    %2677 = vmatprep.subr.mxu0 0.0
    %2678 = vmatpush1.msra.mxu0 0.0
    %2679 = vmatprep.subr.mxu0 0.0
    %2680 = vmatpush1.msra.mxu0 0.0
    %2681 = vmatprep.subr.mxu0 0.0
    %2682 = vmatpush1.msra.mxu0 0.0
    %2683 = vmatprep.subr.mxu0 0.0
    %2684 = vmatpush1.msra.mxu0 0.0
    %2685 = vmatprep.subr.mxu0 0.0
    %2686 = vmatpush1.msra.mxu0 0.0
    %2687 = vmatprep.mubr.f32.mxu0 0.0
    %2688 = vmatmul.mubr.f32.gmra.mrb[0].mxu0 %v2621
    %v2689 = vpop.f32.mrb[0].mxu0
    %v2690 = vadd.f32 0.0, %v2689
    %v2691 = vpop.f32.mrb[0].mxu0
    %2692 = vdwg.mxu0
    %2693 = vrot.lane.b32.xlu0 %v64, 16
    %v2694 = vpop.permute.xlu0 %2693
    %v2697 = vsel %vm220, %v2616, 0
    %2699 = vmatprep.subr.mxu0 0.0
    %2700 = vmatpush1.msra.mxu0 %v2694
    %2701 = vmatprep.subr.mxu0 0.0
    %2702 = vmatpush1.msra.mxu0 0.0
    %2703 = vmatprep.subr.mxu0 0.0
    %2704 = vmatpush1.msra.mxu0 0.0
    %2705 = vmatprep.subr.mxu0 0.0
    %2706 = vmatpush1.msra.mxu0 0.0
    %2707 = vmatprep.subr.mxu0 0.0
    %2708 = vmatpush1.msra.mxu0 0.0
    %2709 = vmatprep.subr.mxu0 0.0
    %2710 = vmatpush1.msra.mxu0 0.0
    %2711 = vmatprep.subr.mxu0 0.0
    %2712 = vmatpush1.msra.mxu0 0.0
    %2713 = vmatprep.subr.mxu0 0.0
    %2714 = vmatpush1.msra.mxu0 0.0
    %2715 = vmatprep.subr.mxu0 0.0
    %2716 = vmatpush1.msra.mxu0 0.0
    %2717 = vmatprep.subr.mxu0 0.0
    %2718 = vmatpush1.msra.mxu0 0.0
    %2719 = vmatprep.subr.mxu0 0.0
    %2720 = vmatpush1.msra.mxu0 0.0
    %2721 = vmatprep.subr.mxu0 0.0
    %2722 = vmatpush1.msra.mxu0 0.0
    %2723 = vmatprep.subr.mxu0 0.0
    %2724 = vmatpush1.msra.mxu0 0.0
    %2725 = vmatprep.subr.mxu0 0.0
    %2726 = vmatpush1.msra.mxu0 0.0
    %2727 = vmatprep.subr.mxu0 0.0
    %2728 = vmatpush1.msra.mxu0 0.0
    %2729 = vmatprep.subr.mxu0 0.0
    %2730 = vmatpush1.msra.mxu0 0.0
    %2731 = vmatprep.subr.mxu0 0.0
    %2732 = vmatpush1.msra.mxu0 0.0
    %2733 = vmatprep.subr.mxu0 0.0
    %2734 = vmatpush1.msra.mxu0 0.0
    %2735 = vmatprep.subr.mxu0 0.0
    %2736 = vmatpush1.msra.mxu0 0.0
    %2737 = vmatprep.subr.mxu0 0.0
    %2738 = vmatpush1.msra.mxu0 0.0
    %2739 = vmatprep.subr.mxu0 0.0
    %2740 = vmatpush1.msra.mxu0 0.0
    %2741 = vmatprep.subr.mxu0 0.0
    %2742 = vmatpush1.msra.mxu0 0.0
    %2743 = vmatprep.subr.mxu0 0.0
    %2744 = vmatpush1.msra.mxu0 0.0
    %2745 = vmatprep.subr.mxu0 0.0
    %2746 = vmatpush1.msra.mxu0 0.0
    %2747 = vmatprep.subr.mxu0 0.0
    %2748 = vmatpush1.msra.mxu0 0.0
    %2749 = vmatprep.subr.mxu0 0.0
    %2750 = vmatpush1.msra.mxu0 0.0
    %2751 = vmatprep.subr.mxu0 0.0
    %2752 = vmatpush1.msra.mxu0 0.0
    %2753 = vmatprep.subr.mxu0 0.0
    %2754 = vmatpush1.msra.mxu0 0.0
    %2755 = vmatprep.subr.mxu0 0.0
    %2756 = vmatpush1.msra.mxu0 0.0
    %2757 = vmatprep.subr.mxu0 0.0
    %2758 = vmatpush1.msra.mxu0 0.0
    %2759 = vmatprep.subr.mxu0 0.0
    %2760 = vmatpush1.msra.mxu0 0.0
    %2761 = vmatprep.subr.mxu0 0.0
    %2762 = vmatpush1.msra.mxu0 0.0
    %2763 = vmatprep.mubr.f32.mxu0 0.0
    %2764 = vmatmul.mubr.f32.gmra.mrb[0].mxu0 %v2697
    %v2765 = vpop.f32.mrb[0].mxu0
    %v2766 = vadd.f32 0.0, %v2765
    %v2767 = vpop.f32.mrb[0].mxu0
    %2768 = vdwg.mxu0
    %2771 = vrot.lane.b32.xlu0 %v2690, 112
    %v2772 = vpop.permute.xlu0 %2771
    %2773 = vrot.lane.b32.xlu0 %v2766, 112
    %v2774 = vpop.permute.xlu0 %2773
    %vm2777 = vcmask 1048448
    %2778 = vst.msk [vmem:[#allocation2] sm:$0xff] %vm2777, %v2772
    %2779 = vst.msk [vmem:[#allocation2 + $0x8] sm:$0xff] %vm2777, %v2774
    %v2780 = vld [vmem:[#allocation2] sm:$0xff]
    %v2781 = vld [vmem:[#allocation2 + $0x8] sm:$0xff]
    %v2782 = vld [vmem:[%s3] sm:$0xff]
    %v2783 = vld [vmem:[%s3 + $0x8] sm:$0xff]
    %v2784 = vld [vmem:[%s3 + $0x10] sm:$0xff]
    %v2785 = vld [vmem:[%s3 + $0x18] sm:$0xff]
    %v2786 = vld [vmem:[%s3 + $0x20] sm:$0xff]
    %v2787 = vld [vmem:[%s3 + $0x28] sm:$0xff]
    %v2788 = vld [vmem:[%s3 + $0x30] sm:$0xff]
    %v2789 = vld [vmem:[%s3 + $0x38] sm:$0xff]
    %v2790 = vld [vmem:[%s3 + $0x40] sm:$0xff]
    %v2791 = vld [vmem:[%s3 + $0x48] sm:$0xff]
    %v2792 = vld [vmem:[%s3 + $0x50] sm:$0xff]
    %v2793 = vld [vmem:[%s3 + $0x58] sm:$0xff]
    %v2794 = vld [vmem:[%s3 + $0x60] sm:$0xff]
    %v2795 = vld [vmem:[%s3 + $0x68] sm:$0xff]
    %v2796 = vld [vmem:[%s3 + $0x70] sm:$0xff]
    %v2797 = vld [vmem:[%s3 + $0x78] sm:$0xff]
    %v2798 = vld [vmem:[%s4] sm:$0x1]
    %v2800 = vlaneseq
    %v2801 = vshrl.u32 %v2800, 7
    %v2802 = vsub.s32 0, %v2801
    %v2803 = vrot.slane %v2798, %v2802
    %2805 = vmatprep.subr.mxu0 0.0
    %2806 = vmatpush1.msra.mxu0 %v2782
    %2807 = vmatprep.subr.mxu0 0.0
    %2808 = vmatpush1.msra.mxu0 %v2783
    %2809 = vmatprep.subr.mxu0 0.0
    %2810 = vmatpush1.msra.mxu0 %v2784
    %2811 = vmatprep.subr.mxu0 0.0
    %2812 = vmatpush1.msra.mxu0 %v2785
    %2813 = vmatprep.subr.mxu0 0.0
    %2814 = vmatpush1.msra.mxu0 %v2786
    %2815 = vmatprep.subr.mxu0 0.0
    %2816 = vmatpush1.msra.mxu0 %v2787
    %2817 = vmatprep.subr.mxu0 0.0
    %2818 = vmatpush1.msra.mxu0 %v2788
    %2819 = vmatprep.subr.mxu0 0.0
    %2820 = vmatpush1.msra.mxu0 %v2789
    %2821 = vmatprep.subr.mxu0 0.0
    %2822 = vmatpush1.msra.mxu0 %v2790
    %2823 = vmatprep.subr.mxu0 0.0
    %2824 = vmatpush1.msra.mxu0 %v2791
    %2825 = vmatprep.subr.mxu0 0.0
    %2826 = vmatpush1.msra.mxu0 %v2792
    %2827 = vmatprep.subr.mxu0 0.0
    %2828 = vmatpush1.msra.mxu0 %v2793
    %2829 = vmatprep.subr.mxu0 0.0
    %2830 = vmatpush1.msra.mxu0 %v2794
    %2831 = vmatprep.subr.mxu0 0.0
    %2832 = vmatpush1.msra.mxu0 %v2795
    %2833 = vmatprep.subr.mxu0 0.0
    %2834 = vmatpush1.msra.mxu0 %v2796
    %2835 = vmatprep.subr.mxu0 0.0
    %2836 = vmatpush1.msra.mxu0 %v2797
    %2837 = vmatprep.subr.mxu0 0.0
    %2838 = vmatpush1.msra.mxu0 0.0
    %2839 = vmatprep.subr.mxu0 0.0
    %2840 = vmatpush1.msra.mxu0 0.0
    %2841 = vmatprep.subr.mxu0 0.0
    %2842 = vmatpush1.msra.mxu0 0.0
    %2843 = vmatprep.subr.mxu0 0.0
    %2844 = vmatpush1.msra.mxu0 0.0
    %2845 = vmatprep.subr.mxu0 0.0
    %2846 = vmatpush1.msra.mxu0 0.0
    %2847 = vmatprep.subr.mxu0 0.0
    %2848 = vmatpush1.msra.mxu0 0.0
    %2849 = vmatprep.subr.mxu0 0.0
    %2850 = vmatpush1.msra.mxu0 0.0
    %2851 = vmatprep.subr.mxu0 0.0
    %2852 = vmatpush1.msra.mxu0 0.0
    %2853 = vmatprep.subr.mxu0 0.0
    %2854 = vmatpush1.msra.mxu0 0.0
    %2855 = vmatprep.subr.mxu0 0.0
    %2856 = vmatpush1.msra.mxu0 0.0
    %2857 = vmatprep.subr.mxu0 0.0
    %2858 = vmatpush1.msra.mxu0 0.0
    %2859 = vmatprep.subr.mxu0 0.0
    %2860 = vmatpush1.msra.mxu0 0.0
    %2861 = vmatprep.subr.mxu0 0.0
    %2862 = vmatpush1.msra.mxu0 0.0
    %2863 = vmatprep.subr.mxu0 0.0
    %2864 = vmatpush1.msra.mxu0 0.0
    %2865 = vmatprep.subr.mxu0 0.0
    %2866 = vmatpush1.msra.mxu0 0.0
    %2867 = vmatprep.subr.mxu0 0.0
    %2868 = vmatpush1.msra.mxu0 0.0
    %2869 = vmatprep.mubr.f32.mxu0 0.0
    %2870 = vmatmul.mubr.f32.gmra.mrb[0].mxu0 %v2780
    %v2871 = vpop.f32.mrb[0].mxu0
    %v2872 = vadd.f32 %v2803, %v2871
    %v2873 = vpop.f32.mrb[0].mxu0
    %2874 = vmatprep.mubr.f32.mxu0 0.0
    %2875 = vmatmul.mubr.f32.gmra.mrb[0].mxu0 %v2781
    %v2876 = vpop.f32.mrb[0].mxu0
    %v2877 = vadd.f32 %v2803, %v2876
    %v2878 = vpop.f32.mrb[0].mxu0
    %2879 = vdwg.mxu0
    %v2880 = vld [vmem:[%s2] sm:$0xff]
    %v2881 = vld [vmem:[%s2 + $0x8] sm:$0xff]
    %v2882 = vld [vmem:[%s5] sm:$0x1]
    %v2884 = vlaneseq
    %v2885 = vshrl.u32 %v2884, 7
    %v2886 = vsub.s32 0, %v2885
    %v2887 = vrot.slane %v2882, %v2886
    %v2889 = vmul.f32 %v2887, %v2872
    %v2890 = vmul.f32 %v2887, %v2877
    %v2891 = vadd.f32 %v2880, %v2889
    %v2892 = vadd.f32 %v2881, %v2890
    %v2893 = vld [vmem:[%s6] sm:$0x1]
    %v2894 = vld [vmem:[%s7] sm:$0x1]
    %2895 = vadd.xlane.f32.xlu0 %v2891
    %v2896 = vpop.xlane.xlu0 %2895
    %2897 = vadd.xlane.f32.xlu0 %v2892
    %v2898 = vpop.xlane.xlu0 %2897
    %v2899 = vrcp.pop 128.0
    %v2900 = vmul.f32 %v2896, %v2899
    %v2901 = vmul.f32 %v2898, %v2899
    %v2902 = vsub.f32 %v2891, %v2900
    %v2903 = vsub.f32 %v2892, %v2901
    %v2904 = vmul.f32 %v2902, %v2902
    %v2905 = vmul.f32 %v2903, %v2903
    %2906 = vadd.xlane.f32.xlu0 %v2904
    %v2907 = vpop.xlane.xlu0 %2906
    %2908 = vadd.xlane.f32.xlu0 %v2905
    %v2909 = vpop.xlane.xlu0 %2908
    %v2910 = vmul.f32 %v2907, %v2899
    %v2911 = vmul.f32 %v2909, %v2899
    %v2912 = vadd.f32 %v2910, 1e-05
    %v2913 = vadd.f32 %v2911, 1e-05
    %v2914 = vrsqrt.pop %v2912
    %v2915 = vrsqrt.pop %v2913
    %v2916 = vmul.f32 %v2902, %v2914
    %v2917 = vmul.f32 %v2903, %v2915
    %v2919 = vlaneseq
    %v2920 = vshrl.u32 %v2919, 7
    %v2921 = vsub.s32 0, %v2920
    %v2922 = vrot.slane %v2893, %v2921
    %v2924 = vmul.f32 %v2916, %v2922
    %v2925 = vmul.f32 %v2917, %v2922
    %v2927 = vlaneseq
    %v2928 = vshrl.u32 %v2927, 7
    %v2929 = vsub.s32 0, %v2928
    %v2930 = vrot.slane %v2894, %v2929
    %v2932 = vadd.f32 %v2924, %v2930
    %v2933 = vadd.f32 %v2925, %v2930
    %v2934 = vld [vmem:[%s8] sm:$0xff]
    %v2935 = vld [vmem:[%s8 + $0x8] sm:$0xff]
    %v2936 = vld [vmem:[%s8 + $0x10] sm:$0xff]
    %v2937 = vld [vmem:[%s8 + $0x18] sm:$0xff]
    %v2938 = vld [vmem:[%s8 + $0x20] sm:$0xff]
    %v2939 = vld [vmem:[%s8 + $0x28] sm:$0xff]
    %v2940 = vld [vmem:[%s8 + $0x30] sm:$0xff]
    %v2941 = vld [vmem:[%s8 + $0x38] sm:$0xff]
    %v2942 = vld [vmem:[%s8 + $0x40] sm:$0xff]
    %v2943 = vld [vmem:[%s8 + $0x48] sm:$0xff]
    %v2944 = vld [vmem:[%s8 + $0x50] sm:$0xff]
    %v2945 = vld [vmem:[%s8 + $0x58] sm:$0xff]
    %v2946 = vld [vmem:[%s8 + $0x60] sm:$0xff]
    %v2947 = vld [vmem:[%s8 + $0x68] sm:$0xff]
    %v2948 = vld [vmem:[%s8 + $0x70] sm:$0xff]
    %v2949 = vld [vmem:[%s8 + $0x78] sm:$0xff]
    %v2950 = vld [vmem:[%s8 + $0x80] sm:$0xff]
    %v2951 = vld [vmem:[%s8 + $0x88] sm:$0xff]
    %v2952 = vld [vmem:[%s8 + $0x90] sm:$0xff]
    %v2953 = vld [vmem:[%s8 + $0x98] sm:$0xff]
    %v2954 = vld [vmem:[%s8 + $0xa0] sm:$0xff]
    %v2955 = vld [vmem:[%s8 + $0xa8] sm:$0xff]
    %v2956 = vld [vmem:[%s8 + $0xb0] sm:$0xff]
    %v2957 = vld [vmem:[%s8 + $0xb8] sm:$0xff]
    %v2958 = vld [vmem:[%s8 + $0xc0] sm:$0xff]
    %v2959 = vld [vmem:[%s8 + $0xc8] sm:$0xff]
    %v2960 = vld [vmem:[%s8 + $0xd0] sm:$0xff]
    %v2961 = vld [vmem:[%s8 + $0xd8] sm:$0xff]
    %v2962 = vld [vmem:[%s8 + $0xe0] sm:$0xff]
    %v2963 = vld [vmem:[%s8 + $0xe8] sm:$0xff]
    %v2964 = vld [vmem:[%s8 + $0xf0] sm:$0xff]
    %v2965 = vld [vmem:[%s8 + $0xf8] sm:$0xff]
    %v2966 = vld [vmem:[%s8 + $0x100] sm:$0xff]
    %v2967 = vld [vmem:[%s8 + $0x108] sm:$0xff]
    %v2968 = vld [vmem:[%s8 + $0x110] sm:$0xff]
    %v2969 = vld [vmem:[%s8 + $0x118] sm:$0xff]
    %v2970 = vld [vmem:[%s8 + $0x120] sm:$0xff]
    %v2971 = vld [vmem:[%s8 + $0x128] sm:$0xff]
    %v2972 = vld [vmem:[%s8 + $0x130] sm:$0xff]
    %v2973 = vld [vmem:[%s8 + $0x138] sm:$0xff]
    %v2974 = vld [vmem:[%s8 + $0x140] sm:$0xff]
    %v2975 = vld [vmem:[%s8 + $0x148] sm:$0xff]
    %v2976 = vld [vmem:[%s8 + $0x150] sm:$0xff]
    %v2977 = vld [vmem:[%s8 + $0x158] sm:$0xff]
    %v2978 = vld [vmem:[%s8 + $0x160] sm:$0xff]
    %v2979 = vld [vmem:[%s8 + $0x168] sm:$0xff]
    %v2980 = vld [vmem:[%s8 + $0x170] sm:$0xff]
    %v2981 = vld [vmem:[%s8 + $0x178] sm:$0xff]
    %v2982 = vld [vmem:[%s8 + $0x180] sm:$0xff]
    %v2983 = vld [vmem:[%s8 + $0x188] sm:$0xff]
    %v2984 = vld [vmem:[%s8 + $0x190] sm:$0xff]
    %v2985 = vld [vmem:[%s8 + $0x198] sm:$0xff]
    %v2986 = vld [vmem:[%s8 + $0x1a0] sm:$0xff]
    %v2987 = vld [vmem:[%s8 + $0x1a8] sm:$0xff]
    %v2988 = vld [vmem:[%s8 + $0x1b0] sm:$0xff]
    %v2989 = vld [vmem:[%s8 + $0x1b8] sm:$0xff]
    %v2990 = vld [vmem:[%s8 + $0x1c0] sm:$0xff]
    %v2991 = vld [vmem:[%s8 + $0x1c8] sm:$0xff]
    %v2992 = vld [vmem:[%s8 + $0x1d0] sm:$0xff]
    %v2993 = vld [vmem:[%s8 + $0x1d8] sm:$0xff]
    %v2994 = vld [vmem:[%s8 + $0x1e0] sm:$0xff]
    %v2995 = vld [vmem:[%s8 + $0x1e8] sm:$0xff]
    %v2996 = vld [vmem:[%s8 + $0x1f0] sm:$0xff]
    %v2997 = vld [vmem:[%s8 + $0x1f8] sm:$0xff]
    %v2998 = vld [vmem:[%s9] sm:$0xf]
    %v3000 = vlaneseq
    %v3001 = vshrl.u32 %v3000, 7
    %v3002 = vsub.s32 0, %v3001
    %v3003 = vrot.slane %v2998, %v3002
    %v3004 = vlaneseq
    %v3005 = vshrl.u32 %v3004, 7
    %v3006 = vsub.s32 1, %v3005
    %v3007 = vrot.slane %v2998, %v3006
    %v3008 = vlaneseq
    %v3009 = vshrl.u32 %v3008, 7
    %v3010 = vsub.s32 2, %v3009
    %v3011 = vrot.slane %v2998, %v3010
    %v3012 = vlaneseq
    %v3013 = vshrl.u32 %v3012, 7
    %v3014 = vsub.s32 3, %v3013
    %v3015 = vrot.slane %v2998, %v3014
    %3020 = vmatprep.subr.mxu0 %v2935
    %3021 = vmatpush1.msra.mxu0 %v2934
    %3022 = vmatprep.subr.mxu0 %v2939
    %3023 = vmatpush1.msra.mxu0 %v2938
    %3024 = vmatprep.subr.mxu0 %v2943
    %3025 = vmatpush1.msra.mxu0 %v2942
    %3026 = vmatprep.subr.mxu0 %v2947
    %3027 = vmatpush1.msra.mxu0 %v2946
    %3028 = vmatprep.subr.mxu0 %v2951
    %3029 = vmatpush1.msra.mxu0 %v2950
    %3030 = vmatprep.subr.mxu0 %v2955
    %3031 = vmatpush1.msra.mxu0 %v2954
    %3032 = vmatprep.subr.mxu0 %v2959
    %3033 = vmatpush1.msra.mxu0 %v2958
    %3034 = vmatprep.subr.mxu0 %v2963
    %3035 = vmatpush1.msra.mxu0 %v2962
    %3036 = vmatprep.subr.mxu0 %v2967
    %3037 = vmatpush1.msra.mxu0 %v2966
    %3038 = vmatprep.subr.mxu0 %v2971
    %3039 = vmatpush1.msra.mxu0 %v2970
    %3040 = vmatprep.subr.mxu0 %v2975
    %3041 = vmatpush1.msra.mxu0 %v2974
    %3042 = vmatprep.subr.mxu0 %v2979
    %3043 = vmatpush1.msra.mxu0 %v2978
    %3044 = vmatprep.subr.mxu0 %v2983
    %3045 = vmatpush1.msra.mxu0 %v2982
    %3046 = vmatprep.subr.mxu0 %v2987
    %3047 = vmatpush1.msra.mxu0 %v2986
    %3048 = vmatprep.subr.mxu0 %v2991
    %3049 = vmatpush1.msra.mxu0 %v2990
    %3050 = vmatprep.subr.mxu0 %v2995
    %3051 = vmatpush1.msra.mxu0 %v2994
    %3052 = vmatprep.subr.mxu0 0.0
    %3053 = vmatpush1.msra.mxu0 0.0
    %3054 = vmatprep.subr.mxu0 0.0
    %3055 = vmatpush1.msra.mxu0 0.0
    %3056 = vmatprep.subr.mxu0 0.0
    %3057 = vmatpush1.msra.mxu0 0.0
    %3058 = vmatprep.subr.mxu0 0.0
    %3059 = vmatpush1.msra.mxu0 0.0
    %3060 = vmatprep.subr.mxu0 0.0
    %3061 = vmatpush1.msra.mxu0 0.0
    %3062 = vmatprep.subr.mxu0 0.0
    %3063 = vmatpush1.msra.mxu0 0.0
    %3064 = vmatprep.subr.mxu0 0.0
    %3065 = vmatpush1.msra.mxu0 0.0
    %3066 = vmatprep.subr.mxu0 0.0
    %3067 = vmatpush1.msra.mxu0 0.0
    %3068 = vmatprep.subr.mxu0 0.0
    %3069 = vmatpush1.msra.mxu0 0.0
    %3070 = vmatprep.subr.mxu0 0.0
    %3071 = vmatpush1.msra.mxu0 0.0
    %3072 = vmatprep.subr.mxu0 0.0
    %3073 = vmatpush1.msra.mxu0 0.0
    %3074 = vmatprep.subr.mxu0 0.0
    %3075 = vmatpush1.msra.mxu0 0.0
    %3076 = vmatprep.subr.mxu0 0.0
    %3077 = vmatpush1.msra.mxu0 0.0
    %3078 = vmatprep.subr.mxu0 0.0
    %3079 = vmatpush1.msra.mxu0 0.0
    %3080 = vmatprep.subr.mxu0 0.0
    %3081 = vmatpush1.msra.mxu0 0.0
    %3082 = vmatprep.subr.mxu0 0.0
    %3083 = vmatpush1.msra.mxu0 0.0
    %3084 = vmatprep.mubr.f32.mxu0 0.0
    %3085 = vmatmul.mubr.f32.gmra.mrb[0].mxu0 %v2932
    %v3086 = vpop.f32.mrb[0].mxu0
    %v3087 = vadd.f32 %v3003, %v3086
    %v3088 = vpop.f32.mrb[0].mxu0
    %v3089 = vadd.f32 %v3007, %v3088
    %3090 = vmatprep.mubr.f32.mxu0 0.0
    %3091 = vmatmul.mubr.f32.gmra.mrb[0].mxu0 %v2933
    %v3092 = vpop.f32.mrb[0].mxu0
    %v3093 = vadd.f32 %v3003, %v3092
    %v3094 = vpop.f32.mrb[0].mxu0
    %v3095 = vadd.f32 %v3007, %v3094
    %3096 = vdwg.mxu0
    %3097 = vmatprep.subr.mxu0 %v2937
    %3098 = vmatpush1.msra.mxu0 %v2936
    %3099 = vmatprep.subr.mxu0 %v2941
    %3100 = vmatpush1.msra.mxu0 %v2940
    %3101 = vmatprep.subr.mxu0 %v2945
    %3102 = vmatpush1.msra.mxu0 %v2944
    %3103 = vmatprep.subr.mxu0 %v2949
    %3104 = vmatpush1.msra.mxu0 %v2948
    %3105 = vmatprep.subr.mxu0 %v2953
    %3106 = vmatpush1.msra.mxu0 %v2952
    %3107 = vmatprep.subr.mxu0 %v2957
    %3108 = vmatpush1.msra.mxu0 %v2956
    %3109 = vmatprep.subr.mxu0 %v2961
    %3110 = vmatpush1.msra.mxu0 %v2960
    %3111 = vmatprep.subr.mxu0 %v2965
    %3112 = vmatpush1.msra.mxu0 %v2964
    %3113 = vmatprep.subr.mxu0 %v2969
    %3114 = vmatpush1.msra.mxu0 %v2968
    %3115 = vmatprep.subr.mxu0 %v2973
    %3116 = vmatpush1.msra.mxu0 %v2972
    %3117 = vmatprep.subr.mxu0 %v2977
    %3118 = vmatpush1.msra.mxu0 %v2976
    %3119 = vmatprep.subr.mxu0 %v2981
    %3120 = vmatpush1.msra.mxu0 %v2980
    %3121 = vmatprep.subr.mxu0 %v2985
    %3122 = vmatpush1.msra.mxu0 %v2984
    %3123 = vmatprep.subr.mxu0 %v2989
    %3124 = vmatpush1.msra.mxu0 %v2988
    %3125 = vmatprep.subr.mxu0 %v2993
    %3126 = vmatpush1.msra.mxu0 %v2992
    %3127 = vmatprep.subr.mxu0 %v2997
    %3128 = vmatpush1.msra.mxu0 %v2996
    %3129 = vmatprep.subr.mxu0 0.0
    %3130 = vmatpush1.msra.mxu0 0.0
    %3131 = vmatprep.subr.mxu0 0.0
    %3132 = vmatpush1.msra.mxu0 0.0
    %3133 = vmatprep.subr.mxu0 0.0
    %3134 = vmatpush1.msra.mxu0 0.0
    %3135 = vmatprep.subr.mxu0 0.0
    %3136 = vmatpush1.msra.mxu0 0.0
    %3137 = vmatprep.subr.mxu0 0.0
    %3138 = vmatpush1.msra.mxu0 0.0
    %3139 = vmatprep.subr.mxu0 0.0
    %3140 = vmatpush1.msra.mxu0 0.0
    %3141 = vmatprep.subr.mxu0 0.0
    %3142 = vmatpush1.msra.mxu0 0.0
    %3143 = vmatprep.subr.mxu0 0.0
    %3144 = vmatpush1.msra.mxu0 0.0
    %3145 = vmatprep.subr.mxu0 0.0
    %3146 = vmatpush1.msra.mxu0 0.0
    %3147 = vmatprep.subr.mxu0 0.0
    %3148 = vmatpush1.msra.mxu0 0.0
    %3149 = vmatprep.subr.mxu0 0.0
    %3150 = vmatpush1.msra.mxu0 0.0
    %3151 = vmatprep.subr.mxu0 0.0
    %3152 = vmatpush1.msra.mxu0 0.0
    %3153 = vmatprep.subr.mxu0 0.0
    %3154 = vmatpush1.msra.mxu0 0.0
    %3155 = vmatprep.subr.mxu0 0.0
    %3156 = vmatpush1.msra.mxu0 0.0
    %3157 = vmatprep.subr.mxu0 0.0
    %3158 = vmatpush1.msra.mxu0 0.0
    %3159 = vmatprep.subr.mxu0 0.0
    %3160 = vmatpush1.msra.mxu0 0.0
    %3161 = vmatprep.mubr.f32.mxu0 0.0
    %3162 = vmatmul.mubr.f32.gmra.mrb[0].mxu0 %v2932
    %v3163 = vpop.f32.mrb[0].mxu0
    %v3164 = vadd.f32 %v3011, %v3163
    %v3165 = vpop.f32.mrb[0].mxu0
    %v3166 = vadd.f32 %v3015, %v3165
    %3167 = vmatprep.mubr.f32.mxu0 0.0
    %3168 = vmatmul.mubr.f32.gmra.mrb[0].mxu0 %v2933
    %v3169 = vpop.f32.mrb[0].mxu0
    %v3170 = vadd.f32 %v3011, %v3169
    %v3171 = vpop.f32.mrb[0].mxu0
    %v3172 = vadd.f32 %v3015, %v3171
    %3173 = vdwg.mxu0
    %v3174 = vmul.f32 %v3087, 0.5
    %v3175 = vmul.f32 %v3089, 0.5
    %v3176 = vmul.f32 %v3164, 0.5
    %v3177 = vmul.f32 %v3166, 0.5
    %v3178 = vmul.f32 %v3093, 0.5
    %v3179 = vmul.f32 %v3095, 0.5
    %v3180 = vmul.f32 %v3170, 0.5
    %v3181 = vmul.f32 %v3172, 0.5
    %v3182 = vmul.f32 %v3087, 0.70710677
    %v3183 = vmul.f32 %v3089, 0.70710677
    %v3184 = vmul.f32 %v3164, 0.70710677
    %v3185 = vmul.f32 %v3166, 0.70710677
    %v3186 = vmul.f32 %v3093, 0.70710677
    %v3187 = vmul.f32 %v3095, 0.70710677
    %v3188 = vmul.f32 %v3170, 0.70710677
    %v3189 = vmul.f32 %v3172, 0.70710677
    %v3190 = verf.f32.pop %v3182
    %v3191 = verf.f32.pop %v3183
    %v3192 = verf.f32.pop %v3184
    %v3193 = verf.f32.pop %v3185
    %v3194 = verf.f32.pop %v3186
    %v3195 = verf.f32.pop %v3187
    %v3196 = verf.f32.pop %v3188
    %v3197 = verf.f32.pop %v3189
    %v3198 = vadd.f32 %v3190, 1.0
    %v3199 = vadd.f32 %v3191, 1.0
    %v3200 = vadd.f32 %v3192, 1.0
    %v3201 = vadd.f32 %v3193, 1.0
    %v3202 = vadd.f32 %v3194, 1.0
    %v3203 = vadd.f32 %v3195, 1.0
    %v3204 = vadd.f32 %v3196, 1.0
    %v3205 = vadd.f32 %v3197, 1.0
    %v3206 = vmul.f32 %v3174, %v3198
    %v3207 = vmul.f32 %v3175, %v3199
    %v3208 = vmul.f32 %v3176, %v3200
    %v3209 = vmul.f32 %v3177, %v3201
    %v3210 = vmul.f32 %v3178, %v3202
    %v3211 = vmul.f32 %v3179, %v3203
    %v3212 = vmul.f32 %v3180, %v3204
    %v3213 = vmul.f32 %v3181, %v3205
    %v3214 = vld [vmem:[%s10] sm:$0xff]
    %v3215 = vld [vmem:[%s10 + $0x8] sm:$0xff]
    %v3216 = vld [vmem:[%s10 + $0x10] sm:$0xff]
    %v3217 = vld [vmem:[%s10 + $0x18] sm:$0xff]
    %v3218 = vld [vmem:[%s10 + $0x20] sm:$0xff]
    %v3219 = vld [vmem:[%s10 + $0x28] sm:$0xff]
    %v3220 = vld [vmem:[%s10 + $0x30] sm:$0xff]
    %v3221 = vld [vmem:[%s10 + $0x38] sm:$0xff]
    %v3222 = vld [vmem:[%s10 + $0x40] sm:$0xff]
    %v3223 = vld [vmem:[%s10 + $0x48] sm:$0xff]
    %v3224 = vld [vmem:[%s10 + $0x50] sm:$0xff]
    %v3225 = vld [vmem:[%s10 + $0x58] sm:$0xff]
    %v3226 = vld [vmem:[%s10 + $0x60] sm:$0xff]
    %v3227 = vld [vmem:[%s10 + $0x68] sm:$0xff]
    %v3228 = vld [vmem:[%s10 + $0x70] sm:$0xff]
    %v3229 = vld [vmem:[%s10 + $0x78] sm:$0xff]
    %v3230 = vld [vmem:[%s10 + $0x80] sm:$0xff]
    %v3231 = vld [vmem:[%s10 + $0x88] sm:$0xff]
    %v3232 = vld [vmem:[%s10 + $0x90] sm:$0xff]
    %v3233 = vld [vmem:[%s10 + $0x98] sm:$0xff]
    %v3234 = vld [vmem:[%s10 + $0xa0] sm:$0xff]
    %v3235 = vld [vmem:[%s10 + $0xa8] sm:$0xff]
    %v3236 = vld [vmem:[%s10 + $0xb0] sm:$0xff]
    %v3237 = vld [vmem:[%s10 + $0xb8] sm:$0xff]
    %v3238 = vld [vmem:[%s10 + $0xc0] sm:$0xff]
    %v3239 = vld [vmem:[%s10 + $0xc8] sm:$0xff]
    %v3240 = vld [vmem:[%s10 + $0xd0] sm:$0xff]
    %v3241 = vld [vmem:[%s10 + $0xd8] sm:$0xff]
    %v3242 = vld [vmem:[%s10 + $0xe0] sm:$0xff]
    %v3243 = vld [vmem:[%s10 + $0xe8] sm:$0xff]
    %v3244 = vld [vmem:[%s10 + $0xf0] sm:$0xff]
    %v3245 = vld [vmem:[%s10 + $0xf8] sm:$0xff]
    %v3246 = vld [vmem:[%s10 + $0x100] sm:$0xff]
    %v3247 = vld [vmem:[%s10 + $0x108] sm:$0xff]
    %v3248 = vld [vmem:[%s10 + $0x110] sm:$0xff]
    %v3249 = vld [vmem:[%s10 + $0x118] sm:$0xff]
    %v3250 = vld [vmem:[%s10 + $0x120] sm:$0xff]
    %v3251 = vld [vmem:[%s10 + $0x128] sm:$0xff]
    %v3252 = vld [vmem:[%s10 + $0x130] sm:$0xff]
    %v3253 = vld [vmem:[%s10 + $0x138] sm:$0xff]
    %v3254 = vld [vmem:[%s10 + $0x140] sm:$0xff]
    %v3255 = vld [vmem:[%s10 + $0x148] sm:$0xff]
    %v3256 = vld [vmem:[%s10 + $0x150] sm:$0xff]
    %v3257 = vld [vmem:[%s10 + $0x158] sm:$0xff]
    %v3258 = vld [vmem:[%s10 + $0x160] sm:$0xff]
    %v3259 = vld [vmem:[%s10 + $0x168] sm:$0xff]
    %v3260 = vld [vmem:[%s10 + $0x170] sm:$0xff]
    %v3261 = vld [vmem:[%s10 + $0x178] sm:$0xff]
    %v3262 = vld [vmem:[%s10 + $0x180] sm:$0xff]
    %v3263 = vld [vmem:[%s10 + $0x188] sm:$0xff]
    %v3264 = vld [vmem:[%s10 + $0x190] sm:$0xff]
    %v3265 = vld [vmem:[%s10 + $0x198] sm:$0xff]
    %v3266 = vld [vmem:[%s10 + $0x1a0] sm:$0xff]
    %v3267 = vld [vmem:[%s10 + $0x1a8] sm:$0xff]
    %v3268 = vld [vmem:[%s10 + $0x1b0] sm:$0xff]
    %v3269 = vld [vmem:[%s10 + $0x1b8] sm:$0xff]
    %v3270 = vld [vmem:[%s10 + $0x1c0] sm:$0xff]
    %v3271 = vld [vmem:[%s10 + $0x1c8] sm:$0xff]
    %v3272 = vld [vmem:[%s10 + $0x1d0] sm:$0xff]
    %v3273 = vld [vmem:[%s10 + $0x1d8] sm:$0xff]
    %v3274 = vld [vmem:[%s10 + $0x1e0] sm:$0xff]
    %v3275 = vld [vmem:[%s10 + $0x1e8] sm:$0xff]
    %v3276 = vld [vmem:[%s10 + $0x1f0] sm:$0xff]
    %v3277 = vld [vmem:[%s10 + $0x1f8] sm:$0xff]
    %v3278 = vld [vmem:[%s11] sm:$0x1]
    %v3280 = vlaneseq
    %v3281 = vshrl.u32 %v3280, 7
    %v3282 = vsub.s32 0, %v3281
    %v3283 = vrot.slane %v3278, %v3282
    %3285 = vmatprep.subr.mxu0 0.0
    %3286 = vmatpush1.msra.mxu0 %v3214
    %3287 = vmatprep.subr.mxu0 0.0
    %3288 = vmatpush1.msra.mxu0 %v3215
    %3289 = vmatprep.subr.mxu0 0.0
    %3290 = vmatpush1.msra.mxu0 %v3216
    %3291 = vmatprep.subr.mxu0 0.0
    %3292 = vmatpush1.msra.mxu0 %v3217
    %3293 = vmatprep.subr.mxu0 0.0
    %3294 = vmatpush1.msra.mxu0 %v3218
    %3295 = vmatprep.subr.mxu0 0.0
    %3296 = vmatpush1.msra.mxu0 %v3219
    %3297 = vmatprep.subr.mxu0 0.0
    %3298 = vmatpush1.msra.mxu0 %v3220
    %3299 = vmatprep.subr.mxu0 0.0
    %3300 = vmatpush1.msra.mxu0 %v3221
    %3301 = vmatprep.subr.mxu0 0.0
    %3302 = vmatpush1.msra.mxu0 %v3222
    %3303 = vmatprep.subr.mxu0 0.0
    %3304 = vmatpush1.msra.mxu0 %v3223
    %3305 = vmatprep.subr.mxu0 0.0
    %3306 = vmatpush1.msra.mxu0 %v3224
    %3307 = vmatprep.subr.mxu0 0.0
    %3308 = vmatpush1.msra.mxu0 %v3225
    %3309 = vmatprep.subr.mxu0 0.0
    %3310 = vmatpush1.msra.mxu0 %v3226
    %3311 = vmatprep.subr.mxu0 0.0
    %3312 = vmatpush1.msra.mxu0 %v3227
    %3313 = vmatprep.subr.mxu0 0.0
    %3314 = vmatpush1.msra.mxu0 %v3228
    %3315 = vmatprep.subr.mxu0 0.0
    %3316 = vmatpush1.msra.mxu0 %v3229
    %3317 = vmatprep.subr.mxu0 0.0
    %3318 = vmatpush1.msra.mxu0 %v3230
    %3319 = vmatprep.subr.mxu0 0.0
    %3320 = vmatpush1.msra.mxu0 %v3231
    %3321 = vmatprep.subr.mxu0 0.0
    %3322 = vmatpush1.msra.mxu0 %v3232
    %3323 = vmatprep.subr.mxu0 0.0
    %3324 = vmatpush1.msra.mxu0 %v3233
    %3325 = vmatprep.subr.mxu0 0.0
    %3326 = vmatpush1.msra.mxu0 %v3234
    %3327 = vmatprep.subr.mxu0 0.0
    %3328 = vmatpush1.msra.mxu0 %v3235
    %3329 = vmatprep.subr.mxu0 0.0
    %3330 = vmatpush1.msra.mxu0 %v3236
    %3331 = vmatprep.subr.mxu0 0.0
    %3332 = vmatpush1.msra.mxu0 %v3237
    %3333 = vmatprep.subr.mxu0 0.0
    %3334 = vmatpush1.msra.mxu0 %v3238
    %3335 = vmatprep.subr.mxu0 0.0
    %3336 = vmatpush1.msra.mxu0 %v3239
    %3337 = vmatprep.subr.mxu0 0.0
    %3338 = vmatpush1.msra.mxu0 %v3240
    %3339 = vmatprep.subr.mxu0 0.0
    %3340 = vmatpush1.msra.mxu0 %v3241
    %3341 = vmatprep.subr.mxu0 0.0
    %3342 = vmatpush1.msra.mxu0 %v3242
    %3343 = vmatprep.subr.mxu0 0.0
    %3344 = vmatpush1.msra.mxu0 %v3243
    %3345 = vmatprep.subr.mxu0 0.0
    %3346 = vmatpush1.msra.mxu0 %v3244
    %3347 = vmatprep.subr.mxu0 0.0
    %3348 = vmatpush1.msra.mxu0 %v3245
    %3349 = vmatprep.mubr.f32.mxu0 %v3207
    %3350 = vmatmul.mubr.f32.gmra.mrb[0].mxu0 %v3206
    %v3351 = vpop.f32.mrb[0].mxu0
    %v3352 = vadd.f32 %v3283, %v3351
    %v3353 = vpop.f32.mrb[0].mxu0
    %3354 = vmatprep.mubr.f32.mxu0 %v3211
    %3355 = vmatmul.mubr.f32.gmra.mrb[0].mxu0 %v3210
    %v3356 = vpop.f32.mrb[0].mxu0
    %v3357 = vadd.f32 %v3283, %v3356
    %v3358 = vpop.f32.mrb[0].mxu0
    %3359 = vdwg.mxu0
    %3360 = vmatprep.subr.mxu0 0.0
    %3361 = vmatpush1.msra.mxu0 %v3246
    %3362 = vmatprep.subr.mxu0 0.0
    %3363 = vmatpush1.msra.mxu0 %v3247
    %3364 = vmatprep.subr.mxu0 0.0
    %3365 = vmatpush1.msra.mxu0 %v3248
    %3366 = vmatprep.subr.mxu0 0.0
    %3367 = vmatpush1.msra.mxu0 %v3249
    %3368 = vmatprep.subr.mxu0 0.0
    %3369 = vmatpush1.msra.mxu0 %v3250
    %3370 = vmatprep.subr.mxu0 0.0
    %3371 = vmatpush1.msra.mxu0 %v3251
    %3372 = vmatprep.subr.mxu0 0.0
    %3373 = vmatpush1.msra.mxu0 %v3252
    %3374 = vmatprep.subr.mxu0 0.0
    %3375 = vmatpush1.msra.mxu0 %v3253
    %3376 = vmatprep.subr.mxu0 0.0
    %3377 = vmatpush1.msra.mxu0 %v3254
    %3378 = vmatprep.subr.mxu0 0.0
    %3379 = vmatpush1.msra.mxu0 %v3255
    %3380 = vmatprep.subr.mxu0 0.0
    %3381 = vmatpush1.msra.mxu0 %v3256
    %3382 = vmatprep.subr.mxu0 0.0
    %3383 = vmatpush1.msra.mxu0 %v3257
    %3384 = vmatprep.subr.mxu0 0.0
    %3385 = vmatpush1.msra.mxu0 %v3258
    %3386 = vmatprep.subr.mxu0 0.0
    %3387 = vmatpush1.msra.mxu0 %v3259
    %3388 = vmatprep.subr.mxu0 0.0
    %3389 = vmatpush1.msra.mxu0 %v3260
    %3390 = vmatprep.subr.mxu0 0.0
    %3391 = vmatpush1.msra.mxu0 %v3261
    %3392 = vmatprep.subr.mxu0 0.0
    %3393 = vmatpush1.msra.mxu0 %v3262
    %3394 = vmatprep.subr.mxu0 0.0
    %3395 = vmatpush1.msra.mxu0 %v3263
    %3396 = vmatprep.subr.mxu0 0.0
    %3397 = vmatpush1.msra.mxu0 %v3264
    %3398 = vmatprep.subr.mxu0 0.0
    %3399 = vmatpush1.msra.mxu0 %v3265
    %3400 = vmatprep.subr.mxu0 0.0
    %3401 = vmatpush1.msra.mxu0 %v3266
    %3402 = vmatprep.subr.mxu0 0.0
    %3403 = vmatpush1.msra.mxu0 %v3267
    %3404 = vmatprep.subr.mxu0 0.0
    %3405 = vmatpush1.msra.mxu0 %v3268
    %3406 = vmatprep.subr.mxu0 0.0
    %3407 = vmatpush1.msra.mxu0 %v3269
    %3408 = vmatprep.subr.mxu0 0.0
    %3409 = vmatpush1.msra.mxu0 %v3270
    %3410 = vmatprep.subr.mxu0 0.0
    %3411 = vmatpush1.msra.mxu0 %v3271
    %3412 = vmatprep.subr.mxu0 0.0
    %3413 = vmatpush1.msra.mxu0 %v3272
    %3414 = vmatprep.subr.mxu0 0.0
    %3415 = vmatpush1.msra.mxu0 %v3273
    %3416 = vmatprep.subr.mxu0 0.0
    %3417 = vmatpush1.msra.mxu0 %v3274
    %3418 = vmatprep.subr.mxu0 0.0
    %3419 = vmatpush1.msra.mxu0 %v3275
    %3420 = vmatprep.subr.mxu0 0.0
    %3421 = vmatpush1.msra.mxu0 %v3276
    %3422 = vmatprep.subr.mxu0 0.0
    %3423 = vmatpush1.msra.mxu0 %v3277
    %3424 = vmatprep.mubr.f32.mxu0 %v3209
    %3425 = vmatmul.mubr.f32.gmra.mrb[0].mxu0 %v3208
    %v3426 = vpop.f32.mrb[0].mxu0
    %v3427 = vadd.f32 %v3352, %v3426
    %v3428 = vpop.f32.mrb[0].mxu0
    %3429 = vmatprep.mubr.f32.mxu0 %v3213
    %3430 = vmatmul.mubr.f32.gmra.mrb[0].mxu0 %v3212
    %v3431 = vpop.f32.mrb[0].mxu0
    %v3432 = vadd.f32 %v3357, %v3431
    %v3433 = vpop.f32.mrb[0].mxu0
    %3434 = vdwg.mxu0
    %v3435 = vld [vmem:[%s12] sm:$0x1]
    %v3437 = vlaneseq
    %v3438 = vshrl.u32 %v3437, 7
    %v3439 = vsub.s32 0, %v3438
    %v3440 = vrot.slane %v3435, %v3439
    %v3442 = vmul.f32 %v3440, %v3427
    %v3443 = vmul.f32 %v3440, %v3432
    %v3444 = vadd.f32 %v2891, %v3442
    %v3445 = vadd.f32 %v2892, %v3443
    %3446 = vst [vmem:[#allocation3] sm:$0xff] %v3444
    %3447 = vst [vmem:[#allocation3 + $0x8] sm:$0xff] %v3445
    // Predicated region
    $region54: #{gru_attention_forward.3} parent=1 // pred_check
      _
    $region55: #{gru_attention_forward.3} parent=1 // pred_check_branch
      %3449 = sbr.rel (0) target = $region57
    $region56: #{gru_attention_forward.3} parent=1 // pred_region
      %s3451 = ssub.s32 256, 256
      %3452 = vsyncadd [#allocation4], %s3451
      %s3453 = sshll.u32 [#allocation3], 4
      %s3454 = int_to_ptr.vmem [resolvable:$true] %s3453
      %3459 = dma.vmem_to_hbm [thread:$0]  %s3454, 256, %s13, [#allocation4], 128, 128, 8
    $region57: #{gru_attention_forward.3} parent=1 // pred_fallthru
      _
    // Predicated region
    $region58: #{gru_attention_forward.3} parent=1 // pred_check
      _
    $region59: #{gru_attention_forward.3} parent=1 // pred_check_branch
      %3461 = sbr.rel (0) target = $region61
    $region60: #{gru_attention_forward.3} parent=1 // pred_region
      %3462 = dma.done [#allocation4], 256
    $region61: #{gru_attention_forward.3} parent=1 // pred_fallthru
      _
    %3463 = vsyncpa [#allocation4], 1

</llo_original>
